<compile_context>
chip_gen: v5e
topology: v5e:2x2
jax: 0.10.0
libtpu: 0.0.40
codegen_flags: <defaults>
</compile_context>

<pallas_src>
import functools
import math

import numpy as np
import jax
import jax.numpy as jnp
from jax import lax
from jax.experimental import pallas as pl
from jax.experimental.pallas import tpu as pltpu

BF16 = jnp.bfloat16
F32 = jnp.float32


# --------------------------------------------------------------------------------------
# Device-aware tuning knobs
# --------------------------------------------------------------------------------------
def _device_kind():
    try:
        return jax.devices()[0].device_kind.lower()
    except Exception:
        return ""


_KIND = _device_kind()
# bf16 exp only where the EUP runs bf16 (v6e / v7x); f32 elsewhere (v5e EUP is f32-only).
_EXP_DTYPE = BF16 if ("v6" in _KIND or "v7" in _KIND) else F32
# Scoped-VMEM ceiling: leave headroom under physical VMEM (64 MiB on v7x, 128 MiB on v5e/v6e).
if "v7" in _KIND:
    _VMEM_LIMIT = 48 * 1024 * 1024
elif "v5" in _KIND or "v6" in _KIND:
    _VMEM_LIMIT = 100 * 1024 * 1024
else:
    _VMEM_LIMIT = None  # unknown chip: keep the compiler default


def _pick_tile(n, target=256):
    """Largest query-row tile <= target that divides n (falls back to n itself)."""
    if n <= target:
        return n
    t = target
    while t >= 8:
        if n % t == 0:
            return t
        t -= 8
    return n


# --------------------------------------------------------------------------------------
# In-kernel math helpers
# --------------------------------------------------------------------------------------
def _mm(a_f32, w_bf16):
    """bf16 MXU matmul, f32 accumulation (weight already bf16, activation cast once here)."""
    return jnp.dot(a_f32.astype(BF16), w_bf16, preferred_element_type=F32)


def _ln(x, g, b, eps=1e-5):
    mu = jnp.mean(x, axis=-1, keepdims=True)
    xc = x - mu
    var = jnp.mean(xc * xc, axis=-1, keepdims=True)
    return xc * lax.rsqrt(var + eps) * g + b


def _erf(x):
    # Abramowitz & Stegun 7.1.26 rational approximation, |err| < 1.5e-7 (Mosaic-friendly ops only).
    c = 0.3275911
    a1, a2, a3, a4, a5 = 0.254829592, -0.284496736, 1.421413741, -1.453152027, 1.061405429
    sgn = jnp.where(x >= 0.0, 1.0, -1.0)
    xa = jnp.abs(x)
    t = 1.0 / (1.0 + c * xa)
    poly = ((((a5 * t + a4) * t + a3) * t + a2) * t + a1) * t
    return sgn * (1.0 - poly * jnp.exp(-xa * xa))


def _gelu(x):
    # Exact (erf) GELU, matching torch nn.GELU() default.
    return 0.5 * x * (1.0 + _erf(x * 0.7071067811865476))


def _attend(q, k, v, n_heads, exp_dtype):
    """Multi-head attention core on one query-row tile.

    q: (tq, E) bf16 — the 1/sqrt(hd) scale is already folded into the Q projection on the host.
    k, v: (Lk, E) bf16.
    Returns the head-concatenated context (tq, E) in f32 (before the fused output projection).
    """
    e = q.shape[-1]
    hd = e // n_heads
    ctxs = []
    # TODO(synk): per-head slices at non-128 offsets incur XLU relayouts; a host-side per-head
    # column reorder could remove them (modest win, skipped).
    for h in range(n_heads):
        sl = slice(h * hd, (h + 1) * hd)
        s = lax.dot_general(q[:, sl], k[:, sl], (((1,), (1,)), ((), ())),
                            preferred_element_type=F32)            # (tq, Lk)
        m = jnp.max(s, axis=-1, keepdims=True)
        p = jnp.exp((s - m).astype(exp_dtype))                      # EUP (bf16 on v6e/v7x)
        denom = jnp.sum(p.astype(F32), axis=-1, keepdims=True)
        ctx = jnp.dot(p.astype(BF16), v[:, sl], preferred_element_type=F32)
        # Softmax normalization applied post-matmul: (tq, hd) multiply instead of (tq, Lk).
        ctxs.append(ctx * pl.reciprocal(denom, approx=True))
    return jnp.concatenate(ctxs, axis=-1)                           # (tq, E) f32


def _self_layer_tiled(x, o_ref, w, n_heads, tq, exp_dtype):
    (in_w, in_b, out_w, out_b, ln1_g, ln1_b,
     f1w, f1b, f2w, f2b, ln2_g, ln2_b) = w
    L, e = x.shape
    # Full-sequence QKV in one lane-dense (L, 3E) matmul; K/V are needed in full anyway.
    qkv = _mm(x, in_w) + in_b
    q = qkv[:, :e].astype(BF16)
    k = qkv[:, e:2 * e].astype(BF16)
    v = qkv[:, 2 * e:].astype(BF16)
    for t0 in range(0, L, tq):                 # Lq tiling bounds scores/probs/FFN-hidden VMEM
        rows = slice(t0, t0 + tq)
        xt = x[rows]
        ctx = _attend(q[rows], k, v, n_heads, exp_dtype)
        a = jnp.dot(ctx.astype(BF16), out_w, preferred_element_type=F32) + out_b
        attn_t = _ln(a, ln1_g, ln1_b) + xt
        h = _gelu(_mm(attn_t, f1w) + f1b)
        ff = _mm(h, f2w) + f2b
        o_ref[rows, :] = _ln(ff, ln2_g, ln2_b) + attn_t


def _cross_layer_tiled(x, close_bf, o_ref, w, n_heads, tq, exp_dtype):
    (a1_iw, a1_ib, a1_ow, a1_ob, ln1_g, ln1_b,
     a2_iw, a2_ib, a2_ow, a2_ob, ln2_g, ln2_b,
     f1w, f1b, f2w, f2b, ln3_g, ln3_b) = w
    L, e = x.shape
    # Self-attention QKV over the full decoder carry (one matmul).
    qkv1 = _mm(x, a1_iw) + a1_ib
    q1 = qkv1[:, :e].astype(BF16)
    k1 = qkv1[:, e:2 * e].astype(BF16)
    v1 = qkv1[:, 2 * e:].astype(BF16)
    # Cross-attention K/V from the (already bf16) encoder output, computed once per layer.
    kv2 = jnp.dot(close_bf, a2_iw[:, e:], preferred_element_type=F32) + a2_ib[:, e:]
    k2 = kv2[:, :e].astype(BF16)
    v2 = kv2[:, e:].astype(BF16)
    for t0 in range(0, L, tq):
        rows = slice(t0, t0 + tq)
        xt = x[rows]
        ctx1 = _attend(q1[rows], k1, v1, n_heads, exp_dtype)
        a1 = jnp.dot(ctx1.astype(BF16), a1_ow, preferred_element_type=F32) + a1_ob
        attn_t = _ln(a1, ln1_g, ln1_b) + xt
        q2 = (_mm(attn_t, a2_iw[:, :e]) + a2_ib[:, :e]).astype(BF16)
        ctx2 = _attend(q2, k2, v2, n_heads, exp_dtype)
        a2 = jnp.dot(ctx2.astype(BF16), a2_ow, preferred_element_type=F32) + a2_ob
        attn2_t = _ln(a2, ln2_g, ln2_b) + attn_t
        h = _gelu(_mm(attn2_t, f1w) + f1b)
        ff = _mm(h, f2w) + f2b
        o_ref[rows, :] = _ln(ff, ln3_g, ln3_b) + attn2_t


# --------------------------------------------------------------------------------------
# Pallas kernels
# --------------------------------------------------------------------------------------
def _embed_kernel(x_ref, g_ref, b_ref, w_ref, wb_ref, pos_ref, o_ref):
    x0 = _ln(x_ref[...].astype(F32), g_ref[...], b_ref[...])
    o_ref[...] = _mm(x0, w_ref[...]) + wb_ref[...] + pos_ref[...]


def _encoder_stack_kernel(
        x0_ref,
        in_w_ref, in_b_ref, out_w_ref, out_b_ref, ln1_g_ref, ln1_b_ref,
        f1w_ref, f1b_ref, f2w_ref, f2b_ref, ln2_g_ref, ln2_b_ref,
        o_ref, o_bf_ref, *, n_heads, tq, exp_dtype):
    # Layer 0: initialize the VMEM-resident carry from the embedded input.
    @pl.when(pl.program_id(0) == 0)
    def _():
        o_ref[...] = x0_ref[...]

    x = o_ref[...]
    _self_layer_tiled(
        x, o_ref,
        (in_w_ref[...], in_b_ref[...], out_w_ref[...], out_b_ref[...],
         ln1_g_ref[...], ln1_b_ref[...],
         f1w_ref[...], f1b_ref[...], f2w_ref[...], f2b_ref[...],
         ln2_g_ref[...], ln2_b_ref[...]),
        n_heads, tq, exp_dtype)

    # Emit a bf16 copy of the final encoder output for the decoder's cross-attention K/V source.
    @pl.when(pl.program_id(0) == pl.num_programs(0) - 1)
    def _():
        o_bf_ref[...] = o_ref[...].astype(BF16)


def _decoder_stack_kernel(
        x0_ref, enc_ref,
        a1_iw_ref, a1_ib_ref, a1_ow_ref, a1_ob_ref, ln1_g_ref, ln1_b_ref,
        a2_iw_ref, a2_ib_ref, a2_ow_ref, a2_ob_ref, ln2_g_ref, ln2_b_ref,
        f1w_ref, f1b_ref, f2w_ref, f2b_ref, ln3_g_ref, ln3_b_ref,
        o_ref, *, n_heads, tq, exp_dtype):
    @pl.when(pl.program_id(0) == 0)
    def _():
        o_ref[...] = x0_ref[...]

    close_bf = enc_ref[...]          # bf16, identical K/V source for every decoder layer
    x = o_ref[...]
    _cross_layer_tiled(
        x, close_bf, o_ref,
        (a1_iw_ref[...], a1_ib_ref[...], a1_ow_ref[...], a1_ob_ref[...],
         ln1_g_ref[...], ln1_b_ref[...],
         a2_iw_ref[...], a2_ib_ref[...], a2_ow_ref[...], a2_ob_ref[...],
         ln2_g_ref[...], ln2_b_ref[...],
         f1w_ref[...], f1b_ref[...], f2w_ref[...], f2b_ref[...],
         ln3_g_ref[...], ln3_b_ref[...]),
        n_heads, tq, exp_dtype)


# --------------------------------------------------------------------------------------
# One-time host-side weight packing (pre-transpose to (in,out), bf16 cast, scale folding, stack)
# --------------------------------------------------------------------------------------
def _pack_mha(attn, e, scale):
    in_w = attn["in_w"].T.astype(F32)                 # (E, 3E)
    in_b = attn["in_b"].reshape(1, -1).astype(F32)    # (1, 3E)
    # Fold 1/sqrt(hd) into the Q columns -> no score scaling inside the kernel.
    in_w = in_w.at[:, :e].multiply(scale)
    in_b = in_b.at[:, :e].multiply(scale)
    return (in_w.astype(BF16), in_b,
            attn["out"]["w"].T.astype(BF16),
            attn["out"]["b"].reshape(1, -1).astype(F32))


def _pack_embed(norm, ie, pos):
    return (norm["g"].reshape(1, -1).astype(F32), norm["b"].reshape(1, -1).astype(F32),
            ie["w"].T.astype(BF16), ie["b"].reshape(1, -1).astype(F32), pos.astype(F32))


def _pack_encoder(layers, e, scale):
    per = []
    for l in layers:
        iw, ib, ow, ob = _pack_mha(l["attn"], e, scale)
        per.append([
            iw, ib, ow, ob,
            l["ln1"]["g"].reshape(1, -1), l["ln1"]["b"].reshape(1, -1),
            l["ffn1"]["w"].T.astype(BF16), l["ffn1"]["b"].reshape(1, -1),
            l["ffn2"]["w"].T.astype(BF16), l["ffn2"]["b"].reshape(1, -1),
            l["ln2"]["g"].reshape(1, -1), l["ln2"]["b"].reshape(1, -1),
        ])
    return [jnp.stack(xs, axis=0) for xs in zip(*per)]


def _pack_decoder(layers, e, scale):
    per = []
    for l in layers:
        a1 = _pack_mha(l["attn1"], e, scale)
        a2 = _pack_mha(l["attn2"], e, scale)
        per.append([
            *a1, l["ln1"]["g"].reshape(1, -1), l["ln1"]["b"].reshape(1, -1),
            *a2, l["ln2"]["g"].reshape(1, -1), l["ln2"]["b"].reshape(1, -1),
            l["ffn1"]["w"].T.astype(BF16), l["ffn1"]["b"].reshape(1, -1),
            l["ffn2"]["w"].T.astype(BF16), l["ffn2"]["b"].reshape(1, -1),
            l["ln3"]["g"].reshape(1, -1), l["ln3"]["b"].reshape(1, -1),
        ])
    return [jnp.stack(xs, axis=0) for xs in zip(*per)]


def prepare_params(p, cfg):
    """One-time packing (hoisted out of the forward per the review)."""
    e, h = cfg["embed_dim"], cfg["n_heads"]
    scale = 1.0 / math.sqrt(e // h)
    return {
        "close_embed": _pack_embed(p["norm1"], p["ie1"], p["pos_close"]),
        "dist_embed": _pack_embed(p["norm2"], p["ie2"], p["pos_dist"]),
        "enc": _pack_encoder(p["enc"], e, scale),
        "dec": _pack_decoder(p["dec"], e, scale),
    }


# --------------------------------------------------------------------------------------
# Forward: 2 tiny prologue calls + encoder stack + decoder stack
# --------------------------------------------------------------------------------------
def _embed(x, g, b, w, wb, pos):
    L, E = pos.shape
    args = (x, g, b, w, wb, pos)
    return pl.pallas_call(
        _embed_kernel,
        out_shape=jax.ShapeDtypeStruct((L, E), F32),
        grid=(1,),
        in_specs=[pl.BlockSpec(a.shape, lambda i, nd=a.ndim: (0,) * nd) for a in args],
        out_specs=pl.BlockSpec((L, E), lambda i: (0, 0)),
        compiler_params=pltpu.CompilerParams(vmem_limit_bytes=_VMEM_LIMIT),
    )(*args)


def cyattn_forward(close, dist, packed, *, n_heads):
    enc_stacked = packed["enc"]
    dec_stacked = packed["dec"]
    n_enc = enc_stacked[0].shape[0]
    n_dec = dec_stacked[0].shape[0]
    E = enc_stacked[0].shape[1]
    T = close.shape[0]
    Ld = dist.shape[0]

    # Prologue embeddings (keeps pos tables / embed weights out of the stack kernels' residency).
    close_emb = _embed(close.astype(F32), *packed["close_embed"])
    dist_emb = _embed(dist.astype(F32), *packed["dist_embed"])

    def const_spec(a):   # fetched once, resident across the (arbitrary) layer axis
        return pl.BlockSpec(a.shape, lambda l, nd=a.ndim: (0,) * nd)

    def layer_spec(a):   # one layer's weights per grid step, leading layer dim squeezed
        return pl.BlockSpec((None,) + tuple(a.shape[1:]),
                            lambda l, nd=a.ndim: (l,) + (0,) * (nd - 1))

    cp = pltpu.CompilerParams(dimension_semantics=("arbitrary",),
                              vmem_limit_bytes=_VMEM_LIMIT)
    tq_enc = _pick_tile(T)
    tq_dec = _pick_tile(Ld)

    # ---------------- encoder stack ----------------
    attn_f32, attn_bf16 = pl.pallas_call(
        functools.partial(_encoder_stack_kernel, n_heads=n_heads, tq=tq_enc,
                          exp_dtype=_EXP_DTYPE),
        out_shape=(jax.ShapeDtypeStruct((T, E), F32),
                   jax.ShapeDtypeStruct((T, E), BF16)),
        grid=(n_enc,),
        in_specs=[const_spec(close_emb)] + [layer_spec(a) for a in enc_stacked],
        out_specs=(pl.BlockSpec((T, E), lambda l: (0, 0)),
                   pl.BlockSpec((T, E), lambda l: (0, 0))),
        compiler_params=cp,
    )(close_emb, *enc_stacked)

    # ---------------- decoder stack ----------------
    out_full = pl.pallas_call(
        functools.partial(_decoder_stack_kernel, n_heads=n_heads, tq=tq_dec,
                          exp_dtype=_EXP_DTYPE),
        out_shape=jax.ShapeDtypeStruct((Ld, E), F32),
        grid=(n_dec,),
        in_specs=[const_spec(dist_emb), const_spec(attn_bf16)]
                 + [layer_spec(a) for a in dec_stacked],
        out_specs=pl.BlockSpec((Ld, E), lambda l: (0, 0)),
        compiler_params=cp,
    )(dist_emb, attn_bf16, *dec_stacked)

    return attn_f32[0], out_full[0]


# --------------------------------------------------------------------------------------
# Pure-JAX reference (mirrors the PyTorch module, eval mode)
# --------------------------------------------------------------------------------------
def _ref_ln(x, g, b, eps=1e-5):
    mu = x.mean(-1, keepdims=True)
    var = ((x - mu) ** 2).mean(-1, keepdims=True)
    return (x - mu) / jnp.sqrt(var + eps) * g + b


def _ref_mha(q_in, kv_in, a, n_heads):
    e = q_in.shape[-1]
    hd = e // n_heads
    w, bias = a["in_w"], a["in_b"]
    q = q_in @ w[:e].T + bias[:e]
    k = kv_in @ w[e:2 * e].T + bias[e:2 * e]
    v = kv_in @ w[2 * e:].T + bias[2 * e:]
    sp = lambda t: t.reshape(t.shape[0], n_heads, hd).transpose(1, 0, 2)
    qh, kh, vh = sp(q), sp(k), sp(v)
    s = jnp.einsum("hqd,hkd->hqk", qh, kh) / math.sqrt(hd)
    prob = jax.nn.softmax(s, axis=-1)
    ctx = jnp.einsum("hqk,hkd->hqd", prob, vh).transpose(1, 0, 2).reshape(q_in.shape[0], e)
    return ctx @ a["out"]["w"].T + a["out"]["b"]


def _ref_ffn(x, l):
    h = x @ l["ffn1"]["w"].T + l["ffn1"]["b"]
    h = jax.nn.gelu(h, approximate=False)
    return h @ l["ffn2"]["w"].T + l["ffn2"]["b"]


def _ref_self(x, l, H):
    attn = _ref_ln(_ref_mha(x, x, l["attn"], H), l["ln1"]["g"], l["ln1"]["b"]) + x
    return _ref_ln(_ref_ffn(attn, l), l["ln2"]["g"], l["ln2"]["b"]) + attn


def _ref_cross(close, dist, l, H):
    attn = _ref_ln(_ref_mha(dist, dist, l["attn1"], H), l["ln1"]["g"], l["ln1"]["b"]) + dist
    attn = _ref_ln(_ref_mha(attn, close, l["attn2"], H), l["ln2"]["g"], l["ln2"]["b"]) + attn
    return _ref_ln(_ref_ffn(attn, l), l["ln3"]["g"], l["ln3"]["b"]) + attn


def cyattn_reference(close, dist, p, cfg):
    H = cfg["n_heads"]
    close = _ref_ln(close, p["norm1"]["g"], p["norm1"]["b"])
    dist = _ref_ln(dist, p["norm2"]["g"], p["norm2"]["b"])
    close = close @ p["ie1"]["w"].T + p["ie1"]["b"] + p["pos_close"]
    dist = dist @ p["ie2"]["w"].T + p["ie2"]["b"] + p["pos_dist"]
    attn = close
    for l in p["enc"]:
        attn = _ref_self(attn, l, H)
    out = _ref_cross(attn, dist, p["dec"][0], H)
    for l in p["dec"][1:]:
        out = _ref_cross(attn, out, l, H)
    return attn[0], out[0]


# --------------------------------------------------------------------------------------
# Deterministic synthetic parameters (PyTorch weight layout: Linear weight is (out, in))
# --------------------------------------------------------------------------------------
def init_params(key, cfg):
    fc, E, T = cfg["voxel_feat_dim"], cfg["embed_dim"], cfg["max_tokens"]
    keys = iter(jax.random.split(key, 1024))
    nk = lambda: next(keys)

    def lin(cout, cin):
        bound = 1.0 / math.sqrt(cin)
        return {"w": jax.random.uniform(nk(), (cout, cin), F32, -bound, bound),
                "b": jax.random.uniform(nk(), (cout,), F32, -bound, bound)}

    def ln(c):
        return {"g": jnp.ones((c,), F32), "b": jnp.zeros((c,), F32)}

    def mha(e):
        lim = math.sqrt(6.0 / (4 * e))  # xavier_uniform_ on (3e, e)
        return {"in_w": jax.random.uniform(nk(), (3 * e, e), F32, -lim, lim),
                "in_b": jnp.zeros((3 * e,), F32),
                "out": lin(e, e)}

    def self_layer(e):
        return {"attn": mha(e), "ln1": ln(e),
                "ffn1": lin(4 * e, e), "ffn2": lin(e, 4 * e), "ln2": ln(e)}

    def cross_layer(e):
        return {"attn1": mha(e), "ln1": ln(e), "attn2": mha(e), "ln2": ln(e),
                "ffn1": lin(4 * e, e), "ffn2": lin(e, 4 * e), "ln3": ln(e)}

    return {
        "norm1": ln(fc), "norm2": ln(fc),
        "pos_close": 0.02 * jax.random.normal(nk(), (T, E), F32),
        "pos_dist": 0.02 * jax.random.normal(nk(), (3 * T, E), F32),
        "ie1": lin(E, fc), "ie2": lin(E, fc),
        "enc": [self_layer(E) for _ in range(cfg["n_enc"])],
        "dec": [cross_layer(E) for _ in range(cfg["n_dec"])],
    }


if __name__ == "__main__":
    # Small-shape config consistent with the module (real CyAttn uses embed_dim=256,
    # max_tokens=512, 6 enc + 6 dec layers; scaled down for the demo).
    cfg = dict(voxel_feat_dim=16, embed_dim=64, max_tokens=16,
               n_enc=2, n_dec=2, n_heads=4, dropout=0.1)

    key = jax.random.PRNGKey(0)
    kp, kc, kd = jax.random.split(key, 3)
    params = init_params(kp, cfg)

    close = jax.random.normal(kc, (cfg["max_tokens"], cfg["voxel_feat_dim"]), F32)
    dist = jax.random.normal(kd, (3 * cfg["max_tokens"], cfg["voxel_feat_dim"]), F32)

    packed = prepare_params(params, cfg)                       # one-time weight packing
    fwd = jax.jit(functools.partial(cyattn_forward, n_heads=cfg["n_heads"]))

    attn0, out0 = fwd(close, dist, packed)
    jax.block_until_ready((attn0, out0))

    # Correctness check against a pure-JAX reference (loose tolerance: bf16 MXU operands,
    # bf16 encoder K/V copy, bf16 softmax exp on v6e/v7x and approximate softmax reciprocal).
    ref_attn0, ref_out0 = cyattn_reference(close, dist, params, cfg)
    np.testing.assert_allclose(np.asarray(attn0), np.asarray(ref_attn0), rtol=1.5e-1, atol=1.5e-1)
    np.testing.assert_allclose(np.asarray(out0), np.asarray(ref_out0), rtol=1.5e-1, atol=1.5e-1)

    print("KERNEL_OK")
</pallas_src>

<mosaic_0001>
module attributes {stable_mosaic.version = 11 : i64} {
  func.func @_embed_kernel(%arg0: i32, %arg1: memref<16x16xf32, #tpu.memory_space<vmem>>, %arg2: memref<1x16xf32, #tpu.memory_space<vmem>>, %arg3: memref<1x16xf32, #tpu.memory_space<vmem>>, %arg4: memref<16x64xbf16, #tpu.memory_space<vmem>>, %arg5: memref<1x64xf32, #tpu.memory_space<vmem>>, %arg6: memref<16x64xf32, #tpu.memory_space<vmem>>, %arg7: memref<16x64xf32, #tpu.memory_space<vmem>>) attributes {dimension_semantics = [#tpu.dimension_semantics<arbitrary>], iteration_bounds = array<i64: 1>, scalar_prefetch = 0 : i64, scratch_operands = 0 : i64, tpu.core_type = #tpu.core_type<tc>, window_params = [{pipeline_mode = #tpu.pipeline_mode<synchronous>, transform_indices = @transform_0, window_bounds = array<i64: 16, 16>}, {pipeline_mode = #tpu.pipeline_mode<synchronous>, transform_indices = @transform_1, window_bounds = array<i64: 1, 16>}, {pipeline_mode = #tpu.pipeline_mode<synchronous>, transform_indices = @transform_2, window_bounds = array<i64: 1, 16>}, {pipeline_mode = #tpu.pipeline_mode<synchronous>, transform_indices = @transform_3, window_bounds = array<i64: 16, 64>}, {pipeline_mode = #tpu.pipeline_mode<synchronous>, transform_indices = @transform_4, window_bounds = array<i64: 1, 64>}, {pipeline_mode = #tpu.pipeline_mode<synchronous>, transform_indices = @transform_5, window_bounds = array<i64: 16, 64>}, {pipeline_mode = #tpu.pipeline_mode<synchronous>, transform_indices = @transform_6, window_bounds = array<i64: 16, 64>}]} {
    %c0 = arith.constant 0 : index
    %c0_0 = arith.constant 0 : index
    %0 = vector.load %arg1[%c0, %c0_0] : memref<16x16xf32, #tpu.memory_space<vmem>>, vector<16x16xf32>
    %c0_1 = arith.constant 0 : index
    %c0_2 = arith.constant 0 : index
    %1 = vector.load %arg2[%c0_1, %c0_2] : memref<1x16xf32, #tpu.memory_space<vmem>>, vector<1x16xf32>
    %c0_3 = arith.constant 0 : index
    %c0_4 = arith.constant 0 : index
    %2 = vector.load %arg3[%c0_3, %c0_4] : memref<1x16xf32, #tpu.memory_space<vmem>>, vector<1x16xf32>
    %cst = arith.constant dense<0.000000e+00> : vector<16xf32>
    %3 = vector.multi_reduction <add>, %0, %cst [1] : vector<16x16xf32> to vector<16xf32>
    %4 = vector.shape_cast %3 : vector<16xf32> to vector<16x1xf32>
    %cst_5 = arith.constant 1.600000e+01 : f32
    %5 = vector.broadcast %cst_5 : f32 to vector<16x1xf32>
    %6 = arith.divf %4, %5 : vector<16x1xf32>
    %7 = vector.broadcast %6 : vector<16x1xf32> to vector<16x16xf32>
    %8 = arith.subf %0, %7 : vector<16x16xf32>
    %9 = arith.mulf %8, %8 : vector<16x16xf32>
    %cst_6 = arith.constant dense<0.000000e+00> : vector<16xf32>
    %10 = vector.multi_reduction <add>, %9, %cst_6 [1] : vector<16x16xf32> to vector<16xf32>
    %11 = vector.shape_cast %10 : vector<16xf32> to vector<16x1xf32>
    %cst_7 = arith.constant 1.600000e+01 : f32
    %12 = vector.broadcast %cst_7 : f32 to vector<16x1xf32>
    %13 = arith.divf %11, %12 : vector<16x1xf32>
    %cst_8 = arith.constant 9.99999974E-6 : f32
    %14 = vector.broadcast %cst_8 : f32 to vector<16x1xf32>
    %15 = arith.addf %13, %14 : vector<16x1xf32>
    %16 = math.rsqrt %15 : vector<16x1xf32>
    %17 = vector.broadcast %16 : vector<16x1xf32> to vector<16x16xf32>
    %18 = arith.mulf %8, %17 : vector<16x16xf32>
    %19 = vector.broadcast %1 : vector<1x16xf32> to vector<16x16xf32>
    %20 = arith.mulf %18, %19 : vector<16x16xf32>
    %21 = vector.broadcast %2 : vector<1x16xf32> to vector<16x16xf32>
    %22 = arith.addf %20, %21 : vector<16x16xf32>
    %c0_9 = arith.constant 0 : index
    %c0_10 = arith.constant 0 : index
    %23 = vector.load %arg4[%c0_9, %c0_10] : memref<16x64xbf16, #tpu.memory_space<vmem>>, vector<16x64xbf16>
    %24 = arith.truncf %22 : vector<16x16xf32> to vector<16x16xbf16>
    %cst_11 = arith.constant dense<0.000000e+00> : vector<16x64xf32>
    %25 = tpu.matmul %24, %23, %cst_11 {dimension_numbers = #tpu.dot_dimension_numbers<[1], [0], [0], [1], [0, 0, 1, 1], [], []>} : vector<16x16xbf16>, vector<16x64xbf16>, vector<16x64xf32> -> vector<16x64xf32>
    %c0_12 = arith.constant 0 : index
    %c0_13 = arith.constant 0 : index
    %26 = vector.load %arg5[%c0_12, %c0_13] : memref<1x64xf32, #tpu.memory_space<vmem>>, vector<1x64xf32>
    %27 = vector.broadcast %26 : vector<1x64xf32> to vector<16x64xf32>
    %28 = arith.addf %25, %27 : vector<16x64xf32>
    %c0_14 = arith.constant 0 : index
    %c0_15 = arith.constant 0 : index
    %29 = vector.load %arg6[%c0_14, %c0_15] : memref<16x64xf32, #tpu.memory_space<vmem>>, vector<16x64xf32>
    %30 = arith.addf %28, %29 : vector<16x64xf32>
    %c0_16 = arith.constant 0 : index
    %c0_17 = arith.constant 0 : index
    %31 = vector.load %arg7[%c0_16, %c0_17] : memref<16x64xf32, #tpu.memory_space<vmem>>, vector<16x64xf32>
    tpu.vector_store %arg7[%c0_16, %c0_17], %30 {strides = array<i32>} : memref<16x64xf32, #tpu.memory_space<vmem>>, vector<16x64xf32>,
    return
  }
  func.func @transform_0(%arg0: i32) -> (i32, i32) {
    %c0_i32 = arith.constant 0 : i32
    %c0_i32_0 = arith.constant 0 : i32
    %c0_i32_1 = arith.constant 0 : i32
    return %c0_i32, %c0_i32_0 : i32, i32
  }
  func.func @transform_1(%arg0: i32) -> (i32, i32) {
    %c0_i32 = arith.constant 0 : i32
    %c0_i32_0 = arith.constant 0 : i32
    %c0_i32_1 = arith.constant 0 : i32
    return %c0_i32, %c0_i32_0 : i32, i32
  }
  func.func @transform_2(%arg0: i32) -> (i32, i32) {
    %c0_i32 = arith.constant 0 : i32
    %c0_i32_0 = arith.constant 0 : i32
    %c0_i32_1 = arith.constant 0 : i32
    return %c0_i32, %c0_i32_0 : i32, i32
  }
  func.func @transform_3(%arg0: i32) -> (i32, i32) {
    %c0_i32 = arith.constant 0 : i32
    %c0_i32_0 = arith.constant 0 : i32
    %c0_i32_1 = arith.constant 0 : i32
    return %c0_i32, %c0_i32_0 : i32, i32
  }
  func.func @transform_4(%arg0: i32) -> (i32, i32) {
    %c0_i32 = arith.constant 0 : i32
    %c0_i32_0 = arith.constant 0 : i32
    %c0_i32_1 = arith.constant 0 : i32
    return %c0_i32, %c0_i32_0 : i32, i32
  }
  func.func @transform_5(%arg0: i32) -> (i32, i32) {
    %c0_i32 = arith.constant 0 : i32
    %c0_i32_0 = arith.constant 0 : i32
    %c0_i32_1 = arith.constant 0 : i32
    return %c0_i32, %c0_i32_0 : i32, i32
  }
  func.func @transform_6(%arg0: i32) -> (i32, i32) {
    %c0_i32 = arith.constant 0 : i32
    %c0_i32_0 = arith.constant 0 : i32
    %c0_i32_1 = arith.constant 0 : i32
    return %c0_i32, %c0_i32_0 : i32, i32
  }
}

module attributes {stable_mosaic.version = 11 : i64} {
  func.func @_encoder_stack_kernel(%arg0: i32, %arg1: memref<16x64xf32, #tpu.memory_space<vmem>>, %arg2: memref<1x64x192xbf16, #tpu.memory_space<vmem>>, %arg3: memref<1x1x192xf32, #tpu.memory_space<vmem>>, %arg4: memref<1x64x64xbf16, #tpu.memory_space<vmem>>, %arg5: memref<1x1x64xf32, #tpu.memory_space<vmem>>, %arg6: memref<1x1x64xf32, #tpu.memory_space<vmem>>, %arg7: memref<1x1x64xf32, #tpu.memory_space<vmem>>, %arg8: memref<1x64x256xbf16, #tpu.memory_space<vmem>>, %arg9: memref<1x1x256xf32, #tpu.memory_space<vmem>>, %arg10: memref<1x256x64xbf16, #tpu.memory_space<vmem>>, %arg11: memref<1x1x64xf32, #tpu.memory_space<vmem>>, %arg12: memref<1x1x64xf32, #tpu.memory_space<vmem>>, %arg13: memref<1x1x64xf32, #tpu.memory_space<vmem>>, %arg14: memref<16x64xf32, #tpu.memory_space<vmem>>, %arg15: memref<16x64xbf16, #tpu.memory_space<vmem>>) attributes {dimension_semantics = [#tpu.dimension_semantics<arbitrary>], iteration_bounds = array<i64: 2>, scalar_prefetch = 0 : i64, scratch_operands = 0 : i64, tpu.core_type = #tpu.core_type<tc>, window_params = [{pipeline_mode = #tpu.pipeline_mode<synchronous>, transform_indices = @transform_0, window_bounds = array<i64: 16, 64>}, {transform_indices = @transform_1, window_bounds = array<i64: 1, 64, 192>}, {transform_indices = @transform_2, window_bounds = array<i64: 1, 1, 192>}, {transform_indices = @transform_3, window_bounds = array<i64: 1, 64, 64>}, {transform_indices = @transform_4, window_bounds = array<i64: 1, 1, 64>}, {transform_indices = @transform_5, window_bounds = array<i64: 1, 1, 64>}, {transform_indices = @transform_6, window_bounds = array<i64: 1, 1, 64>}, {transform_indices = @transform_7, window_bounds = array<i64: 1, 64, 256>}, {transform_indices = @transform_8, window_bounds = array<i64: 1, 1, 256>}, {transform_indices = @transform_9, window_bounds = array<i64: 1, 256, 64>}, {transform_indices = @transform_10, window_bounds = array<i64: 1, 1, 64>}, {transform_indices = @transform_11, window_bounds = array<i64: 1, 1, 64>}, {transform_indices = @transform_12, window_bounds = array<i64: 1, 1, 64>}, {pipeline_mode = #tpu.pipeline_mode<synchronous>, transform_indices = @transform_13, window_bounds = array<i64: 16, 64>}, {pipeline_mode = #tpu.pipeline_mode<synchronous>, transform_indices = @transform_14, window_bounds = array<i64: 16, 64>}]} {
    %c0_i32 = arith.constant 0 : i32
    %0 = arith.cmpi eq, %arg0, %c0_i32 : i32
    %1 = arith.extui %0 : i1 to i32
    %c0_i32_0 = arith.constant 0 : i32
    %2 = arith.cmpi ne, %1, %c0_i32_0 : i32
    scf.if %2 {
      %c0_86 = arith.constant 0 : index
      %c0_87 = arith.constant 0 : index
      %202 = vector.load %arg1[%c0_86, %c0_87] : memref<16x64xf32, #tpu.memory_space<vmem>>, vector<16x64xf32>
      %c0_88 = arith.constant 0 : index
      %c0_89 = arith.constant 0 : index
      %203 = vector.load %arg14[%c0_88, %c0_89] : memref<16x64xf32, #tpu.memory_space<vmem>>, vector<16x64xf32>
      tpu.vector_store %arg14[%c0_88, %c0_89], %202 {strides = array<i32>} : memref<16x64xf32, #tpu.memory_space<vmem>>, vector<16x64xf32>,
    } else {
    }
    %c0 = arith.constant 0 : index
    %c0_1 = arith.constant 0 : index
    %3 = vector.load %arg14[%c0, %c0_1] : memref<16x64xf32, #tpu.memory_space<vmem>>, vector<16x64xf32>
    %c0_2 = arith.constant 0 : index
    %c0_3 = arith.constant 0 : index
    %c0_4 = arith.constant 0 : index
    %4 = vector.load %arg2[%c0_2, %c0_3, %c0_4] : memref<1x64x192xbf16, #tpu.memory_space<vmem>>, vector<1x64x192xbf16>
    %5 = vector.shape_cast %4 : vector<1x64x192xbf16> to vector<64x192xbf16>
    %c0_5 = arith.constant 0 : index
    %c0_6 = arith.constant 0 : index
    %c0_7 = arith.constant 0 : index
    %6 = vector.load %arg3[%c0_5, %c0_6, %c0_7] : memref<1x1x192xf32, #tpu.memory_space<vmem>>, vector<1x1x192xf32>
    %7 = vector.shape_cast %6 : vector<1x1x192xf32> to vector<1x192xf32>
    %c0_8 = arith.constant 0 : index
    %c0_9 = arith.constant 0 : index
    %c0_10 = arith.constant 0 : index
    %8 = vector.load %arg4[%c0_8, %c0_9, %c0_10] : memref<1x64x64xbf16, #tpu.memory_space<vmem>>, vector<1x64x64xbf16>
    %9 = vector.shape_cast %8 : vector<1x64x64xbf16> to vector<64x64xbf16>
    %c0_11 = arith.constant 0 : index
    %c0_12 = arith.constant 0 : index
    %c0_13 = arith.constant 0 : index
    %10 = vector.load %arg5[%c0_11, %c0_12, %c0_13] : memref<1x1x64xf32, #tpu.memory_space<vmem>>, vector<1x1x64xf32>
    %11 = vector.shape_cast %10 : vector<1x1x64xf32> to vector<1x64xf32>
    %c0_14 = arith.constant 0 : index
    %c0_15 = arith.constant 0 : index
    %c0_16 = arith.constant 0 : index
    %12 = vector.load %arg6[%c0_14, %c0_15, %c0_16] : memref<1x1x64xf32, #tpu.memory_space<vmem>>, vector<1x1x64xf32>
    %13 = vector.shape_cast %12 : vector<1x1x64xf32> to vector<1x64xf32>
    %c0_17 = arith.constant 0 : index
    %c0_18 = arith.constant 0 : index
    %c0_19 = arith.constant 0 : index
    %14 = vector.load %arg7[%c0_17, %c0_18, %c0_19] : memref<1x1x64xf32, #tpu.memory_space<vmem>>, vector<1x1x64xf32>
    %15 = vector.shape_cast %14 : vector<1x1x64xf32> to vector<1x64xf32>
    %c0_20 = arith.constant 0 : index
    %c0_21 = arith.constant 0 : index
    %c0_22 = arith.constant 0 : index
    %16 = vector.load %arg8[%c0_20, %c0_21, %c0_22] : memref<1x64x256xbf16, #tpu.memory_space<vmem>>, vector<1x64x256xbf16>
    %17 = vector.shape_cast %16 : vector<1x64x256xbf16> to vector<64x256xbf16>
    %c0_23 = arith.constant 0 : index
    %c0_24 = arith.constant 0 : index
    %c0_25 = arith.constant 0 : index
    %18 = vector.load %arg9[%c0_23, %c0_24, %c0_25] : memref<1x1x256xf32, #tpu.memory_space<vmem>>, vector<1x1x256xf32>
    %19 = vector.shape_cast %18 : vector<1x1x256xf32> to vector<1x256xf32>
    %c0_26 = arith.constant 0 : index
    %c0_27 = arith.constant 0 : index
    %c0_28 = arith.constant 0 : index
    %20 = vector.load %arg10[%c0_26, %c0_27, %c0_28] : memref<1x256x64xbf16, #tpu.memory_space<vmem>>, vector<1x256x64xbf16>
    %21 = vector.shape_cast %20 : vector<1x256x64xbf16> to vector<256x64xbf16>
    %c0_29 = arith.constant 0 : index
    %c0_30 = arith.constant 0 : index
    %c0_31 = arith.constant 0 : index
    %22 = vector.load %arg11[%c0_29, %c0_30, %c0_31] : memref<1x1x64xf32, #tpu.memory_space<vmem>>, vector<1x1x64xf32>
    %23 = vector.shape_cast %22 : vector<1x1x64xf32> to vector<1x64xf32>
    %c0_32 = arith.constant 0 : index
    %c0_33 = arith.constant 0 : index
    %c0_34 = arith.constant 0 : index
    %24 = vector.load %arg12[%c0_32, %c0_33, %c0_34] : memref<1x1x64xf32, #tpu.memory_space<vmem>>, vector<1x1x64xf32>
    %25 = vector.shape_cast %24 : vector<1x1x64xf32> to vector<1x64xf32>
    %c0_35 = arith.constant 0 : index
    %c0_36 = arith.constant 0 : index
    %c0_37 = arith.constant 0 : index
    %26 = vector.load %arg13[%c0_35, %c0_36, %c0_37] : memref<1x1x64xf32, #tpu.memory_space<vmem>>, vector<1x1x64xf32>
    %27 = vector.shape_cast %26 : vector<1x1x64xf32> to vector<1x64xf32>
    %28 = arith.truncf %3 : vector<16x64xf32> to vector<16x64xbf16>
    %cst = arith.constant dense<0.000000e+00> : vector<16x192xf32>
    %29 = tpu.matmul %28, %5, %cst {dimension_numbers = #tpu.dot_dimension_numbers<[1], [0], [0], [1], [0, 0, 1, 1], [], []>} : vector<16x64xbf16>, vector<64x192xbf16>, vector<16x192xf32> -> vector<16x192xf32>
    %30 = vector.broadcast %7 : vector<1x192xf32> to vector<16x192xf32>
    %31 = arith.addf %29, %30 : vector<16x192xf32>
    %32 = vector.extract_strided_slice %31 {offsets = [0, 0], sizes = [16, 64], strides = [1, 1]} : vector<16x192xf32> to vector<16x64xf32>
    %33 = arith.truncf %32 : vector<16x64xf32> to vector<16x64xbf16>
    %34 = vector.extract_strided_slice %31 {offsets = [0, 64], sizes = [16, 64], strides = [1, 1]} : vector<16x192xf32> to vector<16x64xf32>
    %35 = arith.truncf %34 : vector<16x64xf32> to vector<16x64xbf16>
    %36 = vector.extract_strided_slice %31 {offsets = [0, 128], sizes = [16, 64], strides = [1, 1]} : vector<16x192xf32> to vector<16x64xf32>
    %37 = arith.truncf %36 : vector<16x64xf32> to vector<16x64xbf16>
    %38 = vector.extract_strided_slice %33 {offsets = [0, 0], sizes = [16, 16], strides = [1, 1]} : vector<16x64xbf16> to vector<16x16xbf16>
    %39 = vector.extract_strided_slice %35 {offsets = [0, 0], sizes = [16, 16], strides = [1, 1]} : vector<16x64xbf16> to vector<16x16xbf16>
    %cst_38 = arith.constant dense<0.000000e+00> : vector<16x16xf32>
    %40 = tpu.matmul %38, %39, %cst_38 {dimension_numbers = #tpu.dot_dimension_numbers<[1], [1], [0], [0], [0, 0, 1, 0], [], []>} : vector<16x16xbf16>, vector<16x16xbf16>, vector<16x16xf32> -> vector<16x16xf32>
    %cst_39 = arith.constant dense<0xFF800000> : vector<16xf32>
    %41 = vector.multi_reduction <maximumf>, %40, %cst_39 [1] : vector<16x16xf32> to vector<16xf32>
    %42 = vector.shape_cast %41 : vector<16xf32> to vector<16x1xf32>
    %43 = vector.broadcast %42 : vector<16x1xf32> to vector<16x16xf32>
    %44 = arith.subf %40, %43 : vector<16x16xf32>
    %45 = math.exp %44 : vector<16x16xf32>
    %cst_40 = arith.constant dense<0.000000e+00> : vector<16xf32>
    %46 = vector.multi_reduction <add>, %45, %cst_40 [1] : vector<16x16xf32> to vector<16xf32>
    %47 = vector.shape_cast %46 : vector<16xf32> to vector<16x1xf32>
    %48 = arith.truncf %45 : vector<16x16xf32> to vector<16x16xbf16>
    %49 = vector.extract_strided_slice %37 {offsets = [0, 0], sizes = [16, 16], strides = [1, 1]} : vector<16x64xbf16> to vector<16x16xbf16>
    %cst_41 = arith.constant dense<0.000000e+00> : vector<16x16xf32>
    %50 = tpu.matmul %48, %49, %cst_41 {dimension_numbers = #tpu.dot_dimension_numbers<[1], [0], [0], [1], [0, 0, 1, 1], [], []>} : vector<16x16xbf16>, vector<16x16xbf16>, vector<16x16xf32> -> vector<16x16xf32>
    %51 = tpu.reciprocal %47 {approx = true} : vector<16x1xf32> -> vector<16x1xf32>
    %52 = vector.broadcast %51 : vector<16x1xf32> to vector<16x16xf32>
    %53 = arith.mulf %50, %52 : vector<16x16xf32>
    %54 = vector.extract_strided_slice %33 {offsets = [0, 16], sizes = [16, 16], strides = [1, 1]} : vector<16x64xbf16> to vector<16x16xbf16>
    %55 = vector.extract_strided_slice %35 {offsets = [0, 16], sizes = [16, 16], strides = [1, 1]} : vector<16x64xbf16> to vector<16x16xbf16>
    %cst_42 = arith.constant dense<0.000000e+00> : vector<16x16xf32>
    %56 = tpu.matmul %54, %55, %cst_42 {dimension_numbers = #tpu.dot_dimension_numbers<[1], [1], [0], [0], [0, 0, 1, 0], [], []>} : vector<16x16xbf16>, vector<16x16xbf16>, vector<16x16xf32> -> vector<16x16xf32>
    %cst_43 = arith.constant dense<0xFF800000> : vector<16xf32>
    %57 = vector.multi_reduction <maximumf>, %56, %cst_43 [1] : vector<16x16xf32> to vector<16xf32>
    %58 = vector.shape_cast %57 : vector<16xf32> to vector<16x1xf32>
    %59 = vector.broadcast %58 : vector<16x1xf32> to vector<16x16xf32>
    %60 = arith.subf %56, %59 : vector<16x16xf32>
    %61 = math.exp %60 : vector<16x16xf32>
    %cst_44 = arith.constant dense<0.000000e+00> : vector<16xf32>
    %62 = vector.multi_reduction <add>, %61, %cst_44 [1] : vector<16x16xf32> to vector<16xf32>
    %63 = vector.shape_cast %62 : vector<16xf32> to vector<16x1xf32>
    %64 = arith.truncf %61 : vector<16x16xf32> to vector<16x16xbf16>
    %65 = vector.extract_strided_slice %37 {offsets = [0, 16], sizes = [16, 16], strides = [1, 1]} : vector<16x64xbf16> to vector<16x16xbf16>
    %cst_45 = arith.constant dense<0.000000e+00> : vector<16x16xf32>
    %66 = tpu.matmul %64, %65, %cst_45 {dimension_numbers = #tpu.dot_dimension_numbers<[1], [0], [0], [1], [0, 0, 1, 1], [], []>} : vector<16x16xbf16>, vector<16x16xbf16>, vector<16x16xf32> -> vector<16x16xf32>
    %67 = tpu.reciprocal %63 {approx = true} : vector<16x1xf32> -> vector<16x1xf32>
    %68 = vector.broadcast %67 : vector<16x1xf32> to vector<16x16xf32>
    %69 = arith.mulf %66, %68 : vector<16x16xf32>
    %70 = vector.extract_strided_slice %33 {offsets = [0, 32], sizes = [16, 16], strides = [1, 1]} : vector<16x64xbf16> to vector<16x16xbf16>
    %71 = vector.extract_strided_slice %35 {offsets = [0, 32], sizes = [16, 16], strides = [1, 1]} : vector<16x64xbf16> to vector<16x16xbf16>
    %cst_46 = arith.constant dense<0.000000e+00> : vector<16x16xf32>
    %72 = tpu.matmul %70, %71, %cst_46 {dimension_numbers = #tpu.dot_dimension_numbers<[1], [1], [0], [0], [0, 0, 1, 0], [], []>} : vector<16x16xbf16>, vector<16x16xbf16>, vector<16x16xf32> -> vector<16x16xf32>
    %cst_47 = arith.constant dense<0xFF800000> : vector<16xf32>
    %73 = vector.multi_reduction <maximumf>, %72, %cst_47 [1] : vector<16x16xf32> to vector<16xf32>
    %74 = vector.shape_cast %73 : vector<16xf32> to vector<16x1xf32>
    %75 = vector.broadcast %74 : vector<16x1xf32> to vector<16x16xf32>
    %76 = arith.subf %72, %75 : vector<16x16xf32>
    %77 = math.exp %76 : vector<16x16xf32>
    %cst_48 = arith.constant dense<0.000000e+00> : vector<16xf32>
    %78 = vector.multi_reduction <add>, %77, %cst_48 [1] : vector<16x16xf32> to vector<16xf32>
    %79 = vector.shape_cast %78 : vector<16xf32> to vector<16x1xf32>
    %80 = arith.truncf %77 : vector<16x16xf32> to vector<16x16xbf16>
    %81 = vector.extract_strided_slice %37 {offsets = [0, 32], sizes = [16, 16], strides = [1, 1]} : vector<16x64xbf16> to vector<16x16xbf16>
    %cst_49 = arith.constant dense<0.000000e+00> : vector<16x16xf32>
    %82 = tpu.matmul %80, %81, %cst_49 {dimension_numbers = #tpu.dot_dimension_numbers<[1], [0], [0], [1], [0, 0, 1, 1], [], []>} : vector<16x16xbf16>, vector<16x16xbf16>, vector<16x16xf32> -> vector<16x16xf32>
    %83 = tpu.reciprocal %79 {approx = true} : vector<16x1xf32> -> vector<16x1xf32>
    %84 = vector.broadcast %83 : vector<16x1xf32> to vector<16x16xf32>
    %85 = arith.mulf %82, %84 : vector<16x16xf32>
    %86 = vector.extract_strided_slice %33 {offsets = [0, 48], sizes = [16, 16], strides = [1, 1]} : vector<16x64xbf16> to vector<16x16xbf16>
    %87 = vector.extract_strided_slice %35 {offsets = [0, 48], sizes = [16, 16], strides = [1, 1]} : vector<16x64xbf16> to vector<16x16xbf16>
    %cst_50 = arith.constant dense<0.000000e+00> : vector<16x16xf32>
    %88 = tpu.matmul %86, %87, %cst_50 {dimension_numbers = #tpu.dot_dimension_numbers<[1], [1], [0], [0], [0, 0, 1, 0], [], []>} : vector<16x16xbf16>, vector<16x16xbf16>, vector<16x16xf32> -> vector<16x16xf32>
    %cst_51 = arith.constant dense<0xFF800000> : vector<16xf32>
    %89 = vector.multi_reduction <maximumf>, %88, %cst_51 [1] : vector<16x16xf32> to vector<16xf32>
    %90 = vector.shape_cast %89 : vector<16xf32> to vector<16x1xf32>
    %91 = vector.broadcast %90 : vector<16x1xf32> to vector<16x16xf32>
    %92 = arith.subf %88, %91 : vector<16x16xf32>
    %93 = math.exp %92 : vector<16x16xf32>
    %cst_52 = arith.constant dense<0.000000e+00> : vector<16xf32>
    %94 = vector.multi_reduction <add>, %93, %cst_52 [1] : vector<16x16xf32> to vector<16xf32>
    %95 = vector.shape_cast %94 : vector<16xf32> to vector<16x1xf32>
    %96 = arith.truncf %93 : vector<16x16xf32> to vector<16x16xbf16>
    %97 = vector.extract_strided_slice %37 {offsets = [0, 48], sizes = [16, 16], strides = [1, 1]} : vector<16x64xbf16> to vector<16x16xbf16>
    %cst_53 = arith.constant dense<0.000000e+00> : vector<16x16xf32>
    %98 = tpu.matmul %96, %97, %cst_53 {dimension_numbers = #tpu.dot_dimension_numbers<[1], [0], [0], [1], [0, 0, 1, 1], [], []>} : vector<16x16xbf16>, vector<16x16xbf16>, vector<16x16xf32> -> vector<16x16xf32>
    %99 = tpu.reciprocal %95 {approx = true} : vector<16x1xf32> -> vector<16x1xf32>
    %100 = vector.broadcast %99 : vector<16x1xf32> to vector<16x16xf32>
    %101 = arith.mulf %98, %100 : vector<16x16xf32>
    %102 = tpu.concatenate %53, %69, %85, %101 in 1 : vector<16x16xf32>, vector<16x16xf32>, vector<16x16xf32>, vector<16x16xf32> -> vector<16x64xf32>
    %103 = arith.truncf %102 : vector<16x64xf32> to vector<16x64xbf16>
    %cst_54 = arith.constant dense<0.000000e+00> : vector<16x64xf32>
    %104 = tpu.matmul %103, %9, %cst_54 {dimension_numbers = #tpu.dot_dimension_numbers<[1], [0], [0], [1], [0, 0, 1, 1], [], []>} : vector<16x64xbf16>, vector<64x64xbf16>, vector<16x64xf32> -> vector<16x64xf32>
    %105 = vector.broadcast %11 : vector<1x64xf32> to vector<16x64xf32>
    %106 = arith.addf %104, %105 : vector<16x64xf32>
    %cst_55 = arith.constant dense<0.000000e+00> : vector<16xf32>
    %107 = vector.multi_reduction <add>, %106, %cst_55 [1] : vector<16x64xf32> to vector<16xf32>
    %108 = vector.shape_cast %107 : vector<16xf32> to vector<16x1xf32>
    %cst_56 = arith.constant 6.400000e+01 : f32
    %109 = vector.broadcast %cst_56 : f32 to vector<16x1xf32>
    %110 = arith.divf %108, %109 : vector<16x1xf32>
    %111 = vector.broadcast %110 : vector<16x1xf32> to vector<16x64xf32>
    %112 = arith.subf %106, %111 : vector<16x64xf32>
    %113 = arith.mulf %112, %112 : vector<16x64xf32>
    %cst_57 = arith.constant dense<0.000000e+00> : vector<16xf32>
    %114 = vector.multi_reduction <add>, %113, %cst_57 [1] : vector<16x64xf32> to vector<16xf32>
    %115 = vector.shape_cast %114 : vector<16xf32> to vector<16x1xf32>
    %cst_58 = arith.constant 6.400000e+01 : f32
    %116 = vector.broadcast %cst_58 : f32 to vector<16x1xf32>
    %117 = arith.divf %115, %116 : vector<16x1xf32>
    %cst_59 = arith.constant 9.99999974E-6 : f32
    %118 = vector.broadcast %cst_59 : f32 to vector<16x1xf32>
    %119 = arith.addf %117, %118 : vector<16x1xf32>
    %120 = math.rsqrt %119 : vector<16x1xf32>
    %121 = vector.broadcast %120 : vector<16x1xf32> to vector<16x64xf32>
    %122 = arith.mulf %112, %121 : vector<16x64xf32>
    %123 = vector.broadcast %13 : vector<1x64xf32> to vector<16x64xf32>
    %124 = arith.mulf %122, %123 : vector<16x64xf32>
    %125 = vector.broadcast %15 : vector<1x64xf32> to vector<16x64xf32>
    %126 = arith.addf %124, %125 : vector<16x64xf32>
    %127 = arith.addf %126, %3 : vector<16x64xf32>
    %128 = arith.truncf %127 : vector<16x64xf32> to vector<16x64xbf16>
    %cst_60 = arith.constant dense<0.000000e+00> : vector<16x256xf32>
    %129 = tpu.matmul %128, %17, %cst_60 {dimension_numbers = #tpu.dot_dimension_numbers<[1], [0], [0], [1], [0, 0, 1, 1], [], []>} : vector<16x64xbf16>, vector<64x256xbf16>, vector<16x256xf32> -> vector<16x256xf32>
    %130 = vector.broadcast %19 : vector<1x256xf32> to vector<16x256xf32>
    %131 = arith.addf %129, %130 : vector<16x256xf32>
    %cst_61 = arith.constant 5.000000e-01 : f32
    %132 = vector.broadcast %cst_61 : f32 to vector<16x256xf32>
    %133 = arith.mulf %132, %131 : vector<16x256xf32>
    %cst_62 = arith.constant 0.707106769 : f32
    %134 = vector.broadcast %cst_62 : f32 to vector<16x256xf32>
    %135 = arith.mulf %131, %134 : vector<16x256xf32>
    %cst_63 = arith.constant 0.000000e+00 : f32
    %136 = vector.broadcast %cst_63 : f32 to vector<16x256xf32>
    %137 = arith.cmpf oge, %135, %136 : vector<16x256xf32>
    %cst_64 = arith.constant 1.000000e+00 : f32
    %cst_65 = arith.constant -1.000000e+00 : f32
    %138 = vector.broadcast %cst_64 : f32 to vector<16x256xf32>
    %139 = vector.broadcast %cst_65 : f32 to vector<16x256xf32>
    %140 = arith.select %137, %138, %139 : vector<16x256xi1>, vector<16x256xf32>
    %141 = math.absf %135 : vector<16x256xf32>
    %cst_66 = arith.constant 0.327591091 : f32
    %142 = vector.broadcast %cst_66 : f32 to vector<16x256xf32>
    %143 = arith.mulf %142, %141 : vector<16x256xf32>
    %cst_67 = arith.constant 1.000000e+00 : f32
    %144 = vector.broadcast %cst_67 : f32 to vector<16x256xf32>
    %145 = arith.addf %144, %143 : vector<16x256xf32>
    %cst_68 = arith.constant 1.000000e+00 : f32
    %146 = vector.broadcast %cst_68 : f32 to vector<16x256xf32>
    %147 = arith.divf %146, %145 : vector<16x256xf32>
    %cst_69 = arith.constant 1.06140542 : f32
    %148 = vector.broadcast %cst_69 : f32 to vector<16x256xf32>
    %149 = arith.mulf %148, %147 : vector<16x256xf32>
    %cst_70 = arith.constant -1.45315206 : f32
    %150 = vector.broadcast %cst_70 : f32 to vector<16x256xf32>
    %151 = arith.addf %149, %150 : vector<16x256xf32>
    %152 = arith.mulf %151, %147 : vector<16x256xf32>
    %cst_71 = arith.constant 1.42141378 : f32
    %153 = vector.broadcast %cst_71 : f32 to vector<16x256xf32>
    %154 = arith.addf %152, %153 : vector<16x256xf32>
    %155 = arith.mulf %154, %147 : vector<16x256xf32>
    %cst_72 = arith.constant -0.284496725 : f32
    %156 = vector.broadcast %cst_72 : f32 to vector<16x256xf32>
    %157 = arith.addf %155, %156 : vector<16x256xf32>
    %158 = arith.mulf %157, %147 : vector<16x256xf32>
    %cst_73 = arith.constant 0.254829586 : f32
    %159 = vector.broadcast %cst_73 : f32 to vector<16x256xf32>
    %160 = arith.addf %158, %159 : vector<16x256xf32>
    %161 = arith.mulf %160, %147 : vector<16x256xf32>
    %cst_74 = arith.constant 0.000000e+00 : f32
    %162 = vector.broadcast %cst_74 : f32 to vector<16x256xf32>
    %163 = arith.subf %162, %141 : vector<16x256xf32>
    %164 = arith.mulf %163, %141 : vector<16x256xf32>
    %165 = math.exp %164 : vector<16x256xf32>
    %166 = arith.mulf %161, %165 : vector<16x256xf32>
    %cst_75 = arith.constant 1.000000e+00 : f32
    %167 = vector.broadcast %cst_75 : f32 to vector<16x256xf32>
    %168 = arith.subf %167, %166 : vector<16x256xf32>
    %169 = arith.mulf %140, %168 : vector<16x256xf32>
    %cst_76 = arith.constant 1.000000e+00 : f32
    %170 = vector.broadcast %cst_76 : f32 to vector<16x256xf32>
    %171 = arith.addf %170, %169 : vector<16x256xf32>
    %172 = arith.mulf %133, %171 : vector<16x256xf32>
    %173 = arith.truncf %172 : vector<16x256xf32> to vector<16x256xbf16>
    %cst_77 = arith.constant dense<0.000000e+00> : vector<16x64xf32>
    %174 = tpu.matmul %173, %21, %cst_77 {dimension_numbers = #tpu.dot_dimension_numbers<[1], [0], [0], [1], [0, 0, 1, 1], [], []>} : vector<16x256xbf16>, vector<256x64xbf16>, vector<16x64xf32> -> vector<16x64xf32>
    %175 = vector.broadcast %23 : vector<1x64xf32> to vector<16x64xf32>
    %176 = arith.addf %174, %175 : vector<16x64xf32>
    %cst_78 = arith.constant dense<0.000000e+00> : vector<16xf32>
    %177 = vector.multi_reduction <add>, %176, %cst_78 [1] : vector<16x64xf32> to vector<16xf32>
    %178 = vector.shape_cast %177 : vector<16xf32> to vector<16x1xf32>
    %cst_79 = arith.constant 6.400000e+01 : f32
    %179 = vector.broadcast %cst_79 : f32 to vector<16x1xf32>
    %180 = arith.divf %178, %179 : vector<16x1xf32>
    %181 = vector.broadcast %180 : vector<16x1xf32> to vector<16x64xf32>
    %182 = arith.subf %176, %181 : vector<16x64xf32>
    %183 = arith.mulf %182, %182 : vector<16x64xf32>
    %cst_80 = arith.constant dense<0.000000e+00> : vector<16xf32>
    %184 = vector.multi_reduction <add>, %183, %cst_80 [1] : vector<16x64xf32> to vector<16xf32>
    %185 = vector.shape_cast %184 : vector<16xf32> to vector<16x1xf32>
    %cst_81 = arith.constant 6.400000e+01 : f32
    %186 = vector.broadcast %cst_81 : f32 to vector<16x1xf32>
    %187 = arith.divf %185, %186 : vector<16x1xf32>
    %cst_82 = arith.constant 9.99999974E-6 : f32
    %188 = vector.broadcast %cst_82 : f32 to vector<16x1xf32>
    %189 = arith.addf %187, %188 : vector<16x1xf32>
    %190 = math.rsqrt %189 : vector<16x1xf32>
    %191 = vector.broadcast %190 : vector<16x1xf32> to vector<16x64xf32>
    %192 = arith.mulf %182, %191 : vector<16x64xf32>
    %193 = vector.broadcast %25 : vector<1x64xf32> to vector<16x64xf32>
    %194 = arith.mulf %192, %193 : vector<16x64xf32>
    %195 = vector.broadcast %27 : vector<1x64xf32> to vector<16x64xf32>
    %196 = arith.addf %194, %195 : vector<16x64xf32>
    %197 = arith.addf %196, %127 : vector<16x64xf32>
    %c0_83 = arith.constant 0 : index
    %c0_84 = arith.constant 0 : index
    %198 = vector.load %arg14[%c0_83, %c0_84] : memref<16x64xf32, #tpu.memory_space<vmem>>, vector<16x64xf32>
    tpu.vector_store %arg14[%c0_83, %c0_84], %197 {strides = array<i32>} : memref<16x64xf32, #tpu.memory_space<vmem>>, vector<16x64xf32>,
    %c1_i32 = arith.constant 1 : i32
    %199 = arith.cmpi eq, %arg0, %c1_i32 : i32
    %200 = arith.extui %199 : i1 to i32
    %c0_i32_85 = arith.constant 0 : i32
    %201 = arith.cmpi ne, %200, %c0_i32_85 : i32
    scf.if %201 {
      %c0_86 = arith.constant 0 : index
      %c0_87 = arith.constant 0 : index
      %202 = vector.load %arg14[%c0_86, %c0_87] : memref<16x64xf32, #tpu.memory_space<vmem>>, vector<16x64xf32>
      %203 = arith.truncf %202 : vector<16x64xf32> to vector<16x64xbf16>
      %c0_88 = arith.constant 0 : index
      %c0_89 = arith.constant 0 : index
      %204 = vector.load %arg15[%c0_88, %c0_89] : memref<16x64xbf16, #tpu.memory_space<vmem>>, vector<16x64xbf16>
      tpu.vector_store %arg15[%c0_88, %c0_89], %203 {strides = array<i32>} : memref<16x64xbf16, #tpu.memory_space<vmem>>, vector<16x64xbf16>,
    } else {
    }
    return
  }
  func.func @transform_0(%arg0: i32) -> (i32, i32) {
    %c0_i32 = arith.constant 0 : i32
    %c0_i32_0 = arith.constant 0 : i32
    %c0_i32_1 = arith.constant 0 : i32
    return %c0_i32, %c0_i32_0 : i32, i32
  }
  func.func @transform_1(%arg0: i32) -> (i32, i32, i32) {
    %c0_i32 = arith.constant 0 : i32
    %c0_i32_0 = arith.constant 0 : i32
    %c0_i32_1 = arith.constant 0 : i32
    return %arg0, %c0_i32, %c0_i32_0 : i32, i32, i32
  }
  func.func @transform_2(%arg0: i32) -> (i32, i32, i32) {
    %c0_i32 = arith.constant 0 : i32
    %c0_i32_0 = arith.constant 0 : i32
    %c0_i32_1 = arith.constant 0 : i32
    return %arg0, %c0_i32, %c0_i32_0 : i32, i32, i32
  }
  func.func @transform_3(%arg0: i32) -> (i32, i32, i32) {
    %c0_i32 = arith.constant 0 : i32
    %c0_i32_0 = arith.constant 0 : i32
    %c0_i32_1 = arith.constant 0 : i32
    return %arg0, %c0_i32, %c0_i32_0 : i32, i32, i32
  }
  func.func @transform_4(%arg0: i32) -> (i32, i32, i32) {
    %c0_i32 = arith.constant 0 : i32
    %c0_i32_0 = arith.constant 0 : i32
    %c0_i32_1 = arith.constant 0 : i32
    return %arg0, %c0_i32, %c0_i32_0 : i32, i32, i32
  }
  func.func @transform_5(%arg0: i32) -> (i32, i32, i32) {
    %c0_i32 = arith.constant 0 : i32
    %c0_i32_0 = arith.constant 0 : i32
    %c0_i32_1 = arith.constant 0 : i32
    return %arg0, %c0_i32, %c0_i32_0 : i32, i32, i32
  }
  func.func @transform_6(%arg0: i32) -> (i32, i32, i32) {
    %c0_i32 = arith.constant 0 : i32
    %c0_i32_0 = arith.constant 0 : i32
    %c0_i32_1 = arith.constant 0 : i32
    return %arg0, %c0_i32, %c0_i32_0 : i32, i32, i32
  }
  func.func @transform_7(%arg0: i32) -> (i32, i32, i32) {
    %c0_i32 = arith.constant 0 : i32
    %c0_i32_0 = arith.constant 0 : i32
    %c0_i32_1 = arith.constant 0 : i32
    return %arg0, %c0_i32, %c0_i32_0 : i32, i32, i32
  }
  func.func @transform_8(%arg0: i32) -> (i32, i32, i32) {
    %c0_i32 = arith.constant 0 : i32
    %c0_i32_0 = arith.constant 0 : i32
    %c0_i32_1 = arith.constant 0 : i32
    return %arg0, %c0_i32, %c0_i32_0 : i32, i32, i32
  }
  func.func @transform_9(%arg0: i32) -> (i32, i32, i32) {
    %c0_i32 = arith.constant 0 : i32
    %c0_i32_0 = arith.constant 0 : i32
    %c0_i32_1 = arith.constant 0 : i32
    return %arg0, %c0_i32, %c0_i32_0 : i32, i32, i32
  }
  func.func @transform_10(%arg0: i32) -> (i32, i32, i32) {
    %c0_i32 = arith.constant 0 : i32
    %c0_i32_0 = arith.constant 0 : i32
    %c0_i32_1 = arith.constant 0 : i32
    return %arg0, %c0_i32, %c0_i32_0 : i32, i32, i32
  }
  func.func @transform_11(%arg0: i32) -> (i32, i32, i32) {
    %c0_i32 = arith.constant 0 : i32
    %c0_i32_0 = arith.constant 0 : i32
    %c0_i32_1 = arith.constant 0 : i32
    return %arg0, %c0_i32, %c0_i32_0 : i32, i32, i32
  }
  func.func @transform_12(%arg0: i32) -> (i32, i32, i32) {
    %c0_i32 = arith.constant 0 : i32
    %c0_i32_0 = arith.constant 0 : i32
    %c0_i32_1 = arith.constant 0 : i32
    return %arg0, %c0_i32, %c0_i32_0 : i32, i32, i32
  }
  func.func @transform_13(%arg0: i32) -> (i32, i32) {
    %c0_i32 = arith.constant 0 : i32
    %c0_i32_0 = arith.constant 0 : i32
    %c0_i32_1 = arith.constant 0 : i32
    return %c0_i32, %c0_i32_0 : i32, i32
  }
  func.func @transform_14(%arg0: i32) -> (i32, i32) {
    %c0_i32 = arith.constant 0 : i32
    %c0_i32_0 = arith.constant 0 : i32
    %c0_i32_1 = arith.constant 0 : i32
    return %c0_i32, %c0_i32_0 : i32, i32
  }
}

module attributes {stable_mosaic.version = 11 : i64} {
  func.func @_embed_kernel(%arg0: i32, %arg1: memref<48x16xf32, #tpu.memory_space<vmem>>, %arg2: memref<1x16xf32, #tpu.memory_space<vmem>>, %arg3: memref<1x16xf32, #tpu.memory_space<vmem>>, %arg4: memref<16x64xbf16, #tpu.memory_space<vmem>>, %arg5: memref<1x64xf32, #tpu.memory_space<vmem>>, %arg6: memref<48x64xf32, #tpu.memory_space<vmem>>, %arg7: memref<48x64xf32, #tpu.memory_space<vmem>>) attributes {dimension_semantics = [#tpu.dimension_semantics<arbitrary>], iteration_bounds = array<i64: 1>, scalar_prefetch = 0 : i64, scratch_operands = 0 : i64, tpu.core_type = #tpu.core_type<tc>, window_params = [{pipeline_mode = #tpu.pipeline_mode<synchronous>, transform_indices = @transform_0, window_bounds = array<i64: 48, 16>}, {pipeline_mode = #tpu.pipeline_mode<synchronous>, transform_indices = @transform_1, window_bounds = array<i64: 1, 16>}, {pipeline_mode = #tpu.pipeline_mode<synchronous>, transform_indices = @transform_2, window_bounds = array<i64: 1, 16>}, {pipeline_mode = #tpu.pipeline_mode<synchronous>, transform_indices = @transform_3, window_bounds = array<i64: 16, 64>}, {pipeline_mode = #tpu.pipeline_mode<synchronous>, transform_indices = @transform_4, window_bounds = array<i64: 1, 64>}, {pipeline_mode = #tpu.pipeline_mode<synchronous>, transform_indices = @transform_5, window_bounds = array<i64: 48, 64>}, {pipeline_mode = #tpu.pipeline_mode<synchronous>, transform_indices = @transform_6, window_bounds = array<i64: 48, 64>}]} {
    %c0 = arith.constant 0 : index
    %c0_0 = arith.constant 0 : index
    %0 = vector.load %arg1[%c0, %c0_0] : memref<48x16xf32, #tpu.memory_space<vmem>>, vector<48x16xf32>
    %c0_1 = arith.constant 0 : index
    %c0_2 = arith.constant 0 : index
    %1 = vector.load %arg2[%c0_1, %c0_2] : memref<1x16xf32, #tpu.memory_space<vmem>>, vector<1x16xf32>
    %c0_3 = arith.constant 0 : index
    %c0_4 = arith.constant 0 : index
    %2 = vector.load %arg3[%c0_3, %c0_4] : memref<1x16xf32, #tpu.memory_space<vmem>>, vector<1x16xf32>
    %cst = arith.constant dense<0.000000e+00> : vector<48xf32>
    %3 = vector.multi_reduction <add>, %0, %cst [1] : vector<48x16xf32> to vector<48xf32>
    %4 = vector.shape_cast %3 : vector<48xf32> to vector<48x1xf32>
    %cst_5 = arith.constant 1.600000e+01 : f32
    %5 = vector.broadcast %cst_5 : f32 to vector<48x1xf32>
    %6 = arith.divf %4, %5 : vector<48x1xf32>
    %7 = vector.broadcast %6 : vector<48x1xf32> to vector<48x16xf32>
    %8 = arith.subf %0, %7 : vector<48x16xf32>
    %9 = arith.mulf %8, %8 : vector<48x16xf32>
    %cst_6 = arith.constant dense<0.000000e+00> : vector<48xf32>
    %10 = vector.multi_reduction <add>, %9, %cst_6 [1] : vector<48x16xf32> to vector<48xf32>
    %11 = vector.shape_cast %10 : vector<48xf32> to vector<48x1xf32>
    %cst_7 = arith.constant 1.600000e+01 : f32
    %12 = vector.broadcast %cst_7 : f32 to vector<48x1xf32>
    %13 = arith.divf %11, %12 : vector<48x1xf32>
    %cst_8 = arith.constant 9.99999974E-6 : f32
    %14 = vector.broadcast %cst_8 : f32 to vector<48x1xf32>
    %15 = arith.addf %13, %14 : vector<48x1xf32>
    %16 = math.rsqrt %15 : vector<48x1xf32>
    %17 = vector.broadcast %16 : vector<48x1xf32> to vector<48x16xf32>
    %18 = arith.mulf %8, %17 : vector<48x16xf32>
    %19 = vector.broadcast %1 : vector<1x16xf32> to vector<48x16xf32>
    %20 = arith.mulf %18, %19 : vector<48x16xf32>
    %21 = vector.broadcast %2 : vector<1x16xf32> to vector<48x16xf32>
    %22 = arith.addf %20, %21 : vector<48x16xf32>
    %c0_9 = arith.constant 0 : index
    %c0_10 = arith.constant 0 : index
    %23 = vector.load %arg4[%c0_9, %c0_10] : memref<16x64xbf16, #tpu.memory_space<vmem>>, vector<16x64xbf16>
    %24 = arith.truncf %22 : vector<48x16xf32> to vector<48x16xbf16>
    %cst_11 = arith.constant dense<0.000000e+00> : vector<48x64xf32>
    %25 = tpu.matmul %24, %23, %cst_11 {dimension_numbers = #tpu.dot_dimension_numbers<[1], [0], [0], [1], [0, 0, 1, 1], [], []>} : vector<48x16xbf16>, vector<16x64xbf16>, vector<48x64xf32> -> vector<48x64xf32>
    %c0_12 = arith.constant 0 : index
    %c0_13 = arith.constant 0 : index
    %26 = vector.load %arg5[%c0_12, %c0_13] : memref<1x64xf32, #tpu.memory_space<vmem>>, vector<1x64xf32>
    %27 = vector.broadcast %26 : vector<1x64xf32> to vector<48x64xf32>
    %28 = arith.addf %25, %27 : vector<48x64xf32>
    %c0_14 = arith.constant 0 : index
    %c0_15 = arith.constant 0 : index
    %29 = vector.load %arg6[%c0_14, %c0_15] : memref<48x64xf32, #tpu.memory_space<vmem>>, vector<48x64xf32>
    %30 = arith.addf %28, %29 : vector<48x64xf32>
    %c0_16 = arith.constant 0 : index
    %c0_17 = arith.constant 0 : index
    %31 = vector.load %arg7[%c0_16, %c0_17] : memref<48x64xf32, #tpu.memory_space<vmem>>, vector<48x64xf32>
    tpu.vector_store %arg7[%c0_16, %c0_17], %30 {strides = array<i32>} : memref<48x64xf32, #tpu.memory_space<vmem>>, vector<48x64xf32>,
    return
  }
  func.func @transform_0(%arg0: i32) -> (i32, i32) {
    %c0_i32 = arith.constant 0 : i32
    %c0_i32_0 = arith.constant 0 : i32
    %c0_i32_1 = arith.constant 0 : i32
    return %c0_i32, %c0_i32_0 : i32, i32
  }
  func.func @transform_1(%arg0: i32) -> (i32, i32) {
    %c0_i32 = arith.constant 0 : i32
    %c0_i32_0 = arith.constant 0 : i32
    %c0_i32_1 = arith.constant 0 : i32
    return %c0_i32, %c0_i32_0 : i32, i32
  }
  func.func @transform_2(%arg0: i32) -> (i32, i32) {
    %c0_i32 = arith.constant 0 : i32
    %c0_i32_0 = arith.constant 0 : i32
    %c0_i32_1 = arith.constant 0 : i32
    return %c0_i32, %c0_i32_0 : i32, i32
  }
  func.func @transform_3(%arg0: i32) -> (i32, i32) {
    %c0_i32 = arith.constant 0 : i32
    %c0_i32_0 = arith.constant 0 : i32
    %c0_i32_1 = arith.constant 0 : i32
    return %c0_i32, %c0_i32_0 : i32, i32
  }
  func.func @transform_4(%arg0: i32) -> (i32, i32) {
    %c0_i32 = arith.constant 0 : i32
    %c0_i32_0 = arith.constant 0 : i32
    %c0_i32_1 = arith.constant 0 : i32
    return %c0_i32, %c0_i32_0 : i32, i32
  }
  func.func @transform_5(%arg0: i32) -> (i32, i32) {
    %c0_i32 = arith.constant 0 : i32
    %c0_i32_0 = arith.constant 0 : i32
    %c0_i32_1 = arith.constant 0 : i32
    return %c0_i32, %c0_i32_0 : i32, i32
  }
  func.func @transform_6(%arg0: i32) -> (i32, i32) {
    %c0_i32 = arith.constant 0 : i32
    %c0_i32_0 = arith.constant 0 : i32
    %c0_i32_1 = arith.constant 0 : i32
    return %c0_i32, %c0_i32_0 : i32, i32
  }
}

module attributes {stable_mosaic.version = 11 : i64} {
  func.func @_decoder_stack_kernel(%arg0: i32, %arg1: memref<48x64xf32, #tpu.memory_space<vmem>>, %arg2: memref<16x64xbf16, #tpu.memory_space<vmem>>, %arg3: memref<1x64x192xbf16, #tpu.memory_space<vmem>>, %arg4: memref<1x1x192xf32, #tpu.memory_space<vmem>>, %arg5: memref<1x64x64xbf16, #tpu.memory_space<vmem>>, %arg6: memref<1x1x64xf32, #tpu.memory_space<vmem>>, %arg7: memref<1x1x64xf32, #tpu.memory_space<vmem>>, %arg8: memref<1x1x64xf32, #tpu.memory_space<vmem>>, %arg9: memref<1x64x192xbf16, #tpu.memory_space<vmem>>, %arg10: memref<1x1x192xf32, #tpu.memory_space<vmem>>, %arg11: memref<1x64x64xbf16, #tpu.memory_space<vmem>>, %arg12: memref<1x1x64xf32, #tpu.memory_space<vmem>>, %arg13: memref<1x1x64xf32, #tpu.memory_space<vmem>>, %arg14: memref<1x1x64xf32, #tpu.memory_space<vmem>>, %arg15: memref<1x64x256xbf16, #tpu.memory_space<vmem>>, %arg16: memref<1x1x256xf32, #tpu.memory_space<vmem>>, %arg17: memref<1x256x64xbf16, #tpu.memory_space<vmem>>, %arg18: memref<1x1x64xf32, #tpu.memory_space<vmem>>, %arg19: memref<1x1x64xf32, #tpu.memory_space<vmem>>, %arg20: memref<1x1x64xf32, #tpu.memory_space<vmem>>, %arg21: memref<48x64xf32, #tpu.memory_space<vmem>>) attributes {dimension_semantics = [#tpu.dimension_semantics<arbitrary>], iteration_bounds = array<i64: 2>, scalar_prefetch = 0 : i64, scratch_operands = 0 : i64, tpu.core_type = #tpu.core_type<tc>, window_params = [{pipeline_mode = #tpu.pipeline_mode<synchronous>, transform_indices = @transform_0, window_bounds = array<i64: 48, 64>}, {pipeline_mode = #tpu.pipeline_mode<synchronous>, transform_indices = @transform_1, window_bounds = array<i64: 16, 64>}, {transform_indices = @transform_2, window_bounds = array<i64: 1, 64, 192>}, {transform_indices = @transform_3, window_bounds = array<i64: 1, 1, 192>}, {transform_indices = @transform_4, window_bounds = array<i64: 1, 64, 64>}, {transform_indices = @transform_5, window_bounds = array<i64: 1, 1, 64>}, {transform_indices = @transform_6, window_bounds = array<i64: 1, 1, 64>}, {transform_indices = @transform_7, window_bounds = array<i64: 1, 1, 64>}, {transform_indices = @transform_8, window_bounds = array<i64: 1, 64, 192>}, {transform_indices = @transform_9, window_bounds = array<i64: 1, 1, 192>}, {transform_indices = @transform_10, window_bounds = array<i64: 1, 64, 64>}, {transform_indices = @transform_11, window_bounds = array<i64: 1, 1, 64>}, {transform_indices = @transform_12, window_bounds = array<i64: 1, 1, 64>}, {transform_indices = @transform_13, window_bounds = array<i64: 1, 1, 64>}, {transform_indices = @transform_14, window_bounds = array<i64: 1, 64, 256>}, {transform_indices = @transform_15, window_bounds = array<i64: 1, 1, 256>}, {transform_indices = @transform_16, window_bounds = array<i64: 1, 256, 64>}, {transform_indices = @transform_17, window_bounds = array<i64: 1, 1, 64>}, {transform_indices = @transform_18, window_bounds = array<i64: 1, 1, 64>}, {transform_indices = @transform_19, window_bounds = array<i64: 1, 1, 64>}, {pipeline_mode = #tpu.pipeline_mode<synchronous>, transform_indices = @transform_20, window_bounds = array<i64: 48, 64>}]} {
    %c0_i32 = arith.constant 0 : i32
    %0 = arith.cmpi eq, %arg0, %c0_i32 : i32
    %1 = arith.extui %0 : i1 to i32
    %c0_i32_0 = arith.constant 0 : i32
    %2 = arith.cmpi ne, %1, %c0_i32_0 : i32
    scf.if %2 {
      %c0_129 = arith.constant 0 : index
      %c0_130 = arith.constant 0 : index
      %318 = vector.load %arg1[%c0_129, %c0_130] : memref<48x64xf32, #tpu.memory_space<vmem>>, vector<48x64xf32>
      %c0_131 = arith.constant 0 : index
      %c0_132 = arith.constant 0 : index
      %319 = vector.load %arg21[%c0_131, %c0_132] : memref<48x64xf32, #tpu.memory_space<vmem>>, vector<48x64xf32>
      tpu.vector_store %arg21[%c0_131, %c0_132], %318 {strides = array<i32>} : memref<48x64xf32, #tpu.memory_space<vmem>>, vector<48x64xf32>,
    } else {
    }
    %c0 = arith.constant 0 : index
    %c0_1 = arith.constant 0 : index
    %3 = vector.load %arg2[%c0, %c0_1] : memref<16x64xbf16, #tpu.memory_space<vmem>>, vector<16x64xbf16>
    %c0_2 = arith.constant 0 : index
    %c0_3 = arith.constant 0 : index
    %4 = vector.load %arg21[%c0_2, %c0_3] : memref<48x64xf32, #tpu.memory_space<vmem>>, vector<48x64xf32>
    %c0_4 = arith.constant 0 : index
    %c0_5 = arith.constant 0 : index
    %c0_6 = arith.constant 0 : index
    %5 = vector.load %arg3[%c0_4, %c0_5, %c0_6] : memref<1x64x192xbf16, #tpu.memory_space<vmem>>, vector<1x64x192xbf16>
    %6 = vector.shape_cast %5 : vector<1x64x192xbf16> to vector<64x192xbf16>
    %c0_7 = arith.constant 0 : index
    %c0_8 = arith.constant 0 : index
    %c0_9 = arith.constant 0 : index
    %7 = vector.load %arg4[%c0_7, %c0_8, %c0_9] : memref<1x1x192xf32, #tpu.memory_space<vmem>>, vector<1x1x192xf32>
    %8 = vector.shape_cast %7 : vector<1x1x192xf32> to vector<1x192xf32>
    %c0_10 = arith.constant 0 : index
    %c0_11 = arith.constant 0 : index
    %c0_12 = arith.constant 0 : index
    %9 = vector.load %arg5[%c0_10, %c0_11, %c0_12] : memref<1x64x64xbf16, #tpu.memory_space<vmem>>, vector<1x64x64xbf16>
    %10 = vector.shape_cast %9 : vector<1x64x64xbf16> to vector<64x64xbf16>
    %c0_13 = arith.constant 0 : index
    %c0_14 = arith.constant 0 : index
    %c0_15 = arith.constant 0 : index
    %11 = vector.load %arg6[%c0_13, %c0_14, %c0_15] : memref<1x1x64xf32, #tpu.memory_space<vmem>>, vector<1x1x64xf32>
    %12 = vector.shape_cast %11 : vector<1x1x64xf32> to vector<1x64xf32>
    %c0_16 = arith.constant 0 : index
    %c0_17 = arith.constant 0 : index
    %c0_18 = arith.constant 0 : index
    %13 = vector.load %arg7[%c0_16, %c0_17, %c0_18] : memref<1x1x64xf32, #tpu.memory_space<vmem>>, vector<1x1x64xf32>
    %14 = vector.shape_cast %13 : vector<1x1x64xf32> to vector<1x64xf32>
    %c0_19 = arith.constant 0 : index
    %c0_20 = arith.constant 0 : index
    %c0_21 = arith.constant 0 : index
    %15 = vector.load %arg8[%c0_19, %c0_20, %c0_21] : memref<1x1x64xf32, #tpu.memory_space<vmem>>, vector<1x1x64xf32>
    %16 = vector.shape_cast %15 : vector<1x1x64xf32> to vector<1x64xf32>
    %c0_22 = arith.constant 0 : index
    %c0_23 = arith.constant 0 : index
    %c0_24 = arith.constant 0 : index
    %17 = vector.load %arg9[%c0_22, %c0_23, %c0_24] : memref<1x64x192xbf16, #tpu.memory_space<vmem>>, vector<1x64x192xbf16>
    %18 = vector.shape_cast %17 : vector<1x64x192xbf16> to vector<64x192xbf16>
    %c0_25 = arith.constant 0 : index
    %c0_26 = arith.constant 0 : index
    %c0_27 = arith.constant 0 : index
    %19 = vector.load %arg10[%c0_25, %c0_26, %c0_27] : memref<1x1x192xf32, #tpu.memory_space<vmem>>, vector<1x1x192xf32>
    %20 = vector.shape_cast %19 : vector<1x1x192xf32> to vector<1x192xf32>
    %c0_28 = arith.constant 0 : index
    %c0_29 = arith.constant 0 : index
    %c0_30 = arith.constant 0 : index
    %21 = vector.load %arg11[%c0_28, %c0_29, %c0_30] : memref<1x64x64xbf16, #tpu.memory_space<vmem>>, vector<1x64x64xbf16>
    %22 = vector.shape_cast %21 : vector<1x64x64xbf16> to vector<64x64xbf16>
    %c0_31 = arith.constant 0 : index
    %c0_32 = arith.constant 0 : index
    %c0_33 = arith.constant 0 : index
    %23 = vector.load %arg12[%c0_31, %c0_32, %c0_33] : memref<1x1x64xf32, #tpu.memory_space<vmem>>, vector<1x1x64xf32>
    %24 = vector.shape_cast %23 : vector<1x1x64xf32> to vector<1x64xf32>
    %c0_34 = arith.constant 0 : index
    %c0_35 = arith.constant 0 : index
    %c0_36 = arith.constant 0 : index
    %25 = vector.load %arg13[%c0_34, %c0_35, %c0_36] : memref<1x1x64xf32, #tpu.memory_space<vmem>>, vector<1x1x64xf32>
    %26 = vector.shape_cast %25 : vector<1x1x64xf32> to vector<1x64xf32>
    %c0_37 = arith.constant 0 : index
    %c0_38 = arith.constant 0 : index
    %c0_39 = arith.constant 0 : index
    %27 = vector.load %arg14[%c0_37, %c0_38, %c0_39] : memref<1x1x64xf32, #tpu.memory_space<vmem>>, vector<1x1x64xf32>
    %28 = vector.shape_cast %27 : vector<1x1x64xf32> to vector<1x64xf32>
    %c0_40 = arith.constant 0 : index
    %c0_41 = arith.constant 0 : index
    %c0_42 = arith.constant 0 : index
    %29 = vector.load %arg15[%c0_40, %c0_41, %c0_42] : memref<1x64x256xbf16, #tpu.memory_space<vmem>>, vector<1x64x256xbf16>
    %30 = vector.shape_cast %29 : vector<1x64x256xbf16> to vector<64x256xbf16>
    %c0_43 = arith.constant 0 : index
    %c0_44 = arith.constant 0 : index
    %c0_45 = arith.constant 0 : index
    %31 = vector.load %arg16[%c0_43, %c0_44, %c0_45] : memref<1x1x256xf32, #tpu.memory_space<vmem>>, vector<1x1x256xf32>
    %32 = vector.shape_cast %31 : vector<1x1x256xf32> to vector<1x256xf32>
    %c0_46 = arith.constant 0 : index
    %c0_47 = arith.constant 0 : index
    %c0_48 = arith.constant 0 : index
    %33 = vector.load %arg17[%c0_46, %c0_47, %c0_48] : memref<1x256x64xbf16, #tpu.memory_space<vmem>>, vector<1x256x64xbf16>
    %34 = vector.shape_cast %33 : vector<1x256x64xbf16> to vector<256x64xbf16>
    %c0_49 = arith.constant 0 : index
    %c0_50 = arith.constant 0 : index
    %c0_51 = arith.constant 0 : index
    %35 = vector.load %arg18[%c0_49, %c0_50, %c0_51] : memref<1x1x64xf32, #tpu.memory_space<vmem>>, vector<1x1x64xf32>
    %36 = vector.shape_cast %35 : vector<1x1x64xf32> to vector<1x64xf32>
    %c0_52 = arith.constant 0 : index
    %c0_53 = arith.constant 0 : index
    %c0_54 = arith.constant 0 : index
    %37 = vector.load %arg19[%c0_52, %c0_53, %c0_54] : memref<1x1x64xf32, #tpu.memory_space<vmem>>, vector<1x1x64xf32>
    %38 = vector.shape_cast %37 : vector<1x1x64xf32> to vector<1x64xf32>
    %c0_55 = arith.constant 0 : index
    %c0_56 = arith.constant 0 : index
    %c0_57 = arith.constant 0 : index
    %39 = vector.load %arg20[%c0_55, %c0_56, %c0_57] : memref<1x1x64xf32, #tpu.memory_space<vmem>>, vector<1x1x64xf32>
    %40 = vector.shape_cast %39 : vector<1x1x64xf32> to vector<1x64xf32>
    %41 = arith.truncf %4 : vector<48x64xf32> to vector<48x64xbf16>
    %cst = arith.constant dense<0.000000e+00> : vector<48x192xf32>
    %42 = tpu.matmul %41, %6, %cst {dimension_numbers = #tpu.dot_dimension_numbers<[1], [0], [0], [1], [0, 0, 1, 1], [], []>} : vector<48x64xbf16>, vector<64x192xbf16>, vector<48x192xf32> -> vector<48x192xf32>
    %43 = vector.broadcast %8 : vector<1x192xf32> to vector<48x192xf32>
    %44 = arith.addf %42, %43 : vector<48x192xf32>
    %45 = vector.extract_strided_slice %44 {offsets = [0, 0], sizes = [48, 64], strides = [1, 1]} : vector<48x192xf32> to vector<48x64xf32>
    %46 = arith.truncf %45 : vector<48x64xf32> to vector<48x64xbf16>
    %47 = vector.extract_strided_slice %44 {offsets = [0, 64], sizes = [48, 64], strides = [1, 1]} : vector<48x192xf32> to vector<48x64xf32>
    %48 = arith.truncf %47 : vector<48x64xf32> to vector<48x64xbf16>
    %49 = vector.extract_strided_slice %44 {offsets = [0, 128], sizes = [48, 64], strides = [1, 1]} : vector<48x192xf32> to vector<48x64xf32>
    %50 = arith.truncf %49 : vector<48x64xf32> to vector<48x64xbf16>
    %51 = vector.extract_strided_slice %18 {offsets = [0, 64], sizes = [64, 128], strides = [1, 1]} : vector<64x192xbf16> to vector<64x128xbf16>
    %cst_58 = arith.constant dense<0.000000e+00> : vector<16x128xf32>
    %52 = tpu.matmul %3, %51, %cst_58 {dimension_numbers = #tpu.dot_dimension_numbers<[1], [0], [0], [1], [0, 0, 1, 1], [], []>} : vector<16x64xbf16>, vector<64x128xbf16>, vector<16x128xf32> -> vector<16x128xf32>
    %53 = vector.extract_strided_slice %20 {offsets = [0, 64], sizes = [1, 128], strides = [1, 1]} : vector<1x192xf32> to vector<1x128xf32>
    %54 = vector.broadcast %53 : vector<1x128xf32> to vector<16x128xf32>
    %55 = arith.addf %52, %54 : vector<16x128xf32>
    %56 = vector.extract_strided_slice %55 {offsets = [0, 0], sizes = [16, 64], strides = [1, 1]} : vector<16x128xf32> to vector<16x64xf32>
    %57 = arith.truncf %56 : vector<16x64xf32> to vector<16x64xbf16>
    %58 = vector.extract_strided_slice %55 {offsets = [0, 64], sizes = [16, 64], strides = [1, 1]} : vector<16x128xf32> to vector<16x64xf32>
    %59 = arith.truncf %58 : vector<16x64xf32> to vector<16x64xbf16>
    %60 = vector.extract_strided_slice %46 {offsets = [0, 0], sizes = [48, 16], strides = [1, 1]} : vector<48x64xbf16> to vector<48x16xbf16>
    %61 = vector.extract_strided_slice %48 {offsets = [0, 0], sizes = [48, 16], strides = [1, 1]} : vector<48x64xbf16> to vector<48x16xbf16>
    %cst_59 = arith.constant dense<0.000000e+00> : vector<48x48xf32>
    %62 = tpu.matmul %60, %61, %cst_59 {dimension_numbers = #tpu.dot_dimension_numbers<[1], [1], [0], [0], [0, 0, 1, 0], [], []>} : vector<48x16xbf16>, vector<48x16xbf16>, vector<48x48xf32> -> vector<48x48xf32>
    %cst_60 = arith.constant dense<0xFF800000> : vector<48xf32>
    %63 = vector.multi_reduction <maximumf>, %62, %cst_60 [1] : vector<48x48xf32> to vector<48xf32>
    %64 = vector.shape_cast %63 : vector<48xf32> to vector<48x1xf32>
    %65 = vector.broadcast %64 : vector<48x1xf32> to vector<48x48xf32>
    %66 = arith.subf %62, %65 : vector<48x48xf32>
    %67 = math.exp %66 : vector<48x48xf32>
    %cst_61 = arith.constant dense<0.000000e+00> : vector<48xf32>
    %68 = vector.multi_reduction <add>, %67, %cst_61 [1] : vector<48x48xf32> to vector<48xf32>
    %69 = vector.shape_cast %68 : vector<48xf32> to vector<48x1xf32>
    %70 = arith.truncf %67 : vector<48x48xf32> to vector<48x48xbf16>
    %71 = vector.extract_strided_slice %50 {offsets = [0, 0], sizes = [48, 16], strides = [1, 1]} : vector<48x64xbf16> to vector<48x16xbf16>
    %cst_62 = arith.constant dense<0.000000e+00> : vector<48x16xf32>
    %72 = tpu.matmul %70, %71, %cst_62 {dimension_numbers = #tpu.dot_dimension_numbers<[1], [0], [0], [1], [0, 0, 1, 1], [], []>} : vector<48x48xbf16>, vector<48x16xbf16>, vector<48x16xf32> -> vector<48x16xf32>
    %73 = tpu.reciprocal %69 {approx = true} : vector<48x1xf32> -> vector<48x1xf32>
    %74 = vector.broadcast %73 : vector<48x1xf32> to vector<48x16xf32>
    %75 = arith.mulf %72, %74 : vector<48x16xf32>
    %76 = vector.extract_strided_slice %46 {offsets = [0, 16], sizes = [48, 16], strides = [1, 1]} : vector<48x64xbf16> to vector<48x16xbf16>
    %77 = vector.extract_strided_slice %48 {offsets = [0, 16], sizes = [48, 16], strides = [1, 1]} : vector<48x64xbf16> to vector<48x16xbf16>
    %cst_63 = arith.constant dense<0.000000e+00> : vector<48x48xf32>
    %78 = tpu.matmul %76, %77, %cst_63 {dimension_numbers = #tpu.dot_dimension_numbers<[1], [1], [0], [0], [0, 0, 1, 0], [], []>} : vector<48x16xbf16>, vector<48x16xbf16>, vector<48x48xf32> -> vector<48x48xf32>
    %cst_64 = arith.constant dense<0xFF800000> : vector<48xf32>
    %79 = vector.multi_reduction <maximumf>, %78, %cst_64 [1] : vector<48x48xf32> to vector<48xf32>
    %80 = vector.shape_cast %79 : vector<48xf32> to vector<48x1xf32>
    %81 = vector.broadcast %80 : vector<48x1xf32> to vector<48x48xf32>
    %82 = arith.subf %78, %81 : vector<48x48xf32>
    %83 = math.exp %82 : vector<48x48xf32>
    %cst_65 = arith.constant dense<0.000000e+00> : vector<48xf32>
    %84 = vector.multi_reduction <add>, %83, %cst_65 [1] : vector<48x48xf32> to vector<48xf32>
    %85 = vector.shape_cast %84 : vector<48xf32> to vector<48x1xf32>
    %86 = arith.truncf %83 : vector<48x48xf32> to vector<48x48xbf16>
    %87 = vector.extract_strided_slice %50 {offsets = [0, 16], sizes = [48, 16], strides = [1, 1]} : vector<48x64xbf16> to vector<48x16xbf16>
    %cst_66 = arith.constant dense<0.000000e+00> : vector<48x16xf32>
    %88 = tpu.matmul %86, %87, %cst_66 {dimension_numbers = #tpu.dot_dimension_numbers<[1], [0], [0], [1], [0, 0, 1, 1], [], []>} : vector<48x48xbf16>, vector<48x16xbf16>, vector<48x16xf32> -> vector<48x16xf32>
    %89 = tpu.reciprocal %85 {approx = true} : vector<48x1xf32> -> vector<48x1xf32>
    %90 = vector.broadcast %89 : vector<48x1xf32> to vector<48x16xf32>
    %91 = arith.mulf %88, %90 : vector<48x16xf32>
    %92 = vector.extract_strided_slice %46 {offsets = [0, 32], sizes = [48, 16], strides = [1, 1]} : vector<48x64xbf16> to vector<48x16xbf16>
    %93 = vector.extract_strided_slice %48 {offsets = [0, 32], sizes = [48, 16], strides = [1, 1]} : vector<48x64xbf16> to vector<48x16xbf16>
    %cst_67 = arith.constant dense<0.000000e+00> : vector<48x48xf32>
    %94 = tpu.matmul %92, %93, %cst_67 {dimension_numbers = #tpu.dot_dimension_numbers<[1], [1], [0], [0], [0, 0, 1, 0], [], []>} : vector<48x16xbf16>, vector<48x16xbf16>, vector<48x48xf32> -> vector<48x48xf32>
    %cst_68 = arith.constant dense<0xFF800000> : vector<48xf32>
    %95 = vector.multi_reduction <maximumf>, %94, %cst_68 [1] : vector<48x48xf32> to vector<48xf32>
    %96 = vector.shape_cast %95 : vector<48xf32> to vector<48x1xf32>
    %97 = vector.broadcast %96 : vector<48x1xf32> to vector<48x48xf32>
    %98 = arith.subf %94, %97 : vector<48x48xf32>
    %99 = math.exp %98 : vector<48x48xf32>
    %cst_69 = arith.constant dense<0.000000e+00> : vector<48xf32>
    %100 = vector.multi_reduction <add>, %99, %cst_69 [1] : vector<48x48xf32> to vector<48xf32>
    %101 = vector.shape_cast %100 : vector<48xf32> to vector<48x1xf32>
    %102 = arith.truncf %99 : vector<48x48xf32> to vector<48x48xbf16>
    %103 = vector.extract_strided_slice %50 {offsets = [0, 32], sizes = [48, 16], strides = [1, 1]} : vector<48x64xbf16> to vector<48x16xbf16>
    %cst_70 = arith.constant dense<0.000000e+00> : vector<48x16xf32>
    %104 = tpu.matmul %102, %103, %cst_70 {dimension_numbers = #tpu.dot_dimension_numbers<[1], [0], [0], [1], [0, 0, 1, 1], [], []>} : vector<48x48xbf16>, vector<48x16xbf16>, vector<48x16xf32> -> vector<48x16xf32>
    %105 = tpu.reciprocal %101 {approx = true} : vector<48x1xf32> -> vector<48x1xf32>
    %106 = vector.broadcast %105 : vector<48x1xf32> to vector<48x16xf32>
    %107 = arith.mulf %104, %106 : vector<48x16xf32>
    %108 = vector.extract_strided_slice %46 {offsets = [0, 48], sizes = [48, 16], strides = [1, 1]} : vector<48x64xbf16> to vector<48x16xbf16>
    %109 = vector.extract_strided_slice %48 {offsets = [0, 48], sizes = [48, 16], strides = [1, 1]} : vector<48x64xbf16> to vector<48x16xbf16>
    %cst_71 = arith.constant dense<0.000000e+00> : vector<48x48xf32>
    %110 = tpu.matmul %108, %109, %cst_71 {dimension_numbers = #tpu.dot_dimension_numbers<[1], [1], [0], [0], [0, 0, 1, 0], [], []>} : vector<48x16xbf16>, vector<48x16xbf16>, vector<48x48xf32> -> vector<48x48xf32>
    %cst_72 = arith.constant dense<0xFF800000> : vector<48xf32>
    %111 = vector.multi_reduction <maximumf>, %110, %cst_72 [1] : vector<48x48xf32> to vector<48xf32>
    %112 = vector.shape_cast %111 : vector<48xf32> to vector<48x1xf32>
    %113 = vector.broadcast %112 : vector<48x1xf32> to vector<48x48xf32>
    %114 = arith.subf %110, %113 : vector<48x48xf32>
    %115 = math.exp %114 : vector<48x48xf32>
    %cst_73 = arith.constant dense<0.000000e+00> : vector<48xf32>
    %116 = vector.multi_reduction <add>, %115, %cst_73 [1] : vector<48x48xf32> to vector<48xf32>
    %117 = vector.shape_cast %116 : vector<48xf32> to vector<48x1xf32>
    %118 = arith.truncf %115 : vector<48x48xf32> to vector<48x48xbf16>
    %119 = vector.extract_strided_slice %50 {offsets = [0, 48], sizes = [48, 16], strides = [1, 1]} : vector<48x64xbf16> to vector<48x16xbf16>
    %cst_74 = arith.constant dense<0.000000e+00> : vector<48x16xf32>
    %120 = tpu.matmul %118, %119, %cst_74 {dimension_numbers = #tpu.dot_dimension_numbers<[1], [0], [0], [1], [0, 0, 1, 1], [], []>} : vector<48x48xbf16>, vector<48x16xbf16>, vector<48x16xf32> -> vector<48x16xf32>
    %121 = tpu.reciprocal %117 {approx = true} : vector<48x1xf32> -> vector<48x1xf32>
    %122 = vector.broadcast %121 : vector<48x1xf32> to vector<48x16xf32>
    %123 = arith.mulf %120, %122 : vector<48x16xf32>
    %124 = tpu.concatenate %75, %91, %107, %123 in 1 : vector<48x16xf32>, vector<48x16xf32>, vector<48x16xf32>, vector<48x16xf32> -> vector<48x64xf32>
    %125 = arith.truncf %124 : vector<48x64xf32> to vector<48x64xbf16>
    %cst_75 = arith.constant dense<0.000000e+00> : vector<48x64xf32>
    %126 = tpu.matmul %125, %10, %cst_75 {dimension_numbers = #tpu.dot_dimension_numbers<[1], [0], [0], [1], [0, 0, 1, 1], [], []>} : vector<48x64xbf16>, vector<64x64xbf16>, vector<48x64xf32> -> vector<48x64xf32>
    %127 = vector.broadcast %12 : vector<1x64xf32> to vector<48x64xf32>
    %128 = arith.addf %126, %127 : vector<48x64xf32>
    %cst_76 = arith.constant dense<0.000000e+00> : vector<48xf32>
    %129 = vector.multi_reduction <add>, %128, %cst_76 [1] : vector<48x64xf32> to vector<48xf32>
    %130 = vector.shape_cast %129 : vector<48xf32> to vector<48x1xf32>
    %cst_77 = arith.constant 6.400000e+01 : f32
    %131 = vector.broadcast %cst_77 : f32 to vector<48x1xf32>
    %132 = arith.divf %130, %131 : vector<48x1xf32>
    %133 = vector.broadcast %132 : vector<48x1xf32> to vector<48x64xf32>
    %134 = arith.subf %128, %133 : vector<48x64xf32>
    %135 = arith.mulf %134, %134 : vector<48x64xf32>
    %cst_78 = arith.constant dense<0.000000e+00> : vector<48xf32>
    %136 = vector.multi_reduction <add>, %135, %cst_78 [1] : vector<48x64xf32> to vector<48xf32>
    %137 = vector.shape_cast %136 : vector<48xf32> to vector<48x1xf32>
    %cst_79 = arith.constant 6.400000e+01 : f32
    %138 = vector.broadcast %cst_79 : f32 to vector<48x1xf32>
    %139 = arith.divf %137, %138 : vector<48x1xf32>
    %cst_80 = arith.constant 9.99999974E-6 : f32
    %140 = vector.broadcast %cst_80 : f32 to vector<48x1xf32>
    %141 = arith.addf %139, %140 : vector<48x1xf32>
    %142 = math.rsqrt %141 : vector<48x1xf32>
    %143 = vector.broadcast %142 : vector<48x1xf32> to vector<48x64xf32>
    %144 = arith.mulf %134, %143 : vector<48x64xf32>
    %145 = vector.broadcast %14 : vector<1x64xf32> to vector<48x64xf32>
    %146 = arith.mulf %144, %145 : vector<48x64xf32>
    %147 = vector.broadcast %16 : vector<1x64xf32> to vector<48x64xf32>
    %148 = arith.addf %146, %147 : vector<48x64xf32>
    %149 = arith.addf %148, %4 : vector<48x64xf32>
    %150 = vector.extract_strided_slice %18 {offsets = [0, 0], sizes = [64, 64], strides = [1, 1]} : vector<64x192xbf16> to vector<64x64xbf16>
    %151 = arith.truncf %149 : vector<48x64xf32> to vector<48x64xbf16>
    %cst_81 = arith.constant dense<0.000000e+00> : vector<48x64xf32>
    %152 = tpu.matmul %151, %150, %cst_81 {dimension_numbers = #tpu.dot_dimension_numbers<[1], [0], [0], [1], [0, 0, 1, 1], [], []>} : vector<48x64xbf16>, vector<64x64xbf16>, vector<48x64xf32> -> vector<48x64xf32>
    %153 = vector.extract_strided_slice %20 {offsets = [0, 0], sizes = [1, 64], strides = [1, 1]} : vector<1x192xf32> to vector<1x64xf32>
    %154 = vector.broadcast %153 : vector<1x64xf32> to vector<48x64xf32>
    %155 = arith.addf %152, %154 : vector<48x64xf32>
    %156 = arith.truncf %155 : vector<48x64xf32> to vector<48x64xbf16>
    %157 = vector.extract_strided_slice %156 {offsets = [0, 0], sizes = [48, 16], strides = [1, 1]} : vector<48x64xbf16> to vector<48x16xbf16>
    %158 = vector.extract_strided_slice %57 {offsets = [0, 0], sizes = [16, 16], strides = [1, 1]} : vector<16x64xbf16> to vector<16x16xbf16>
    %cst_82 = arith.constant dense<0.000000e+00> : vector<48x16xf32>
    %159 = tpu.matmul %157, %158, %cst_82 {dimension_numbers = #tpu.dot_dimension_numbers<[1], [1], [0], [0], [0, 0, 1, 0], [], []>} : vector<48x16xbf16>, vector<16x16xbf16>, vector<48x16xf32> -> vector<48x16xf32>
    %cst_83 = arith.constant dense<0xFF800000> : vector<48xf32>
    %160 = vector.multi_reduction <maximumf>, %159, %cst_83 [1] : vector<48x16xf32> to vector<48xf32>
    %161 = vector.shape_cast %160 : vector<48xf32> to vector<48x1xf32>
    %162 = vector.broadcast %161 : vector<48x1xf32> to vector<48x16xf32>
    %163 = arith.subf %159, %162 : vector<48x16xf32>
    %164 = math.exp %163 : vector<48x16xf32>
    %cst_84 = arith.constant dense<0.000000e+00> : vector<48xf32>
    %165 = vector.multi_reduction <add>, %164, %cst_84 [1] : vector<48x16xf32> to vector<48xf32>
    %166 = vector.shape_cast %165 : vector<48xf32> to vector<48x1xf32>
    %167 = arith.truncf %164 : vector<48x16xf32> to vector<48x16xbf16>
    %168 = vector.extract_strided_slice %59 {offsets = [0, 0], sizes = [16, 16], strides = [1, 1]} : vector<16x64xbf16> to vector<16x16xbf16>
    %cst_85 = arith.constant dense<0.000000e+00> : vector<48x16xf32>
    %169 = tpu.matmul %167, %168, %cst_85 {dimension_numbers = #tpu.dot_dimension_numbers<[1], [0], [0], [1], [0, 0, 1, 1], [], []>} : vector<48x16xbf16>, vector<16x16xbf16>, vector<48x16xf32> -> vector<48x16xf32>
    %170 = tpu.reciprocal %166 {approx = true} : vector<48x1xf32> -> vector<48x1xf32>
    %171 = vector.broadcast %170 : vector<48x1xf32> to vector<48x16xf32>
    %172 = arith.mulf %169, %171 : vector<48x16xf32>
    %173 = vector.extract_strided_slice %156 {offsets = [0, 16], sizes = [48, 16], strides = [1, 1]} : vector<48x64xbf16> to vector<48x16xbf16>
    %174 = vector.extract_strided_slice %57 {offsets = [0, 16], sizes = [16, 16], strides = [1, 1]} : vector<16x64xbf16> to vector<16x16xbf16>
    %cst_86 = arith.constant dense<0.000000e+00> : vector<48x16xf32>
    %175 = tpu.matmul %173, %174, %cst_86 {dimension_numbers = #tpu.dot_dimension_numbers<[1], [1], [0], [0], [0, 0, 1, 0], [], []>} : vector<48x16xbf16>, vector<16x16xbf16>, vector<48x16xf32> -> vector<48x16xf32>
    %cst_87 = arith.constant dense<0xFF800000> : vector<48xf32>
    %176 = vector.multi_reduction <maximumf>, %175, %cst_87 [1] : vector<48x16xf32> to vector<48xf32>
    %177 = vector.shape_cast %176 : vector<48xf32> to vector<48x1xf32>
    %178 = vector.broadcast %177 : vector<48x1xf32> to vector<48x16xf32>
    %179 = arith.subf %175, %178 : vector<48x16xf32>
    %180 = math.exp %179 : vector<48x16xf32>
    %cst_88 = arith.constant dense<0.000000e+00> : vector<48xf32>
    %181 = vector.multi_reduction <add>, %180, %cst_88 [1] : vector<48x16xf32> to vector<48xf32>
    %182 = vector.shape_cast %181 : vector<48xf32> to vector<48x1xf32>
    %183 = arith.truncf %180 : vector<48x16xf32> to vector<48x16xbf16>
    %184 = vector.extract_strided_slice %59 {offsets = [0, 16], sizes = [16, 16], strides = [1, 1]} : vector<16x64xbf16> to vector<16x16xbf16>
    %cst_89 = arith.constant dense<0.000000e+00> : vector<48x16xf32>
    %185 = tpu.matmul %183, %184, %cst_89 {dimension_numbers = #tpu.dot_dimension_numbers<[1], [0], [0], [1], [0, 0, 1, 1], [], []>} : vector<48x16xbf16>, vector<16x16xbf16>, vector<48x16xf32> -> vector<48x16xf32>
    %186 = tpu.reciprocal %182 {approx = true} : vector<48x1xf32> -> vector<48x1xf32>
    %187 = vector.broadcast %186 : vector<48x1xf32> to vector<48x16xf32>
    %188 = arith.mulf %185, %187 : vector<48x16xf32>
    %189 = vector.extract_strided_slice %156 {offsets = [0, 32], sizes = [48, 16], strides = [1, 1]} : vector<48x64xbf16> to vector<48x16xbf16>
    %190 = vector.extract_strided_slice %57 {offsets = [0, 32], sizes = [16, 16], strides = [1, 1]} : vector<16x64xbf16> to vector<16x16xbf16>
    %cst_90 = arith.constant dense<0.000000e+00> : vector<48x16xf32>
    %191 = tpu.matmul %189, %190, %cst_90 {dimension_numbers = #tpu.dot_dimension_numbers<[1], [1], [0], [0], [0, 0, 1, 0], [], []>} : vector<48x16xbf16>, vector<16x16xbf16>, vector<48x16xf32> -> vector<48x16xf32>
    %cst_91 = arith.constant dense<0xFF800000> : vector<48xf32>
    %192 = vector.multi_reduction <maximumf>, %191, %cst_91 [1] : vector<48x16xf32> to vector<48xf32>
    %193 = vector.shape_cast %192 : vector<48xf32> to vector<48x1xf32>
    %194 = vector.broadcast %193 : vector<48x1xf32> to vector<48x16xf32>
    %195 = arith.subf %191, %194 : vector<48x16xf32>
    %196 = math.exp %195 : vector<48x16xf32>
    %cst_92 = arith.constant dense<0.000000e+00> : vector<48xf32>
    %197 = vector.multi_reduction <add>, %196, %cst_92 [1] : vector<48x16xf32> to vector<48xf32>
    %198 = vector.shape_cast %197 : vector<48xf32> to vector<48x1xf32>
    %199 = arith.truncf %196 : vector<48x16xf32> to vector<48x16xbf16>
    %200 = vector.extract_strided_slice %59 {offsets = [0, 32], sizes = [16, 16], strides = [1, 1]} : vector<16x64xbf16> to vector<16x16xbf16>
    %cst_93 = arith.constant dense<0.000000e+00> : vector<48x16xf32>
    %201 = tpu.matmul %199, %200, %cst_93 {dimension_numbers = #tpu.dot_dimension_numbers<[1], [0], [0], [1], [0, 0, 1, 1], [], []>} : vector<48x16xbf16>, vector<16x16xbf16>, vector<48x16xf32> -> vector<48x16xf32>
    %202 = tpu.reciprocal %198 {approx = true} : vector<48x1xf32> -> vector<48x1xf32>
    %203 = vector.broadcast %202 : vector<48x1xf32> to vector<48x16xf32>
    %204 = arith.mulf %201, %203 : vector<48x16xf32>
    %205 = vector.extract_strided_slice %156 {offsets = [0, 48], sizes = [48, 16], strides = [1, 1]} : vector<48x64xbf16> to vector<48x16xbf16>
    %206 = vector.extract_strided_slice %57 {offsets = [0, 48], sizes = [16, 16], strides = [1, 1]} : vector<16x64xbf16> to vector<16x16xbf16>
    %cst_94 = arith.constant dense<0.000000e+00> : vector<48x16xf32>
    %207 = tpu.matmul %205, %206, %cst_94 {dimension_numbers = #tpu.dot_dimension_numbers<[1], [1], [0], [0], [0, 0, 1, 0], [], []>} : vector<48x16xbf16>, vector<16x16xbf16>, vector<48x16xf32> -> vector<48x16xf32>
    %cst_95 = arith.constant dense<0xFF800000> : vector<48xf32>
    %208 = vector.multi_reduction <maximumf>, %207, %cst_95 [1] : vector<48x16xf32> to vector<48xf32>
    %209 = vector.shape_cast %208 : vector<48xf32> to vector<48x1xf32>
    %210 = vector.broadcast %209 : vector<48x1xf32> to vector<48x16xf32>
    %211 = arith.subf %207, %210 : vector<48x16xf32>
    %212 = math.exp %211 : vector<48x16xf32>
    %cst_96 = arith.constant dense<0.000000e+00> : vector<48xf32>
    %213 = vector.multi_reduction <add>, %212, %cst_96 [1] : vector<48x16xf32> to vector<48xf32>
    %214 = vector.shape_cast %213 : vector<48xf32> to vector<48x1xf32>
    %215 = arith.truncf %212 : vector<48x16xf32> to vector<48x16xbf16>
    %216 = vector.extract_strided_slice %59 {offsets = [0, 48], sizes = [16, 16], strides = [1, 1]} : vector<16x64xbf16> to vector<16x16xbf16>
    %cst_97 = arith.constant dense<0.000000e+00> : vector<48x16xf32>
    %217 = tpu.matmul %215, %216, %cst_97 {dimension_numbers = #tpu.dot_dimension_numbers<[1], [0], [0], [1], [0, 0, 1, 1], [], []>} : vector<48x16xbf16>, vector<16x16xbf16>, vector<48x16xf32> -> vector<48x16xf32>
    %218 = tpu.reciprocal %214 {approx = true} : vector<48x1xf32> -> vector<48x1xf32>
    %219 = vector.broadcast %218 : vector<48x1xf32> to vector<48x16xf32>
    %220 = arith.mulf %217, %219 : vector<48x16xf32>
    %221 = tpu.concatenate %172, %188, %204, %220 in 1 : vector<48x16xf32>, vector<48x16xf32>, vector<48x16xf32>, vector<48x16xf32> -> vector<48x64xf32>
    %222 = arith.truncf %221 : vector<48x64xf32> to vector<48x64xbf16>
    %cst_98 = arith.constant dense<0.000000e+00> : vector<48x64xf32>
    %223 = tpu.matmul %222, %22, %cst_98 {dimension_numbers = #tpu.dot_dimension_numbers<[1], [0], [0], [1], [0, 0, 1, 1], [], []>} : vector<48x64xbf16>, vector<64x64xbf16>, vector<48x64xf32> -> vector<48x64xf32>
    %224 = vector.broadcast %24 : vector<1x64xf32> to vector<48x64xf32>
    %225 = arith.addf %223, %224 : vector<48x64xf32>
    %cst_99 = arith.constant dense<0.000000e+00> : vector<48xf32>
    %226 = vector.multi_reduction <add>, %225, %cst_99 [1] : vector<48x64xf32> to vector<48xf32>
    %227 = vector.shape_cast %226 : vector<48xf32> to vector<48x1xf32>
    %cst_100 = arith.constant 6.400000e+01 : f32
    %228 = vector.broadcast %cst_100 : f32 to vector<48x1xf32>
    %229 = arith.divf %227, %228 : vector<48x1xf32>
    %230 = vector.broadcast %229 : vector<48x1xf32> to vector<48x64xf32>
    %231 = arith.subf %225, %230 : vector<48x64xf32>
    %232 = arith.mulf %231, %231 : vector<48x64xf32>
    %cst_101 = arith.constant dense<0.000000e+00> : vector<48xf32>
    %233 = vector.multi_reduction <add>, %232, %cst_101 [1] : vector<48x64xf32> to vector<48xf32>
    %234 = vector.shape_cast %233 : vector<48xf32> to vector<48x1xf32>
    %cst_102 = arith.constant 6.400000e+01 : f32
    %235 = vector.broadcast %cst_102 : f32 to vector<48x1xf32>
    %236 = arith.divf %234, %235 : vector<48x1xf32>
    %cst_103 = arith.constant 9.99999974E-6 : f32
    %237 = vector.broadcast %cst_103 : f32 to vector<48x1xf32>
    %238 = arith.addf %236, %237 : vector<48x1xf32>
    %239 = math.rsqrt %238 : vector<48x1xf32>
    %240 = vector.broadcast %239 : vector<48x1xf32> to vector<48x64xf32>
    %241 = arith.mulf %231, %240 : vector<48x64xf32>
    %242 = vector.broadcast %26 : vector<1x64xf32> to vector<48x64xf32>
    %243 = arith.mulf %241, %242 : vector<48x64xf32>
    %244 = vector.broadcast %28 : vector<1x64xf32> to vector<48x64xf32>
    %245 = arith.addf %243, %244 : vector<48x64xf32>
    %246 = arith.addf %245, %149 : vector<48x64xf32>
    %247 = arith.truncf %246 : vector<48x64xf32> to vector<48x64xbf16>
    %cst_104 = arith.constant dense<0.000000e+00> : vector<48x256xf32>
    %248 = tpu.matmul %247, %30, %cst_104 {dimension_numbers = #tpu.dot_dimension_numbers<[1], [0], [0], [1], [0, 0, 1, 1], [], []>} : vector<48x64xbf16>, vector<64x256xbf16>, vector<48x256xf32> -> vector<48x256xf32>
    %249 = vector.broadcast %32 : vector<1x256xf32> to vector<48x256xf32>
    %250 = arith.addf %248, %249 : vector<48x256xf32>
    %cst_105 = arith.constant 5.000000e-01 : f32
    %251 = vector.broadcast %cst_105 : f32 to vector<48x256xf32>
    %252 = arith.mulf %251, %250 : vector<48x256xf32>
    %cst_106 = arith.constant 0.707106769 : f32
    %253 = vector.broadcast %cst_106 : f32 to vector<48x256xf32>
    %254 = arith.mulf %250, %253 : vector<48x256xf32>
    %cst_107 = arith.constant 0.000000e+00 : f32
    %255 = vector.broadcast %cst_107 : f32 to vector<48x256xf32>
    %256 = arith.cmpf oge, %254, %255 : vector<48x256xf32>
    %cst_108 = arith.constant 1.000000e+00 : f32
    %cst_109 = arith.constant -1.000000e+00 : f32
    %257 = vector.broadcast %cst_108 : f32 to vector<48x256xf32>
    %258 = vector.broadcast %cst_109 : f32 to vector<48x256xf32>
    %259 = arith.select %256, %257, %258 : vector<48x256xi1>, vector<48x256xf32>
    %260 = math.absf %254 : vector<48x256xf32>
    %cst_110 = arith.constant 0.327591091 : f32
    %261 = vector.broadcast %cst_110 : f32 to vector<48x256xf32>
    %262 = arith.mulf %261, %260 : vector<48x256xf32>
    %cst_111 = arith.constant 1.000000e+00 : f32
    %263 = vector.broadcast %cst_111 : f32 to vector<48x256xf32>
    %264 = arith.addf %263, %262 : vector<48x256xf32>
    %cst_112 = arith.constant 1.000000e+00 : f32
    %265 = vector.broadcast %cst_112 : f32 to vector<48x256xf32>
    %266 = arith.divf %265, %264 : vector<48x256xf32>
    %cst_113 = arith.constant 1.06140542 : f32
    %267 = vector.broadcast %cst_113 : f32 to vector<48x256xf32>
    %268 = arith.mulf %267, %266 : vector<48x256xf32>
    %cst_114 = arith.constant -1.45315206 : f32
    %269 = vector.broadcast %cst_114 : f32 to vector<48x256xf32>
    %270 = arith.addf %268, %269 : vector<48x256xf32>
    %271 = arith.mulf %270, %266 : vector<48x256xf32>
    %cst_115 = arith.constant 1.42141378 : f32
    %272 = vector.broadcast %cst_115 : f32 to vector<48x256xf32>
    %273 = arith.addf %271, %272 : vector<48x256xf32>
    %274 = arith.mulf %273, %266 : vector<48x256xf32>
    %cst_116 = arith.constant -0.284496725 : f32
    %275 = vector.broadcast %cst_116 : f32 to vector<48x256xf32>
    %276 = arith.addf %274, %275 : vector<48x256xf32>
    %277 = arith.mulf %276, %266 : vector<48x256xf32>
    %cst_117 = arith.constant 0.254829586 : f32
    %278 = vector.broadcast %cst_117 : f32 to vector<48x256xf32>
    %279 = arith.addf %277, %278 : vector<48x256xf32>
    %280 = arith.mulf %279, %266 : vector<48x256xf32>
    %cst_118 = arith.constant 0.000000e+00 : f32
    %281 = vector.broadcast %cst_118 : f32 to vector<48x256xf32>
    %282 = arith.subf %281, %260 : vector<48x256xf32>
    %283 = arith.mulf %282, %260 : vector<48x256xf32>
    %284 = math.exp %283 : vector<48x256xf32>
    %285 = arith.mulf %280, %284 : vector<48x256xf32>
    %cst_119 = arith.constant 1.000000e+00 : f32
    %286 = vector.broadcast %cst_119 : f32 to vector<48x256xf32>
    %287 = arith.subf %286, %285 : vector<48x256xf32>
    %288 = arith.mulf %259, %287 : vector<48x256xf32>
    %cst_120 = arith.constant 1.000000e+00 : f32
    %289 = vector.broadcast %cst_120 : f32 to vector<48x256xf32>
    %290 = arith.addf %289, %288 : vector<48x256xf32>
    %291 = arith.mulf %252, %290 : vector<48x256xf32>
    %292 = arith.truncf %291 : vector<48x256xf32> to vector<48x256xbf16>
    %cst_121 = arith.constant dense<0.000000e+00> : vector<48x64xf32>
    %293 = tpu.matmul %292, %34, %cst_121 {dimension_numbers = #tpu.dot_dimension_numbers<[1], [0], [0], [1], [0, 0, 1, 1], [], []>} : vector<48x256xbf16>, vector<256x64xbf16>, vector<48x64xf32> -> vector<48x64xf32>
    %294 = vector.broadcast %36 : vector<1x64xf32> to vector<48x64xf32>
    %295 = arith.addf %293, %294 : vector<48x64xf32>
    %cst_122 = arith.constant dense<0.000000e+00> : vector<48xf32>
    %296 = vector.multi_reduction <add>, %295, %cst_122 [1] : vector<48x64xf32> to vector<48xf32>
    %297 = vector.shape_cast %296 : vector<48xf32> to vector<48x1xf32>
    %cst_123 = arith.constant 6.400000e+01 : f32
    %298 = vector.broadcast %cst_123 : f32 to vector<48x1xf32>
    %299 = arith.divf %297, %298 : vector<48x1xf32>
    %300 = vector.broadcast %299 : vector<48x1xf32> to vector<48x64xf32>
    %301 = arith.subf %295, %300 : vector<48x64xf32>
    %302 = arith.mulf %301, %301 : vector<48x64xf32>
    %cst_124 = arith.constant dense<0.000000e+00> : vector<48xf32>
    %303 = vector.multi_reduction <add>, %302, %cst_124 [1] : vector<48x64xf32> to vector<48xf32>
    %304 = vector.shape_cast %303 : vector<48xf32> to vector<48x1xf32>
    %cst_125 = arith.constant 6.400000e+01 : f32
    %305 = vector.broadcast %cst_125 : f32 to vector<48x1xf32>
    %306 = arith.divf %304, %305 : vector<48x1xf32>
    %cst_126 = arith.constant 9.99999974E-6 : f32
    %307 = vector.broadcast %cst_126 : f32 to vector<48x1xf32>
    %308 = arith.addf %306, %307 : vector<48x1xf32>
    %309 = math.rsqrt %308 : vector<48x1xf32>
    %310 = vector.broadcast %309 : vector<48x1xf32> to vector<48x64xf32>
    %311 = arith.mulf %301, %310 : vector<48x64xf32>
    %312 = vector.broadcast %38 : vector<1x64xf32> to vector<48x64xf32>
    %313 = arith.mulf %311, %312 : vector<48x64xf32>
    %314 = vector.broadcast %40 : vector<1x64xf32> to vector<48x64xf32>
    %315 = arith.addf %313, %314 : vector<48x64xf32>
    %316 = arith.addf %315, %246 : vector<48x64xf32>
    %c0_127 = arith.constant 0 : index
    %c0_128 = arith.constant 0 : index
    %317 = vector.load %arg21[%c0_127, %c0_128] : memref<48x64xf32, #tpu.memory_space<vmem>>, vector<48x64xf32>
    tpu.vector_store %arg21[%c0_127, %c0_128], %316 {strides = array<i32>} : memref<48x64xf32, #tpu.memory_space<vmem>>, vector<48x64xf32>,
    return
  }
  func.func @transform_0(%arg0: i32) -> (i32, i32) {
    %c0_i32 = arith.constant 0 : i32
    %c0_i32_0 = arith.constant 0 : i32
    %c0_i32_1 = arith.constant 0 : i32
    return %c0_i32, %c0_i32_0 : i32, i32
  }
  func.func @transform_1(%arg0: i32) -> (i32, i32) {
    %c0_i32 = arith.constant 0 : i32
    %c0_i32_0 = arith.constant 0 : i32
    %c0_i32_1 = arith.constant 0 : i32
    return %c0_i32, %c0_i32_0 : i32, i32
  }
  func.func @transform_2(%arg0: i32) -> (i32, i32, i32) {
    %c0_i32 = arith.constant 0 : i32
    %c0_i32_0 = arith.constant 0 : i32
    %c0_i32_1 = arith.constant 0 : i32
    return %arg0, %c0_i32, %c0_i32_0 : i32, i32, i32
  }
  func.func @transform_3(%arg0: i32) -> (i32, i32, i32) {
    %c0_i32 = arith.constant 0 : i32
    %c0_i32_0 = arith.constant 0 : i32
    %c0_i32_1 = arith.constant 0 : i32
    return %arg0, %c0_i32, %c0_i32_0 : i32, i32, i32
  }
  func.func @transform_4(%arg0: i32) -> (i32, i32, i32) {
    %c0_i32 = arith.constant 0 : i32
    %c0_i32_0 = arith.constant 0 : i32
    %c0_i32_1 = arith.constant 0 : i32
    return %arg0, %c0_i32, %c0_i32_0 : i32, i32, i32
  }
  func.func @transform_5(%arg0: i32) -> (i32, i32, i32) {
    %c0_i32 = arith.constant 0 : i32
    %c0_i32_0 = arith.constant 0 : i32
    %c0_i32_1 = arith.constant 0 : i32
    return %arg0, %c0_i32, %c0_i32_0 : i32, i32, i32
  }
  func.func @transform_6(%arg0: i32) -> (i32, i32, i32) {
    %c0_i32 = arith.constant 0 : i32
    %c0_i32_0 = arith.constant 0 : i32
    %c0_i32_1 = arith.constant 0 : i32
    return %arg0, %c0_i32, %c0_i32_0 : i32, i32, i32
  }
  func.func @transform_7(%arg0: i32) -> (i32, i32, i32) {
    %c0_i32 = arith.constant 0 : i32
    %c0_i32_0 = arith.constant 0 : i32
    %c0_i32_1 = arith.constant 0 : i32
    return %arg0, %c0_i32, %c0_i32_0 : i32, i32, i32
  }
  func.func @transform_8(%arg0: i32) -> (i32, i32, i32) {
    %c0_i32 = arith.constant 0 : i32
    %c0_i32_0 = arith.constant 0 : i32
    %c0_i32_1 = arith.constant 0 : i32
    return %arg0, %c0_i32, %c0_i32_0 : i32, i32, i32
  }
  func.func @transform_9(%arg0: i32) -> (i32, i32, i32) {
    %c0_i32 = arith.constant 0 : i32
    %c0_i32_0 = arith.constant 0 : i32
    %c0_i32_1 = arith.constant 0 : i32
    return %arg0, %c0_i32, %c0_i32_0 : i32, i32, i32
  }
  func.func @transform_10(%arg0: i32) -> (i32, i32, i32) {
    %c0_i32 = arith.constant 0 : i32
    %c0_i32_0 = arith.constant 0 : i32
    %c0_i32_1 = arith.constant 0 : i32
    return %arg0, %c0_i32, %c0_i32_0 : i32, i32, i32
  }
  func.func @transform_11(%arg0: i32) -> (i32, i32, i32) {
    %c0_i32 = arith.constant 0 : i32
    %c0_i32_0 = arith.constant 0 : i32
    %c0_i32_1 = arith.constant 0 : i32
    return %arg0, %c0_i32, %c0_i32_0 : i32, i32, i32
  }
  func.func @transform_12(%arg0: i32) -> (i32, i32, i32) {
    %c0_i32 = arith.constant 0 : i32
    %c0_i32_0 = arith.constant 0 : i32
    %c0_i32_1 = arith.constant 0 : i32
    return %arg0, %c0_i32, %c0_i32_0 : i32, i32, i32
  }
  func.func @transform_13(%arg0: i32) -> (i32, i32, i32) {
    %c0_i32 = arith.constant 0 : i32
    %c0_i32_0 = arith.constant 0 : i32
    %c0_i32_1 = arith.constant 0 : i32
    return %arg0, %c0_i32, %c0_i32_0 : i32, i32, i32
  }
  func.func @transform_14(%arg0: i32) -> (i32, i32, i32) {
    %c0_i32 = arith.constant 0 : i32
    %c0_i32_0 = arith.constant 0 : i32
    %c0_i32_1 = arith.constant 0 : i32
    return %arg0, %c0_i32, %c0_i32_0 : i32, i32, i32
  }
  func.func @transform_15(%arg0: i32) -> (i32, i32, i32) {
    %c0_i32 = arith.constant 0 : i32
    %c0_i32_0 = arith.constant 0 : i32
    %c0_i32_1 = arith.constant 0 : i32
    return %arg0, %c0_i32, %c0_i32_0 : i32, i32, i32
  }
  func.func @transform_16(%arg0: i32) -> (i32, i32, i32) {
    %c0_i32 = arith.constant 0 : i32
    %c0_i32_0 = arith.constant 0 : i32
    %c0_i32_1 = arith.constant 0 : i32
    return %arg0, %c0_i32, %c0_i32_0 : i32, i32, i32
  }
  func.func @transform_17(%arg0: i32) -> (i32, i32, i32) {
    %c0_i32 = arith.constant 0 : i32
    %c0_i32_0 = arith.constant 0 : i32
    %c0_i32_1 = arith.constant 0 : i32
    return %arg0, %c0_i32, %c0_i32_0 : i32, i32, i32
  }
  func.func @transform_18(%arg0: i32) -> (i32, i32, i32) {
    %c0_i32 = arith.constant 0 : i32
    %c0_i32_0 = arith.constant 0 : i32
    %c0_i32_1 = arith.constant 0 : i32
    return %arg0, %c0_i32, %c0_i32_0 : i32, i32, i32
  }
  func.func @transform_19(%arg0: i32) -> (i32, i32, i32) {
    %c0_i32 = arith.constant 0 : i32
    %c0_i32_0 = arith.constant 0 : i32
    %c0_i32_1 = arith.constant 0 : i32
    return %arg0, %c0_i32, %c0_i32_0 : i32, i32, i32
  }
  func.func @transform_20(%arg0: i32) -> (i32, i32) {
    %c0_i32 = arith.constant 0 : i32
    %c0_i32_0 = arith.constant 0 : i32
    %c0_i32_1 = arith.constant 0 : i32
    return %c0_i32, %c0_i32_0 : i32, i32
  }
}

</mosaic_0001>

<llo_original>
// kernel: cyattn_forward.4
$region0: #{cyattn_forward.4}
  #allocation0 [shape = 'u32[]', space=smem, size = 0x4, offset = 0x4, fixed_abs, tag = 'smem constant byte address 0x4 - core index']
  #allocation1 [shape = 'u32[72,128]{1,0:T(1,128)}', space=vmem, size = 0x9000, scoped, tag = 'internal scratch']
  %s0 = inlined_call_operand.vmem [shape: f32[16,16], index: 0, kind: input, shape index: {}]
  %s1 = inlined_call_operand.vmem [shape: f32[1,16], index: 1, kind: input, shape index: {}]
  %s2 = inlined_call_operand.vmem [shape: f32[1,16], index: 2, kind: input, shape index: {}]
  %s3 = inlined_call_operand.hbm [shape: bf16[16,64], index: 3, kind: input, shape index: {}]
  %s4 = inlined_call_operand.vmem [shape: f32[1,64], index: 4, kind: input, shape index: {}]
  %s5 = inlined_call_operand.hbm [shape: f32[16,64], index: 5, kind: input, shape index: {}]
  %s6 = inlined_call_operand.vmem [shape: f32[16,64], index: 6, kind: output, shape index: {}]
  %s7 = sld [smem:[#allocation0]]
  $region42: #{cyattn_forward.4} parent=0
    _
  %s9 = ssub.s32 1, %s7
  %s10 = scalar_select 0, %s9, %s7
  $region1: #{cyattn_forward.4} parent=0
    #allocation2 [shape = 'u8[4096]{0}', space=vmem, size = 0x1000, scoped, tag = 'input window, operand 3, single buffered']
    #allocation3 [shape = 's32[1]{0}', space=sflag, size = 0x4, scoped, tag = 'scoped memory for cyattn_forward.4']
    #allocation4 [shape = 'u8[8192]{0}', space=vmem, size = 0x2000, scoped, tag = 'input window, operand 5, single buffered']
    #allocation5 [shape = 's32[1]{0}', space=sflag, size = 0x4, scoped, tag = 'scoped memory for cyattn_forward.4']
    %11 = vsyncpa [#allocation3], 0
    %12 = vsyncpa [#allocation5], 0
    // Predicated region
    $region2: #{cyattn_forward.4} parent=1 // pred_check
      _
    $region3: #{cyattn_forward.4} parent=1 // pred_check_branch
      %14 = sbr.rel (0) target = $region5
    $region4: #{cyattn_forward.4} parent=1 // pred_region
      _
    $region5: #{cyattn_forward.4} parent=1 // pred_fallthru
      _
    // Predicated region
    $region6: #{cyattn_forward.4} parent=1 // pred_check
      _
    $region7: #{cyattn_forward.4} parent=1 // pred_check_branch
      %16 = sbr.rel (0) target = $region9
    $region8: #{cyattn_forward.4} parent=1 // pred_region
      _
    $region9: #{cyattn_forward.4} parent=1 // pred_fallthru
      _
    // Predicated region
    $region10: #{cyattn_forward.4} parent=1 // pred_check
      _
    $region11: #{cyattn_forward.4} parent=1 // pred_check_branch
      %18 = sbr.rel (0) target = $region13
    $region12: #{cyattn_forward.4} parent=1 // pred_region
      _
    $region13: #{cyattn_forward.4} parent=1 // pred_fallthru
      _
    // Predicated region
    $region14: #{cyattn_forward.4} parent=1 // pred_check
      _
    $region15: #{cyattn_forward.4} parent=1 // pred_check_branch
      %20 = sbr.rel (0) target = $region17
    $region16: #{cyattn_forward.4} parent=1 // pred_region
      %22 = vsyncadd [#allocation3], 0
      %s23 = sshll.u32 %s3, 4
      %s24 = int_to_ptr.hbm [resolvable:$true] %s23
      %s25 = sshll.u32 [#allocation2], 4
      %s26 = int_to_ptr.vmem [resolvable:$true] %s25
      %31 = dma.hbm_to_vmem [thread:$0]  %s24, 128, %s26, [#allocation3], 64, 64, 4
    $region17: #{cyattn_forward.4} parent=1 // pred_fallthru
      _
    // Predicated region
    $region18: #{cyattn_forward.4} parent=1 // pred_check
      _
    $region19: #{cyattn_forward.4} parent=1 // pred_check_branch
      %33 = sbr.rel (0) target = $region21
    $region20: #{cyattn_forward.4} parent=1 // pred_region
      _
    $region21: #{cyattn_forward.4} parent=1 // pred_fallthru
      _
    // Predicated region
    $region22: #{cyattn_forward.4} parent=1 // pred_check
      _
    $region23: #{cyattn_forward.4} parent=1 // pred_check_branch
      %35 = sbr.rel (0) target = $region25
    $region24: #{cyattn_forward.4} parent=1 // pred_region
      %37 = vsyncadd [#allocation5], 0
      %s38 = sshll.u32 %s5, 4
      %s39 = int_to_ptr.hbm [resolvable:$true] %s38
      %s40 = sshll.u32 [#allocation4], 4
      %s41 = int_to_ptr.vmem [resolvable:$true] %s40
      %46 = dma.hbm_to_vmem [thread:$0]  %s39, 256, %s41, [#allocation5], 128, 128, 8
    $region25: #{cyattn_forward.4} parent=1 // pred_fallthru
      _
    // Predicated region
    $region26: #{cyattn_forward.4} parent=1 // pred_check
      _
    $region27: #{cyattn_forward.4} parent=1 // pred_check_branch
      %48 = sbr.rel (0) target = $region29
    $region28: #{cyattn_forward.4} parent=1 // pred_region
      %50 = dma.done [#allocation3], 128
    $region29: #{cyattn_forward.4} parent=1 // pred_fallthru
      _
    // Predicated region
    $region30: #{cyattn_forward.4} parent=1 // pred_check
      _
    $region31: #{cyattn_forward.4} parent=1 // pred_check_branch
      %52 = sbr.rel (0) target = $region33
    $region32: #{cyattn_forward.4} parent=1 // pred_region
      %54 = dma.done [#allocation5], 256
    $region33: #{cyattn_forward.4} parent=1 // pred_fallthru
      _
    %v56 = vld [vmem:[%s0] sm:$0xff]
    %v57 = vld [vmem:[%s0 + $0x8] sm:$0xff]
    %v58 = vld [vmem:[%s1] sm:$0x1]
    %v59 = vld [vmem:[%s2] sm:$0x1]
    %vm60 = vcmask 130048
    %v61 = vsel %vm60, %v56, 0.0
    %62 = vadd.xlane.f32.xlu0 %v61
    %v63 = vpop.xlane.xlu0 %62
    %v64 = vsel %vm60, %v57, 0.0
    %65 = vadd.xlane.f32.xlu0 %v64
    %v66 = vpop.xlane.xlu0 %65
    %v67 = vrcp.pop 16.0
    %v68 = vmul.f32 16.0, %v67
    %v69 = vsub.f32 1.0, %v68
    %v70 = vmul.f32 %v67, %v69
    %v71 = vadd.f32 %v67, %v70
    %vm72 = vweird.f32 %v67
    %v73 = vsel %vm72, %v67, %v71
    %v74 = vmul.f32 %v63, %v73
    %v75 = vmul.f32 %v66, %v73
    %v76 = vsub.f32 %v56, %v74
    %v77 = vsub.f32 %v57, %v75
    %v78 = vmul.f32 %v76, %v76
    %v79 = vmul.f32 %v77, %v77
    %v80 = vsel %vm60, %v78, 0.0
    %81 = vadd.xlane.f32.xlu0 %v80
    %v82 = vpop.xlane.xlu0 %81
    %v83 = vsel %vm60, %v79, 0.0
    %84 = vadd.xlane.f32.xlu0 %v83
    %v85 = vpop.xlane.xlu0 %84
    %v86 = vmul.f32 %v82, %v73
    %v87 = vmul.f32 %v85, %v73
    %v88 = vadd.f32 %v86, 1e-05
    %v89 = vadd.f32 %v87, 1e-05
    %v90 = vrsqrt.pop %v88
    %v91 = vmul.f32 %v90, %v88
    %v92 = vmul.f32 %v91, %v90
    %v93 = vmul.f32 0.5, %v92
    %v94 = vsub.f32 1.5, %v93
    %v95 = vmul.f32 %v90, %v94
    %vm96 = vweird.f32 %v88
    %vm97 = vweird.f32 %v90
    %vm98 = vmor %vm96, %vm97
    %v99 = vsel %vm98, %v90, %v95
    %v100 = vrsqrt.pop %v89
    %v101 = vmul.f32 %v100, %v89
    %v102 = vmul.f32 %v101, %v100
    %v103 = vmul.f32 0.5, %v102
    %v104 = vsub.f32 1.5, %v103
    %v105 = vmul.f32 %v100, %v104
    %vm106 = vweird.f32 %v89
    %vm107 = vweird.f32 %v100
    %vm108 = vmor %vm106, %vm107
    %v109 = vsel %vm108, %v100, %v105
    %v110 = vmul.f32 %v76, %v99
    %v111 = vmul.f32 %v77, %v109
    %v113 = vperm.slane %v58, 0
    %v115 = vmul.f32 %v110, %v113
    %v116 = vmul.f32 %v111, %v113
    %v118 = vperm.slane %v59, 0
    %v120 = vadd.f32 %v115, %v118
    %v121 = vadd.f32 %v116, %v118
    %v122 = vld [vmem:[#allocation2] sm:$0xf]
    %v123 = vld [vmem:[#allocation2 + $0x4] sm:$0xf]
    %v124 = vpack.c.bf16 %v121, %v120
    %v125 = vld [vmem:[%s4] sm:$0x1]
    %v127 = vperm.slane %v125, 0
    %v131 = vunpack.c.l.b16 %v122
    %v132 = vunpack.c.l.b16 %v123
    %v133 = vpack.c.b16 %v132, %v131
    %v136 = vsel %vm60, %v124, 0
    %138 = vmatpush.bf16.msra.mxu0 0
    %139 = vmatpush.bf16.msra.mxu0 0
    %140 = vmatpush.bf16.msra.mxu0 0
    %141 = vmatpush.bf16.msra.mxu0 0
    %142 = vmatpush.bf16.msra.mxu0 0
    %143 = vmatpush.bf16.msra.mxu0 0
    %144 = vmatpush.bf16.msra.mxu0 0
    %145 = vmatpush.bf16.msra.mxu0 %v133
    %146 = vmatmul.bf16.gmra.mxu0 %v136
    %v147 = vpop.f32.mrf.mxu0
    %v148 = vadd.f32 %v127, %v147
    %v149 = vpop.f32.mrf.mxu0
    %v150 = vadd.f32 %v127, %v149
    %151 = vdwg.mxu0
    %v152 = vld [vmem:[#allocation4] sm:$0xff]
    %v153 = vld [vmem:[#allocation4 + $0x8] sm:$0xff]
    %v154 = vadd.f32 %v148, %v152
    %v155 = vadd.f32 %v150, %v153
    %vm156 = vcmask 523264
    %157 = vst.msk [vmem:[%s6] sm:$0xff] %vm156, %v154
    %158 = vst.msk [vmem:[%s6 + $0x8] sm:$0xff] %vm156, %v155
    // Predicated region
    $region34: #{cyattn_forward.4} parent=1 // pred_check
      _
    $region35: #{cyattn_forward.4} parent=1 // pred_check_branch
      %160 = sbr.rel (0) target = $region37
    $region36: #{cyattn_forward.4} parent=1 // pred_region
      _
    $region37: #{cyattn_forward.4} parent=1 // pred_fallthru
      _
    // Predicated region
    $region38: #{cyattn_forward.4} parent=1 // pred_check
      _
    $region39: #{cyattn_forward.4} parent=1 // pred_check_branch
      %162 = sbr.rel (0) target = $region41
    $region40: #{cyattn_forward.4} parent=1 // pred_region
      _
    $region41: #{cyattn_forward.4} parent=1 // pred_fallthru
      _
    %163 = vsyncpa [#allocation3], 1
    %164 = vsyncpa [#allocation5], 1

// kernel: cyattn_forward.5
$region0: #{cyattn_forward.5}
  #allocation0 [shape = 'u32[]', space=smem, size = 0x4, offset = 0x4, fixed_abs, tag = 'smem constant byte address 0x4 - core index']
  #allocation1 [shape = 'u32[72,128]{1,0:T(1,128)}', space=vmem, size = 0x9000, scoped, tag = 'internal scratch']
  %s0 = inlined_call_operand.vmem [shape: f32[48,16], index: 0, kind: input, shape index: {}]
  %s1 = inlined_call_operand.hbm [shape: f32[1,16], index: 1, kind: input, shape index: {}]
  %s2 = inlined_call_operand.hbm [shape: f32[1,16], index: 2, kind: input, shape index: {}]
  %s3 = inlined_call_operand.hbm [shape: bf16[16,64], index: 3, kind: input, shape index: {}]
  %s4 = inlined_call_operand.hbm [shape: f32[1,64], index: 4, kind: input, shape index: {}]
  %s5 = inlined_call_operand.hbm [shape: f32[48,64], index: 5, kind: input, shape index: {}]
  %s6 = inlined_call_operand.vmem [shape: f32[48,64], index: 6, kind: output, shape index: {}]
  %s7 = sld [smem:[#allocation0]]
  $region54: #{cyattn_forward.5} parent=0
    _
  %s9 = ssub.s32 1, %s7
  %s10 = scalar_select 0, %s9, %s7
  $region1: #{cyattn_forward.5} parent=0
    #allocation2 [shape = 'u8[512]{0}', space=vmem, size = 0x400, scoped, tag = 'input window, operand 1, single buffered']
    #allocation3 [shape = 's32[1]{0}', space=sflag, size = 0x4, scoped, tag = 'scoped memory for cyattn_forward.5']
    #allocation4 [shape = 'u8[512]{0}', space=vmem, size = 0x400, scoped, tag = 'input window, operand 2, single buffered']
    #allocation5 [shape = 's32[1]{0}', space=sflag, size = 0x4, scoped, tag = 'scoped memory for cyattn_forward.5']
    #allocation6 [shape = 'u8[4096]{0}', space=vmem, size = 0x1000, scoped, tag = 'input window, operand 3, single buffered']
    #allocation7 [shape = 'u8[512]{0}', space=vmem, size = 0x400, scoped, tag = 'input window, operand 4, single buffered']
    #allocation8 [shape = 's32[1]{0}', space=sflag, size = 0x4, scoped, tag = 'scoped memory for cyattn_forward.5']
    #allocation9 [shape = 'u8[24576]{0}', space=vmem, size = 0x6000, scoped, tag = 'input window, operand 5, single buffered']
    %11 = vsyncpa [#allocation3], 0
    %12 = vsyncpa [#allocation5], 0
    %13 = vsyncpa [#allocation8], 0
    // Predicated region
    $region2: #{cyattn_forward.5} parent=1 // pred_check
      _
    $region3: #{cyattn_forward.5} parent=1 // pred_check_branch
      %15 = sbr.rel (0) target = $region5
    $region4: #{cyattn_forward.5} parent=1 // pred_region
      _
    $region5: #{cyattn_forward.5} parent=1 // pred_fallthru
      _
    // Predicated region
    $region6: #{cyattn_forward.5} parent=1 // pred_check
      _
    $region7: #{cyattn_forward.5} parent=1 // pred_check_branch
      %17 = sbr.rel (0) target = $region9
    $region8: #{cyattn_forward.5} parent=1 // pred_region
      %19 = vsyncadd [#allocation3], 0
      %s21 = sshll.u32 %s1, 4
      %s22 = int_to_ptr.hbm [resolvable:$true] %s21
      %s23 = sshll.u32 [#allocation2], 4
      %s24 = int_to_ptr.vmem [resolvable:$true] %s23
      %26 = dma.hbm_to_vmem [thread:$0]  %s22, 16, %s24, [#allocation3]
    $region9: #{cyattn_forward.5} parent=1 // pred_fallthru
      _
    // Predicated region
    $region10: #{cyattn_forward.5} parent=1 // pred_check
      _
    $region11: #{cyattn_forward.5} parent=1 // pred_check_branch
      %28 = sbr.rel (0) target = $region13
    $region12: #{cyattn_forward.5} parent=1 // pred_region
      %30 = vsyncadd [#allocation5], 0
      %s32 = sshll.u32 %s2, 4
      %s33 = int_to_ptr.hbm [resolvable:$true] %s32
      %s34 = sshll.u32 [#allocation4], 4
      %s35 = int_to_ptr.vmem [resolvable:$true] %s34
      %37 = dma.hbm_to_vmem [thread:$0]  %s33, 16, %s35, [#allocation5]
    $region13: #{cyattn_forward.5} parent=1 // pred_fallthru
      _
    // Predicated region
    $region14: #{cyattn_forward.5} parent=1 // pred_check
      _
    $region15: #{cyattn_forward.5} parent=1 // pred_check_branch
      %39 = sbr.rel (0) target = $region17
    $region16: #{cyattn_forward.5} parent=1 // pred_region
      %41 = vsyncadd [#allocation5], 0
      %s42 = sshll.u32 %s3, 4
      %s43 = int_to_ptr.hbm [resolvable:$true] %s42
      %s44 = sshll.u32 [#allocation6], 4
      %s45 = int_to_ptr.vmem [resolvable:$true] %s44
      %50 = dma.hbm_to_vmem [thread:$0]  %s43, 128, %s45, [#allocation5], 64, 64, 4
    $region17: #{cyattn_forward.5} parent=1 // pred_fallthru
      _
    // Predicated region
    $region18: #{cyattn_forward.5} parent=1 // pred_check
      _
    $region19: #{cyattn_forward.5} parent=1 // pred_check_branch
      %52 = sbr.rel (0) target = $region21
    $region20: #{cyattn_forward.5} parent=1 // pred_region
      %54 = vsyncadd [#allocation8], 0
      %s56 = sshll.u32 %s4, 4
      %s57 = int_to_ptr.hbm [resolvable:$true] %s56
      %s58 = sshll.u32 [#allocation7], 4
      %s59 = int_to_ptr.vmem [resolvable:$true] %s58
      %61 = dma.hbm_to_vmem [thread:$0]  %s57, 16, %s59, [#allocation8]
    $region21: #{cyattn_forward.5} parent=1 // pred_fallthru
      _
    // Predicated region
    $region22: #{cyattn_forward.5} parent=1 // pred_check
      _
    $region23: #{cyattn_forward.5} parent=1 // pred_check_branch
      %63 = sbr.rel (0) target = $region25
    $region24: #{cyattn_forward.5} parent=1 // pred_region
      %65 = vsyncadd [#allocation8], 0
      %s66 = sshll.u32 %s5, 4
      %s67 = int_to_ptr.hbm [resolvable:$true] %s66
      %s68 = sshll.u32 [#allocation9], 4
      %s69 = int_to_ptr.vmem [resolvable:$true] %s68
      %74 = dma.hbm_to_vmem [thread:$0]  %s67, 768, %s69, [#allocation8], 128, 128, 8
    $region25: #{cyattn_forward.5} parent=1 // pred_fallthru
      _
    // Predicated region
    $region26: #{cyattn_forward.5} parent=1 // pred_check
      _
    $region27: #{cyattn_forward.5} parent=1 // pred_check_branch
      %76 = sbr.rel (0) target = $region29
    $region28: #{cyattn_forward.5} parent=1 // pred_region
      %78 = dma.done [#allocation3], 16
    $region29: #{cyattn_forward.5} parent=1 // pred_fallthru
      _
    // Predicated region
    $region30: #{cyattn_forward.5} parent=1 // pred_check
      _
    $region31: #{cyattn_forward.5} parent=1 // pred_check_branch
      %80 = sbr.rel (0) target = $region33
    $region32: #{cyattn_forward.5} parent=1 // pred_region
      %82 = dma.done [#allocation5], 16
    $region33: #{cyattn_forward.5} parent=1 // pred_fallthru
      _
    // Predicated region
    $region34: #{cyattn_forward.5} parent=1 // pred_check
      _
    $region35: #{cyattn_forward.5} parent=1 // pred_check_branch
      %84 = sbr.rel (0) target = $region37
    $region36: #{cyattn_forward.5} parent=1 // pred_region
      %86 = dma.done [#allocation5], 128
    $region37: #{cyattn_forward.5} parent=1 // pred_fallthru
      _
    // Predicated region
    $region38: #{cyattn_forward.5} parent=1 // pred_check
      _
    $region39: #{cyattn_forward.5} parent=1 // pred_check_branch
      %88 = sbr.rel (0) target = $region41
    $region40: #{cyattn_forward.5} parent=1 // pred_region
      %90 = dma.done [#allocation8], 16
    $region41: #{cyattn_forward.5} parent=1 // pred_fallthru
      _
    // Predicated region
    $region42: #{cyattn_forward.5} parent=1 // pred_check
      _
    $region43: #{cyattn_forward.5} parent=1 // pred_check_branch
      %92 = sbr.rel (0) target = $region45
    $region44: #{cyattn_forward.5} parent=1 // pred_region
      %94 = dma.done [#allocation8], 768
    $region45: #{cyattn_forward.5} parent=1 // pred_fallthru
      _
    %v96 = vld [vmem:[%s0] sm:$0xff]
    %v97 = vld [vmem:[%s0 + $0x8] sm:$0xff]
    %v98 = vld [vmem:[%s0 + $0x10] sm:$0xff]
    %v99 = vld [vmem:[%s0 + $0x18] sm:$0xff]
    %v100 = vld [vmem:[%s0 + $0x20] sm:$0xff]
    %v101 = vld [vmem:[%s0 + $0x28] sm:$0xff]
    %v102 = vld [vmem:[#allocation2] sm:$0x1]
    %v103 = vld [vmem:[#allocation4] sm:$0x1]
    %vm104 = vcmask 130048
    %v105 = vsel %vm104, %v96, 0.0
    %106 = vadd.xlane.f32.xlu0 %v105
    %v107 = vpop.xlane.xlu0 %106
    %v108 = vsel %vm104, %v97, 0.0
    %109 = vadd.xlane.f32.xlu0 %v108
    %v110 = vpop.xlane.xlu0 %109
    %v111 = vsel %vm104, %v98, 0.0
    %112 = vadd.xlane.f32.xlu0 %v111
    %v113 = vpop.xlane.xlu0 %112
    %v114 = vsel %vm104, %v99, 0.0
    %115 = vadd.xlane.f32.xlu0 %v114
    %v116 = vpop.xlane.xlu0 %115
    %v117 = vsel %vm104, %v100, 0.0
    %118 = vadd.xlane.f32.xlu0 %v117
    %v119 = vpop.xlane.xlu0 %118
    %v120 = vsel %vm104, %v101, 0.0
    %121 = vadd.xlane.f32.xlu0 %v120
    %v122 = vpop.xlane.xlu0 %121
    %v123 = vrcp.pop 16.0
    %v124 = vmul.f32 16.0, %v123
    %v125 = vsub.f32 1.0, %v124
    %v126 = vmul.f32 %v123, %v125
    %v127 = vadd.f32 %v123, %v126
    %vm128 = vweird.f32 %v123
    %v129 = vsel %vm128, %v123, %v127
    %v130 = vmul.f32 %v107, %v129
    %v131 = vmul.f32 %v110, %v129
    %v132 = vmul.f32 %v113, %v129
    %v133 = vmul.f32 %v116, %v129
    %v134 = vmul.f32 %v119, %v129
    %v135 = vmul.f32 %v122, %v129
    %v136 = vsub.f32 %v96, %v130
    %v137 = vsub.f32 %v97, %v131
    %v138 = vsub.f32 %v98, %v132
    %v139 = vsub.f32 %v99, %v133
    %v140 = vsub.f32 %v100, %v134
    %v141 = vsub.f32 %v101, %v135
    %v142 = vmul.f32 %v136, %v136
    %v143 = vmul.f32 %v137, %v137
    %v144 = vmul.f32 %v138, %v138
    %v145 = vmul.f32 %v139, %v139
    %v146 = vmul.f32 %v140, %v140
    %v147 = vmul.f32 %v141, %v141
    %v148 = vsel %vm104, %v142, 0.0
    %149 = vadd.xlane.f32.xlu0 %v148
    %v150 = vpop.xlane.xlu0 %149
    %v151 = vsel %vm104, %v143, 0.0
    %152 = vadd.xlane.f32.xlu0 %v151
    %v153 = vpop.xlane.xlu0 %152
    %v154 = vsel %vm104, %v144, 0.0
    %155 = vadd.xlane.f32.xlu0 %v154
    %v156 = vpop.xlane.xlu0 %155
    %v157 = vsel %vm104, %v145, 0.0
    %158 = vadd.xlane.f32.xlu0 %v157
    %v159 = vpop.xlane.xlu0 %158
    %v160 = vsel %vm104, %v146, 0.0
    %161 = vadd.xlane.f32.xlu0 %v160
    %v162 = vpop.xlane.xlu0 %161
    %v163 = vsel %vm104, %v147, 0.0
    %164 = vadd.xlane.f32.xlu0 %v163
    %v165 = vpop.xlane.xlu0 %164
    %v166 = vmul.f32 %v150, %v129
    %v167 = vmul.f32 %v153, %v129
    %v168 = vmul.f32 %v156, %v129
    %v169 = vmul.f32 %v159, %v129
    %v170 = vmul.f32 %v162, %v129
    %v171 = vmul.f32 %v165, %v129
    %v172 = vadd.f32 %v166, 1e-05
    %v173 = vadd.f32 %v167, 1e-05
    %v174 = vadd.f32 %v168, 1e-05
    %v175 = vadd.f32 %v169, 1e-05
    %v176 = vadd.f32 %v170, 1e-05
    %v177 = vadd.f32 %v171, 1e-05
    %v178 = vrsqrt.pop %v172
    %v179 = vmul.f32 %v178, %v172
    %v180 = vmul.f32 %v179, %v178
    %v181 = vmul.f32 0.5, %v180
    %v182 = vsub.f32 1.5, %v181
    %v183 = vmul.f32 %v178, %v182
    %vm184 = vweird.f32 %v172
    %vm185 = vweird.f32 %v178
    %vm186 = vmor %vm184, %vm185
    %v187 = vsel %vm186, %v178, %v183
    %v188 = vrsqrt.pop %v173
    %v189 = vmul.f32 %v188, %v173
    %v190 = vmul.f32 %v189, %v188
    %v191 = vmul.f32 0.5, %v190
    %v192 = vsub.f32 1.5, %v191
    %v193 = vmul.f32 %v188, %v192
    %vm194 = vweird.f32 %v173
    %vm195 = vweird.f32 %v188
    %vm196 = vmor %vm194, %vm195
    %v197 = vsel %vm196, %v188, %v193
    %v198 = vrsqrt.pop %v174
    %v199 = vmul.f32 %v198, %v174
    %v200 = vmul.f32 %v199, %v198
    %v201 = vmul.f32 0.5, %v200
    %v202 = vsub.f32 1.5, %v201
    %v203 = vmul.f32 %v198, %v202
    %vm204 = vweird.f32 %v174
    %vm205 = vweird.f32 %v198
    %vm206 = vmor %vm204, %vm205
    %v207 = vsel %vm206, %v198, %v203
    %v208 = vrsqrt.pop %v175
    %v209 = vmul.f32 %v208, %v175
    %v210 = vmul.f32 %v209, %v208
    %v211 = vmul.f32 0.5, %v210
    %v212 = vsub.f32 1.5, %v211
    %v213 = vmul.f32 %v208, %v212
    %vm214 = vweird.f32 %v175
    %vm215 = vweird.f32 %v208
    %vm216 = vmor %vm214, %vm215
    %v217 = vsel %vm216, %v208, %v213
    %v218 = vrsqrt.pop %v176
    %v219 = vmul.f32 %v218, %v176
    %v220 = vmul.f32 %v219, %v218
    %v221 = vmul.f32 0.5, %v220
    %v222 = vsub.f32 1.5, %v221
    %v223 = vmul.f32 %v218, %v222
    %vm224 = vweird.f32 %v176
    %vm225 = vweird.f32 %v218
    %vm226 = vmor %vm224, %vm225
    %v227 = vsel %vm226, %v218, %v223
    %v228 = vrsqrt.pop %v177
    %v229 = vmul.f32 %v228, %v177
    %v230 = vmul.f32 %v229, %v228
    %v231 = vmul.f32 0.5, %v230
    %v232 = vsub.f32 1.5, %v231
    %v233 = vmul.f32 %v228, %v232
    %vm234 = vweird.f32 %v177
    %vm235 = vweird.f32 %v228
    %vm236 = vmor %vm234, %vm235
    %v237 = vsel %vm236, %v228, %v233
    %v238 = vmul.f32 %v136, %v187
    %v239 = vmul.f32 %v137, %v197
    %v240 = vmul.f32 %v138, %v207
    %v241 = vmul.f32 %v139, %v217
    %v242 = vmul.f32 %v140, %v227
    %v243 = vmul.f32 %v141, %v237
    %v245 = vperm.slane %v102, 0
    %v247 = vmul.f32 %v238, %v245
    %v248 = vmul.f32 %v239, %v245
    %v249 = vmul.f32 %v240, %v245
    %v250 = vmul.f32 %v241, %v245
    %v251 = vmul.f32 %v242, %v245
    %v252 = vmul.f32 %v243, %v245
    %v254 = vperm.slane %v103, 0
    %v256 = vadd.f32 %v247, %v254
    %v257 = vadd.f32 %v248, %v254
    %v258 = vadd.f32 %v249, %v254
    %v259 = vadd.f32 %v250, %v254
    %v260 = vadd.f32 %v251, %v254
    %v261 = vadd.f32 %v252, %v254
    %v262 = vld [vmem:[#allocation6] sm:$0xf]
    %v263 = vld [vmem:[#allocation6 + $0x4] sm:$0xf]
    %v264 = vpack.c.bf16 %v257, %v256
    %v265 = vpack.c.bf16 %v259, %v258
    %v266 = vpack.c.bf16 %v261, %v260
    %v267 = vld [vmem:[#allocation7] sm:$0x1]
    %v269 = vperm.slane %v267, 0
    %v273 = vunpack.c.l.b16 %v262
    %v274 = vunpack.c.l.b16 %v263
    %v275 = vpack.c.b16 %v274, %v273
    %v278 = vsel %vm104, %v264, 0
    %v281 = vsel %vm104, %v265, 0
    %v284 = vsel %vm104, %v266, 0
    %286 = vmatpush.bf16.msra.mxu0 0
    %287 = vmatpush.bf16.msra.mxu0 0
    %288 = vmatpush.bf16.msra.mxu0 0
    %289 = vmatpush.bf16.msra.mxu0 0
    %290 = vmatpush.bf16.msra.mxu0 0
    %291 = vmatpush.bf16.msra.mxu0 0
    %292 = vmatpush.bf16.msra.mxu0 0
    %293 = vmatpush.bf16.msra.mxu0 %v275
    %294 = vmatmul.bf16.gmra.mxu0 %v278
    %v295 = vpop.f32.mrf.mxu0
    %v296 = vadd.f32 %v269, %v295
    %v297 = vpop.f32.mrf.mxu0
    %v298 = vadd.f32 %v269, %v297
    %299 = vmatmul.bf16.gmra.mxu0 %v281
    %v300 = vpop.f32.mrf.mxu0
    %v301 = vadd.f32 %v269, %v300
    %v302 = vpop.f32.mrf.mxu0
    %v303 = vadd.f32 %v269, %v302
    %304 = vmatmul.bf16.gmra.mxu0 %v284
    %v305 = vpop.f32.mrf.mxu0
    %v306 = vadd.f32 %v269, %v305
    %v307 = vpop.f32.mrf.mxu0
    %v308 = vadd.f32 %v269, %v307
    %309 = vdwg.mxu0
    %v310 = vld [vmem:[#allocation9] sm:$0xff]
    %v311 = vld [vmem:[#allocation9 + $0x8] sm:$0xff]
    %v312 = vld [vmem:[#allocation9 + $0x10] sm:$0xff]
    %v313 = vld [vmem:[#allocation9 + $0x18] sm:$0xff]
    %v314 = vld [vmem:[#allocation9 + $0x20] sm:$0xff]
    %v315 = vld [vmem:[#allocation9 + $0x28] sm:$0xff]
    %v316 = vadd.f32 %v296, %v310
    %v317 = vadd.f32 %v298, %v311
    %v318 = vadd.f32 %v301, %v312
    %v319 = vadd.f32 %v303, %v313
    %v320 = vadd.f32 %v306, %v314
    %v321 = vadd.f32 %v308, %v315
    %vm322 = vcmask 523264
    %323 = vst.msk [vmem:[%s6] sm:$0xff] %vm322, %v316
    %324 = vst.msk [vmem:[%s6 + $0x8] sm:$0xff] %vm322, %v317
    %325 = vst.msk [vmem:[%s6 + $0x10] sm:$0xff] %vm322, %v318
    %326 = vst.msk [vmem:[%s6 + $0x18] sm:$0xff] %vm322, %v319
    %327 = vst.msk [vmem:[%s6 + $0x20] sm:$0xff] %vm322, %v320
    %328 = vst.msk [vmem:[%s6 + $0x28] sm:$0xff] %vm322, %v321
    // Predicated region
    $region46: #{cyattn_forward.5} parent=1 // pred_check
      _
    $region47: #{cyattn_forward.5} parent=1 // pred_check_branch
      %330 = sbr.rel (0) target = $region49
    $region48: #{cyattn_forward.5} parent=1 // pred_region
      _
    $region49: #{cyattn_forward.5} parent=1 // pred_fallthru
      _
    // Predicated region
    $region50: #{cyattn_forward.5} parent=1 // pred_check
      _
    $region51: #{cyattn_forward.5} parent=1 // pred_check_branch
      %332 = sbr.rel (0) target = $region53
    $region52: #{cyattn_forward.5} parent=1 // pred_region
      _
    $region53: #{cyattn_forward.5} parent=1 // pred_fallthru
      _
    %333 = vsyncpa [#allocation3], 1
    %334 = vsyncpa [#allocation5], 1
    %335 = vsyncpa [#allocation8], 1

// kernel: cyattn_forward.6
$region0: #{cyattn_forward.6}
  #allocation0 [shape = 'u32[]', space=smem, size = 0x4, offset = 0x4, fixed_abs, tag = 'smem constant byte address 0x4 - core index']
  #allocation1 [shape = 'u32[72,128]{1,0:T(1,128)}', space=vmem, size = 0x9000, scoped, tag = 'internal scratch']
  %s0 = inlined_call_operand.vmem [shape: f32[16,64], index: 0, kind: input, shape index: {}]
  %s1 = inlined_call_operand.vmem [shape: bf16[2,64,192], index: 1, kind: input, shape index: {}]
  %s2 = inlined_call_operand.hbm [shape: f32[2,1,192], index: 2, kind: input, shape index: {}]
  %s3 = inlined_call_operand.hbm [shape: bf16[2,64,64], index: 3, kind: input, shape index: {}]
  %s4 = inlined_call_operand.hbm [shape: f32[2,1,64], index: 4, kind: input, shape index: {}]
  %s5 = inlined_call_operand.hbm [shape: f32[2,1,64], index: 5, kind: input, shape index: {}]
  %s6 = inlined_call_operand.hbm [shape: f32[2,1,64], index: 6, kind: input, shape index: {}]
  %s7 = inlined_call_operand.vmem [shape: bf16[2,64,256], index: 7, kind: input, shape index: {}]
  %s8 = inlined_call_operand.hbm [shape: f32[2,1,256], index: 8, kind: input, shape index: {}]
  %s9 = inlined_call_operand.vmem [shape: bf16[2,256,64], index: 9, kind: input, shape index: {}]
  %s10 = inlined_call_operand.hbm [shape: f32[2,1,64], index: 10, kind: input, shape index: {}]
  %s11 = inlined_call_operand.hbm [shape: f32[2,1,64], index: 11, kind: input, shape index: {}]
  %s12 = inlined_call_operand.hbm [shape: f32[2,1,64], index: 12, kind: input, shape index: {}]
  %s13 = inlined_call_operand.vmem [shape: f32[16,64], index: 13, kind: output, shape index: {0}]
  %s14 = inlined_call_operand.vmem [shape: bf16[16,64], index: 14, kind: output, shape index: {1}]
  %15 = xla_tuple %s13, %s14
  %s16 = sld [smem:[#allocation0]]
  $region137: #{cyattn_forward.6} parent=0
    _
  %s18 = ssub.s32 1, %s16
  %s19 = scalar_select 0, %s18, %s16
  $region1: #{cyattn_forward.6} parent=0
    #allocation2 [shape = 'u8[2048]{0}', space=vmem, size = 0x800, scoped, tag = 'input window, operand 2']
    #allocation3 [shape = 's32[2]{0}', space=sflag, size = 0x8, scoped, tag = 'scoped memory for cyattn_forward.6']
    #allocation4 [shape = 'u8[32768]{0}', space=vmem, size = 0x8000, scoped, tag = 'input window, operand 3']
    #allocation5 [shape = 's32[2]{0}', space=sflag, size = 0x8, scoped, tag = 'scoped memory for cyattn_forward.6']
    #allocation6 [shape = 'u8[1024]{0}', space=vmem, size = 0x400, scoped, tag = 'input window, operand 4']
    #allocation7 [shape = 'u8[1024]{0}', space=vmem, size = 0x400, scoped, tag = 'input window, operand 5']
    #allocation8 [shape = 's32[2]{0}', space=sflag, size = 0x8, scoped, tag = 'scoped memory for cyattn_forward.6']
    #allocation9 [shape = 'u8[1024]{0}', space=vmem, size = 0x400, scoped, tag = 'input window, operand 6']
    #allocation10 [shape = 'u8[2048]{0}', space=vmem, size = 0x800, scoped, tag = 'input window, operand 8']
    #allocation11 [shape = 's32[2]{0}', space=sflag, size = 0x8, scoped, tag = 'scoped memory for cyattn_forward.6']
    #allocation12 [shape = 'u8[1024]{0}', space=vmem, size = 0x400, scoped, tag = 'input window, operand 10']
    #allocation13 [shape = 'u8[1024]{0}', space=vmem, size = 0x400, scoped, tag = 'input window, operand 11']
    #allocation14 [shape = 's32[2]{0}', space=sflag, size = 0x8, scoped, tag = 'scoped memory for cyattn_forward.6']
    #allocation15 [shape = 'u8[1024]{0}', space=vmem, size = 0x400, scoped, tag = 'input window, operand 12']
    %20 = vsyncpa [#allocation3], 0
    %s21 = scalar_lea.sflag [#allocation3], 1
    %22 = vsyncpa %s21, 0
    %23 = vsyncpa [#allocation5], 0
    %s24 = scalar_lea.sflag [#allocation5], 1
    %25 = vsyncpa %s24, 0
    %26 = vsyncpa [#allocation8], 0
    %s27 = scalar_lea.sflag [#allocation8], 1
    %28 = vsyncpa %s27, 0
    %29 = vsyncpa [#allocation11], 0
    %s30 = scalar_lea.sflag [#allocation11], 1
    %31 = vsyncpa %s30, 0
    %32 = vsyncpa [#allocation14], 0
    %s33 = scalar_lea.sflag [#allocation14], 1
    %34 = vsyncpa %s33, 0
    loop: start=0, step=1, limit=4
    $region2: #{cyattn_forward.6} parent=1 // loop_pre_header
      _
    $region3: #{cyattn_forward.6} parent=1 // loop_header
      %s36 = sphi 0, %s40
      %p37 = scmp.ge.s32.totalorder %s36, 4
      %s44 = sphi 0, %s44
      %s46 = sphi 0, %s44
      %s47 = sphi 0, %s46
      %s61 = sphi 0, %s47
      %s67 = sphi 0, %s69
      %s70 = sphi 0, %s67
      %s71 = sphi 0, %s70
      %s87 = sphi 0, %s71
      %s93 = sphi 0, %s95
      %s96 = sphi 0, %s93
      %s97 = sphi 0, %s96
      %s113 = sphi 0, %s97
      %s119 = sphi 0, %s121
      %s122 = sphi 0, %s119
      %s123 = sphi 0, %s122
      %s139 = sphi 0, %s123
      %s145 = sphi 0, %s147
      %s148 = sphi 0, %s145
      %s149 = sphi 0, %s148
      %s165 = sphi 0, %s149
      %s171 = sphi 0, %s173
      %s174 = sphi 0, %s171
      %s175 = sphi 0, %s174
      %s191 = sphi 0, %s175
      %s197 = sphi 0, %s199
      %s200 = sphi 0, %s197
      %s201 = sphi 0, %s200
      %s217 = sphi 0, %s201
      %s223 = sphi 0, %s225
      %s226 = sphi 0, %s223
      %s227 = sphi 0, %s226
      %s243 = sphi 0, %s227
      %s249 = sphi 0, %s251
      %s252 = sphi 0, %s249
      %s253 = sphi 0, %s252
      %s269 = sphi 0, %s253
      %s275 = sphi 0, %s277
      %s278 = sphi 0, %s275
      %s279 = sphi 0, %s278
      %s295 = sphi 0, %s279
      %s301 = sphi 0, %s303
      %s304 = sphi 0, %s301
      %s305 = sphi 0, %s304
      %s321 = sphi 0, %s305
      %s327 = sphi 0, %s329
      %s330 = sphi 0, %s327
      %s331 = sphi 0, %s330
      %s347 = sphi 0, %s331
      %s353 = sphi 0, %s355
      %s356 = sphi 0, %s353
      %s357 = sphi 0, %s356
      %s373 = sphi 0, %s357
      %s377 = sphi 0, %s377
      %s379 = sphi 0, %s377
      %s380 = sphi 0, %s379
      %s394 = sphi 0, %s380
      %s398 = sphi 0, %s398
      %s400 = sphi 0, %s398
      %s401 = sphi 0, %s400
      %s415 = sphi 0, %s401
    $region4: #{cyattn_forward.6} parent=1 // loop_header_branch
      %39 = sbr.rel (%p37) target = $region8
    $region5: #{cyattn_forward.6} parent=1 // loop_body
      %s41 = ssub.s32 %s36, 1
      %s42 = ssub.s32 %s36, 2
      %s43 = sadd.s32 %s36, 1
      %s45 = sadd.s32 %s44, 1
      %p48 = scmp.eq.s32.totalorder %s36, 1
      %p49 = scmp.ne.s32.totalorder %s44, %s46
      %p50 = scmp.eq.s32.totalorder %s36, 0
      %p51 = por %p49, %p50
      %p52 = scmp.ne.s32.totalorder %s44, %s46
      %p53 = scmp.eq.s32.totalorder %s41, 1
      %p54 = por %p52, %p53
      %p55 = scmp.ne.s32.totalorder %s46, %s47
      %p56 = scmp.eq.s32.totalorder %s41, 0
      %p57 = por %p55, %p56
      %p58 = scmp.ne.s32.totalorder %s46, %s47
      %p59 = scmp.eq.s32.totalorder %s42, 1
      %p60 = por %p58, %p59
      %p62 = scmp.ne.s32.totalorder %s47, %s61
      %p63 = scmp.eq.s32.totalorder %s42, 0
      %p64 = por %p62, %p63
      %s65 = ssub.s32 %s36, %s43
      %p66 = scmp.eq.s32.totalorder %s65, 0
      %s68 = sadd.s32 %s67, 1
      %s69 = scalar_select %p66, %s67, %s68
      %p72 = pneg %p66
      %p73 = scmp.eq.s32.totalorder %s36, 1
      %p74 = por %p72, %p73
      %p75 = scmp.ne.s32.totalorder %s67, %s70
      %p76 = scmp.eq.s32.totalorder %s36, 0
      %p77 = por %p75, %p76
      %p78 = scmp.ne.s32.totalorder %s67, %s70
      %p79 = scmp.eq.s32.totalorder %s41, 1
      %p80 = por %p78, %p79
      %p81 = scmp.ne.s32.totalorder %s70, %s71
      %p82 = scmp.eq.s32.totalorder %s41, 0
      %p83 = por %p81, %p82
      %p84 = scmp.ne.s32.totalorder %s70, %s71
      %p85 = scmp.eq.s32.totalorder %s42, 1
      %p86 = por %p84, %p85
      %p88 = scmp.ne.s32.totalorder %s71, %s87
      %p89 = scmp.eq.s32.totalorder %s42, 0
      %p90 = por %p88, %p89
      %s91 = ssub.s32 %s36, %s43
      %p92 = scmp.eq.s32.totalorder %s91, 0
      %s94 = sadd.s32 %s93, 1
      %s95 = scalar_select %p92, %s93, %s94
      %p98 = pneg %p92
      %p99 = scmp.eq.s32.totalorder %s36, 1
      %p100 = por %p98, %p99
      %p101 = scmp.ne.s32.totalorder %s93, %s96
      %p102 = scmp.eq.s32.totalorder %s36, 0
      %p103 = por %p101, %p102
      %p104 = scmp.ne.s32.totalorder %s93, %s96
      %p105 = scmp.eq.s32.totalorder %s41, 1
      %p106 = por %p104, %p105
      %p107 = scmp.ne.s32.totalorder %s96, %s97
      %p108 = scmp.eq.s32.totalorder %s41, 0
      %p109 = por %p107, %p108
      %p110 = scmp.ne.s32.totalorder %s96, %s97
      %p111 = scmp.eq.s32.totalorder %s42, 1
      %p112 = por %p110, %p111
      %p114 = scmp.ne.s32.totalorder %s97, %s113
      %p115 = scmp.eq.s32.totalorder %s42, 0
      %p116 = por %p114, %p115
      %s117 = ssub.s32 %s36, %s43
      %p118 = scmp.eq.s32.totalorder %s117, 0
      %s120 = sadd.s32 %s119, 1
      %s121 = scalar_select %p118, %s119, %s120
      %p124 = pneg %p118
      %p125 = scmp.eq.s32.totalorder %s36, 1
      %p126 = por %p124, %p125
      %p127 = scmp.ne.s32.totalorder %s119, %s122
      %p128 = scmp.eq.s32.totalorder %s36, 0
      %p129 = por %p127, %p128
      %p130 = scmp.ne.s32.totalorder %s119, %s122
      %p131 = scmp.eq.s32.totalorder %s41, 1
      %p132 = por %p130, %p131
      %p133 = scmp.ne.s32.totalorder %s122, %s123
      %p134 = scmp.eq.s32.totalorder %s41, 0
      %p135 = por %p133, %p134
      %p136 = scmp.ne.s32.totalorder %s122, %s123
      %p137 = scmp.eq.s32.totalorder %s42, 1
      %p138 = por %p136, %p137
      %p140 = scmp.ne.s32.totalorder %s123, %s139
      %p141 = scmp.eq.s32.totalorder %s42, 0
      %p142 = por %p140, %p141
      %s143 = ssub.s32 %s36, %s43
      %p144 = scmp.eq.s32.totalorder %s143, 0
      %s146 = sadd.s32 %s145, 1
      %s147 = scalar_select %p144, %s145, %s146
      %p150 = pneg %p144
      %p151 = scmp.eq.s32.totalorder %s36, 1
      %p152 = por %p150, %p151
      %p153 = scmp.ne.s32.totalorder %s145, %s148
      %p154 = scmp.eq.s32.totalorder %s36, 0
      %p155 = por %p153, %p154
      %p156 = scmp.ne.s32.totalorder %s145, %s148
      %p157 = scmp.eq.s32.totalorder %s41, 1
      %p158 = por %p156, %p157
      %p159 = scmp.ne.s32.totalorder %s148, %s149
      %p160 = scmp.eq.s32.totalorder %s41, 0
      %p161 = por %p159, %p160
      %p162 = scmp.ne.s32.totalorder %s148, %s149
      %p163 = scmp.eq.s32.totalorder %s42, 1
      %p164 = por %p162, %p163
      %p166 = scmp.ne.s32.totalorder %s149, %s165
      %p167 = scmp.eq.s32.totalorder %s42, 0
      %p168 = por %p166, %p167
      %s169 = ssub.s32 %s36, %s43
      %p170 = scmp.eq.s32.totalorder %s169, 0
      %s172 = sadd.s32 %s171, 1
      %s173 = scalar_select %p170, %s171, %s172
      %p176 = pneg %p170
      %p177 = scmp.eq.s32.totalorder %s36, 1
      %p178 = por %p176, %p177
      %p179 = scmp.ne.s32.totalorder %s171, %s174
      %p180 = scmp.eq.s32.totalorder %s36, 0
      %p181 = por %p179, %p180
      %p182 = scmp.ne.s32.totalorder %s171, %s174
      %p183 = scmp.eq.s32.totalorder %s41, 1
      %p184 = por %p182, %p183
      %p185 = scmp.ne.s32.totalorder %s174, %s175
      %p186 = scmp.eq.s32.totalorder %s41, 0
      %p187 = por %p185, %p186
      %p188 = scmp.ne.s32.totalorder %s174, %s175
      %p189 = scmp.eq.s32.totalorder %s42, 1
      %p190 = por %p188, %p189
      %p192 = scmp.ne.s32.totalorder %s175, %s191
      %p193 = scmp.eq.s32.totalorder %s42, 0
      %p194 = por %p192, %p193
      %s195 = ssub.s32 %s36, %s43
      %p196 = scmp.eq.s32.totalorder %s195, 0
      %s198 = sadd.s32 %s197, 1
      %s199 = scalar_select %p196, %s197, %s198
      %p202 = pneg %p196
      %p203 = scmp.eq.s32.totalorder %s36, 1
      %p204 = por %p202, %p203
      %p205 = scmp.ne.s32.totalorder %s197, %s200
      %p206 = scmp.eq.s32.totalorder %s36, 0
      %p207 = por %p205, %p206
      %p208 = scmp.ne.s32.totalorder %s197, %s200
      %p209 = scmp.eq.s32.totalorder %s41, 1
      %p210 = por %p208, %p209
      %p211 = scmp.ne.s32.totalorder %s200, %s201
      %p212 = scmp.eq.s32.totalorder %s41, 0
      %p213 = por %p211, %p212
      %p214 = scmp.ne.s32.totalorder %s200, %s201
      %p215 = scmp.eq.s32.totalorder %s42, 1
      %p216 = por %p214, %p215
      %p218 = scmp.ne.s32.totalorder %s201, %s217
      %p219 = scmp.eq.s32.totalorder %s42, 0
      %p220 = por %p218, %p219
      %s221 = ssub.s32 %s36, %s43
      %p222 = scmp.eq.s32.totalorder %s221, 0
      %s224 = sadd.s32 %s223, 1
      %s225 = scalar_select %p222, %s223, %s224
      %p228 = pneg %p222
      %p229 = scmp.eq.s32.totalorder %s36, 1
      %p230 = por %p228, %p229
      %p231 = scmp.ne.s32.totalorder %s223, %s226
      %p232 = scmp.eq.s32.totalorder %s36, 0
      %p233 = por %p231, %p232
      %p234 = scmp.ne.s32.totalorder %s223, %s226
      %p235 = scmp.eq.s32.totalorder %s41, 1
      %p236 = por %p234, %p235
      %p237 = scmp.ne.s32.totalorder %s226, %s227
      %p238 = scmp.eq.s32.totalorder %s41, 0
      %p239 = por %p237, %p238
      %p240 = scmp.ne.s32.totalorder %s226, %s227
      %p241 = scmp.eq.s32.totalorder %s42, 1
      %p242 = por %p240, %p241
      %p244 = scmp.ne.s32.totalorder %s227, %s243
      %p245 = scmp.eq.s32.totalorder %s42, 0
      %p246 = por %p244, %p245
      %s247 = ssub.s32 %s36, %s43
      %p248 = scmp.eq.s32.totalorder %s247, 0
      %s250 = sadd.s32 %s249, 1
      %s251 = scalar_select %p248, %s249, %s250
      %p254 = pneg %p248
      %p255 = scmp.eq.s32.totalorder %s36, 1
      %p256 = por %p254, %p255
      %p257 = scmp.ne.s32.totalorder %s249, %s252
      %p258 = scmp.eq.s32.totalorder %s36, 0
      %p259 = por %p257, %p258
      %p260 = scmp.ne.s32.totalorder %s249, %s252
      %p261 = scmp.eq.s32.totalorder %s41, 1
      %p262 = por %p260, %p261
      %p263 = scmp.ne.s32.totalorder %s252, %s253
      %p264 = scmp.eq.s32.totalorder %s41, 0
      %p265 = por %p263, %p264
      %p266 = scmp.ne.s32.totalorder %s252, %s253
      %p267 = scmp.eq.s32.totalorder %s42, 1
      %p268 = por %p266, %p267
      %p270 = scmp.ne.s32.totalorder %s253, %s269
      %p271 = scmp.eq.s32.totalorder %s42, 0
      %p272 = por %p270, %p271
      %s273 = ssub.s32 %s36, %s43
      %p274 = scmp.eq.s32.totalorder %s273, 0
      %s276 = sadd.s32 %s275, 1
      %s277 = scalar_select %p274, %s275, %s276
      %p280 = pneg %p274
      %p281 = scmp.eq.s32.totalorder %s36, 1
      %p282 = por %p280, %p281
      %p283 = scmp.ne.s32.totalorder %s275, %s278
      %p284 = scmp.eq.s32.totalorder %s36, 0
      %p285 = por %p283, %p284
      %p286 = scmp.ne.s32.totalorder %s275, %s278
      %p287 = scmp.eq.s32.totalorder %s41, 1
      %p288 = por %p286, %p287
      %p289 = scmp.ne.s32.totalorder %s278, %s279
      %p290 = scmp.eq.s32.totalorder %s41, 0
      %p291 = por %p289, %p290
      %p292 = scmp.ne.s32.totalorder %s278, %s279
      %p293 = scmp.eq.s32.totalorder %s42, 1
      %p294 = por %p292, %p293
      %p296 = scmp.ne.s32.totalorder %s279, %s295
      %p297 = scmp.eq.s32.totalorder %s42, 0
      %p298 = por %p296, %p297
      %s299 = ssub.s32 %s36, %s43
      %p300 = scmp.eq.s32.totalorder %s299, 0
      %s302 = sadd.s32 %s301, 1
      %s303 = scalar_select %p300, %s301, %s302
      %p306 = pneg %p300
      %p307 = scmp.eq.s32.totalorder %s36, 1
      %p308 = por %p306, %p307
      %p309 = scmp.ne.s32.totalorder %s301, %s304
      %p310 = scmp.eq.s32.totalorder %s36, 0
      %p311 = por %p309, %p310
      %p312 = scmp.ne.s32.totalorder %s301, %s304
      %p313 = scmp.eq.s32.totalorder %s41, 1
      %p314 = por %p312, %p313
      %p315 = scmp.ne.s32.totalorder %s304, %s305
      %p316 = scmp.eq.s32.totalorder %s41, 0
      %p317 = por %p315, %p316
      %p318 = scmp.ne.s32.totalorder %s304, %s305
      %p319 = scmp.eq.s32.totalorder %s42, 1
      %p320 = por %p318, %p319
      %p322 = scmp.ne.s32.totalorder %s305, %s321
      %p323 = scmp.eq.s32.totalorder %s42, 0
      %p324 = por %p322, %p323
      %s325 = ssub.s32 %s36, %s43
      %p326 = scmp.eq.s32.totalorder %s325, 0
      %s328 = sadd.s32 %s327, 1
      %s329 = scalar_select %p326, %s327, %s328
      %p332 = pneg %p326
      %p333 = scmp.eq.s32.totalorder %s36, 1
      %p334 = por %p332, %p333
      %p335 = scmp.ne.s32.totalorder %s327, %s330
      %p336 = scmp.eq.s32.totalorder %s36, 0
      %p337 = por %p335, %p336
      %p338 = scmp.ne.s32.totalorder %s327, %s330
      %p339 = scmp.eq.s32.totalorder %s41, 1
      %p340 = por %p338, %p339
      %p341 = scmp.ne.s32.totalorder %s330, %s331
      %p342 = scmp.eq.s32.totalorder %s41, 0
      %p343 = por %p341, %p342
      %p344 = scmp.ne.s32.totalorder %s330, %s331
      %p345 = scmp.eq.s32.totalorder %s42, 1
      %p346 = por %p344, %p345
      %p348 = scmp.ne.s32.totalorder %s331, %s347
      %p349 = scmp.eq.s32.totalorder %s42, 0
      %p350 = por %p348, %p349
      %s351 = ssub.s32 %s36, %s43
      %p352 = scmp.eq.s32.totalorder %s351, 0
      %s354 = sadd.s32 %s353, 1
      %s355 = scalar_select %p352, %s353, %s354
      %p358 = pneg %p352
      %p359 = scmp.eq.s32.totalorder %s36, 1
      %p360 = por %p358, %p359
      %p361 = scmp.ne.s32.totalorder %s353, %s356
      %p362 = scmp.eq.s32.totalorder %s36, 0
      %p363 = por %p361, %p362
      %p364 = scmp.ne.s32.totalorder %s353, %s356
      %p365 = scmp.eq.s32.totalorder %s41, 1
      %p366 = por %p364, %p365
      %p367 = scmp.ne.s32.totalorder %s356, %s357
      %p368 = scmp.eq.s32.totalorder %s41, 0
      %p369 = por %p367, %p368
      %p370 = scmp.ne.s32.totalorder %s356, %s357
      %p371 = scmp.eq.s32.totalorder %s42, 1
      %p372 = por %p370, %p371
      %p374 = scmp.ne.s32.totalorder %s357, %s373
      %p375 = scmp.eq.s32.totalorder %s42, 0
      %p376 = por %p374, %p375
      %s378 = sadd.s32 %s377, 1
      %p381 = scmp.eq.s32.totalorder %s36, 1
      %p382 = scmp.ne.s32.totalorder %s377, %s379
      %p383 = scmp.eq.s32.totalorder %s36, 0
      %p384 = por %p382, %p383
      %p385 = scmp.ne.s32.totalorder %s377, %s379
      %p386 = scmp.eq.s32.totalorder %s41, 1
      %p387 = por %p385, %p386
      %p388 = scmp.ne.s32.totalorder %s379, %s380
      %p389 = scmp.eq.s32.totalorder %s41, 0
      %p390 = por %p388, %p389
      %p391 = scmp.ne.s32.totalorder %s379, %s380
      %p392 = scmp.eq.s32.totalorder %s42, 1
      %p393 = por %p391, %p392
      %p395 = scmp.ne.s32.totalorder %s380, %s394
      %p396 = scmp.eq.s32.totalorder %s42, 0
      %p397 = por %p395, %p396
      %s399 = sadd.s32 %s398, 1
      %p402 = scmp.eq.s32.totalorder %s36, 1
      %p403 = scmp.ne.s32.totalorder %s398, %s400
      %p404 = scmp.eq.s32.totalorder %s36, 0
      %p405 = por %p403, %p404
      %p406 = scmp.ne.s32.totalorder %s398, %s400
      %p407 = scmp.eq.s32.totalorder %s41, 1
      %p408 = por %p406, %p407
      %p409 = scmp.ne.s32.totalorder %s400, %s401
      %p410 = scmp.eq.s32.totalorder %s41, 0
      %p411 = por %p409, %p410
      %p412 = scmp.ne.s32.totalorder %s400, %s401
      %p413 = scmp.eq.s32.totalorder %s42, 1
      %p414 = por %p412, %p413
      %p416 = scmp.ne.s32.totalorder %s401, %s415
      %p417 = scmp.eq.s32.totalorder %s42, 0
      %p418 = por %p416, %p417
      %p419 = scmp.le.s32.totalorder 1, %s36
      %p420 = scmp.lt.s32.totalorder %s36, 3
      %p421 = pnand %p419, %p420
      %p422 = pneg %p421
      // Predicated region
      $region9: #{cyattn_forward.6} parent=5 // pred_check
        _
      $region10: #{cyattn_forward.6} parent=5 // pred_check_branch
        %424 = sbr.rel (%p421) target = $region12
      $region11: #{cyattn_forward.6} parent=5 // pred_region
        %s425 = ssub.s32 %s36, 1
        // Predicated region
        $region13: #{cyattn_forward.6} parent=11 // pred_check
          %p426 = pneg %p57
        $region14: #{cyattn_forward.6} parent=11 // pred_check_branch
          %428 = sbr.rel (%p426) target = $region16
        $region15: #{cyattn_forward.6} parent=11 // pred_region
          _
        $region16: #{cyattn_forward.6} parent=11 // pred_fallthru
          _
      $region12: #{cyattn_forward.6} parent=5 // pred_fallthru
        _
      %p429 = scmp.lt.s32.totalorder %s36, 2
      // Predicated region
      $region17: #{cyattn_forward.6} parent=5 // pred_check
        %p430 = pneg %p429
      $region18: #{cyattn_forward.6} parent=5 // pred_check_branch
        %432 = sbr.rel (%p430) target = $region20
      $region19: #{cyattn_forward.6} parent=5 // pred_region
        // Predicated region
        $region21: #{cyattn_forward.6} parent=19 // pred_check
          %p433 = pneg %p77
        $region22: #{cyattn_forward.6} parent=19 // pred_check_branch
          %435 = sbr.rel (%p433) target = $region24
        $region23: #{cyattn_forward.6} parent=19 // pred_region
          %p436 = scmp.lt.s32.totalorder %s36, 1
          %s437 = scalar_select %p436, %s36, 1
          %s438 = smul.addr %s437, 16
          %s439 = smul.addr %s438, 4
          %s440 = scalar_lea.vmem %s1, %s439
        $region24: #{cyattn_forward.6} parent=19 // pred_fallthru
          _
        // Predicated region
        $region25: #{cyattn_forward.6} parent=19 // pred_check
          %p441 = pneg %p103
        $region26: #{cyattn_forward.6} parent=19 // pred_check_branch
          %443 = sbr.rel (%p441) target = $region28
        $region27: #{cyattn_forward.6} parent=19 // pred_region
          %s444 = sand.u32 %s93, 1
          %s445 = scalar_lea.sflag [#allocation3], %s444
          %s446 = sand.u32 %s93, 1
          %s447 = smul.addr %s446, 2
          %s448 = scalar_lea.vmem [#allocation2], %s447
          %450 = vsyncadd %s445, 0
          %s451 = smul.addr %s36, 2
          %s452 = scalar_lea.hbm %s2, %s451
          %s454 = sshll.u32 %s452, 4
          %s455 = int_to_ptr.hbm [resolvable:$true] %s454
          %s456 = sshll.u32 %s448, 4
          %s457 = int_to_ptr.vmem [resolvable:$true] %s456
          %459 = dma.hbm_to_vmem [thread:$0]  %s455, 32, %s457, %s445
        $region28: #{cyattn_forward.6} parent=19 // pred_fallthru
          _
        // Predicated region
        $region29: #{cyattn_forward.6} parent=19 // pred_check
          %p460 = pneg %p129
        $region30: #{cyattn_forward.6} parent=19 // pred_check_branch
          %462 = sbr.rel (%p460) target = $region32
        $region31: #{cyattn_forward.6} parent=19 // pred_region
          %s463 = sand.u32 %s36, 1
          %s464 = scalar_lea.sflag [#allocation5], %s463
          %s465 = sand.u32 %s119, 1
          %s466 = smul.addr %s465, 32
          %s467 = scalar_lea.vmem [#allocation4], %s466
          %469 = vsyncadd %s464, 0
          %s470 = smul.addr %s36, 8
          %s471 = smul.addr %s470, 4
          %s472 = scalar_lea.hbm %s3, %s471
          %s473 = sshll.u32 %s472, 4
          %s474 = int_to_ptr.hbm [resolvable:$true] %s473
          %s475 = sshll.u32 %s467, 4
          %s476 = int_to_ptr.vmem [resolvable:$true] %s475
          %481 = dma.hbm_to_vmem [thread:$0]  %s474, 512, %s476, %s464, 64, 64, 4
        $region32: #{cyattn_forward.6} parent=19 // pred_fallthru
          _
        // Predicated region
        $region33: #{cyattn_forward.6} parent=19 // pred_check
          %p482 = pneg %p155
        $region34: #{cyattn_forward.6} parent=19 // pred_check_branch
          %484 = sbr.rel (%p482) target = $region36
        $region35: #{cyattn_forward.6} parent=19 // pred_region
          %s485 = sand.u32 %s36, 1
          %s486 = scalar_lea.sflag [#allocation5], %s485
          %s487 = sand.u32 %s145, 1
          %s488 = scalar_lea.vmem [#allocation6], %s487
          %490 = vsyncadd %s486, 0
          %s491 = scalar_lea.hbm %s4, %s36
          %s493 = sshll.u32 %s491, 4
          %s494 = int_to_ptr.hbm [resolvable:$true] %s493
          %s495 = sshll.u32 %s488, 4
          %s496 = int_to_ptr.vmem [resolvable:$true] %s495
          %498 = dma.hbm_to_vmem [thread:$0]  %s494, 16, %s496, %s486
        $region36: #{cyattn_forward.6} parent=19 // pred_fallthru
          _
        // Predicated region
        $region37: #{cyattn_forward.6} parent=19 // pred_check
          %p499 = pneg %p181
        $region38: #{cyattn_forward.6} parent=19 // pred_check_branch
          %501 = sbr.rel (%p499) target = $region40
        $region39: #{cyattn_forward.6} parent=19 // pred_region
          %s502 = sand.u32 %s36, 1
          %s503 = scalar_lea.sflag [#allocation8], %s502
          %s504 = sand.u32 %s171, 1
          %s505 = scalar_lea.vmem [#allocation7], %s504
          %507 = vsyncadd %s503, 0
          %s508 = scalar_lea.hbm %s5, %s36
          %s510 = sshll.u32 %s508, 4
          %s511 = int_to_ptr.hbm [resolvable:$true] %s510
          %s512 = sshll.u32 %s505, 4
          %s513 = int_to_ptr.vmem [resolvable:$true] %s512
          %515 = dma.hbm_to_vmem [thread:$0]  %s511, 16, %s513, %s503
        $region40: #{cyattn_forward.6} parent=19 // pred_fallthru
          _
        // Predicated region
        $region41: #{cyattn_forward.6} parent=19 // pred_check
          %p516 = pneg %p207
        $region42: #{cyattn_forward.6} parent=19 // pred_check_branch
          %518 = sbr.rel (%p516) target = $region44
        $region43: #{cyattn_forward.6} parent=19 // pred_region
          %s519 = sand.u32 %s36, 1
          %s520 = scalar_lea.sflag [#allocation8], %s519
          %s521 = sand.u32 %s197, 1
          %s522 = scalar_lea.vmem [#allocation9], %s521
          %524 = vsyncadd %s520, 0
          %s525 = scalar_lea.hbm %s6, %s36
          %s527 = sshll.u32 %s525, 4
          %s528 = int_to_ptr.hbm [resolvable:$true] %s527
          %s529 = sshll.u32 %s522, 4
          %s530 = int_to_ptr.vmem [resolvable:$true] %s529
          %532 = dma.hbm_to_vmem [thread:$0]  %s528, 16, %s530, %s520
        $region44: #{cyattn_forward.6} parent=19 // pred_fallthru
          _
        // Predicated region
        $region45: #{cyattn_forward.6} parent=19 // pred_check
          %p533 = pneg %p233
        $region46: #{cyattn_forward.6} parent=19 // pred_check_branch
          %535 = sbr.rel (%p533) target = $region48
        $region47: #{cyattn_forward.6} parent=19 // pred_region
          %p536 = scmp.lt.s32.totalorder %s36, 1
          %s537 = scalar_select %p536, %s36, 1
          %s538 = smul.addr %s537, 16
          %s539 = smul.addr %s538, 4
          %s540 = scalar_lea.vmem %s7, %s539
        $region48: #{cyattn_forward.6} parent=19 // pred_fallthru
          _
        // Predicated region
        $region49: #{cyattn_forward.6} parent=19 // pred_check
          %p541 = pneg %p259
        $region50: #{cyattn_forward.6} parent=19 // pred_check_branch
          %543 = sbr.rel (%p541) target = $region52
        $region51: #{cyattn_forward.6} parent=19 // pred_region
          %s544 = sand.u32 %s36, 1
          %s545 = scalar_lea.sflag [#allocation11], %s544
          %s546 = sand.u32 %s249, 1
          %s547 = smul.addr %s546, 2
          %s548 = scalar_lea.vmem [#allocation10], %s547
          %550 = vsyncadd %s545, 0
          %s551 = smul.addr %s36, 2
          %s552 = scalar_lea.hbm %s8, %s551
          %s554 = sshll.u32 %s552, 4
          %s555 = int_to_ptr.hbm [resolvable:$true] %s554
          %s556 = sshll.u32 %s548, 4
          %s557 = int_to_ptr.vmem [resolvable:$true] %s556
          %559 = dma.hbm_to_vmem [thread:$0]  %s555, 32, %s557, %s545
        $region52: #{cyattn_forward.6} parent=19 // pred_fallthru
          _
        // Predicated region
        $region53: #{cyattn_forward.6} parent=19 // pred_check
          %p560 = pneg %p285
        $region54: #{cyattn_forward.6} parent=19 // pred_check_branch
          %562 = sbr.rel (%p560) target = $region56
        $region55: #{cyattn_forward.6} parent=19 // pred_region
          %p563 = scmp.lt.s32.totalorder %s36, 1
          %s564 = scalar_select %p563, %s36, 1
          %s565 = smul.addr %s564, 32
          %s566 = smul.addr %s565, 4
          %s567 = scalar_lea.vmem %s9, %s566
        $region56: #{cyattn_forward.6} parent=19 // pred_fallthru
          _
        // Predicated region
        $region57: #{cyattn_forward.6} parent=19 // pred_check
          %p568 = pneg %p311
        $region58: #{cyattn_forward.6} parent=19 // pred_check_branch
          %570 = sbr.rel (%p568) target = $region60
        $region59: #{cyattn_forward.6} parent=19 // pred_region
          %s571 = sand.u32 %s36, 1
          %s572 = scalar_lea.sflag [#allocation11], %s571
          %s573 = sand.u32 %s301, 1
          %s574 = scalar_lea.vmem [#allocation12], %s573
          %576 = vsyncadd %s572, 0
          %s577 = scalar_lea.hbm %s10, %s36
          %s579 = sshll.u32 %s577, 4
          %s580 = int_to_ptr.hbm [resolvable:$true] %s579
          %s581 = sshll.u32 %s574, 4
          %s582 = int_to_ptr.vmem [resolvable:$true] %s581
          %584 = dma.hbm_to_vmem [thread:$0]  %s580, 16, %s582, %s572
        $region60: #{cyattn_forward.6} parent=19 // pred_fallthru
          _
        // Predicated region
        $region61: #{cyattn_forward.6} parent=19 // pred_check
          %p585 = pneg %p337
        $region62: #{cyattn_forward.6} parent=19 // pred_check_branch
          %587 = sbr.rel (%p585) target = $region64
        $region63: #{cyattn_forward.6} parent=19 // pred_region
          %s588 = sand.u32 %s36, 1
          %s589 = scalar_lea.sflag [#allocation14], %s588
          %s590 = sand.u32 %s327, 1
          %s591 = scalar_lea.vmem [#allocation13], %s590
          %593 = vsyncadd %s589, 0
          %s594 = scalar_lea.hbm %s11, %s36
          %s596 = sshll.u32 %s594, 4
          %s597 = int_to_ptr.hbm [resolvable:$true] %s596
          %s598 = sshll.u32 %s591, 4
          %s599 = int_to_ptr.vmem [resolvable:$true] %s598
          %601 = dma.hbm_to_vmem [thread:$0]  %s597, 16, %s599, %s589
        $region64: #{cyattn_forward.6} parent=19 // pred_fallthru
          _
        // Predicated region
        $region65: #{cyattn_forward.6} parent=19 // pred_check
          %p602 = pneg %p363
        $region66: #{cyattn_forward.6} parent=19 // pred_check_branch
          %604 = sbr.rel (%p602) target = $region68
        $region67: #{cyattn_forward.6} parent=19 // pred_region
          %s605 = sand.u32 %s36, 1
          %s606 = scalar_lea.sflag [#allocation14], %s605
          %s607 = sand.u32 %s353, 1
          %s608 = scalar_lea.vmem [#allocation15], %s607
          %610 = vsyncadd %s606, 0
          %s611 = scalar_lea.hbm %s12, %s36
          %s613 = sshll.u32 %s611, 4
          %s614 = int_to_ptr.hbm [resolvable:$true] %s613
          %s615 = sshll.u32 %s608, 4
          %s616 = int_to_ptr.vmem [resolvable:$true] %s615
          %618 = dma.hbm_to_vmem [thread:$0]  %s614, 16, %s616, %s606
        $region68: #{cyattn_forward.6} parent=19 // pred_fallthru
          _
      $region20: #{cyattn_forward.6} parent=5 // pred_fallthru
        _
      %p619 = scmp.le.s32.totalorder 1, %s36
      %p620 = scmp.lt.s32.totalorder %s36, 3
      %p621 = pnand %p619, %p620
      %p622 = pneg %p621
      // Predicated region
      $region69: #{cyattn_forward.6} parent=5 // pred_check
        _
      $region70: #{cyattn_forward.6} parent=5 // pred_check_branch
        %624 = sbr.rel (%p621) target = $region72
      $region71: #{cyattn_forward.6} parent=5 // pred_region
        %s625 = ssub.s32 %s36, 1
        %s626 = sand.u32 %s96, 1
        %s627 = scalar_lea.sflag [#allocation3], %s626
        %s628 = sand.u32 %s96, 1
        %s629 = smul.addr %s628, 2
        %s630 = scalar_lea.vmem [#allocation2], %s629
        // Predicated region
        $region73: #{cyattn_forward.6} parent=71 // pred_check
          %p631 = pneg %p109
        $region74: #{cyattn_forward.6} parent=71 // pred_check_branch
          %633 = sbr.rel (%p631) target = $region76
        $region75: #{cyattn_forward.6} parent=71 // pred_region
          %635 = dma.done %s627, 32
        $region76: #{cyattn_forward.6} parent=71 // pred_fallthru
          _
        %s636 = sand.u32 %s41, 1
        %s637 = scalar_lea.sflag [#allocation5], %s636
        %s638 = sand.u32 %s122, 1
        %s639 = smul.addr %s638, 32
        %s640 = scalar_lea.vmem [#allocation4], %s639
        // Predicated region
        $region77: #{cyattn_forward.6} parent=71 // pred_check
          %p641 = pneg %p135
        $region78: #{cyattn_forward.6} parent=71 // pred_check_branch
          %643 = sbr.rel (%p641) target = $region80
        $region79: #{cyattn_forward.6} parent=71 // pred_region
          %645 = dma.done %s637, 512
        $region80: #{cyattn_forward.6} parent=71 // pred_fallthru
          _
        %s646 = sand.u32 %s41, 1
        %s647 = scalar_lea.sflag [#allocation5], %s646
        %s648 = sand.u32 %s148, 1
        %s649 = scalar_lea.vmem [#allocation6], %s648
        // Predicated region
        $region81: #{cyattn_forward.6} parent=71 // pred_check
          %p650 = pneg %p161
        $region82: #{cyattn_forward.6} parent=71 // pred_check_branch
          %652 = sbr.rel (%p650) target = $region84
        $region83: #{cyattn_forward.6} parent=71 // pred_region
          %654 = dma.done %s647, 16
        $region84: #{cyattn_forward.6} parent=71 // pred_fallthru
          _
        %s655 = sand.u32 %s41, 1
        %s656 = scalar_lea.sflag [#allocation8], %s655
        %s657 = sand.u32 %s174, 1
        %s658 = scalar_lea.vmem [#allocation7], %s657
        // Predicated region
        $region85: #{cyattn_forward.6} parent=71 // pred_check
          %p659 = pneg %p187
        $region86: #{cyattn_forward.6} parent=71 // pred_check_branch
          %661 = sbr.rel (%p659) target = $region88
        $region87: #{cyattn_forward.6} parent=71 // pred_region
          %663 = dma.done %s656, 16
        $region88: #{cyattn_forward.6} parent=71 // pred_fallthru
          _
        %s664 = sand.u32 %s41, 1
        %s665 = scalar_lea.sflag [#allocation8], %s664
        %s666 = sand.u32 %s200, 1
        %s667 = scalar_lea.vmem [#allocation9], %s666
        // Predicated region
        $region89: #{cyattn_forward.6} parent=71 // pred_check
          %p668 = pneg %p213
        $region90: #{cyattn_forward.6} parent=71 // pred_check_branch
          %670 = sbr.rel (%p668) target = $region92
        $region91: #{cyattn_forward.6} parent=71 // pred_region
          %672 = dma.done %s665, 16
        $region92: #{cyattn_forward.6} parent=71 // pred_fallthru
          _
        %s673 = sand.u32 %s41, 1
        %s674 = scalar_lea.sflag [#allocation11], %s673
        %s675 = sand.u32 %s252, 1
        %s676 = smul.addr %s675, 2
        %s677 = scalar_lea.vmem [#allocation10], %s676
        // Predicated region
        $region93: #{cyattn_forward.6} parent=71 // pred_check
          %p678 = pneg %p265
        $region94: #{cyattn_forward.6} parent=71 // pred_check_branch
          %680 = sbr.rel (%p678) target = $region96
        $region95: #{cyattn_forward.6} parent=71 // pred_region
          %682 = dma.done %s674, 32
        $region96: #{cyattn_forward.6} parent=71 // pred_fallthru
          _
        %s683 = sand.u32 %s41, 1
        %s684 = scalar_lea.sflag [#allocation11], %s683
        %s685 = sand.u32 %s304, 1
        %s686 = scalar_lea.vmem [#allocation12], %s685
        // Predicated region
        $region97: #{cyattn_forward.6} parent=71 // pred_check
          %p687 = pneg %p317
        $region98: #{cyattn_forward.6} parent=71 // pred_check_branch
          %689 = sbr.rel (%p687) target = $region100
        $region99: #{cyattn_forward.6} parent=71 // pred_region
          %691 = dma.done %s684, 16
        $region100: #{cyattn_forward.6} parent=71 // pred_fallthru
          _
        %s692 = sand.u32 %s41, 1
        %s693 = scalar_lea.sflag [#allocation14], %s692
        %s694 = sand.u32 %s330, 1
        %s695 = scalar_lea.vmem [#allocation13], %s694
        // Predicated region
        $region101: #{cyattn_forward.6} parent=71 // pred_check
          %p696 = pneg %p343
        $region102: #{cyattn_forward.6} parent=71 // pred_check_branch
          %698 = sbr.rel (%p696) target = $region104
        $region103: #{cyattn_forward.6} parent=71 // pred_region
          %700 = dma.done %s693, 16
        $region104: #{cyattn_forward.6} parent=71 // pred_fallthru
          _
        %s701 = sand.u32 %s41, 1
        %s702 = scalar_lea.sflag [#allocation14], %s701
        %s703 = sand.u32 %s356, 1
        %s704 = scalar_lea.vmem [#allocation15], %s703
        // Predicated region
        $region105: #{cyattn_forward.6} parent=71 // pred_check
          %p705 = pneg %p369
        $region106: #{cyattn_forward.6} parent=71 // pred_check_branch
          %707 = sbr.rel (%p705) target = $region108
        $region107: #{cyattn_forward.6} parent=71 // pred_region
          %709 = dma.done %s702, 16
        $region108: #{cyattn_forward.6} parent=71 // pred_fallthru
          _
        %p710 = pneg %p57
        %p711 = pneg %p54
        %p712 = scmp.lt.s32.totalorder %s41, 1
        %s713 = scalar_select %p712, %s41, 1
        %s714 = smul.addr %s713, 16
        %s715 = smul.addr %s714, 4
        %s716 = scalar_lea.vmem %s1, %s715
        %p717 = pneg %p83
        %p718 = pneg %p80
        %s719 = sand.u32 %s96, 1
        %s720 = scalar_lea.sflag [#allocation3], %s719
        %s721 = sand.u32 %s96, 1
        %s722 = smul.addr %s721, 2
        %s723 = scalar_lea.vmem [#allocation2], %s722
        %p724 = pneg %p109
        %p725 = pneg %p106
        %s726 = sand.u32 %s41, 1
        %s727 = scalar_lea.sflag [#allocation5], %s726
        %s728 = sand.u32 %s122, 1
        %s729 = smul.addr %s728, 32
        %s730 = scalar_lea.vmem [#allocation4], %s729
        %p731 = pneg %p135
        %p732 = pneg %p132
        %s733 = sand.u32 %s41, 1
        %s734 = scalar_lea.sflag [#allocation5], %s733
        %s735 = sand.u32 %s148, 1
        %s736 = scalar_lea.vmem [#allocation6], %s735
        %p737 = pneg %p161
        %p738 = pneg %p158
        %s739 = sand.u32 %s41, 1
        %s740 = scalar_lea.sflag [#allocation8], %s739
        %s741 = sand.u32 %s174, 1
        %s742 = scalar_lea.vmem [#allocation7], %s741
        %p743 = pneg %p187
        %p744 = pneg %p184
        %s745 = sand.u32 %s41, 1
        %s746 = scalar_lea.sflag [#allocation8], %s745
        %s747 = sand.u32 %s200, 1
        %s748 = scalar_lea.vmem [#allocation9], %s747
        %p749 = pneg %p213
        %p750 = pneg %p210
        %p751 = scmp.lt.s32.totalorder %s41, 1
        %s752 = scalar_select %p751, %s41, 1
        %s753 = smul.addr %s752, 16
        %s754 = smul.addr %s753, 4
        %s755 = scalar_lea.vmem %s7, %s754
        %p756 = pneg %p239
        %p757 = pneg %p236
        %s758 = sand.u32 %s41, 1
        %s759 = scalar_lea.sflag [#allocation11], %s758
        %s760 = sand.u32 %s252, 1
        %s761 = smul.addr %s760, 2
        %s762 = scalar_lea.vmem [#allocation10], %s761
        %p763 = pneg %p265
        %p764 = pneg %p262
        %p765 = scmp.lt.s32.totalorder %s41, 1
        %s766 = scalar_select %p765, %s41, 1
        %s767 = smul.addr %s766, 32
        %s768 = smul.addr %s767, 4
        %s769 = scalar_lea.vmem %s9, %s768
        %p770 = pneg %p291
        %p771 = pneg %p288
        %s772 = sand.u32 %s41, 1
        %s773 = scalar_lea.sflag [#allocation11], %s772
        %s774 = sand.u32 %s304, 1
        %s775 = scalar_lea.vmem [#allocation12], %s774
        %p776 = pneg %p317
        %p777 = pneg %p314
        %s778 = sand.u32 %s41, 1
        %s779 = scalar_lea.sflag [#allocation14], %s778
        %s780 = sand.u32 %s330, 1
        %s781 = scalar_lea.vmem [#allocation13], %s780
        %p782 = pneg %p343
        %p783 = pneg %p340
        %s784 = sand.u32 %s41, 1
        %s785 = scalar_lea.sflag [#allocation14], %s784
        %s786 = sand.u32 %s356, 1
        %s787 = scalar_lea.vmem [#allocation15], %s786
        %p788 = pneg %p369
        %p789 = pneg %p366
        %p790 = pneg %p390
        %p791 = pneg %p387
        %p792 = pneg %p411
        %p793 = pneg %p408
        %p794 = scmp.lt.s32.totalorder %s41, 1
        %s795 = scalar_select %p794, %s41, 1
        %s796 = smul.addr %s795, 16
        %s797 = smul.addr %s796, 4
        %s798 = scalar_lea.vmem %s1, %s797
        %p799 = scmp.lt.s32.totalorder %s41, 1
        %s800 = scalar_select %p799, %s41, 1
        %s801 = smul.addr %s800, 16
        %s802 = smul.addr %s801, 4
        %s803 = scalar_lea.vmem %s7, %s802
        %p804 = scmp.lt.s32.totalorder %s41, 1
        %s805 = scalar_select %p804, %s41, 1
        %s806 = smul.addr %s805, 32
        %s807 = smul.addr %s806, 4
        %s808 = scalar_lea.vmem %s9, %s807
        %p810 = scmp.eq.s32.totalorder %s41, 0
        // Predicated region
        $region109: #{cyattn_forward.6} parent=71 // pred_check
          %p811 = pneg %p810
        $region110: #{cyattn_forward.6} parent=71 // pred_check_branch
          %813 = sbr.rel (%p811) target = $region112
        $region111: #{cyattn_forward.6} parent=71 // pred_region
          %v814 = vld [vmem:[%s0] sm:$0xff]
          %v815 = vld [vmem:[%s0 + $0x8] sm:$0xff]
          %vm816 = vcmask 523264
          %817 = vst.msk [vmem:[%s13] sm:$0xff] %vm816, %v814
          %818 = vst.msk [vmem:[%s13 + $0x8] sm:$0xff] %vm816, %v815
        $region112: #{cyattn_forward.6} parent=71 // pred_fallthru
          _
        %v819 = vld [vmem:[%s13] sm:$0xff]
        %v820 = vld [vmem:[%s13 + $0x8] sm:$0xff]
        %v821 = vld [vmem:[%s798] sm:$0xff]
        %v822 = vld [vmem:[%s798 + $0x8] sm:$0xff]
        %v823 = vld [vmem:[%s798 + $0x10] sm:$0xff]
        %v824 = vld [vmem:[%s798 + $0x18] sm:$0xff]
        %v825 = vld [vmem:[%s798 + $0x20] sm:$0xff]
        %v826 = vld [vmem:[%s798 + $0x28] sm:$0xff]
        %v827 = vld [vmem:[%s798 + $0x30] sm:$0xff]
        %v828 = vld [vmem:[%s798 + $0x38] sm:$0xff]
        %v829 = vld [vmem:[%s630] sm:$0x3]
        %v830 = vld [vmem:[%s640] sm:$0xf]
        %v831 = vld [vmem:[%s640 + $0x4] sm:$0xf]
        %v832 = vld [vmem:[%s640 + $0x8] sm:$0xf]
        %v833 = vld [vmem:[%s640 + $0xc] sm:$0xf]
        %v834 = vld [vmem:[%s640 + $0x10] sm:$0xf]
        %v835 = vld [vmem:[%s640 + $0x14] sm:$0xf]
        %v836 = vld [vmem:[%s640 + $0x18] sm:$0xf]
        %v837 = vld [vmem:[%s640 + $0x1c] sm:$0xf]
        %v838 = vld [vmem:[%s649] sm:$0x1]
        %v839 = vld [vmem:[%s658] sm:$0x1]
        %v840 = vld [vmem:[%s667] sm:$0x1]
        %v841 = vld [vmem:[%s803] sm:$0xff]
        %v842 = vld [vmem:[%s803 + $0x8] sm:$0xff]
        %v843 = vld [vmem:[%s803 + $0x10] sm:$0xff]
        %v844 = vld [vmem:[%s803 + $0x18] sm:$0xff]
        %v845 = vld [vmem:[%s803 + $0x20] sm:$0xff]
        %v846 = vld [vmem:[%s803 + $0x28] sm:$0xff]
        %v847 = vld [vmem:[%s803 + $0x30] sm:$0xff]
        %v848 = vld [vmem:[%s803 + $0x38] sm:$0xff]
        %v849 = vld [vmem:[%s677] sm:$0x3]
        %v850 = vld [vmem:[%s808] sm:$0xf]
        %v851 = vld [vmem:[%s808 + $0x4] sm:$0xf]
        %v852 = vld [vmem:[%s808 + $0x8] sm:$0xf]
        %v853 = vld [vmem:[%s808 + $0xc] sm:$0xf]
        %v854 = vld [vmem:[%s808 + $0x10] sm:$0xf]
        %v855 = vld [vmem:[%s808 + $0x14] sm:$0xf]
        %v856 = vld [vmem:[%s808 + $0x18] sm:$0xf]
        %v857 = vld [vmem:[%s808 + $0x1c] sm:$0xf]
        %v858 = vld [vmem:[%s808 + $0x20] sm:$0xf]
        %v859 = vld [vmem:[%s808 + $0x24] sm:$0xf]
        %v860 = vld [vmem:[%s808 + $0x28] sm:$0xf]
        %v861 = vld [vmem:[%s808 + $0x2c] sm:$0xf]
        %v862 = vld [vmem:[%s808 + $0x30] sm:$0xf]
        %v863 = vld [vmem:[%s808 + $0x34] sm:$0xf]
        %v864 = vld [vmem:[%s808 + $0x38] sm:$0xf]
        %v865 = vld [vmem:[%s808 + $0x3c] sm:$0xf]
        %v866 = vld [vmem:[%s808 + $0x40] sm:$0xf]
        %v867 = vld [vmem:[%s808 + $0x44] sm:$0xf]
        %v868 = vld [vmem:[%s808 + $0x48] sm:$0xf]
        %v869 = vld [vmem:[%s808 + $0x4c] sm:$0xf]
        %v870 = vld [vmem:[%s808 + $0x50] sm:$0xf]
        %v871 = vld [vmem:[%s808 + $0x54] sm:$0xf]
        %v872 = vld [vmem:[%s808 + $0x58] sm:$0xf]
        %v873 = vld [vmem:[%s808 + $0x5c] sm:$0xf]
        %v874 = vld [vmem:[%s808 + $0x60] sm:$0xf]
        %v875 = vld [vmem:[%s808 + $0x64] sm:$0xf]
        %v876 = vld [vmem:[%s808 + $0x68] sm:$0xf]
        %v877 = vld [vmem:[%s808 + $0x6c] sm:$0xf]
        %v878 = vld [vmem:[%s808 + $0x70] sm:$0xf]
        %v879 = vld [vmem:[%s808 + $0x74] sm:$0xf]
        %v880 = vld [vmem:[%s808 + $0x78] sm:$0xf]
        %v881 = vld [vmem:[%s808 + $0x7c] sm:$0xf]
        %v882 = vld [vmem:[%s686] sm:$0x1]
        %v883 = vld [vmem:[%s695] sm:$0x1]
        %v884 = vld [vmem:[%s704] sm:$0x1]
        %v885 = vpack.c.bf16 %v820, %v819
        %v887 = vperm.slane %v829, 0
        %v888 = vperm.slane %v829, 1
        %v899 = vunpack.c.l.b16 %v821
        %v900 = vunpack.c.h.b16 %v821
        %v901 = vunpack.c.l.b16 %v822
        %v902 = vunpack.c.h.b16 %v822
        %v903 = vunpack.c.l.b16 %v823
        %v904 = vunpack.c.h.b16 %v823
        %v905 = vunpack.c.l.b16 %v824
        %v906 = vunpack.c.h.b16 %v824
        %v907 = vunpack.c.l.b16 %v825
        %v908 = vunpack.c.h.b16 %v825
        %v909 = vunpack.c.l.b16 %v826
        %v910 = vunpack.c.h.b16 %v826
        %v911 = vunpack.c.l.b16 %v827
        %v912 = vunpack.c.h.b16 %v827
        %v913 = vunpack.c.l.b16 %v828
        %v914 = vunpack.c.h.b16 %v828
        %v915 = vpack.c.b16 %v901, %v899
        %v916 = vpack.c.b16 %v902, %v900
        %v917 = vpack.c.b16 %v905, %v903
        %v918 = vpack.c.b16 %v906, %v904
        %v919 = vpack.c.b16 %v909, %v907
        %v920 = vpack.c.b16 %v910, %v908
        %v921 = vpack.c.b16 %v913, %v911
        %v922 = vpack.c.b16 %v914, %v912
        %vm931 = vcmask 523264
        %v933 = vsel %vm931, %v885, 0
        %935 = vmatpush.bf16.msra.mxu0 0
        %936 = vmatpush.bf16.msra.mxu0 0
        %937 = vmatpush.bf16.msra.mxu0 0
        %938 = vmatpush.bf16.msra.mxu0 0
        %939 = vmatpush.bf16.msra.mxu0 %v921
        %940 = vmatpush.bf16.msra.mxu0 %v919
        %941 = vmatpush.bf16.msra.mxu0 %v917
        %942 = vmatpush.bf16.msra.mxu0 %v915
        %943 = vmatmul.bf16.gmra.mxu0 %v933
        %v944 = vpop.f32.mrf.mxu0
        %v945 = vadd.f32 %v887, %v944
        %v946 = vpop.f32.mrf.mxu0
        %v947 = vadd.f32 %v887, %v946
        %948 = vdwg.mxu0
        %949 = vmatpush.bf16.msra.mxu0 0
        %950 = vmatpush.bf16.msra.mxu0 0
        %951 = vmatpush.bf16.msra.mxu0 0
        %952 = vmatpush.bf16.msra.mxu0 0
        %953 = vmatpush.bf16.msra.mxu0 %v922
        %954 = vmatpush.bf16.msra.mxu0 %v920
        %955 = vmatpush.bf16.msra.mxu0 %v918
        %956 = vmatpush.bf16.msra.mxu0 %v916
        %957 = vmatmul.bf16.gmra.mxu0 %v933
        %v958 = vpop.f32.mrf.mxu0
        %v959 = vadd.f32 %v888, %v958
        %v960 = vpop.f32.mrf.mxu0
        %v961 = vadd.f32 %v888, %v960
        %962 = vdwg.mxu0
        %v963 = vpack.c.bf16 %v945, %v945
        %v964 = vpack.c.bf16 %v947, %v947
        %v965 = vpack.c.bf16 %v959, %v959
        %v966 = vpack.c.bf16 %v961, %v961
        %v969 = vunpack.c.l.b16 %v963
        %v970 = vunpack.c.l.b16 %v964
        %v971 = vpack.c.b16 %v970, %v969
        %972 = vrot.lane.b32.xlu0 %v971, 64
        %v973 = vpop.permute.xlu0 %972
        %vm974 = vcmask 130048
        %v976 = vsel %vm974, %v971, 0
        %v979 = vsel %vm974, %v973, 0
        %981 = vmatpush.bf16.xpose.msra.mxu0 0
        %982 = vmatpush.bf16.xpose.msra.mxu0 0
        %983 = vmatpush.bf16.xpose.msra.mxu0 0
        %984 = vmatpush.bf16.xpose.msra.mxu0 0
        %985 = vmatpush.bf16.xpose.msra.mxu0 0
        %986 = vmatpush.bf16.xpose.msra.mxu0 0
        %987 = vmatpush.bf16.xpose.msra.mxu0 0
        %988 = vmatpush.bf16.xpose.msra.mxu0 %v979
        %989 = vmatmul.bf16.gmra.mxu0 %v976
        %v990 = vpop.f32.mrf.mxu0
        %v991 = vadd.f32 0.0, %v990
        %v992 = vpop.f32.mrf.mxu0
        %v993 = vadd.f32 0.0, %v992
        %994 = vdwg.mxu0
        %v995 = vsel %vm974, %v991, -inf
        %996 = vmax.xlane.f32.xlu0 %v995
        %v997 = vpop.xlane.xlu0 %996
        %v998 = vsel %vm974, %v993, -inf
        %999 = vmax.xlane.f32.xlu0 %v998
        %v1000 = vpop.xlane.xlu0 %999
        %v1001 = vsub.f32 %v991, %v997
        %v1002 = vsub.f32 %v993, %v1000
        %v1003 = vmul.f32 %v1001, 1.442695
        %v1004 = vpow.pop %v1003
        %v1005 = vmul.f32 %v1002, 1.442695
        %v1006 = vpow.pop %v1005
        %v1007 = vsel %vm974, %v1004, 0.0
        %1008 = vadd.xlane.f32.xlu0 %v1007
        %v1009 = vpop.xlane.xlu0 %1008
        %v1010 = vsel %vm974, %v1006, 0.0
        %1011 = vadd.xlane.f32.xlu0 %v1010
        %v1012 = vpop.xlane.xlu0 %1011
        %v1013 = vpack.c.bf16 %v1006, %v1004
        %v1016 = vunpack.c.l.b16 %v965
        %v1017 = vunpack.c.l.b16 %v966
        %v1018 = vpack.c.b16 %v1017, %v1016
        %v1021 = vsel %vm974, %v1013, 0
        %1023 = vmatpush.bf16.msra.mxu0 0
        %1024 = vmatpush.bf16.msra.mxu0 0
        %1025 = vmatpush.bf16.msra.mxu0 0
        %1026 = vmatpush.bf16.msra.mxu0 0
        %1027 = vmatpush.bf16.msra.mxu0 0
        %1028 = vmatpush.bf16.msra.mxu0 0
        %1029 = vmatpush.bf16.msra.mxu0 0
        %1030 = vmatpush.bf16.msra.mxu0 %v1018
        %1031 = vmatmul.bf16.gmra.mxu0 %v1021
        %v1032 = vpop.f32.mrf.mxu0
        %v1033 = vadd.f32 0.0, %v1032
        %v1034 = vpop.f32.mrf.mxu0
        %v1035 = vadd.f32 0.0, %v1034
        %1036 = vdwg.mxu0
        %v1037 = vrcp.pop %v1009
        %v1038 = vrcp.pop %v1012
        %v1039 = vmul.f32 %v1033, %v1037
        %v1040 = vmul.f32 %v1035, %v1038
        %1041 = vrot.lane.b32.xlu0 %v971, 112
        %v1042 = vpop.permute.xlu0 %1041
        %1043 = vrot.lane.b32.xlu0 %v971, 48
        %v1044 = vpop.permute.xlu0 %1043
        %v1046 = vsel %vm974, %v1042, 0
        %v1049 = vsel %vm974, %v1044, 0
        %1051 = vmatpush.bf16.xpose.msra.mxu0 0
        %1052 = vmatpush.bf16.xpose.msra.mxu0 0
        %1053 = vmatpush.bf16.xpose.msra.mxu0 0
        %1054 = vmatpush.bf16.xpose.msra.mxu0 0
        %1055 = vmatpush.bf16.xpose.msra.mxu0 0
        %1056 = vmatpush.bf16.xpose.msra.mxu0 0
        %1057 = vmatpush.bf16.xpose.msra.mxu0 0
        %1058 = vmatpush.bf16.xpose.msra.mxu0 %v1049
        %1059 = vmatmul.bf16.gmra.mxu0 %v1046
        %v1060 = vpop.f32.mrf.mxu0
        %v1061 = vadd.f32 0.0, %v1060
        %v1062 = vpop.f32.mrf.mxu0
        %v1063 = vadd.f32 0.0, %v1062
        %1064 = vdwg.mxu0
        %v1065 = vsel %vm974, %v1061, -inf
        %1066 = vmax.xlane.f32.xlu0 %v1065
        %v1067 = vpop.xlane.xlu0 %1066
        %v1068 = vsel %vm974, %v1063, -inf
        %1069 = vmax.xlane.f32.xlu0 %v1068
        %v1070 = vpop.xlane.xlu0 %1069
        %v1071 = vsub.f32 %v1061, %v1067
        %v1072 = vsub.f32 %v1063, %v1070
        %v1073 = vmul.f32 %v1071, 1.442695
        %v1074 = vpow.pop %v1073
        %v1075 = vmul.f32 %v1072, 1.442695
        %v1076 = vpow.pop %v1075
        %v1077 = vsel %vm974, %v1074, 0.0
        %1078 = vadd.xlane.f32.xlu0 %v1077
        %v1079 = vpop.xlane.xlu0 %1078
        %v1080 = vsel %vm974, %v1076, 0.0
        %1081 = vadd.xlane.f32.xlu0 %v1080
        %v1082 = vpop.xlane.xlu0 %1081
        %v1083 = vpack.c.bf16 %v1076, %v1074
        %1084 = vrot.lane.b32.xlu0 %v1018, 112
        %v1085 = vpop.permute.xlu0 %1084
        %v1088 = vsel %vm974, %v1083, 0
        %1090 = vmatpush.bf16.msra.mxu0 0
        %1091 = vmatpush.bf16.msra.mxu0 0
        %1092 = vmatpush.bf16.msra.mxu0 0
        %1093 = vmatpush.bf16.msra.mxu0 0
        %1094 = vmatpush.bf16.msra.mxu0 0
        %1095 = vmatpush.bf16.msra.mxu0 0
        %1096 = vmatpush.bf16.msra.mxu0 0
        %1097 = vmatpush.bf16.msra.mxu0 %v1085
        %1098 = vmatmul.bf16.gmra.mxu0 %v1088
        %v1099 = vpop.f32.mrf.mxu0
        %v1100 = vadd.f32 0.0, %v1099
        %v1101 = vpop.f32.mrf.mxu0
        %v1102 = vadd.f32 0.0, %v1101
        %1103 = vdwg.mxu0
        %v1104 = vrcp.pop %v1079
        %v1105 = vrcp.pop %v1082
        %v1106 = vmul.f32 %v1100, %v1104
        %v1107 = vmul.f32 %v1102, %v1105
        %1108 = vrot.lane.b32.xlu0 %v971, 96
        %v1109 = vpop.permute.xlu0 %1108
        %1110 = vrot.lane.b32.xlu0 %v971, 32
        %v1111 = vpop.permute.xlu0 %1110
        %v1113 = vsel %vm974, %v1109, 0
        %v1116 = vsel %vm974, %v1111, 0
        %1118 = vmatpush.bf16.xpose.msra.mxu0 0
        %1119 = vmatpush.bf16.xpose.msra.mxu0 0
        %1120 = vmatpush.bf16.xpose.msra.mxu0 0
        %1121 = vmatpush.bf16.xpose.msra.mxu0 0
        %1122 = vmatpush.bf16.xpose.msra.mxu0 0
        %1123 = vmatpush.bf16.xpose.msra.mxu0 0
        %1124 = vmatpush.bf16.xpose.msra.mxu0 0
        %1125 = vmatpush.bf16.xpose.msra.mxu0 %v1116
        %1126 = vmatmul.bf16.gmra.mxu0 %v1113
        %v1127 = vpop.f32.mrf.mxu0
        %v1128 = vadd.f32 0.0, %v1127
        %v1129 = vpop.f32.mrf.mxu0
        %v1130 = vadd.f32 0.0, %v1129
        %1131 = vdwg.mxu0
        %v1132 = vsel %vm974, %v1128, -inf
        %1133 = vmax.xlane.f32.xlu0 %v1132
        %v1134 = vpop.xlane.xlu0 %1133
        %v1135 = vsel %vm974, %v1130, -inf
        %1136 = vmax.xlane.f32.xlu0 %v1135
        %v1137 = vpop.xlane.xlu0 %1136
        %v1138 = vsub.f32 %v1128, %v1134
        %v1139 = vsub.f32 %v1130, %v1137
        %v1140 = vmul.f32 %v1138, 1.442695
        %v1141 = vpow.pop %v1140
        %v1142 = vmul.f32 %v1139, 1.442695
        %v1143 = vpow.pop %v1142
        %v1144 = vsel %vm974, %v1141, 0.0
        %1145 = vadd.xlane.f32.xlu0 %v1144
        %v1146 = vpop.xlane.xlu0 %1145
        %v1147 = vsel %vm974, %v1143, 0.0
        %1148 = vadd.xlane.f32.xlu0 %v1147
        %v1149 = vpop.xlane.xlu0 %1148
        %v1150 = vpack.c.bf16 %v1143, %v1141
        %1151 = vrot.lane.b32.xlu0 %v1018, 96
        %v1152 = vpop.permute.xlu0 %1151
        %v1155 = vsel %vm974, %v1150, 0
        %1157 = vmatpush.bf16.msra.mxu0 0
        %1158 = vmatpush.bf16.msra.mxu0 0
        %1159 = vmatpush.bf16.msra.mxu0 0
        %1160 = vmatpush.bf16.msra.mxu0 0
        %1161 = vmatpush.bf16.msra.mxu0 0
        %1162 = vmatpush.bf16.msra.mxu0 0
        %1163 = vmatpush.bf16.msra.mxu0 0
        %1164 = vmatpush.bf16.msra.mxu0 %v1152
        %1165 = vmatmul.bf16.gmra.mxu0 %v1155
        %v1166 = vpop.f32.mrf.mxu0
        %v1167 = vadd.f32 0.0, %v1166
        %v1168 = vpop.f32.mrf.mxu0
        %v1169 = vadd.f32 0.0, %v1168
        %1170 = vdwg.mxu0
        %v1171 = vrcp.pop %v1146
        %v1172 = vrcp.pop %v1149
        %v1173 = vmul.f32 %v1167, %v1171
        %v1174 = vmul.f32 %v1169, %v1172
        %1175 = vrot.lane.b32.xlu0 %v971, 80
        %v1176 = vpop.permute.xlu0 %1175
        %1177 = vrot.lane.b32.xlu0 %v971, 16
        %v1178 = vpop.permute.xlu0 %1177
        %v1180 = vsel %vm974, %v1176, 0
        %v1183 = vsel %vm974, %v1178, 0
        %1185 = vmatpush.bf16.xpose.msra.mxu0 0
        %1186 = vmatpush.bf16.xpose.msra.mxu0 0
        %1187 = vmatpush.bf16.xpose.msra.mxu0 0
        %1188 = vmatpush.bf16.xpose.msra.mxu0 0
        %1189 = vmatpush.bf16.xpose.msra.mxu0 0
        %1190 = vmatpush.bf16.xpose.msra.mxu0 0
        %1191 = vmatpush.bf16.xpose.msra.mxu0 0
        %1192 = vmatpush.bf16.xpose.msra.mxu0 %v1183
        %1193 = vmatmul.bf16.gmra.mxu0 %v1180
        %v1194 = vpop.f32.mrf.mxu0
        %v1195 = vadd.f32 0.0, %v1194
        %v1196 = vpop.f32.mrf.mxu0
        %v1197 = vadd.f32 0.0, %v1196
        %1198 = vdwg.mxu0
        %v1199 = vsel %vm974, %v1195, -inf
        %1200 = vmax.xlane.f32.xlu0 %v1199
        %v1201 = vpop.xlane.xlu0 %1200
        %v1202 = vsel %vm974, %v1197, -inf
        %1203 = vmax.xlane.f32.xlu0 %v1202
        %v1204 = vpop.xlane.xlu0 %1203
        %v1205 = vsub.f32 %v1195, %v1201
        %v1206 = vsub.f32 %v1197, %v1204
        %v1207 = vmul.f32 %v1205, 1.442695
        %v1208 = vpow.pop %v1207
        %v1209 = vmul.f32 %v1206, 1.442695
        %v1210 = vpow.pop %v1209
        %v1211 = vsel %vm974, %v1208, 0.0
        %1212 = vadd.xlane.f32.xlu0 %v1211
        %v1213 = vpop.xlane.xlu0 %1212
        %v1214 = vsel %vm974, %v1210, 0.0
        %1215 = vadd.xlane.f32.xlu0 %v1214
        %v1216 = vpop.xlane.xlu0 %1215
        %v1217 = vpack.c.bf16 %v1210, %v1208
        %1218 = vrot.lane.b32.xlu0 %v1018, 80
        %v1219 = vpop.permute.xlu0 %1218
        %v1222 = vsel %vm974, %v1217, 0
        %1224 = vmatpush.bf16.msra.mxu0 0
        %1225 = vmatpush.bf16.msra.mxu0 0
        %1226 = vmatpush.bf16.msra.mxu0 0
        %1227 = vmatpush.bf16.msra.mxu0 0
        %1228 = vmatpush.bf16.msra.mxu0 0
        %1229 = vmatpush.bf16.msra.mxu0 0
        %1230 = vmatpush.bf16.msra.mxu0 0
        %1231 = vmatpush.bf16.msra.mxu0 %v1219
        %1232 = vmatmul.bf16.gmra.mxu0 %v1222
        %v1233 = vpop.f32.mrf.mxu0
        %v1234 = vadd.f32 0.0, %v1233
        %v1235 = vpop.f32.mrf.mxu0
        %v1236 = vadd.f32 0.0, %v1235
        %1237 = vdwg.mxu0
        %v1238 = vrcp.pop %v1213
        %v1239 = vrcp.pop %v1216
        %v1240 = vmul.f32 %v1234, %v1238
        %v1241 = vmul.f32 %v1236, %v1239
        %1244 = vrot.lane.b32.xlu0 %v1106, 16
        %v1245 = vpop.permute.xlu0 %1244
        %1246 = vrot.lane.b32.xlu0 %v1107, 16
        %v1247 = vpop.permute.xlu0 %1246
        %1252 = vrot.lane.b32.xlu0 %v1173, 32
        %v1253 = vpop.permute.xlu0 %1252
        %1254 = vrot.lane.b32.xlu0 %v1174, 32
        %v1255 = vpop.permute.xlu0 %1254
        %1260 = vrot.lane.b32.xlu0 %v1240, 48
        %v1261 = vpop.permute.xlu0 %1260
        %1262 = vrot.lane.b32.xlu0 %v1241, 48
        %v1263 = vpop.permute.xlu0 %1262
        %v1266 = vsel %vm974, %v1039, %v1245
        %v1267 = vsel %vm974, %v1040, %v1247
        %vm1268 = vcmask 261120
        %v1269 = vsel %vm1268, %v1266, %v1253
        %v1270 = vsel %vm1268, %v1267, %v1255
        %vm1271 = vcmask 392192
        %v1272 = vsel %vm1271, %v1269, %v1261
        %v1273 = vsel %vm1271, %v1270, %v1263
        %v1274 = vpack.c.bf16 %v1273, %v1272
        %v1276 = vperm.slane %v838, 0
        %v1286 = vunpack.c.l.b16 %v830
        %v1287 = vunpack.c.l.b16 %v831
        %v1288 = vunpack.c.l.b16 %v832
        %v1289 = vunpack.c.l.b16 %v833
        %v1290 = vunpack.c.l.b16 %v834
        %v1291 = vunpack.c.l.b16 %v835
        %v1292 = vunpack.c.l.b16 %v836
        %v1293 = vunpack.c.l.b16 %v837
        %v1294 = vpack.c.b16 %v1287, %v1286
        %v1295 = vpack.c.b16 %v1289, %v1288
        %v1296 = vpack.c.b16 %v1291, %v1290
        %v1297 = vpack.c.b16 %v1293, %v1292
        %v1303 = vsel %vm931, %v1274, 0
        %1305 = vmatpush.bf16.msra.mxu0 0
        %1306 = vmatpush.bf16.msra.mxu0 0
        %1307 = vmatpush.bf16.msra.mxu0 0
        %1308 = vmatpush.bf16.msra.mxu0 0
        %1309 = vmatpush.bf16.msra.mxu0 %v1297
        %1310 = vmatpush.bf16.msra.mxu0 %v1296
        %1311 = vmatpush.bf16.msra.mxu0 %v1295
        %1312 = vmatpush.bf16.msra.mxu0 %v1294
        %1313 = vmatmul.bf16.gmra.mxu0 %v1303
        %v1314 = vpop.f32.mrf.mxu0
        %v1315 = vadd.f32 %v1276, %v1314
        %v1316 = vpop.f32.mrf.mxu0
        %v1317 = vadd.f32 %v1276, %v1316
        %1318 = vdwg.mxu0
        %v1319 = vsel %vm931, %v1315, 0.0
        %1320 = vadd.xlane.f32.xlu0 %v1319
        %v1321 = vpop.xlane.xlu0 %1320
        %v1322 = vsel %vm931, %v1317, 0.0
        %1323 = vadd.xlane.f32.xlu0 %v1322
        %v1324 = vpop.xlane.xlu0 %1323
        %v1325 = vrcp.pop 64.0
        %v1326 = vmul.f32 64.0, %v1325
        %v1327 = vsub.f32 1.0, %v1326
        %v1328 = vmul.f32 %v1325, %v1327
        %v1329 = vadd.f32 %v1325, %v1328
        %vm1330 = vweird.f32 %v1325
        %v1331 = vsel %vm1330, %v1325, %v1329
        %v1332 = vmul.f32 %v1321, %v1331
        %v1333 = vmul.f32 %v1324, %v1331
        %v1334 = vsub.f32 %v1315, %v1332
        %v1335 = vsub.f32 %v1317, %v1333
        %v1336 = vmul.f32 %v1334, %v1334
        %v1337 = vmul.f32 %v1335, %v1335
        %v1338 = vsel %vm931, %v1336, 0.0
        %1339 = vadd.xlane.f32.xlu0 %v1338
        %v1340 = vpop.xlane.xlu0 %1339
        %v1341 = vsel %vm931, %v1337, 0.0
        %1342 = vadd.xlane.f32.xlu0 %v1341
        %v1343 = vpop.xlane.xlu0 %1342
        %v1344 = vmul.f32 %v1340, %v1331
        %v1345 = vmul.f32 %v1343, %v1331
        %v1346 = vadd.f32 %v1344, 1e-05
        %v1347 = vadd.f32 %v1345, 1e-05
        %v1348 = vrsqrt.pop %v1346
        %v1349 = vmul.f32 %v1348, %v1346
        %v1350 = vmul.f32 %v1349, %v1348
        %v1351 = vmul.f32 0.5, %v1350
        %v1352 = vsub.f32 1.5, %v1351
        %v1353 = vmul.f32 %v1348, %v1352
        %vm1354 = vweird.f32 %v1346
        %vm1355 = vweird.f32 %v1348
        %vm1356 = vmor %vm1354, %vm1355
        %v1357 = vsel %vm1356, %v1348, %v1353
        %v1358 = vrsqrt.pop %v1347
        %v1359 = vmul.f32 %v1358, %v1347
        %v1360 = vmul.f32 %v1359, %v1358
        %v1361 = vmul.f32 0.5, %v1360
        %v1362 = vsub.f32 1.5, %v1361
        %v1363 = vmul.f32 %v1358, %v1362
        %vm1364 = vweird.f32 %v1347
        %vm1365 = vweird.f32 %v1358
        %vm1366 = vmor %vm1364, %vm1365
        %v1367 = vsel %vm1366, %v1358, %v1363
        %v1368 = vmul.f32 %v1334, %v1357
        %v1369 = vmul.f32 %v1335, %v1367
        %v1371 = vperm.slane %v839, 0
        %v1373 = vmul.f32 %v1368, %v1371
        %v1374 = vmul.f32 %v1369, %v1371
        %v1376 = vperm.slane %v840, 0
        %v1378 = vadd.f32 %v1373, %v1376
        %v1379 = vadd.f32 %v1374, %v1376
        %v1380 = vadd.f32 %v1378, %v819
        %v1381 = vadd.f32 %v1379, %v820
        %v1382 = vpack.c.bf16 %v1381, %v1380
        %v1384 = vperm.slane %v849, 0
        %v1385 = vperm.slane %v849, 1
        %v1396 = vunpack.c.l.b16 %v841
        %v1397 = vunpack.c.h.b16 %v841
        %v1398 = vunpack.c.l.b16 %v842
        %v1399 = vunpack.c.h.b16 %v842
        %v1400 = vunpack.c.l.b16 %v843
        %v1401 = vunpack.c.h.b16 %v843
        %v1402 = vunpack.c.l.b16 %v844
        %v1403 = vunpack.c.h.b16 %v844
        %v1404 = vunpack.c.l.b16 %v845
        %v1405 = vunpack.c.h.b16 %v845
        %v1406 = vunpack.c.l.b16 %v846
        %v1407 = vunpack.c.h.b16 %v846
        %v1408 = vunpack.c.l.b16 %v847
        %v1409 = vunpack.c.h.b16 %v847
        %v1410 = vunpack.c.l.b16 %v848
        %v1411 = vunpack.c.h.b16 %v848
        %v1412 = vpack.c.b16 %v1398, %v1396
        %v1413 = vpack.c.b16 %v1399, %v1397
        %v1414 = vpack.c.b16 %v1402, %v1400
        %v1415 = vpack.c.b16 %v1403, %v1401
        %v1416 = vpack.c.b16 %v1406, %v1404
        %v1417 = vpack.c.b16 %v1407, %v1405
        %v1418 = vpack.c.b16 %v1410, %v1408
        %v1419 = vpack.c.b16 %v1411, %v1409
        %v1429 = vsel %vm931, %v1382, 0
        %1431 = vmatpush.bf16.msra.mxu0 0
        %1432 = vmatpush.bf16.msra.mxu0 0
        %1433 = vmatpush.bf16.msra.mxu0 0
        %1434 = vmatpush.bf16.msra.mxu0 0
        %1435 = vmatpush.bf16.msra.mxu0 %v1418
        %1436 = vmatpush.bf16.msra.mxu0 %v1416
        %1437 = vmatpush.bf16.msra.mxu0 %v1414
        %1438 = vmatpush.bf16.msra.mxu0 %v1412
        %1439 = vmatmul.bf16.gmra.mxu0 %v1429
        %v1440 = vpop.f32.mrf.mxu0
        %v1441 = vadd.f32 %v1384, %v1440
        %v1442 = vpop.f32.mrf.mxu0
        %v1443 = vadd.f32 %v1384, %v1442
        %1444 = vdwg.mxu0
        %1445 = vmatpush.bf16.msra.mxu0 0
        %1446 = vmatpush.bf16.msra.mxu0 0
        %1447 = vmatpush.bf16.msra.mxu0 0
        %1448 = vmatpush.bf16.msra.mxu0 0
        %1449 = vmatpush.bf16.msra.mxu0 %v1419
        %1450 = vmatpush.bf16.msra.mxu0 %v1417
        %1451 = vmatpush.bf16.msra.mxu0 %v1415
        %1452 = vmatpush.bf16.msra.mxu0 %v1413
        %1453 = vmatmul.bf16.gmra.mxu0 %v1429
        %v1454 = vpop.f32.mrf.mxu0
        %v1455 = vadd.f32 %v1385, %v1454
        %v1456 = vpop.f32.mrf.mxu0
        %v1457 = vadd.f32 %v1385, %v1456
        %1458 = vdwg.mxu0
        %v1459 = vmul.f32 %v1441, 0.5
        %v1460 = vmul.f32 %v1455, 0.5
        %v1461 = vmul.f32 %v1443, 0.5
        %v1462 = vmul.f32 %v1457, 0.5
        %v1463 = vmul.f32 %v1441, 0.70710677
        %v1464 = vmul.f32 %v1455, 0.70710677
        %v1465 = vmul.f32 %v1443, 0.70710677
        %v1466 = vmul.f32 %v1457, 0.70710677
        %vm1467 = vcmp.ge.f32.partialorder %v1463, 0.0
        %vm1468 = vcmp.ge.f32.partialorder %v1464, 0.0
        %vm1469 = vcmp.ge.f32.partialorder %v1465, 0.0
        %vm1470 = vcmp.ge.f32.partialorder %v1466, 0.0
        %v1471 = vsel %vm1467, 1.0, -1.0
        %v1472 = vsel %vm1468, 1.0, -1.0
        %v1473 = vsel %vm1469, 1.0, -1.0
        %v1474 = vsel %vm1470, 1.0, -1.0
        %v1475 = vand.u32 2147483647, %v1463
        %v1476 = vand.u32 2147483647, %v1464
        %v1477 = vand.u32 2147483647, %v1465
        %v1478 = vand.u32 2147483647, %v1466
        %v1479 = vmul.f32 %v1475, 0.3275911
        %v1480 = vmul.f32 %v1476, 0.3275911
        %v1481 = vmul.f32 %v1477, 0.3275911
        %v1482 = vmul.f32 %v1478, 0.3275911
        %v1483 = vadd.f32 %v1479, 1.0
        %v1484 = vadd.f32 %v1480, 1.0
        %v1485 = vadd.f32 %v1481, 1.0
        %v1486 = vadd.f32 %v1482, 1.0
        %v1487 = vrcp.pop %v1483
        %v1488 = vmul.f32 %v1483, %v1487
        %v1489 = vsub.f32 1.0, %v1488
        %v1490 = vmul.f32 %v1487, %v1489
        %v1491 = vadd.f32 %v1487, %v1490
        %vm1492 = vweird.f32 %v1483
        %vm1493 = vweird.f32 %v1487
        %vm1494 = vmor %vm1492, %vm1493
        %v1495 = vsel %vm1494, %v1487, %v1491
        %v1496 = vand.u32 2147483647, %v1483
        %vm1497 = vcmp.eq.f32.partialorder %v1496, 8.507059e+37
        %v1498 = vand.u32 %v1483, 2147483648
        %v1499 = vor.u32 1.1754944e-38, %v1498
        %v1500 = vsel %vm1497, %v1499, %v1495
        %v1501 = vmul.f32 1.0, %v1500
        %v1502 = vrcp.pop %v1484
        %v1503 = vmul.f32 %v1484, %v1502
        %v1504 = vsub.f32 1.0, %v1503
        %v1505 = vmul.f32 %v1502, %v1504
        %v1506 = vadd.f32 %v1502, %v1505
        %vm1507 = vweird.f32 %v1484
        %vm1508 = vweird.f32 %v1502
        %vm1509 = vmor %vm1507, %vm1508
        %v1510 = vsel %vm1509, %v1502, %v1506
        %v1511 = vand.u32 2147483647, %v1484
        %vm1512 = vcmp.eq.f32.partialorder %v1511, 8.507059e+37
        %v1513 = vand.u32 %v1484, 2147483648
        %v1514 = vor.u32 1.1754944e-38, %v1513
        %v1515 = vsel %vm1512, %v1514, %v1510
        %v1516 = vmul.f32 1.0, %v1515
        %v1517 = vrcp.pop %v1485
        %v1518 = vmul.f32 %v1485, %v1517
        %v1519 = vsub.f32 1.0, %v1518
        %v1520 = vmul.f32 %v1517, %v1519
        %v1521 = vadd.f32 %v1517, %v1520
        %vm1522 = vweird.f32 %v1485
        %vm1523 = vweird.f32 %v1517
        %vm1524 = vmor %vm1522, %vm1523
        %v1525 = vsel %vm1524, %v1517, %v1521
        %v1526 = vand.u32 2147483647, %v1485
        %vm1527 = vcmp.eq.f32.partialorder %v1526, 8.507059e+37
        %v1528 = vand.u32 %v1485, 2147483648
        %v1529 = vor.u32 1.1754944e-38, %v1528
        %v1530 = vsel %vm1527, %v1529, %v1525
        %v1531 = vmul.f32 1.0, %v1530
        %v1532 = vrcp.pop %v1486
        %v1533 = vmul.f32 %v1486, %v1532
        %v1534 = vsub.f32 1.0, %v1533
        %v1535 = vmul.f32 %v1532, %v1534
        %v1536 = vadd.f32 %v1532, %v1535
        %vm1537 = vweird.f32 %v1486
        %vm1538 = vweird.f32 %v1532
        %vm1539 = vmor %vm1537, %vm1538
        %v1540 = vsel %vm1539, %v1532, %v1536
        %v1541 = vand.u32 2147483647, %v1486
        %vm1542 = vcmp.eq.f32.partialorder %v1541, 8.507059e+37
        %v1543 = vand.u32 %v1486, 2147483648
        %v1544 = vor.u32 1.1754944e-38, %v1543
        %v1545 = vsel %vm1542, %v1544, %v1540
        %v1546 = vmul.f32 1.0, %v1545
        %v1547 = vmul.f32 %v1501, 1.0614054
        %v1548 = vmul.f32 %v1516, 1.0614054
        %v1549 = vmul.f32 %v1531, 1.0614054
        %v1550 = vmul.f32 %v1546, 1.0614054
        %v1551 = vadd.f32 %v1547, -1.4531521
        %v1552 = vadd.f32 %v1548, -1.4531521
        %v1553 = vadd.f32 %v1549, -1.4531521
        %v1554 = vadd.f32 %v1550, -1.4531521
        %v1555 = vmul.f32 %v1551, %v1501
        %v1556 = vmul.f32 %v1552, %v1516
        %v1557 = vmul.f32 %v1553, %v1531
        %v1558 = vmul.f32 %v1554, %v1546
        %v1559 = vadd.f32 %v1555, 1.4214138
        %v1560 = vadd.f32 %v1556, 1.4214138
        %v1561 = vadd.f32 %v1557, 1.4214138
        %v1562 = vadd.f32 %v1558, 1.4214138
        %v1563 = vmul.f32 %v1559, %v1501
        %v1564 = vmul.f32 %v1560, %v1516
        %v1565 = vmul.f32 %v1561, %v1531
        %v1566 = vmul.f32 %v1562, %v1546
        %v1567 = vadd.f32 %v1563, -0.28449672
        %v1568 = vadd.f32 %v1564, -0.28449672
        %v1569 = vadd.f32 %v1565, -0.28449672
        %v1570 = vadd.f32 %v1566, -0.28449672
        %v1571 = vmul.f32 %v1567, %v1501
        %v1572 = vmul.f32 %v1568, %v1516
        %v1573 = vmul.f32 %v1569, %v1531
        %v1574 = vmul.f32 %v1570, %v1546
        %v1575 = vadd.f32 %v1571, 0.2548296
        %v1576 = vadd.f32 %v1572, 0.2548296
        %v1577 = vadd.f32 %v1573, 0.2548296
        %v1578 = vadd.f32 %v1574, 0.2548296
        %v1579 = vmul.f32 %v1575, %v1501
        %v1580 = vmul.f32 %v1576, %v1516
        %v1581 = vmul.f32 %v1577, %v1531
        %v1582 = vmul.f32 %v1578, %v1546
        %v1583 = vsub.f32 0.0, %v1475
        %v1584 = vsub.f32 0.0, %v1476
        %v1585 = vsub.f32 0.0, %v1477
        %v1586 = vsub.f32 0.0, %v1478
        %v1587 = vmul.f32 %v1583, %v1475
        %v1588 = vmul.f32 %v1584, %v1476
        %v1589 = vmul.f32 %v1585, %v1477
        %v1590 = vmul.f32 %v1586, %v1478
        %v1591 = vmul.f32 %v1587, 1.442695
        %v1592 = vpow.pop %v1591
        %v1593 = vmul.f32 %v1588, 1.442695
        %v1594 = vpow.pop %v1593
        %v1595 = vmul.f32 %v1589, 1.442695
        %v1596 = vpow.pop %v1595
        %v1597 = vmul.f32 %v1590, 1.442695
        %v1598 = vpow.pop %v1597
        %v1599 = vmul.f32 %v1579, %v1592
        %v1600 = vmul.f32 %v1580, %v1594
        %v1601 = vmul.f32 %v1581, %v1596
        %v1602 = vmul.f32 %v1582, %v1598
        %v1603 = vsub.f32 1.0, %v1599
        %v1604 = vsub.f32 1.0, %v1600
        %v1605 = vsub.f32 1.0, %v1601
        %v1606 = vsub.f32 1.0, %v1602
        %v1607 = vmul.f32 %v1471, %v1603
        %v1608 = vmul.f32 %v1472, %v1604
        %v1609 = vmul.f32 %v1473, %v1605
        %v1610 = vmul.f32 %v1474, %v1606
        %v1611 = vadd.f32 %v1607, 1.0
        %v1612 = vadd.f32 %v1608, 1.0
        %v1613 = vadd.f32 %v1609, 1.0
        %v1614 = vadd.f32 %v1610, 1.0
        %v1615 = vmul.f32 %v1459, %v1611
        %v1616 = vmul.f32 %v1460, %v1612
        %v1617 = vmul.f32 %v1461, %v1613
        %v1618 = vmul.f32 %v1462, %v1614
        %v1619 = vpack.c.bf16 %v1617, %v1615
        %v1620 = vpack.c.bf16 %v1618, %v1616
        %v1622 = vperm.slane %v882, 0
        %v1656 = vunpack.c.l.b16 %v850
        %v1657 = vunpack.c.l.b16 %v851
        %v1658 = vunpack.c.l.b16 %v852
        %v1659 = vunpack.c.l.b16 %v853
        %v1660 = vunpack.c.l.b16 %v854
        %v1661 = vunpack.c.l.b16 %v855
        %v1662 = vunpack.c.l.b16 %v856
        %v1663 = vunpack.c.l.b16 %v857
        %v1664 = vunpack.c.l.b16 %v858
        %v1665 = vunpack.c.l.b16 %v859
        %v1666 = vunpack.c.l.b16 %v860
        %v1667 = vunpack.c.l.b16 %v861
        %v1668 = vunpack.c.l.b16 %v862
        %v1669 = vunpack.c.l.b16 %v863
        %v1670 = vunpack.c.l.b16 %v864
        %v1671 = vunpack.c.l.b16 %v865
        %v1672 = vunpack.c.l.b16 %v866
        %v1673 = vunpack.c.l.b16 %v867
        %v1674 = vunpack.c.l.b16 %v868
        %v1675 = vunpack.c.l.b16 %v869
        %v1676 = vunpack.c.l.b16 %v870
        %v1677 = vunpack.c.l.b16 %v871
        %v1678 = vunpack.c.l.b16 %v872
        %v1679 = vunpack.c.l.b16 %v873
        %v1680 = vunpack.c.l.b16 %v874
        %v1681 = vunpack.c.l.b16 %v875
        %v1682 = vunpack.c.l.b16 %v876
        %v1683 = vunpack.c.l.b16 %v877
        %v1684 = vunpack.c.l.b16 %v878
        %v1685 = vunpack.c.l.b16 %v879
        %v1686 = vunpack.c.l.b16 %v880
        %v1687 = vunpack.c.l.b16 %v881
        %v1688 = vpack.c.b16 %v1657, %v1656
        %v1689 = vpack.c.b16 %v1659, %v1658
        %v1690 = vpack.c.b16 %v1661, %v1660
        %v1691 = vpack.c.b16 %v1663, %v1662
        %v1692 = vpack.c.b16 %v1665, %v1664
        %v1693 = vpack.c.b16 %v1667, %v1666
        %v1694 = vpack.c.b16 %v1669, %v1668
        %v1695 = vpack.c.b16 %v1671, %v1670
        %v1696 = vpack.c.b16 %v1673, %v1672
        %v1697 = vpack.c.b16 %v1675, %v1674
        %v1698 = vpack.c.b16 %v1677, %v1676
        %v1699 = vpack.c.b16 %v1679, %v1678
        %v1700 = vpack.c.b16 %v1681, %v1680
        %v1701 = vpack.c.b16 %v1683, %v1682
        %v1702 = vpack.c.b16 %v1685, %v1684
        %v1703 = vpack.c.b16 %v1687, %v1686
        %1720 = vmatpush.bf16.msra.mxu0 %v1695
        %1721 = vmatpush.bf16.msra.mxu0 %v1694
        %1722 = vmatpush.bf16.msra.mxu0 %v1693
        %1723 = vmatpush.bf16.msra.mxu0 %v1692
        %1724 = vmatpush.bf16.msra.mxu0 %v1691
        %1725 = vmatpush.bf16.msra.mxu0 %v1690
        %1726 = vmatpush.bf16.msra.mxu0 %v1689
        %1727 = vmatpush.bf16.msra.mxu0 %v1688
        %1728 = vmatmul.bf16.gmra.mxu0 %v1619
        %v1729 = vpop.f32.mrf.mxu0
        %v1730 = vadd.f32 %v1622, %v1729
        %v1731 = vpop.f32.mrf.mxu0
        %v1732 = vadd.f32 %v1622, %v1731
        %1733 = vdwg.mxu0
        %1734 = vmatpush.bf16.msra.mxu0 %v1703
        %1735 = vmatpush.bf16.msra.mxu0 %v1702
        %1736 = vmatpush.bf16.msra.mxu0 %v1701
        %1737 = vmatpush.bf16.msra.mxu0 %v1700
        %1738 = vmatpush.bf16.msra.mxu0 %v1699
        %1739 = vmatpush.bf16.msra.mxu0 %v1698
        %1740 = vmatpush.bf16.msra.mxu0 %v1697
        %1741 = vmatpush.bf16.msra.mxu0 %v1696
        %1742 = vmatmul.bf16.gmra.mxu0 %v1620
        %v1743 = vpop.f32.mrf.mxu0
        %v1744 = vadd.f32 %v1730, %v1743
        %v1745 = vpop.f32.mrf.mxu0
        %v1746 = vadd.f32 %v1732, %v1745
        %1747 = vdwg.mxu0
        %v1748 = vsel %vm931, %v1744, 0.0
        %1749 = vadd.xlane.f32.xlu0 %v1748
        %v1750 = vpop.xlane.xlu0 %1749
        %v1751 = vsel %vm931, %v1746, 0.0
        %1752 = vadd.xlane.f32.xlu0 %v1751
        %v1753 = vpop.xlane.xlu0 %1752
        %v1754 = vmul.f32 %v1750, %v1331
        %v1755 = vmul.f32 %v1753, %v1331
        %v1756 = vsub.f32 %v1744, %v1754
        %v1757 = vsub.f32 %v1746, %v1755
        %v1758 = vmul.f32 %v1756, %v1756
        %v1759 = vmul.f32 %v1757, %v1757
        %v1760 = vsel %vm931, %v1758, 0.0
        %1761 = vadd.xlane.f32.xlu0 %v1760
        %v1762 = vpop.xlane.xlu0 %1761
        %v1763 = vsel %vm931, %v1759, 0.0
        %1764 = vadd.xlane.f32.xlu0 %v1763
        %v1765 = vpop.xlane.xlu0 %1764
        %v1766 = vmul.f32 %v1762, %v1331
        %v1767 = vmul.f32 %v1765, %v1331
        %v1768 = vadd.f32 %v1766, 1e-05
        %v1769 = vadd.f32 %v1767, 1e-05
        %v1770 = vrsqrt.pop %v1768
        %v1771 = vmul.f32 %v1770, %v1768
        %v1772 = vmul.f32 %v1771, %v1770
        %v1773 = vmul.f32 0.5, %v1772
        %v1774 = vsub.f32 1.5, %v1773
        %v1775 = vmul.f32 %v1770, %v1774
        %vm1776 = vweird.f32 %v1768
        %vm1777 = vweird.f32 %v1770
        %vm1778 = vmor %vm1776, %vm1777
        %v1779 = vsel %vm1778, %v1770, %v1775
        %v1780 = vrsqrt.pop %v1769
        %v1781 = vmul.f32 %v1780, %v1769
        %v1782 = vmul.f32 %v1781, %v1780
        %v1783 = vmul.f32 0.5, %v1782
        %v1784 = vsub.f32 1.5, %v1783
        %v1785 = vmul.f32 %v1780, %v1784
        %vm1786 = vweird.f32 %v1769
        %vm1787 = vweird.f32 %v1780
        %vm1788 = vmor %vm1786, %vm1787
        %v1789 = vsel %vm1788, %v1780, %v1785
        %v1790 = vmul.f32 %v1756, %v1779
        %v1791 = vmul.f32 %v1757, %v1789
        %v1793 = vperm.slane %v883, 0
        %v1795 = vmul.f32 %v1790, %v1793
        %v1796 = vmul.f32 %v1791, %v1793
        %v1798 = vperm.slane %v884, 0
        %v1800 = vadd.f32 %v1795, %v1798
        %v1801 = vadd.f32 %v1796, %v1798
        %v1802 = vadd.f32 %v1800, %v1380
        %v1803 = vadd.f32 %v1801, %v1381
        %1804 = vst.msk [vmem:[%s13] sm:$0xff] %vm931, %v1802
        %1805 = vst.msk [vmem:[%s13 + $0x8] sm:$0xff] %vm931, %v1803
        %p1806 = scmp.eq.s32.totalorder %s41, 1
        // Predicated region
        $region113: #{cyattn_forward.6} parent=71 // pred_check
          %p1807 = pneg %p1806
        $region114: #{cyattn_forward.6} parent=71 // pred_check_branch
          %1809 = sbr.rel (%p1807) target = $region116
        $region115: #{cyattn_forward.6} parent=71 // pred_region
          %v1810 = vld [vmem:[%s13] sm:$0xff]
          %v1811 = vld [vmem:[%s13 + $0x8] sm:$0xff]
          %v1812 = vpack.c.bf16 %v1810, %v1810
          %v1813 = vpack.c.bf16 %v1811, %v1811
          %vm1814 = vcmask 519168
          %1815 = vst.msk [vmem:[%s14] sm:$0xf] %vm1814, %v1812
          %1816 = vst.msk [vmem:[%s14 + $0x4] sm:$0xf] %vm1814, %v1813
        $region116: #{cyattn_forward.6} parent=71 // pred_fallthru
          _
        // Predicated region
        $region117: #{cyattn_forward.6} parent=71 // pred_check
          %p1817 = pneg %p387
        $region118: #{cyattn_forward.6} parent=71 // pred_check_branch
          %1819 = sbr.rel (%p1817) target = $region120
        $region119: #{cyattn_forward.6} parent=71 // pred_region
          _
        $region120: #{cyattn_forward.6} parent=71 // pred_fallthru
          _
        // Predicated region
        $region121: #{cyattn_forward.6} parent=71 // pred_check
          %p1820 = pneg %p408
        $region122: #{cyattn_forward.6} parent=71 // pred_check_branch
          %1822 = sbr.rel (%p1820) target = $region124
        $region123: #{cyattn_forward.6} parent=71 // pred_region
          _
        $region124: #{cyattn_forward.6} parent=71 // pred_fallthru
          _
        // Predicated region
        $region125: #{cyattn_forward.6} parent=71 // pred_check
          %p1823 = pneg %p387
        $region126: #{cyattn_forward.6} parent=71 // pred_check_branch
          %1825 = sbr.rel (%p1823) target = $region128
        $region127: #{cyattn_forward.6} parent=71 // pred_region
          _
        $region128: #{cyattn_forward.6} parent=71 // pred_fallthru
          _
        // Predicated region
        $region129: #{cyattn_forward.6} parent=71 // pred_check
          %p1826 = pneg %p408
        $region130: #{cyattn_forward.6} parent=71 // pred_check_branch
          %1828 = sbr.rel (%p1826) target = $region132
        $region131: #{cyattn_forward.6} parent=71 // pred_region
          _
        $region132: #{cyattn_forward.6} parent=71 // pred_fallthru
          _
      $region72: #{cyattn_forward.6} parent=5 // pred_fallthru
        _
      %p1829 = scmp.le.s32.totalorder 2, %s36
      // Predicated region
      $region133: #{cyattn_forward.6} parent=5 // pred_check
        %p1830 = pneg %p1829
      $region134: #{cyattn_forward.6} parent=5 // pred_check_branch
        %1832 = sbr.rel (%p1830) target = $region136
      $region135: #{cyattn_forward.6} parent=5 // pred_region
        %s1833 = ssub.s32 %s36, 2
      $region136: #{cyattn_forward.6} parent=5 // pred_fallthru
        _
    $region6: #{cyattn_forward.6} parent=1 // loop_footer
      %s40 = sadd.s32 1, %s36
    $region7: #{cyattn_forward.6} parent=1 // loop_footer_branch
      %35 = sbr.rel target = $region3
    $region8: #{cyattn_forward.6} parent=1 // loop_exit
      _
    %1834 = vsyncpa [#allocation3], 1
    %s1835 = scalar_lea.sflag [#allocation3], 1
    %1836 = vsyncpa %s1835, 1
    %1837 = vsyncpa [#allocation5], 1
    %s1838 = scalar_lea.sflag [#allocation5], 1
    %1839 = vsyncpa %s1838, 1
    %1840 = vsyncpa [#allocation8], 1
    %s1841 = scalar_lea.sflag [#allocation8], 1
    %1842 = vsyncpa %s1841, 1
    %1843 = vsyncpa [#allocation11], 1
    %s1844 = scalar_lea.sflag [#allocation11], 1
    %1845 = vsyncpa %s1844, 1
    %1846 = vsyncpa [#allocation14], 1
    %s1847 = scalar_lea.sflag [#allocation14], 1
    %1848 = vsyncpa %s1847, 1

// kernel: cyattn_forward.7
$region0: #{cyattn_forward.7}
  #allocation0 [shape = 'u32[]', space=smem, size = 0x4, offset = 0x4, fixed_abs, tag = 'smem constant byte address 0x4 - core index']
  #allocation1 [shape = 'u32[72,128]{1,0:T(1,128)}', space=vmem, size = 0x9000, scoped, tag = 'internal scratch']
  %s0 = inlined_call_operand.vmem [shape: f32[48,64], index: 0, kind: input, shape index: {}]
  %s1 = inlined_call_operand.vmem [shape: bf16[16,64], index: 1, kind: input, shape index: {}]
  %s2 = inlined_call_operand.vmem [shape: bf16[2,64,192], index: 2, kind: input, shape index: {}]
  %s3 = inlined_call_operand.vmem [shape: f32[2,1,192], index: 3, kind: input, shape index: {}]
  %s4 = inlined_call_operand.vmem [shape: bf16[2,64,64], index: 4, kind: input, shape index: {}]
  %s5 = inlined_call_operand.vmem [shape: f32[2,1,64], index: 5, kind: input, shape index: {}]
  %s6 = inlined_call_operand.hbm [shape: f32[2,1,64], index: 6, kind: input, shape index: {}]
  %s7 = inlined_call_operand.hbm [shape: f32[2,1,64], index: 7, kind: input, shape index: {}]
  %s8 = inlined_call_operand.vmem [shape: bf16[2,64,192], index: 8, kind: input, shape index: {}]
  %s9 = inlined_call_operand.hbm [shape: f32[2,1,192], index: 9, kind: input, shape index: {}]
  %s10 = inlined_call_operand.hbm [shape: bf16[2,64,64], index: 10, kind: input, shape index: {}]
  %s11 = inlined_call_operand.hbm [shape: f32[2,1,64], index: 11, kind: input, shape index: {}]
  %s12 = inlined_call_operand.hbm [shape: f32[2,1,64], index: 12, kind: input, shape index: {}]
  %s13 = inlined_call_operand.hbm [shape: f32[2,1,64], index: 13, kind: input, shape index: {}]
  %s14 = inlined_call_operand.vmem [shape: bf16[2,64,256], index: 14, kind: input, shape index: {}]
  %s15 = inlined_call_operand.hbm [shape: f32[2,1,256], index: 15, kind: input, shape index: {}]
  %s16 = inlined_call_operand.vmem [shape: bf16[2,256,64], index: 16, kind: input, shape index: {}]
  %s17 = inlined_call_operand.hbm [shape: f32[2,1,64], index: 17, kind: input, shape index: {}]
  %s18 = inlined_call_operand.hbm [shape: f32[2,1,64], index: 18, kind: input, shape index: {}]
  %s19 = inlined_call_operand.hbm [shape: f32[2,1,64], index: 19, kind: input, shape index: {}]
  %s20 = inlined_call_operand.vmem [shape: f32[48,64], index: 20, kind: output, shape index: {}]
  %s21 = sld [smem:[#allocation0]]
  $region161: #{cyattn_forward.7} parent=0
    _
  %s23 = ssub.s32 1, %s21
  %s24 = scalar_select 0, %s23, %s21
  $region1: #{cyattn_forward.7} parent=0
    #allocation2 [shape = 'u8[1024]{0}', space=vmem, size = 0x400, scoped, tag = 'input window, operand 6']
    #allocation3 [shape = 's32[2]{0}', space=sflag, size = 0x8, scoped, tag = 'scoped memory for cyattn_forward.7']
    #allocation4 [shape = 'u8[1024]{0}', space=vmem, size = 0x400, scoped, tag = 'input window, operand 7']
    #allocation5 [shape = 's32[2]{0}', space=sflag, size = 0x8, scoped, tag = 'scoped memory for cyattn_forward.7']
    #allocation6 [shape = 'u8[2048]{0}', space=vmem, size = 0x800, scoped, tag = 'input window, operand 9']
    #allocation7 [shape = 'u8[32768]{0}', space=vmem, size = 0x8000, scoped, tag = 'input window, operand 10']
    #allocation8 [shape = 's32[2]{0}', space=sflag, size = 0x8, scoped, tag = 'scoped memory for cyattn_forward.7']
    #allocation9 [shape = 'u8[1024]{0}', space=vmem, size = 0x400, scoped, tag = 'input window, operand 11']
    #allocation10 [shape = 'u8[1024]{0}', space=vmem, size = 0x400, scoped, tag = 'input window, operand 12']
    #allocation11 [shape = 's32[2]{0}', space=sflag, size = 0x8, scoped, tag = 'scoped memory for cyattn_forward.7']
    #allocation12 [shape = 'u8[1024]{0}', space=vmem, size = 0x400, scoped, tag = 'input window, operand 13']
    #allocation13 [shape = 'u8[2048]{0}', space=vmem, size = 0x800, scoped, tag = 'input window, operand 15']
    #allocation14 [shape = 's32[2]{0}', space=sflag, size = 0x8, scoped, tag = 'scoped memory for cyattn_forward.7']
    #allocation15 [shape = 'u8[1024]{0}', space=vmem, size = 0x400, scoped, tag = 'input window, operand 17']
    #allocation16 [shape = 'u8[1024]{0}', space=vmem, size = 0x400, scoped, tag = 'input window, operand 18']
    #allocation17 [shape = 's32[2]{0}', space=sflag, size = 0x8, scoped, tag = 'scoped memory for cyattn_forward.7']
    #allocation18 [shape = 'u8[1024]{0}', space=vmem, size = 0x400, scoped, tag = 'input window, operand 19']
    %25 = vsyncpa [#allocation3], 0
    %s26 = scalar_lea.sflag [#allocation3], 1
    %27 = vsyncpa %s26, 0
    %28 = vsyncpa [#allocation5], 0
    %s29 = scalar_lea.sflag [#allocation5], 1
    %30 = vsyncpa %s29, 0
    %31 = vsyncpa [#allocation8], 0
    %s32 = scalar_lea.sflag [#allocation8], 1
    %33 = vsyncpa %s32, 0
    %34 = vsyncpa [#allocation11], 0
    %s35 = scalar_lea.sflag [#allocation11], 1
    %36 = vsyncpa %s35, 0
    %37 = vsyncpa [#allocation14], 0
    %s38 = scalar_lea.sflag [#allocation14], 1
    %39 = vsyncpa %s38, 0
    %40 = vsyncpa [#allocation17], 0
    %s41 = scalar_lea.sflag [#allocation17], 1
    %42 = vsyncpa %s41, 0
    loop: start=0, step=1, limit=4
    $region2: #{cyattn_forward.7} parent=1 // loop_pre_header
      _
    $region3: #{cyattn_forward.7} parent=1 // loop_header
      %s44 = sphi 0, %s48
      %p45 = scmp.ge.s32.totalorder %s44, 4
      %s52 = sphi 0, %s52
      %s54 = sphi 0, %s52
      %s55 = sphi 0, %s54
      %s69 = sphi 0, %s55
      %s73 = sphi 0, %s73
      %s75 = sphi 0, %s73
      %s76 = sphi 0, %s75
      %s90 = sphi 0, %s76
      %s96 = sphi 0, %s98
      %s99 = sphi 0, %s96
      %s100 = sphi 0, %s99
      %s116 = sphi 0, %s100
      %s122 = sphi 0, %s124
      %s125 = sphi 0, %s122
      %s126 = sphi 0, %s125
      %s142 = sphi 0, %s126
      %s148 = sphi 0, %s150
      %s151 = sphi 0, %s148
      %s152 = sphi 0, %s151
      %s168 = sphi 0, %s152
      %s174 = sphi 0, %s176
      %s177 = sphi 0, %s174
      %s178 = sphi 0, %s177
      %s194 = sphi 0, %s178
      %s200 = sphi 0, %s202
      %s203 = sphi 0, %s200
      %s204 = sphi 0, %s203
      %s220 = sphi 0, %s204
      %s226 = sphi 0, %s228
      %s229 = sphi 0, %s226
      %s230 = sphi 0, %s229
      %s246 = sphi 0, %s230
      %s252 = sphi 0, %s254
      %s255 = sphi 0, %s252
      %s256 = sphi 0, %s255
      %s272 = sphi 0, %s256
      %s278 = sphi 0, %s280
      %s281 = sphi 0, %s278
      %s282 = sphi 0, %s281
      %s298 = sphi 0, %s282
      %s304 = sphi 0, %s306
      %s307 = sphi 0, %s304
      %s308 = sphi 0, %s307
      %s324 = sphi 0, %s308
      %s330 = sphi 0, %s332
      %s333 = sphi 0, %s330
      %s334 = sphi 0, %s333
      %s350 = sphi 0, %s334
      %s356 = sphi 0, %s358
      %s359 = sphi 0, %s356
      %s360 = sphi 0, %s359
      %s376 = sphi 0, %s360
      %s382 = sphi 0, %s384
      %s385 = sphi 0, %s382
      %s386 = sphi 0, %s385
      %s402 = sphi 0, %s386
      %s408 = sphi 0, %s410
      %s411 = sphi 0, %s408
      %s412 = sphi 0, %s411
      %s428 = sphi 0, %s412
      %s434 = sphi 0, %s436
      %s437 = sphi 0, %s434
      %s438 = sphi 0, %s437
      %s454 = sphi 0, %s438
      %s460 = sphi 0, %s462
      %s463 = sphi 0, %s460
      %s464 = sphi 0, %s463
      %s480 = sphi 0, %s464
      %s486 = sphi 0, %s488
      %s489 = sphi 0, %s486
      %s490 = sphi 0, %s489
      %s506 = sphi 0, %s490
      %s512 = sphi 0, %s514
      %s515 = sphi 0, %s512
      %s516 = sphi 0, %s515
      %s532 = sphi 0, %s516
      %s538 = sphi 0, %s540
      %s541 = sphi 0, %s538
      %s542 = sphi 0, %s541
      %s558 = sphi 0, %s542
      %s562 = sphi 0, %s562
      %s564 = sphi 0, %s562
      %s565 = sphi 0, %s564
      %s579 = sphi 0, %s565
    $region4: #{cyattn_forward.7} parent=1 // loop_header_branch
      %47 = sbr.rel (%p45) target = $region8
    $region5: #{cyattn_forward.7} parent=1 // loop_body
      %s49 = ssub.s32 %s44, 1
      %s50 = ssub.s32 %s44, 2
      %s51 = sadd.s32 %s44, 1
      %s53 = sadd.s32 %s52, 1
      %p56 = scmp.eq.s32.totalorder %s44, 1
      %p57 = scmp.ne.s32.totalorder %s52, %s54
      %p58 = scmp.eq.s32.totalorder %s44, 0
      %p59 = por %p57, %p58
      %p60 = scmp.ne.s32.totalorder %s52, %s54
      %p61 = scmp.eq.s32.totalorder %s49, 1
      %p62 = por %p60, %p61
      %p63 = scmp.ne.s32.totalorder %s54, %s55
      %p64 = scmp.eq.s32.totalorder %s49, 0
      %p65 = por %p63, %p64
      %p66 = scmp.ne.s32.totalorder %s54, %s55
      %p67 = scmp.eq.s32.totalorder %s50, 1
      %p68 = por %p66, %p67
      %p70 = scmp.ne.s32.totalorder %s55, %s69
      %p71 = scmp.eq.s32.totalorder %s50, 0
      %p72 = por %p70, %p71
      %s74 = sadd.s32 %s73, 1
      %p77 = scmp.eq.s32.totalorder %s44, 1
      %p78 = scmp.ne.s32.totalorder %s73, %s75
      %p79 = scmp.eq.s32.totalorder %s44, 0
      %p80 = por %p78, %p79
      %p81 = scmp.ne.s32.totalorder %s73, %s75
      %p82 = scmp.eq.s32.totalorder %s49, 1
      %p83 = por %p81, %p82
      %p84 = scmp.ne.s32.totalorder %s75, %s76
      %p85 = scmp.eq.s32.totalorder %s49, 0
      %p86 = por %p84, %p85
      %p87 = scmp.ne.s32.totalorder %s75, %s76
      %p88 = scmp.eq.s32.totalorder %s50, 1
      %p89 = por %p87, %p88
      %p91 = scmp.ne.s32.totalorder %s76, %s90
      %p92 = scmp.eq.s32.totalorder %s50, 0
      %p93 = por %p91, %p92
      %s94 = ssub.s32 %s44, %s51
      %p95 = scmp.eq.s32.totalorder %s94, 0
      %s97 = sadd.s32 %s96, 1
      %s98 = scalar_select %p95, %s96, %s97
      %p101 = pneg %p95
      %p102 = scmp.eq.s32.totalorder %s44, 1
      %p103 = por %p101, %p102
      %p104 = scmp.ne.s32.totalorder %s96, %s99
      %p105 = scmp.eq.s32.totalorder %s44, 0
      %p106 = por %p104, %p105
      %p107 = scmp.ne.s32.totalorder %s96, %s99
      %p108 = scmp.eq.s32.totalorder %s49, 1
      %p109 = por %p107, %p108
      %p110 = scmp.ne.s32.totalorder %s99, %s100
      %p111 = scmp.eq.s32.totalorder %s49, 0
      %p112 = por %p110, %p111
      %p113 = scmp.ne.s32.totalorder %s99, %s100
      %p114 = scmp.eq.s32.totalorder %s50, 1
      %p115 = por %p113, %p114
      %p117 = scmp.ne.s32.totalorder %s100, %s116
      %p118 = scmp.eq.s32.totalorder %s50, 0
      %p119 = por %p117, %p118
      %s120 = ssub.s32 %s44, %s51
      %p121 = scmp.eq.s32.totalorder %s120, 0
      %s123 = sadd.s32 %s122, 1
      %s124 = scalar_select %p121, %s122, %s123
      %p127 = pneg %p121
      %p128 = scmp.eq.s32.totalorder %s44, 1
      %p129 = por %p127, %p128
      %p130 = scmp.ne.s32.totalorder %s122, %s125
      %p131 = scmp.eq.s32.totalorder %s44, 0
      %p132 = por %p130, %p131
      %p133 = scmp.ne.s32.totalorder %s122, %s125
      %p134 = scmp.eq.s32.totalorder %s49, 1
      %p135 = por %p133, %p134
      %p136 = scmp.ne.s32.totalorder %s125, %s126
      %p137 = scmp.eq.s32.totalorder %s49, 0
      %p138 = por %p136, %p137
      %p139 = scmp.ne.s32.totalorder %s125, %s126
      %p140 = scmp.eq.s32.totalorder %s50, 1
      %p141 = por %p139, %p140
      %p143 = scmp.ne.s32.totalorder %s126, %s142
      %p144 = scmp.eq.s32.totalorder %s50, 0
      %p145 = por %p143, %p144
      %s146 = ssub.s32 %s44, %s51
      %p147 = scmp.eq.s32.totalorder %s146, 0
      %s149 = sadd.s32 %s148, 1
      %s150 = scalar_select %p147, %s148, %s149
      %p153 = pneg %p147
      %p154 = scmp.eq.s32.totalorder %s44, 1
      %p155 = por %p153, %p154
      %p156 = scmp.ne.s32.totalorder %s148, %s151
      %p157 = scmp.eq.s32.totalorder %s44, 0
      %p158 = por %p156, %p157
      %p159 = scmp.ne.s32.totalorder %s148, %s151
      %p160 = scmp.eq.s32.totalorder %s49, 1
      %p161 = por %p159, %p160
      %p162 = scmp.ne.s32.totalorder %s151, %s152
      %p163 = scmp.eq.s32.totalorder %s49, 0
      %p164 = por %p162, %p163
      %p165 = scmp.ne.s32.totalorder %s151, %s152
      %p166 = scmp.eq.s32.totalorder %s50, 1
      %p167 = por %p165, %p166
      %p169 = scmp.ne.s32.totalorder %s152, %s168
      %p170 = scmp.eq.s32.totalorder %s50, 0
      %p171 = por %p169, %p170
      %s172 = ssub.s32 %s44, %s51
      %p173 = scmp.eq.s32.totalorder %s172, 0
      %s175 = sadd.s32 %s174, 1
      %s176 = scalar_select %p173, %s174, %s175
      %p179 = pneg %p173
      %p180 = scmp.eq.s32.totalorder %s44, 1
      %p181 = por %p179, %p180
      %p182 = scmp.ne.s32.totalorder %s174, %s177
      %p183 = scmp.eq.s32.totalorder %s44, 0
      %p184 = por %p182, %p183
      %p185 = scmp.ne.s32.totalorder %s174, %s177
      %p186 = scmp.eq.s32.totalorder %s49, 1
      %p187 = por %p185, %p186
      %p188 = scmp.ne.s32.totalorder %s177, %s178
      %p189 = scmp.eq.s32.totalorder %s49, 0
      %p190 = por %p188, %p189
      %p191 = scmp.ne.s32.totalorder %s177, %s178
      %p192 = scmp.eq.s32.totalorder %s50, 1
      %p193 = por %p191, %p192
      %p195 = scmp.ne.s32.totalorder %s178, %s194
      %p196 = scmp.eq.s32.totalorder %s50, 0
      %p197 = por %p195, %p196
      %s198 = ssub.s32 %s44, %s51
      %p199 = scmp.eq.s32.totalorder %s198, 0
      %s201 = sadd.s32 %s200, 1
      %s202 = scalar_select %p199, %s200, %s201
      %p205 = pneg %p199
      %p206 = scmp.eq.s32.totalorder %s44, 1
      %p207 = por %p205, %p206
      %p208 = scmp.ne.s32.totalorder %s200, %s203
      %p209 = scmp.eq.s32.totalorder %s44, 0
      %p210 = por %p208, %p209
      %p211 = scmp.ne.s32.totalorder %s200, %s203
      %p212 = scmp.eq.s32.totalorder %s49, 1
      %p213 = por %p211, %p212
      %p214 = scmp.ne.s32.totalorder %s203, %s204
      %p215 = scmp.eq.s32.totalorder %s49, 0
      %p216 = por %p214, %p215
      %p217 = scmp.ne.s32.totalorder %s203, %s204
      %p218 = scmp.eq.s32.totalorder %s50, 1
      %p219 = por %p217, %p218
      %p221 = scmp.ne.s32.totalorder %s204, %s220
      %p222 = scmp.eq.s32.totalorder %s50, 0
      %p223 = por %p221, %p222
      %s224 = ssub.s32 %s44, %s51
      %p225 = scmp.eq.s32.totalorder %s224, 0
      %s227 = sadd.s32 %s226, 1
      %s228 = scalar_select %p225, %s226, %s227
      %p231 = pneg %p225
      %p232 = scmp.eq.s32.totalorder %s44, 1
      %p233 = por %p231, %p232
      %p234 = scmp.ne.s32.totalorder %s226, %s229
      %p235 = scmp.eq.s32.totalorder %s44, 0
      %p236 = por %p234, %p235
      %p237 = scmp.ne.s32.totalorder %s226, %s229
      %p238 = scmp.eq.s32.totalorder %s49, 1
      %p239 = por %p237, %p238
      %p240 = scmp.ne.s32.totalorder %s229, %s230
      %p241 = scmp.eq.s32.totalorder %s49, 0
      %p242 = por %p240, %p241
      %p243 = scmp.ne.s32.totalorder %s229, %s230
      %p244 = scmp.eq.s32.totalorder %s50, 1
      %p245 = por %p243, %p244
      %p247 = scmp.ne.s32.totalorder %s230, %s246
      %p248 = scmp.eq.s32.totalorder %s50, 0
      %p249 = por %p247, %p248
      %s250 = ssub.s32 %s44, %s51
      %p251 = scmp.eq.s32.totalorder %s250, 0
      %s253 = sadd.s32 %s252, 1
      %s254 = scalar_select %p251, %s252, %s253
      %p257 = pneg %p251
      %p258 = scmp.eq.s32.totalorder %s44, 1
      %p259 = por %p257, %p258
      %p260 = scmp.ne.s32.totalorder %s252, %s255
      %p261 = scmp.eq.s32.totalorder %s44, 0
      %p262 = por %p260, %p261
      %p263 = scmp.ne.s32.totalorder %s252, %s255
      %p264 = scmp.eq.s32.totalorder %s49, 1
      %p265 = por %p263, %p264
      %p266 = scmp.ne.s32.totalorder %s255, %s256
      %p267 = scmp.eq.s32.totalorder %s49, 0
      %p268 = por %p266, %p267
      %p269 = scmp.ne.s32.totalorder %s255, %s256
      %p270 = scmp.eq.s32.totalorder %s50, 1
      %p271 = por %p269, %p270
      %p273 = scmp.ne.s32.totalorder %s256, %s272
      %p274 = scmp.eq.s32.totalorder %s50, 0
      %p275 = por %p273, %p274
      %s276 = ssub.s32 %s44, %s51
      %p277 = scmp.eq.s32.totalorder %s276, 0
      %s279 = sadd.s32 %s278, 1
      %s280 = scalar_select %p277, %s278, %s279
      %p283 = pneg %p277
      %p284 = scmp.eq.s32.totalorder %s44, 1
      %p285 = por %p283, %p284
      %p286 = scmp.ne.s32.totalorder %s278, %s281
      %p287 = scmp.eq.s32.totalorder %s44, 0
      %p288 = por %p286, %p287
      %p289 = scmp.ne.s32.totalorder %s278, %s281
      %p290 = scmp.eq.s32.totalorder %s49, 1
      %p291 = por %p289, %p290
      %p292 = scmp.ne.s32.totalorder %s281, %s282
      %p293 = scmp.eq.s32.totalorder %s49, 0
      %p294 = por %p292, %p293
      %p295 = scmp.ne.s32.totalorder %s281, %s282
      %p296 = scmp.eq.s32.totalorder %s50, 1
      %p297 = por %p295, %p296
      %p299 = scmp.ne.s32.totalorder %s282, %s298
      %p300 = scmp.eq.s32.totalorder %s50, 0
      %p301 = por %p299, %p300
      %s302 = ssub.s32 %s44, %s51
      %p303 = scmp.eq.s32.totalorder %s302, 0
      %s305 = sadd.s32 %s304, 1
      %s306 = scalar_select %p303, %s304, %s305
      %p309 = pneg %p303
      %p310 = scmp.eq.s32.totalorder %s44, 1
      %p311 = por %p309, %p310
      %p312 = scmp.ne.s32.totalorder %s304, %s307
      %p313 = scmp.eq.s32.totalorder %s44, 0
      %p314 = por %p312, %p313
      %p315 = scmp.ne.s32.totalorder %s304, %s307
      %p316 = scmp.eq.s32.totalorder %s49, 1
      %p317 = por %p315, %p316
      %p318 = scmp.ne.s32.totalorder %s307, %s308
      %p319 = scmp.eq.s32.totalorder %s49, 0
      %p320 = por %p318, %p319
      %p321 = scmp.ne.s32.totalorder %s307, %s308
      %p322 = scmp.eq.s32.totalorder %s50, 1
      %p323 = por %p321, %p322
      %p325 = scmp.ne.s32.totalorder %s308, %s324
      %p326 = scmp.eq.s32.totalorder %s50, 0
      %p327 = por %p325, %p326
      %s328 = ssub.s32 %s44, %s51
      %p329 = scmp.eq.s32.totalorder %s328, 0
      %s331 = sadd.s32 %s330, 1
      %s332 = scalar_select %p329, %s330, %s331
      %p335 = pneg %p329
      %p336 = scmp.eq.s32.totalorder %s44, 1
      %p337 = por %p335, %p336
      %p338 = scmp.ne.s32.totalorder %s330, %s333
      %p339 = scmp.eq.s32.totalorder %s44, 0
      %p340 = por %p338, %p339
      %p341 = scmp.ne.s32.totalorder %s330, %s333
      %p342 = scmp.eq.s32.totalorder %s49, 1
      %p343 = por %p341, %p342
      %p344 = scmp.ne.s32.totalorder %s333, %s334
      %p345 = scmp.eq.s32.totalorder %s49, 0
      %p346 = por %p344, %p345
      %p347 = scmp.ne.s32.totalorder %s333, %s334
      %p348 = scmp.eq.s32.totalorder %s50, 1
      %p349 = por %p347, %p348
      %p351 = scmp.ne.s32.totalorder %s334, %s350
      %p352 = scmp.eq.s32.totalorder %s50, 0
      %p353 = por %p351, %p352
      %s354 = ssub.s32 %s44, %s51
      %p355 = scmp.eq.s32.totalorder %s354, 0
      %s357 = sadd.s32 %s356, 1
      %s358 = scalar_select %p355, %s356, %s357
      %p361 = pneg %p355
      %p362 = scmp.eq.s32.totalorder %s44, 1
      %p363 = por %p361, %p362
      %p364 = scmp.ne.s32.totalorder %s356, %s359
      %p365 = scmp.eq.s32.totalorder %s44, 0
      %p366 = por %p364, %p365
      %p367 = scmp.ne.s32.totalorder %s356, %s359
      %p368 = scmp.eq.s32.totalorder %s49, 1
      %p369 = por %p367, %p368
      %p370 = scmp.ne.s32.totalorder %s359, %s360
      %p371 = scmp.eq.s32.totalorder %s49, 0
      %p372 = por %p370, %p371
      %p373 = scmp.ne.s32.totalorder %s359, %s360
      %p374 = scmp.eq.s32.totalorder %s50, 1
      %p375 = por %p373, %p374
      %p377 = scmp.ne.s32.totalorder %s360, %s376
      %p378 = scmp.eq.s32.totalorder %s50, 0
      %p379 = por %p377, %p378
      %s380 = ssub.s32 %s44, %s51
      %p381 = scmp.eq.s32.totalorder %s380, 0
      %s383 = sadd.s32 %s382, 1
      %s384 = scalar_select %p381, %s382, %s383
      %p387 = pneg %p381
      %p388 = scmp.eq.s32.totalorder %s44, 1
      %p389 = por %p387, %p388
      %p390 = scmp.ne.s32.totalorder %s382, %s385
      %p391 = scmp.eq.s32.totalorder %s44, 0
      %p392 = por %p390, %p391
      %p393 = scmp.ne.s32.totalorder %s382, %s385
      %p394 = scmp.eq.s32.totalorder %s49, 1
      %p395 = por %p393, %p394
      %p396 = scmp.ne.s32.totalorder %s385, %s386
      %p397 = scmp.eq.s32.totalorder %s49, 0
      %p398 = por %p396, %p397
      %p399 = scmp.ne.s32.totalorder %s385, %s386
      %p400 = scmp.eq.s32.totalorder %s50, 1
      %p401 = por %p399, %p400
      %p403 = scmp.ne.s32.totalorder %s386, %s402
      %p404 = scmp.eq.s32.totalorder %s50, 0
      %p405 = por %p403, %p404
      %s406 = ssub.s32 %s44, %s51
      %p407 = scmp.eq.s32.totalorder %s406, 0
      %s409 = sadd.s32 %s408, 1
      %s410 = scalar_select %p407, %s408, %s409
      %p413 = pneg %p407
      %p414 = scmp.eq.s32.totalorder %s44, 1
      %p415 = por %p413, %p414
      %p416 = scmp.ne.s32.totalorder %s408, %s411
      %p417 = scmp.eq.s32.totalorder %s44, 0
      %p418 = por %p416, %p417
      %p419 = scmp.ne.s32.totalorder %s408, %s411
      %p420 = scmp.eq.s32.totalorder %s49, 1
      %p421 = por %p419, %p420
      %p422 = scmp.ne.s32.totalorder %s411, %s412
      %p423 = scmp.eq.s32.totalorder %s49, 0
      %p424 = por %p422, %p423
      %p425 = scmp.ne.s32.totalorder %s411, %s412
      %p426 = scmp.eq.s32.totalorder %s50, 1
      %p427 = por %p425, %p426
      %p429 = scmp.ne.s32.totalorder %s412, %s428
      %p430 = scmp.eq.s32.totalorder %s50, 0
      %p431 = por %p429, %p430
      %s432 = ssub.s32 %s44, %s51
      %p433 = scmp.eq.s32.totalorder %s432, 0
      %s435 = sadd.s32 %s434, 1
      %s436 = scalar_select %p433, %s434, %s435
      %p439 = pneg %p433
      %p440 = scmp.eq.s32.totalorder %s44, 1
      %p441 = por %p439, %p440
      %p442 = scmp.ne.s32.totalorder %s434, %s437
      %p443 = scmp.eq.s32.totalorder %s44, 0
      %p444 = por %p442, %p443
      %p445 = scmp.ne.s32.totalorder %s434, %s437
      %p446 = scmp.eq.s32.totalorder %s49, 1
      %p447 = por %p445, %p446
      %p448 = scmp.ne.s32.totalorder %s437, %s438
      %p449 = scmp.eq.s32.totalorder %s49, 0
      %p450 = por %p448, %p449
      %p451 = scmp.ne.s32.totalorder %s437, %s438
      %p452 = scmp.eq.s32.totalorder %s50, 1
      %p453 = por %p451, %p452
      %p455 = scmp.ne.s32.totalorder %s438, %s454
      %p456 = scmp.eq.s32.totalorder %s50, 0
      %p457 = por %p455, %p456
      %s458 = ssub.s32 %s44, %s51
      %p459 = scmp.eq.s32.totalorder %s458, 0
      %s461 = sadd.s32 %s460, 1
      %s462 = scalar_select %p459, %s460, %s461
      %p465 = pneg %p459
      %p466 = scmp.eq.s32.totalorder %s44, 1
      %p467 = por %p465, %p466
      %p468 = scmp.ne.s32.totalorder %s460, %s463
      %p469 = scmp.eq.s32.totalorder %s44, 0
      %p470 = por %p468, %p469
      %p471 = scmp.ne.s32.totalorder %s460, %s463
      %p472 = scmp.eq.s32.totalorder %s49, 1
      %p473 = por %p471, %p472
      %p474 = scmp.ne.s32.totalorder %s463, %s464
      %p475 = scmp.eq.s32.totalorder %s49, 0
      %p476 = por %p474, %p475
      %p477 = scmp.ne.s32.totalorder %s463, %s464
      %p478 = scmp.eq.s32.totalorder %s50, 1
      %p479 = por %p477, %p478
      %p481 = scmp.ne.s32.totalorder %s464, %s480
      %p482 = scmp.eq.s32.totalorder %s50, 0
      %p483 = por %p481, %p482
      %s484 = ssub.s32 %s44, %s51
      %p485 = scmp.eq.s32.totalorder %s484, 0
      %s487 = sadd.s32 %s486, 1
      %s488 = scalar_select %p485, %s486, %s487
      %p491 = pneg %p485
      %p492 = scmp.eq.s32.totalorder %s44, 1
      %p493 = por %p491, %p492
      %p494 = scmp.ne.s32.totalorder %s486, %s489
      %p495 = scmp.eq.s32.totalorder %s44, 0
      %p496 = por %p494, %p495
      %p497 = scmp.ne.s32.totalorder %s486, %s489
      %p498 = scmp.eq.s32.totalorder %s49, 1
      %p499 = por %p497, %p498
      %p500 = scmp.ne.s32.totalorder %s489, %s490
      %p501 = scmp.eq.s32.totalorder %s49, 0
      %p502 = por %p500, %p501
      %p503 = scmp.ne.s32.totalorder %s489, %s490
      %p504 = scmp.eq.s32.totalorder %s50, 1
      %p505 = por %p503, %p504
      %p507 = scmp.ne.s32.totalorder %s490, %s506
      %p508 = scmp.eq.s32.totalorder %s50, 0
      %p509 = por %p507, %p508
      %s510 = ssub.s32 %s44, %s51
      %p511 = scmp.eq.s32.totalorder %s510, 0
      %s513 = sadd.s32 %s512, 1
      %s514 = scalar_select %p511, %s512, %s513
      %p517 = pneg %p511
      %p518 = scmp.eq.s32.totalorder %s44, 1
      %p519 = por %p517, %p518
      %p520 = scmp.ne.s32.totalorder %s512, %s515
      %p521 = scmp.eq.s32.totalorder %s44, 0
      %p522 = por %p520, %p521
      %p523 = scmp.ne.s32.totalorder %s512, %s515
      %p524 = scmp.eq.s32.totalorder %s49, 1
      %p525 = por %p523, %p524
      %p526 = scmp.ne.s32.totalorder %s515, %s516
      %p527 = scmp.eq.s32.totalorder %s49, 0
      %p528 = por %p526, %p527
      %p529 = scmp.ne.s32.totalorder %s515, %s516
      %p530 = scmp.eq.s32.totalorder %s50, 1
      %p531 = por %p529, %p530
      %p533 = scmp.ne.s32.totalorder %s516, %s532
      %p534 = scmp.eq.s32.totalorder %s50, 0
      %p535 = por %p533, %p534
      %s536 = ssub.s32 %s44, %s51
      %p537 = scmp.eq.s32.totalorder %s536, 0
      %s539 = sadd.s32 %s538, 1
      %s540 = scalar_select %p537, %s538, %s539
      %p543 = pneg %p537
      %p544 = scmp.eq.s32.totalorder %s44, 1
      %p545 = por %p543, %p544
      %p546 = scmp.ne.s32.totalorder %s538, %s541
      %p547 = scmp.eq.s32.totalorder %s44, 0
      %p548 = por %p546, %p547
      %p549 = scmp.ne.s32.totalorder %s538, %s541
      %p550 = scmp.eq.s32.totalorder %s49, 1
      %p551 = por %p549, %p550
      %p552 = scmp.ne.s32.totalorder %s541, %s542
      %p553 = scmp.eq.s32.totalorder %s49, 0
      %p554 = por %p552, %p553
      %p555 = scmp.ne.s32.totalorder %s541, %s542
      %p556 = scmp.eq.s32.totalorder %s50, 1
      %p557 = por %p555, %p556
      %p559 = scmp.ne.s32.totalorder %s542, %s558
      %p560 = scmp.eq.s32.totalorder %s50, 0
      %p561 = por %p559, %p560
      %s563 = sadd.s32 %s562, 1
      %p566 = scmp.eq.s32.totalorder %s44, 1
      %p567 = scmp.ne.s32.totalorder %s562, %s564
      %p568 = scmp.eq.s32.totalorder %s44, 0
      %p569 = por %p567, %p568
      %p570 = scmp.ne.s32.totalorder %s562, %s564
      %p571 = scmp.eq.s32.totalorder %s49, 1
      %p572 = por %p570, %p571
      %p573 = scmp.ne.s32.totalorder %s564, %s565
      %p574 = scmp.eq.s32.totalorder %s49, 0
      %p575 = por %p573, %p574
      %p576 = scmp.ne.s32.totalorder %s564, %s565
      %p577 = scmp.eq.s32.totalorder %s50, 1
      %p578 = por %p576, %p577
      %p580 = scmp.ne.s32.totalorder %s565, %s579
      %p581 = scmp.eq.s32.totalorder %s50, 0
      %p582 = por %p580, %p581
      %p583 = scmp.le.s32.totalorder 1, %s44
      %p584 = scmp.lt.s32.totalorder %s44, 3
      %p585 = pnand %p583, %p584
      %p586 = pneg %p585
      // Predicated region
      $region9: #{cyattn_forward.7} parent=5 // pred_check
        _
      $region10: #{cyattn_forward.7} parent=5 // pred_check_branch
        %588 = sbr.rel (%p585) target = $region12
      $region11: #{cyattn_forward.7} parent=5 // pred_region
        %s589 = ssub.s32 %s44, 1
        // Predicated region
        $region13: #{cyattn_forward.7} parent=11 // pred_check
          %p590 = pneg %p65
        $region14: #{cyattn_forward.7} parent=11 // pred_check_branch
          %592 = sbr.rel (%p590) target = $region16
        $region15: #{cyattn_forward.7} parent=11 // pred_region
          _
        $region16: #{cyattn_forward.7} parent=11 // pred_fallthru
          _
        // Predicated region
        $region17: #{cyattn_forward.7} parent=11 // pred_check
          %p593 = pneg %p86
        $region18: #{cyattn_forward.7} parent=11 // pred_check_branch
          %595 = sbr.rel (%p593) target = $region20
        $region19: #{cyattn_forward.7} parent=11 // pred_region
          _
        $region20: #{cyattn_forward.7} parent=11 // pred_fallthru
          _
      $region12: #{cyattn_forward.7} parent=5 // pred_fallthru
        _
      %p596 = scmp.lt.s32.totalorder %s44, 2
      // Predicated region
      $region21: #{cyattn_forward.7} parent=5 // pred_check
        %p597 = pneg %p596
      $region22: #{cyattn_forward.7} parent=5 // pred_check_branch
        %599 = sbr.rel (%p597) target = $region24
      $region23: #{cyattn_forward.7} parent=5 // pred_region
        // Predicated region
        $region25: #{cyattn_forward.7} parent=23 // pred_check
          %p600 = pneg %p106
        $region26: #{cyattn_forward.7} parent=23 // pred_check_branch
          %602 = sbr.rel (%p600) target = $region28
        $region27: #{cyattn_forward.7} parent=23 // pred_region
          %p603 = scmp.lt.s32.totalorder %s44, 1
          %s604 = scalar_select %p603, %s44, 1
          %s605 = smul.addr %s604, 16
          %s606 = smul.addr %s605, 4
          %s607 = scalar_lea.vmem %s2, %s606
        $region28: #{cyattn_forward.7} parent=23 // pred_fallthru
          _
        // Predicated region
        $region29: #{cyattn_forward.7} parent=23 // pred_check
          %p608 = pneg %p132
        $region30: #{cyattn_forward.7} parent=23 // pred_check_branch
          %610 = sbr.rel (%p608) target = $region32
        $region31: #{cyattn_forward.7} parent=23 // pred_region
          %p611 = scmp.lt.s32.totalorder %s44, 1
          %s612 = scalar_select %p611, %s44, 1
          %s613 = smul.addr %s612, 2
          %s614 = scalar_lea.vmem %s3, %s613
        $region32: #{cyattn_forward.7} parent=23 // pred_fallthru
          _
        // Predicated region
        $region33: #{cyattn_forward.7} parent=23 // pred_check
          %p615 = pneg %p158
        $region34: #{cyattn_forward.7} parent=23 // pred_check_branch
          %617 = sbr.rel (%p615) target = $region36
        $region35: #{cyattn_forward.7} parent=23 // pred_region
          %p618 = scmp.lt.s32.totalorder %s44, 1
          %s619 = scalar_select %p618, %s44, 1
          %s620 = smul.addr %s619, 8
          %s621 = smul.addr %s620, 4
          %s622 = scalar_lea.vmem %s4, %s621
        $region36: #{cyattn_forward.7} parent=23 // pred_fallthru
          _
        // Predicated region
        $region37: #{cyattn_forward.7} parent=23 // pred_check
          %p623 = pneg %p184
        $region38: #{cyattn_forward.7} parent=23 // pred_check_branch
          %625 = sbr.rel (%p623) target = $region40
        $region39: #{cyattn_forward.7} parent=23 // pred_region
          %p626 = scmp.lt.s32.totalorder %s44, 1
          %s627 = scalar_select %p626, %s44, 1
          %s628 = scalar_lea.vmem %s5, %s627
        $region40: #{cyattn_forward.7} parent=23 // pred_fallthru
          _
        // Predicated region
        $region41: #{cyattn_forward.7} parent=23 // pred_check
          %p629 = pneg %p210
        $region42: #{cyattn_forward.7} parent=23 // pred_check_branch
          %631 = sbr.rel (%p629) target = $region44
        $region43: #{cyattn_forward.7} parent=23 // pred_region
          %s632 = sand.u32 %s200, 1
          %s633 = scalar_lea.sflag [#allocation3], %s632
          %s634 = sand.u32 %s200, 1
          %s635 = scalar_lea.vmem [#allocation2], %s634
          %637 = vsyncadd %s633, 0
          %s638 = scalar_lea.hbm %s6, %s44
          %s640 = sshll.u32 %s638, 4
          %s641 = int_to_ptr.hbm [resolvable:$true] %s640
          %s642 = sshll.u32 %s635, 4
          %s643 = int_to_ptr.vmem [resolvable:$true] %s642
          %645 = dma.hbm_to_vmem [thread:$0]  %s641, 16, %s643, %s633
        $region44: #{cyattn_forward.7} parent=23 // pred_fallthru
          _
        // Predicated region
        $region45: #{cyattn_forward.7} parent=23 // pred_check
          %p646 = pneg %p236
        $region46: #{cyattn_forward.7} parent=23 // pred_check_branch
          %648 = sbr.rel (%p646) target = $region48
        $region47: #{cyattn_forward.7} parent=23 // pred_region
          %s649 = sand.u32 %s44, 1
          %s650 = scalar_lea.sflag [#allocation5], %s649
          %s651 = sand.u32 %s226, 1
          %s652 = scalar_lea.vmem [#allocation4], %s651
          %654 = vsyncadd %s650, 0
          %s655 = scalar_lea.hbm %s7, %s44
          %s657 = sshll.u32 %s655, 4
          %s658 = int_to_ptr.hbm [resolvable:$true] %s657
          %s659 = sshll.u32 %s652, 4
          %s660 = int_to_ptr.vmem [resolvable:$true] %s659
          %662 = dma.hbm_to_vmem [thread:$0]  %s658, 16, %s660, %s650
        $region48: #{cyattn_forward.7} parent=23 // pred_fallthru
          _
        // Predicated region
        $region49: #{cyattn_forward.7} parent=23 // pred_check
          %p663 = pneg %p262
        $region50: #{cyattn_forward.7} parent=23 // pred_check_branch
          %665 = sbr.rel (%p663) target = $region52
        $region51: #{cyattn_forward.7} parent=23 // pred_region
          %p666 = scmp.lt.s32.totalorder %s44, 1
          %s667 = scalar_select %p666, %s44, 1
          %s668 = smul.addr %s667, 16
          %s669 = smul.addr %s668, 4
          %s670 = scalar_lea.vmem %s8, %s669
        $region52: #{cyattn_forward.7} parent=23 // pred_fallthru
          _
        // Predicated region
        $region53: #{cyattn_forward.7} parent=23 // pred_check
          %p671 = pneg %p288
        $region54: #{cyattn_forward.7} parent=23 // pred_check_branch
          %673 = sbr.rel (%p671) target = $region56
        $region55: #{cyattn_forward.7} parent=23 // pred_region
          %s674 = sand.u32 %s44, 1
          %s675 = scalar_lea.sflag [#allocation5], %s674
          %s676 = sand.u32 %s278, 1
          %s677 = smul.addr %s676, 2
          %s678 = scalar_lea.vmem [#allocation6], %s677
          %680 = vsyncadd %s675, 0
          %s681 = smul.addr %s44, 2
          %s682 = scalar_lea.hbm %s9, %s681
          %s684 = sshll.u32 %s682, 4
          %s685 = int_to_ptr.hbm [resolvable:$true] %s684
          %s686 = sshll.u32 %s678, 4
          %s687 = int_to_ptr.vmem [resolvable:$true] %s686
          %689 = dma.hbm_to_vmem [thread:$0]  %s685, 32, %s687, %s675
        $region56: #{cyattn_forward.7} parent=23 // pred_fallthru
          _
        // Predicated region
        $region57: #{cyattn_forward.7} parent=23 // pred_check
          %p690 = pneg %p314
        $region58: #{cyattn_forward.7} parent=23 // pred_check_branch
          %692 = sbr.rel (%p690) target = $region60
        $region59: #{cyattn_forward.7} parent=23 // pred_region
          %s693 = sand.u32 %s44, 1
          %s694 = scalar_lea.sflag [#allocation8], %s693
          %s695 = sand.u32 %s304, 1
          %s696 = smul.addr %s695, 32
          %s697 = scalar_lea.vmem [#allocation7], %s696
          %699 = vsyncadd %s694, 0
          %s700 = smul.addr %s44, 8
          %s701 = smul.addr %s700, 4
          %s702 = scalar_lea.hbm %s10, %s701
          %s703 = sshll.u32 %s702, 4
          %s704 = int_to_ptr.hbm [resolvable:$true] %s703
          %s705 = sshll.u32 %s697, 4
          %s706 = int_to_ptr.vmem [resolvable:$true] %s705
          %711 = dma.hbm_to_vmem [thread:$0]  %s704, 512, %s706, %s694, 64, 64, 4
        $region60: #{cyattn_forward.7} parent=23 // pred_fallthru
          _
        // Predicated region
        $region61: #{cyattn_forward.7} parent=23 // pred_check
          %p712 = pneg %p340
        $region62: #{cyattn_forward.7} parent=23 // pred_check_branch
          %714 = sbr.rel (%p712) target = $region64
        $region63: #{cyattn_forward.7} parent=23 // pred_region
          %s715 = sand.u32 %s44, 1
          %s716 = scalar_lea.sflag [#allocation8], %s715
          %s717 = sand.u32 %s330, 1
          %s718 = scalar_lea.vmem [#allocation9], %s717
          %720 = vsyncadd %s716, 0
          %s721 = scalar_lea.hbm %s11, %s44
          %s723 = sshll.u32 %s721, 4
          %s724 = int_to_ptr.hbm [resolvable:$true] %s723
          %s725 = sshll.u32 %s718, 4
          %s726 = int_to_ptr.vmem [resolvable:$true] %s725
          %728 = dma.hbm_to_vmem [thread:$0]  %s724, 16, %s726, %s716
        $region64: #{cyattn_forward.7} parent=23 // pred_fallthru
          _
        // Predicated region
        $region65: #{cyattn_forward.7} parent=23 // pred_check
          %p729 = pneg %p366
        $region66: #{cyattn_forward.7} parent=23 // pred_check_branch
          %731 = sbr.rel (%p729) target = $region68
        $region67: #{cyattn_forward.7} parent=23 // pred_region
          %s732 = sand.u32 %s44, 1
          %s733 = scalar_lea.sflag [#allocation11], %s732
          %s734 = sand.u32 %s356, 1
          %s735 = scalar_lea.vmem [#allocation10], %s734
          %737 = vsyncadd %s733, 0
          %s738 = scalar_lea.hbm %s12, %s44
          %s740 = sshll.u32 %s738, 4
          %s741 = int_to_ptr.hbm [resolvable:$true] %s740
          %s742 = sshll.u32 %s735, 4
          %s743 = int_to_ptr.vmem [resolvable:$true] %s742
          %745 = dma.hbm_to_vmem [thread:$0]  %s741, 16, %s743, %s733
        $region68: #{cyattn_forward.7} parent=23 // pred_fallthru
          _
        // Predicated region
        $region69: #{cyattn_forward.7} parent=23 // pred_check
          %p746 = pneg %p392
        $region70: #{cyattn_forward.7} parent=23 // pred_check_branch
          %748 = sbr.rel (%p746) target = $region72
        $region71: #{cyattn_forward.7} parent=23 // pred_region
          %s749 = sand.u32 %s44, 1
          %s750 = scalar_lea.sflag [#allocation11], %s749
          %s751 = sand.u32 %s382, 1
          %s752 = scalar_lea.vmem [#allocation12], %s751
          %754 = vsyncadd %s750, 0
          %s755 = scalar_lea.hbm %s13, %s44
          %s757 = sshll.u32 %s755, 4
          %s758 = int_to_ptr.hbm [resolvable:$true] %s757
          %s759 = sshll.u32 %s752, 4
          %s760 = int_to_ptr.vmem [resolvable:$true] %s759
          %762 = dma.hbm_to_vmem [thread:$0]  %s758, 16, %s760, %s750
        $region72: #{cyattn_forward.7} parent=23 // pred_fallthru
          _
        // Predicated region
        $region73: #{cyattn_forward.7} parent=23 // pred_check
          %p763 = pneg %p418
        $region74: #{cyattn_forward.7} parent=23 // pred_check_branch
          %765 = sbr.rel (%p763) target = $region76
        $region75: #{cyattn_forward.7} parent=23 // pred_region
          %p766 = scmp.lt.s32.totalorder %s44, 1
          %s767 = scalar_select %p766, %s44, 1
          %s768 = smul.addr %s767, 16
          %s769 = smul.addr %s768, 4
          %s770 = scalar_lea.vmem %s14, %s769
        $region76: #{cyattn_forward.7} parent=23 // pred_fallthru
          _
        // Predicated region
        $region77: #{cyattn_forward.7} parent=23 // pred_check
          %p771 = pneg %p444
        $region78: #{cyattn_forward.7} parent=23 // pred_check_branch
          %773 = sbr.rel (%p771) target = $region80
        $region79: #{cyattn_forward.7} parent=23 // pred_region
          %s774 = sand.u32 %s44, 1
          %s775 = scalar_lea.sflag [#allocation14], %s774
          %s776 = sand.u32 %s434, 1
          %s777 = smul.addr %s776, 2
          %s778 = scalar_lea.vmem [#allocation13], %s777
          %780 = vsyncadd %s775, 0
          %s781 = smul.addr %s44, 2
          %s782 = scalar_lea.hbm %s15, %s781
          %s784 = sshll.u32 %s782, 4
          %s785 = int_to_ptr.hbm [resolvable:$true] %s784
          %s786 = sshll.u32 %s778, 4
          %s787 = int_to_ptr.vmem [resolvable:$true] %s786
          %789 = dma.hbm_to_vmem [thread:$0]  %s785, 32, %s787, %s775
        $region80: #{cyattn_forward.7} parent=23 // pred_fallthru
          _
        // Predicated region
        $region81: #{cyattn_forward.7} parent=23 // pred_check
          %p790 = pneg %p470
        $region82: #{cyattn_forward.7} parent=23 // pred_check_branch
          %792 = sbr.rel (%p790) target = $region84
        $region83: #{cyattn_forward.7} parent=23 // pred_region
          %p793 = scmp.lt.s32.totalorder %s44, 1
          %s794 = scalar_select %p793, %s44, 1
          %s795 = smul.addr %s794, 32
          %s796 = smul.addr %s795, 4
          %s797 = scalar_lea.vmem %s16, %s796
        $region84: #{cyattn_forward.7} parent=23 // pred_fallthru
          _
        // Predicated region
        $region85: #{cyattn_forward.7} parent=23 // pred_check
          %p798 = pneg %p496
        $region86: #{cyattn_forward.7} parent=23 // pred_check_branch
          %800 = sbr.rel (%p798) target = $region88
        $region87: #{cyattn_forward.7} parent=23 // pred_region
          %s801 = sand.u32 %s44, 1
          %s802 = scalar_lea.sflag [#allocation14], %s801
          %s803 = sand.u32 %s486, 1
          %s804 = scalar_lea.vmem [#allocation15], %s803
          %806 = vsyncadd %s802, 0
          %s807 = scalar_lea.hbm %s17, %s44
          %s809 = sshll.u32 %s807, 4
          %s810 = int_to_ptr.hbm [resolvable:$true] %s809
          %s811 = sshll.u32 %s804, 4
          %s812 = int_to_ptr.vmem [resolvable:$true] %s811
          %814 = dma.hbm_to_vmem [thread:$0]  %s810, 16, %s812, %s802
        $region88: #{cyattn_forward.7} parent=23 // pred_fallthru
          _
        // Predicated region
        $region89: #{cyattn_forward.7} parent=23 // pred_check
          %p815 = pneg %p522
        $region90: #{cyattn_forward.7} parent=23 // pred_check_branch
          %817 = sbr.rel (%p815) target = $region92
        $region91: #{cyattn_forward.7} parent=23 // pred_region
          %s818 = sand.u32 %s44, 1
          %s819 = scalar_lea.sflag [#allocation17], %s818
          %s820 = sand.u32 %s512, 1
          %s821 = scalar_lea.vmem [#allocation16], %s820
          %823 = vsyncadd %s819, 0
          %s824 = scalar_lea.hbm %s18, %s44
          %s826 = sshll.u32 %s824, 4
          %s827 = int_to_ptr.hbm [resolvable:$true] %s826
          %s828 = sshll.u32 %s821, 4
          %s829 = int_to_ptr.vmem [resolvable:$true] %s828
          %831 = dma.hbm_to_vmem [thread:$0]  %s827, 16, %s829, %s819
        $region92: #{cyattn_forward.7} parent=23 // pred_fallthru
          _
        // Predicated region
        $region93: #{cyattn_forward.7} parent=23 // pred_check
          %p832 = pneg %p548
        $region94: #{cyattn_forward.7} parent=23 // pred_check_branch
          %834 = sbr.rel (%p832) target = $region96
        $region95: #{cyattn_forward.7} parent=23 // pred_region
          %s835 = sand.u32 %s44, 1
          %s836 = scalar_lea.sflag [#allocation17], %s835
          %s837 = sand.u32 %s538, 1
          %s838 = scalar_lea.vmem [#allocation18], %s837
          %840 = vsyncadd %s836, 0
          %s841 = scalar_lea.hbm %s19, %s44
          %s843 = sshll.u32 %s841, 4
          %s844 = int_to_ptr.hbm [resolvable:$true] %s843
          %s845 = sshll.u32 %s838, 4
          %s846 = int_to_ptr.vmem [resolvable:$true] %s845
          %848 = dma.hbm_to_vmem [thread:$0]  %s844, 16, %s846, %s836
        $region96: #{cyattn_forward.7} parent=23 // pred_fallthru
          _
      $region24: #{cyattn_forward.7} parent=5 // pred_fallthru
        _
      %p849 = scmp.le.s32.totalorder 1, %s44
      %p850 = scmp.lt.s32.totalorder %s44, 3
      %p851 = pnand %p849, %p850
      %p852 = pneg %p851
      // Predicated region
      $region97: #{cyattn_forward.7} parent=5 // pred_check
        _
      $region98: #{cyattn_forward.7} parent=5 // pred_check_branch
        %854 = sbr.rel (%p851) target = $region100
      $region99: #{cyattn_forward.7} parent=5 // pred_region
        %s855 = ssub.s32 %s44, 1
        %s856 = sand.u32 %s203, 1
        %s857 = scalar_lea.sflag [#allocation3], %s856
        %s858 = sand.u32 %s203, 1
        %s859 = scalar_lea.vmem [#allocation2], %s858
        // Predicated region
        $region101: #{cyattn_forward.7} parent=99 // pred_check
          %p860 = pneg %p216
        $region102: #{cyattn_forward.7} parent=99 // pred_check_branch
          %862 = sbr.rel (%p860) target = $region104
        $region103: #{cyattn_forward.7} parent=99 // pred_region
          %864 = dma.done %s857, 16
        $region104: #{cyattn_forward.7} parent=99 // pred_fallthru
          _
        %s865 = sand.u32 %s49, 1
        %s866 = scalar_lea.sflag [#allocation5], %s865
        %s867 = sand.u32 %s229, 1
        %s868 = scalar_lea.vmem [#allocation4], %s867
        // Predicated region
        $region105: #{cyattn_forward.7} parent=99 // pred_check
          %p869 = pneg %p242
        $region106: #{cyattn_forward.7} parent=99 // pred_check_branch
          %871 = sbr.rel (%p869) target = $region108
        $region107: #{cyattn_forward.7} parent=99 // pred_region
          %873 = dma.done %s866, 16
        $region108: #{cyattn_forward.7} parent=99 // pred_fallthru
          _
        %s874 = sand.u32 %s49, 1
        %s875 = scalar_lea.sflag [#allocation5], %s874
        %s876 = sand.u32 %s281, 1
        %s877 = smul.addr %s876, 2
        %s878 = scalar_lea.vmem [#allocation6], %s877
        // Predicated region
        $region109: #{cyattn_forward.7} parent=99 // pred_check
          %p879 = pneg %p294
        $region110: #{cyattn_forward.7} parent=99 // pred_check_branch
          %881 = sbr.rel (%p879) target = $region112
        $region111: #{cyattn_forward.7} parent=99 // pred_region
          %883 = dma.done %s875, 32
        $region112: #{cyattn_forward.7} parent=99 // pred_fallthru
          _
        %s884 = sand.u32 %s49, 1
        %s885 = scalar_lea.sflag [#allocation8], %s884
        %s886 = sand.u32 %s307, 1
        %s887 = smul.addr %s886, 32
        %s888 = scalar_lea.vmem [#allocation7], %s887
        // Predicated region
        $region113: #{cyattn_forward.7} parent=99 // pred_check
          %p889 = pneg %p320
        $region114: #{cyattn_forward.7} parent=99 // pred_check_branch
          %891 = sbr.rel (%p889) target = $region116
        $region115: #{cyattn_forward.7} parent=99 // pred_region
          %893 = dma.done %s885, 512
        $region116: #{cyattn_forward.7} parent=99 // pred_fallthru
          _
        %s894 = sand.u32 %s49, 1
        %s895 = scalar_lea.sflag [#allocation8], %s894
        %s896 = sand.u32 %s333, 1
        %s897 = scalar_lea.vmem [#allocation9], %s896
        // Predicated region
        $region117: #{cyattn_forward.7} parent=99 // pred_check
          %p898 = pneg %p346
        $region118: #{cyattn_forward.7} parent=99 // pred_check_branch
          %900 = sbr.rel (%p898) target = $region120
        $region119: #{cyattn_forward.7} parent=99 // pred_region
          %902 = dma.done %s895, 16
        $region120: #{cyattn_forward.7} parent=99 // pred_fallthru
          _
        %s903 = sand.u32 %s49, 1
        %s904 = scalar_lea.sflag [#allocation11], %s903
        %s905 = sand.u32 %s359, 1
        %s906 = scalar_lea.vmem [#allocation10], %s905
        // Predicated region
        $region121: #{cyattn_forward.7} parent=99 // pred_check
          %p907 = pneg %p372
        $region122: #{cyattn_forward.7} parent=99 // pred_check_branch
          %909 = sbr.rel (%p907) target = $region124
        $region123: #{cyattn_forward.7} parent=99 // pred_region
          %911 = dma.done %s904, 16
        $region124: #{cyattn_forward.7} parent=99 // pred_fallthru
          _
        %s912 = sand.u32 %s49, 1
        %s913 = scalar_lea.sflag [#allocation11], %s912
        %s914 = sand.u32 %s385, 1
        %s915 = scalar_lea.vmem [#allocation12], %s914
        // Predicated region
        $region125: #{cyattn_forward.7} parent=99 // pred_check
          %p916 = pneg %p398
        $region126: #{cyattn_forward.7} parent=99 // pred_check_branch
          %918 = sbr.rel (%p916) target = $region128
        $region127: #{cyattn_forward.7} parent=99 // pred_region
          %920 = dma.done %s913, 16
        $region128: #{cyattn_forward.7} parent=99 // pred_fallthru
          _
        %s921 = sand.u32 %s49, 1
        %s922 = scalar_lea.sflag [#allocation14], %s921
        %s923 = sand.u32 %s437, 1
        %s924 = smul.addr %s923, 2
        %s925 = scalar_lea.vmem [#allocation13], %s924
        // Predicated region
        $region129: #{cyattn_forward.7} parent=99 // pred_check
          %p926 = pneg %p450
        $region130: #{cyattn_forward.7} parent=99 // pred_check_branch
          %928 = sbr.rel (%p926) target = $region132
        $region131: #{cyattn_forward.7} parent=99 // pred_region
          %930 = dma.done %s922, 32
        $region132: #{cyattn_forward.7} parent=99 // pred_fallthru
          _
        %s931 = sand.u32 %s49, 1
        %s932 = scalar_lea.sflag [#allocation14], %s931
        %s933 = sand.u32 %s489, 1
        %s934 = scalar_lea.vmem [#allocation15], %s933
        // Predicated region
        $region133: #{cyattn_forward.7} parent=99 // pred_check
          %p935 = pneg %p502
        $region134: #{cyattn_forward.7} parent=99 // pred_check_branch
          %937 = sbr.rel (%p935) target = $region136
        $region135: #{cyattn_forward.7} parent=99 // pred_region
          %939 = dma.done %s932, 16
        $region136: #{cyattn_forward.7} parent=99 // pred_fallthru
          _
        %s940 = sand.u32 %s49, 1
        %s941 = scalar_lea.sflag [#allocation17], %s940
        %s942 = sand.u32 %s515, 1
        %s943 = scalar_lea.vmem [#allocation16], %s942
        // Predicated region
        $region137: #{cyattn_forward.7} parent=99 // pred_check
          %p944 = pneg %p528
        $region138: #{cyattn_forward.7} parent=99 // pred_check_branch
          %946 = sbr.rel (%p944) target = $region140
        $region139: #{cyattn_forward.7} parent=99 // pred_region
          %948 = dma.done %s941, 16
        $region140: #{cyattn_forward.7} parent=99 // pred_fallthru
          _
        %s949 = sand.u32 %s49, 1
        %s950 = scalar_lea.sflag [#allocation17], %s949
        %s951 = sand.u32 %s541, 1
        %s952 = scalar_lea.vmem [#allocation18], %s951
        // Predicated region
        $region141: #{cyattn_forward.7} parent=99 // pred_check
          %p953 = pneg %p554
        $region142: #{cyattn_forward.7} parent=99 // pred_check_branch
          %955 = sbr.rel (%p953) target = $region144
        $region143: #{cyattn_forward.7} parent=99 // pred_region
          %957 = dma.done %s950, 16
        $region144: #{cyattn_forward.7} parent=99 // pred_fallthru
          _
        %p958 = pneg %p65
        %p959 = pneg %p62
        %p960 = pneg %p86
        %p961 = pneg %p83
        %p962 = scmp.lt.s32.totalorder %s49, 1
        %s963 = scalar_select %p962, %s49, 1
        %s964 = smul.addr %s963, 16
        %s965 = smul.addr %s964, 4
        %s966 = scalar_lea.vmem %s2, %s965
        %p967 = pneg %p112
        %p968 = pneg %p109
        %p969 = scmp.lt.s32.totalorder %s49, 1
        %s970 = scalar_select %p969, %s49, 1
        %s971 = smul.addr %s970, 2
        %s972 = scalar_lea.vmem %s3, %s971
        %p973 = pneg %p138
        %p974 = pneg %p135
        %p975 = scmp.lt.s32.totalorder %s49, 1
        %s976 = scalar_select %p975, %s49, 1
        %s977 = smul.addr %s976, 8
        %s978 = smul.addr %s977, 4
        %s979 = scalar_lea.vmem %s4, %s978
        %p980 = pneg %p164
        %p981 = pneg %p161
        %p982 = scmp.lt.s32.totalorder %s49, 1
        %s983 = scalar_select %p982, %s49, 1
        %s984 = scalar_lea.vmem %s5, %s983
        %p985 = pneg %p190
        %p986 = pneg %p187
        %s987 = sand.u32 %s203, 1
        %s988 = scalar_lea.sflag [#allocation3], %s987
        %s989 = sand.u32 %s203, 1
        %s990 = scalar_lea.vmem [#allocation2], %s989
        %p991 = pneg %p216
        %p992 = pneg %p213
        %s993 = sand.u32 %s49, 1
        %s994 = scalar_lea.sflag [#allocation5], %s993
        %s995 = sand.u32 %s229, 1
        %s996 = scalar_lea.vmem [#allocation4], %s995
        %p997 = pneg %p242
        %p998 = pneg %p239
        %p999 = scmp.lt.s32.totalorder %s49, 1
        %s1000 = scalar_select %p999, %s49, 1
        %s1001 = smul.addr %s1000, 16
        %s1002 = smul.addr %s1001, 4
        %s1003 = scalar_lea.vmem %s8, %s1002
        %p1004 = pneg %p268
        %p1005 = pneg %p265
        %s1006 = sand.u32 %s49, 1
        %s1007 = scalar_lea.sflag [#allocation5], %s1006
        %s1008 = sand.u32 %s281, 1
        %s1009 = smul.addr %s1008, 2
        %s1010 = scalar_lea.vmem [#allocation6], %s1009
        %p1011 = pneg %p294
        %p1012 = pneg %p291
        %s1013 = sand.u32 %s49, 1
        %s1014 = scalar_lea.sflag [#allocation8], %s1013
        %s1015 = sand.u32 %s307, 1
        %s1016 = smul.addr %s1015, 32
        %s1017 = scalar_lea.vmem [#allocation7], %s1016
        %p1018 = pneg %p320
        %p1019 = pneg %p317
        %s1020 = sand.u32 %s49, 1
        %s1021 = scalar_lea.sflag [#allocation8], %s1020
        %s1022 = sand.u32 %s333, 1
        %s1023 = scalar_lea.vmem [#allocation9], %s1022
        %p1024 = pneg %p346
        %p1025 = pneg %p343
        %s1026 = sand.u32 %s49, 1
        %s1027 = scalar_lea.sflag [#allocation11], %s1026
        %s1028 = sand.u32 %s359, 1
        %s1029 = scalar_lea.vmem [#allocation10], %s1028
        %p1030 = pneg %p372
        %p1031 = pneg %p369
        %s1032 = sand.u32 %s49, 1
        %s1033 = scalar_lea.sflag [#allocation11], %s1032
        %s1034 = sand.u32 %s385, 1
        %s1035 = scalar_lea.vmem [#allocation12], %s1034
        %p1036 = pneg %p398
        %p1037 = pneg %p395
        %p1038 = scmp.lt.s32.totalorder %s49, 1
        %s1039 = scalar_select %p1038, %s49, 1
        %s1040 = smul.addr %s1039, 16
        %s1041 = smul.addr %s1040, 4
        %s1042 = scalar_lea.vmem %s14, %s1041
        %p1043 = pneg %p424
        %p1044 = pneg %p421
        %s1045 = sand.u32 %s49, 1
        %s1046 = scalar_lea.sflag [#allocation14], %s1045
        %s1047 = sand.u32 %s437, 1
        %s1048 = smul.addr %s1047, 2
        %s1049 = scalar_lea.vmem [#allocation13], %s1048
        %p1050 = pneg %p450
        %p1051 = pneg %p447
        %p1052 = scmp.lt.s32.totalorder %s49, 1
        %s1053 = scalar_select %p1052, %s49, 1
        %s1054 = smul.addr %s1053, 32
        %s1055 = smul.addr %s1054, 4
        %s1056 = scalar_lea.vmem %s16, %s1055
        %p1057 = pneg %p476
        %p1058 = pneg %p473
        %s1059 = sand.u32 %s49, 1
        %s1060 = scalar_lea.sflag [#allocation14], %s1059
        %s1061 = sand.u32 %s489, 1
        %s1062 = scalar_lea.vmem [#allocation15], %s1061
        %p1063 = pneg %p502
        %p1064 = pneg %p499
        %s1065 = sand.u32 %s49, 1
        %s1066 = scalar_lea.sflag [#allocation17], %s1065
        %s1067 = sand.u32 %s515, 1
        %s1068 = scalar_lea.vmem [#allocation16], %s1067
        %p1069 = pneg %p528
        %p1070 = pneg %p525
        %s1071 = sand.u32 %s49, 1
        %s1072 = scalar_lea.sflag [#allocation17], %s1071
        %s1073 = sand.u32 %s541, 1
        %s1074 = scalar_lea.vmem [#allocation18], %s1073
        %p1075 = pneg %p554
        %p1076 = pneg %p551
        %p1077 = pneg %p575
        %p1078 = pneg %p572
        %p1079 = scmp.lt.s32.totalorder %s49, 1
        %s1080 = scalar_select %p1079, %s49, 1
        %s1081 = smul.addr %s1080, 16
        %s1082 = smul.addr %s1081, 4
        %s1083 = scalar_lea.vmem %s2, %s1082
        %p1084 = scmp.lt.s32.totalorder %s49, 1
        %s1085 = scalar_select %p1084, %s49, 1
        %s1086 = smul.addr %s1085, 2
        %s1087 = scalar_lea.vmem %s3, %s1086
        %p1088 = scmp.lt.s32.totalorder %s49, 1
        %s1089 = scalar_select %p1088, %s49, 1
        %s1090 = smul.addr %s1089, 8
        %s1091 = smul.addr %s1090, 4
        %s1092 = scalar_lea.vmem %s4, %s1091
        %p1093 = scmp.lt.s32.totalorder %s49, 1
        %s1094 = scalar_select %p1093, %s49, 1
        %s1095 = scalar_lea.vmem %s5, %s1094
        %p1096 = scmp.lt.s32.totalorder %s49, 1
        %s1097 = scalar_select %p1096, %s49, 1
        %s1098 = smul.addr %s1097, 16
        %s1099 = smul.addr %s1098, 4
        %s1100 = scalar_lea.vmem %s8, %s1099
        %p1101 = scmp.lt.s32.totalorder %s49, 1
        %s1102 = scalar_select %p1101, %s49, 1
        %s1103 = smul.addr %s1102, 16
        %s1104 = smul.addr %s1103, 4
        %s1105 = scalar_lea.vmem %s14, %s1104
        %p1106 = scmp.lt.s32.totalorder %s49, 1
        %s1107 = scalar_select %p1106, %s49, 1
        %s1108 = smul.addr %s1107, 32
        %s1109 = smul.addr %s1108, 4
        %s1110 = scalar_lea.vmem %s16, %s1109
        %p1112 = scmp.eq.s32.totalorder %s49, 0
        // Predicated region
        $region145: #{cyattn_forward.7} parent=99 // pred_check
          %p1113 = pneg %p1112
        $region146: #{cyattn_forward.7} parent=99 // pred_check_branch
          %1115 = sbr.rel (%p1113) target = $region148
        $region147: #{cyattn_forward.7} parent=99 // pred_region
          %v1116 = vld [vmem:[%s0] sm:$0xff]
          %v1117 = vld [vmem:[%s0 + $0x8] sm:$0xff]
          %v1118 = vld [vmem:[%s0 + $0x10] sm:$0xff]
          %v1119 = vld [vmem:[%s0 + $0x18] sm:$0xff]
          %v1120 = vld [vmem:[%s0 + $0x20] sm:$0xff]
          %v1121 = vld [vmem:[%s0 + $0x28] sm:$0xff]
          %vm1122 = vcmask 523264
          %1123 = vst.msk [vmem:[%s20] sm:$0xff] %vm1122, %v1116
          %1124 = vst.msk [vmem:[%s20 + $0x8] sm:$0xff] %vm1122, %v1117
          %1125 = vst.msk [vmem:[%s20 + $0x10] sm:$0xff] %vm1122, %v1118
          %1126 = vst.msk [vmem:[%s20 + $0x18] sm:$0xff] %vm1122, %v1119
          %1127 = vst.msk [vmem:[%s20 + $0x20] sm:$0xff] %vm1122, %v1120
          %1128 = vst.msk [vmem:[%s20 + $0x28] sm:$0xff] %vm1122, %v1121
        $region148: #{cyattn_forward.7} parent=99 // pred_fallthru
          _
        %v1129 = vld [vmem:[%s1] sm:$0xf]
        %v1130 = vld [vmem:[%s1 + $0x4] sm:$0xf]
        %v1131 = vld [vmem:[%s20] sm:$0xff]
        %v1132 = vld [vmem:[%s20 + $0x8] sm:$0xff]
        %v1133 = vld [vmem:[%s20 + $0x10] sm:$0xff]
        %v1134 = vld [vmem:[%s20 + $0x18] sm:$0xff]
        %v1135 = vld [vmem:[%s20 + $0x20] sm:$0xff]
        %v1136 = vld [vmem:[%s20 + $0x28] sm:$0xff]
        %v1137 = vld [vmem:[%s1083] sm:$0xff]
        %v1138 = vld [vmem:[%s1083 + $0x8] sm:$0xff]
        %v1139 = vld [vmem:[%s1083 + $0x10] sm:$0xff]
        %v1140 = vld [vmem:[%s1083 + $0x18] sm:$0xff]
        %v1141 = vld [vmem:[%s1083 + $0x20] sm:$0xff]
        %v1142 = vld [vmem:[%s1083 + $0x28] sm:$0xff]
        %v1143 = vld [vmem:[%s1083 + $0x30] sm:$0xff]
        %v1144 = vld [vmem:[%s1083 + $0x38] sm:$0xff]
        %v1145 = vld [vmem:[%s1087] sm:$0x3]
        %v1146 = vld [vmem:[%s1092] sm:$0xf]
        %v1147 = vld [vmem:[%s1092 + $0x4] sm:$0xf]
        %v1148 = vld [vmem:[%s1092 + $0x8] sm:$0xf]
        %v1149 = vld [vmem:[%s1092 + $0xc] sm:$0xf]
        %v1150 = vld [vmem:[%s1092 + $0x10] sm:$0xf]
        %v1151 = vld [vmem:[%s1092 + $0x14] sm:$0xf]
        %v1152 = vld [vmem:[%s1092 + $0x18] sm:$0xf]
        %v1153 = vld [vmem:[%s1092 + $0x1c] sm:$0xf]
        %v1154 = vld [vmem:[%s1095] sm:$0x1]
        %v1155 = vld [vmem:[%s859] sm:$0x1]
        %v1156 = vld [vmem:[%s868] sm:$0x1]
        %v1157 = vld [vmem:[%s1100] sm:$0xff]
        %v1158 = vld [vmem:[%s1100 + $0x8] sm:$0xff]
        %v1159 = vld [vmem:[%s1100 + $0x10] sm:$0xff]
        %v1160 = vld [vmem:[%s1100 + $0x18] sm:$0xff]
        %v1161 = vld [vmem:[%s1100 + $0x20] sm:$0xff]
        %v1162 = vld [vmem:[%s1100 + $0x28] sm:$0xff]
        %v1163 = vld [vmem:[%s1100 + $0x30] sm:$0xff]
        %v1164 = vld [vmem:[%s1100 + $0x38] sm:$0xff]
        %v1165 = vld [vmem:[%s878] sm:$0x3]
        %v1166 = vld [vmem:[%s888] sm:$0xf]
        %v1167 = vld [vmem:[%s888 + $0x4] sm:$0xf]
        %v1168 = vld [vmem:[%s888 + $0x8] sm:$0xf]
        %v1169 = vld [vmem:[%s888 + $0xc] sm:$0xf]
        %v1170 = vld [vmem:[%s888 + $0x10] sm:$0xf]
        %v1171 = vld [vmem:[%s888 + $0x14] sm:$0xf]
        %v1172 = vld [vmem:[%s888 + $0x18] sm:$0xf]
        %v1173 = vld [vmem:[%s888 + $0x1c] sm:$0xf]
        %v1174 = vld [vmem:[%s897] sm:$0x1]
        %v1175 = vld [vmem:[%s906] sm:$0x1]
        %v1176 = vld [vmem:[%s915] sm:$0x1]
        %v1177 = vld [vmem:[%s1105] sm:$0xff]
        %v1178 = vld [vmem:[%s1105 + $0x8] sm:$0xff]
        %v1179 = vld [vmem:[%s1105 + $0x10] sm:$0xff]
        %v1180 = vld [vmem:[%s1105 + $0x18] sm:$0xff]
        %v1181 = vld [vmem:[%s1105 + $0x20] sm:$0xff]
        %v1182 = vld [vmem:[%s1105 + $0x28] sm:$0xff]
        %v1183 = vld [vmem:[%s1105 + $0x30] sm:$0xff]
        %v1184 = vld [vmem:[%s1105 + $0x38] sm:$0xff]
        %v1185 = vld [vmem:[%s925] sm:$0x3]
        %v1186 = vld [vmem:[%s1110] sm:$0xf]
        %v1187 = vld [vmem:[%s1110 + $0x4] sm:$0xf]
        %v1188 = vld [vmem:[%s1110 + $0x8] sm:$0xf]
        %v1189 = vld [vmem:[%s1110 + $0xc] sm:$0xf]
        %v1190 = vld [vmem:[%s1110 + $0x10] sm:$0xf]
        %v1191 = vld [vmem:[%s1110 + $0x14] sm:$0xf]
        %v1192 = vld [vmem:[%s1110 + $0x18] sm:$0xf]
        %v1193 = vld [vmem:[%s1110 + $0x1c] sm:$0xf]
        %v1194 = vld [vmem:[%s1110 + $0x20] sm:$0xf]
        %v1195 = vld [vmem:[%s1110 + $0x24] sm:$0xf]
        %v1196 = vld [vmem:[%s1110 + $0x28] sm:$0xf]
        %v1197 = vld [vmem:[%s1110 + $0x2c] sm:$0xf]
        %v1198 = vld [vmem:[%s1110 + $0x30] sm:$0xf]
        %v1199 = vld [vmem:[%s1110 + $0x34] sm:$0xf]
        %v1200 = vld [vmem:[%s1110 + $0x38] sm:$0xf]
        %v1201 = vld [vmem:[%s1110 + $0x3c] sm:$0xf]
        %v1202 = vld [vmem:[%s1110 + $0x40] sm:$0xf]
        %v1203 = vld [vmem:[%s1110 + $0x44] sm:$0xf]
        %v1204 = vld [vmem:[%s1110 + $0x48] sm:$0xf]
        %v1205 = vld [vmem:[%s1110 + $0x4c] sm:$0xf]
        %v1206 = vld [vmem:[%s1110 + $0x50] sm:$0xf]
        %v1207 = vld [vmem:[%s1110 + $0x54] sm:$0xf]
        %v1208 = vld [vmem:[%s1110 + $0x58] sm:$0xf]
        %v1209 = vld [vmem:[%s1110 + $0x5c] sm:$0xf]
        %v1210 = vld [vmem:[%s1110 + $0x60] sm:$0xf]
        %v1211 = vld [vmem:[%s1110 + $0x64] sm:$0xf]
        %v1212 = vld [vmem:[%s1110 + $0x68] sm:$0xf]
        %v1213 = vld [vmem:[%s1110 + $0x6c] sm:$0xf]
        %v1214 = vld [vmem:[%s1110 + $0x70] sm:$0xf]
        %v1215 = vld [vmem:[%s1110 + $0x74] sm:$0xf]
        %v1216 = vld [vmem:[%s1110 + $0x78] sm:$0xf]
        %v1217 = vld [vmem:[%s1110 + $0x7c] sm:$0xf]
        %v1218 = vld [vmem:[%s934] sm:$0x1]
        %v1219 = vld [vmem:[%s943] sm:$0x1]
        %v1220 = vld [vmem:[%s952] sm:$0x1]
        %v1221 = vpack.c.bf16 %v1132, %v1131
        %v1222 = vpack.c.bf16 %v1134, %v1133
        %v1223 = vpack.c.bf16 %v1136, %v1135
        %v1225 = vperm.slane %v1145, 0
        %v1226 = vperm.slane %v1145, 1
        %v1237 = vunpack.c.l.b16 %v1137
        %v1238 = vunpack.c.h.b16 %v1137
        %v1239 = vunpack.c.l.b16 %v1138
        %v1240 = vunpack.c.h.b16 %v1138
        %v1241 = vunpack.c.l.b16 %v1139
        %v1242 = vunpack.c.h.b16 %v1139
        %v1243 = vunpack.c.l.b16 %v1140
        %v1244 = vunpack.c.h.b16 %v1140
        %v1245 = vunpack.c.l.b16 %v1141
        %v1246 = vunpack.c.h.b16 %v1141
        %v1247 = vunpack.c.l.b16 %v1142
        %v1248 = vunpack.c.h.b16 %v1142
        %v1249 = vunpack.c.l.b16 %v1143
        %v1250 = vunpack.c.h.b16 %v1143
        %v1251 = vunpack.c.l.b16 %v1144
        %v1252 = vunpack.c.h.b16 %v1144
        %v1253 = vpack.c.b16 %v1239, %v1237
        %v1254 = vpack.c.b16 %v1240, %v1238
        %v1255 = vpack.c.b16 %v1243, %v1241
        %v1256 = vpack.c.b16 %v1244, %v1242
        %v1257 = vpack.c.b16 %v1247, %v1245
        %v1258 = vpack.c.b16 %v1248, %v1246
        %v1259 = vpack.c.b16 %v1251, %v1249
        %v1260 = vpack.c.b16 %v1252, %v1250
        %vm1269 = vcmask 523264
        %v1271 = vsel %vm1269, %v1221, 0
        %v1274 = vsel %vm1269, %v1222, 0
        %v1277 = vsel %vm1269, %v1223, 0
        %1279 = vmatpush.bf16.msra.mxu0 0
        %1280 = vmatpush.bf16.msra.mxu0 0
        %1281 = vmatpush.bf16.msra.mxu0 0
        %1282 = vmatpush.bf16.msra.mxu0 0
        %1283 = vmatpush.bf16.msra.mxu0 %v1259
        %1284 = vmatpush.bf16.msra.mxu0 %v1257
        %1285 = vmatpush.bf16.msra.mxu0 %v1255
        %1286 = vmatpush.bf16.msra.mxu0 %v1253
        %1287 = vmatmul.bf16.gmra.mxu0 %v1271
        %v1288 = vpop.f32.mrf.mxu0
        %v1289 = vadd.f32 %v1225, %v1288
        %v1290 = vpop.f32.mrf.mxu0
        %v1291 = vadd.f32 %v1225, %v1290
        %1292 = vmatmul.bf16.gmra.mxu0 %v1274
        %v1293 = vpop.f32.mrf.mxu0
        %v1294 = vadd.f32 %v1225, %v1293
        %v1295 = vpop.f32.mrf.mxu0
        %v1296 = vadd.f32 %v1225, %v1295
        %1297 = vmatmul.bf16.gmra.mxu0 %v1277
        %v1298 = vpop.f32.mrf.mxu0
        %v1299 = vadd.f32 %v1225, %v1298
        %v1300 = vpop.f32.mrf.mxu0
        %v1301 = vadd.f32 %v1225, %v1300
        %1302 = vdwg.mxu0
        %1303 = vmatpush.bf16.msra.mxu0 0
        %1304 = vmatpush.bf16.msra.mxu0 0
        %1305 = vmatpush.bf16.msra.mxu0 0
        %1306 = vmatpush.bf16.msra.mxu0 0
        %1307 = vmatpush.bf16.msra.mxu0 %v1260
        %1308 = vmatpush.bf16.msra.mxu0 %v1258
        %1309 = vmatpush.bf16.msra.mxu0 %v1256
        %1310 = vmatpush.bf16.msra.mxu0 %v1254
        %1311 = vmatmul.bf16.gmra.mxu0 %v1271
        %v1312 = vpop.f32.mrf.mxu0
        %v1313 = vadd.f32 %v1226, %v1312
        %v1314 = vpop.f32.mrf.mxu0
        %v1315 = vadd.f32 %v1226, %v1314
        %1316 = vmatmul.bf16.gmra.mxu0 %v1274
        %v1317 = vpop.f32.mrf.mxu0
        %v1318 = vadd.f32 %v1226, %v1317
        %v1319 = vpop.f32.mrf.mxu0
        %v1320 = vadd.f32 %v1226, %v1319
        %1321 = vmatmul.bf16.gmra.mxu0 %v1277
        %v1322 = vpop.f32.mrf.mxu0
        %v1323 = vadd.f32 %v1226, %v1322
        %v1324 = vpop.f32.mrf.mxu0
        %v1325 = vadd.f32 %v1226, %v1324
        %1326 = vdwg.mxu0
        %v1327 = vpack.c.bf16 %v1289, %v1289
        %v1328 = vpack.c.bf16 %v1291, %v1291
        %v1329 = vpack.c.bf16 %v1294, %v1294
        %v1330 = vpack.c.bf16 %v1296, %v1296
        %v1331 = vpack.c.bf16 %v1299, %v1299
        %v1332 = vpack.c.bf16 %v1301, %v1301
        %v1333 = vpack.c.bf16 %v1313, %v1313
        %v1334 = vpack.c.bf16 %v1315, %v1315
        %v1335 = vpack.c.bf16 %v1318, %v1318
        %v1336 = vpack.c.bf16 %v1320, %v1320
        %v1337 = vpack.c.bf16 %v1323, %v1323
        %v1338 = vpack.c.bf16 %v1325, %v1325
        %v1340 = vperm.slane %v1165, 0
        %v1341 = vperm.slane %v1165, 1
        %v1344 = vunpack.c.l.b16 %v1129
        %v1345 = vunpack.c.l.b16 %v1130
        %v1346 = vpack.c.b16 %v1345, %v1344
        %v1355 = vunpack.c.l.b16 %v1157
        %v1356 = vunpack.c.h.b16 %v1157
        %v1357 = vunpack.c.l.b16 %v1158
        %v1358 = vunpack.c.h.b16 %v1158
        %v1359 = vunpack.c.l.b16 %v1159
        %v1360 = vunpack.c.h.b16 %v1159
        %v1361 = vunpack.c.l.b16 %v1160
        %v1362 = vunpack.c.h.b16 %v1160
        %v1363 = vunpack.c.l.b16 %v1161
        %v1364 = vunpack.c.h.b16 %v1161
        %v1365 = vunpack.c.l.b16 %v1162
        %v1366 = vunpack.c.h.b16 %v1162
        %v1367 = vunpack.c.l.b16 %v1163
        %v1368 = vunpack.c.h.b16 %v1163
        %v1369 = vunpack.c.l.b16 %v1164
        %v1370 = vunpack.c.h.b16 %v1164
        %v1371 = vpack.c.b16 %v1357, %v1355
        %v1372 = vpack.c.b16 %v1358, %v1356
        %v1373 = vpack.c.b16 %v1361, %v1359
        %v1374 = vpack.c.b16 %v1362, %v1360
        %v1375 = vpack.c.b16 %v1365, %v1363
        %v1376 = vpack.c.b16 %v1366, %v1364
        %v1377 = vpack.c.b16 %v1369, %v1367
        %v1378 = vpack.c.b16 %v1370, %v1368
        %1379 = vrot.lane.b32.xlu0 %v1371, 64
        %v1380 = vpop.permute.xlu0 %1379
        %1381 = vrot.lane.b32.xlu0 %v1372, 64
        %v1382 = vpop.permute.xlu0 %1381
        %1383 = vrot.lane.b32.xlu0 %v1373, 64
        %v1384 = vpop.permute.xlu0 %1383
        %1385 = vrot.lane.b32.xlu0 %v1374, 64
        %v1386 = vpop.permute.xlu0 %1385
        %1387 = vrot.lane.b32.xlu0 %v1375, 64
        %v1388 = vpop.permute.xlu0 %1387
        %1389 = vrot.lane.b32.xlu0 %v1376, 64
        %v1390 = vpop.permute.xlu0 %1389
        %1391 = vrot.lane.b32.xlu0 %v1377, 64
        %v1392 = vpop.permute.xlu0 %1391
        %1393 = vrot.lane.b32.xlu0 %v1378, 64
        %v1394 = vpop.permute.xlu0 %1393
        %vm1395 = vcmask 523264
        %v1396 = vsel %vm1395, %v1380, %v1382
        %v1397 = vsel %vm1395, %v1384, %v1386
        %v1398 = vsel %vm1395, %v1388, %v1390
        %v1399 = vsel %vm1395, %v1392, %v1394
        %1404 = vrot.lane.b32.xlu0 %v1340, 64
        %v1405 = vpop.permute.xlu0 %1404
        %1406 = vrot.lane.b32.xlu0 %v1341, 64
        %v1407 = vpop.permute.xlu0 %1406
        %v1408 = vsel %vm1269, %v1405, %v1407
        %v1411 = vsel %vm1269, %v1346, 0
        %1413 = vmatpush.bf16.msra.mxu0 0
        %1414 = vmatpush.bf16.msra.mxu0 0
        %1415 = vmatpush.bf16.msra.mxu0 0
        %1416 = vmatpush.bf16.msra.mxu0 0
        %1417 = vmatpush.bf16.msra.mxu0 %v1399
        %1418 = vmatpush.bf16.msra.mxu0 %v1398
        %1419 = vmatpush.bf16.msra.mxu0 %v1397
        %1420 = vmatpush.bf16.msra.mxu0 %v1396
        %1421 = vmatmul.bf16.gmra.mxu0 %v1411
        %v1422 = vpop.f32.mrf.mxu0
        %v1423 = vadd.f32 %v1408, %v1422
        %v1424 = vpop.f32.mrf.mxu0
        %v1425 = vadd.f32 %v1408, %v1424
        %1426 = vdwg.mxu0
        %v1427 = vpack.c.bf16 %v1423, %v1423
        %v1428 = vpack.c.bf16 %v1425, %v1425
        %v1435 = vunpack.c.l.b16 %v1327
        %v1436 = vunpack.c.l.b16 %v1328
        %v1437 = vunpack.c.l.b16 %v1329
        %v1438 = vunpack.c.l.b16 %v1330
        %v1439 = vunpack.c.l.b16 %v1331
        %v1440 = vunpack.c.l.b16 %v1332
        %v1441 = vpack.c.b16 %v1436, %v1435
        %v1442 = vpack.c.b16 %v1438, %v1437
        %v1443 = vpack.c.b16 %v1440, %v1439
        %1444 = vrot.lane.b32.xlu0 %v1441, 64
        %v1445 = vpop.permute.xlu0 %1444
        %1446 = vrot.lane.b32.xlu0 %v1442, 64
        %v1447 = vpop.permute.xlu0 %1446
        %1448 = vrot.lane.b32.xlu0 %v1443, 64
        %v1449 = vpop.permute.xlu0 %1448
        %vm1450 = vcmask 130048
        %v1452 = vsel %vm1450, %v1441, 0
        %v1455 = vsel %vm1450, %v1442, 0
        %v1458 = vsel %vm1450, %v1443, 0
        %v1461 = vsel %vm1450, %v1445, 0
        %v1464 = vsel %vm1450, %v1447, 0
        %v1467 = vsel %vm1450, %v1449, 0
        %1469 = vmatpush.bf16.xpose.msra.mxu0 0
        %1470 = vmatpush.bf16.xpose.msra.mxu0 0
        %1471 = vmatpush.bf16.xpose.msra.mxu0 0
        %1472 = vmatpush.bf16.xpose.msra.mxu0 0
        %1473 = vmatpush.bf16.xpose.msra.mxu0 0
        %1474 = vmatpush.bf16.xpose.msra.mxu0 %v1467
        %1475 = vmatpush.bf16.xpose.msra.mxu0 %v1464
        %1476 = vmatpush.bf16.xpose.msra.mxu0 %v1461
        %1477 = vmatmul.bf16.gmra.mxu0 %v1452
        %v1478 = vpop.f32.mrf.mxu0
        %v1479 = vadd.f32 0.0, %v1478
        %v1480 = vpop.f32.mrf.mxu0
        %v1481 = vadd.f32 0.0, %v1480
        %1482 = vmatmul.bf16.gmra.mxu0 %v1455
        %v1483 = vpop.f32.mrf.mxu0
        %v1484 = vadd.f32 0.0, %v1483
        %v1485 = vpop.f32.mrf.mxu0
        %v1486 = vadd.f32 0.0, %v1485
        %1487 = vmatmul.bf16.gmra.mxu0 %v1458
        %v1488 = vpop.f32.mrf.mxu0
        %v1489 = vadd.f32 0.0, %v1488
        %v1490 = vpop.f32.mrf.mxu0
        %v1491 = vadd.f32 0.0, %v1490
        %1492 = vdwg.mxu0
        %vm1493 = vcmask 392192
        %v1494 = vsel %vm1493, %v1479, -inf
        %1495 = vmax.xlane.f32.xlu0 %v1494
        %v1496 = vpop.xlane.xlu0 %1495
        %v1497 = vsel %vm1493, %v1481, -inf
        %1498 = vmax.xlane.f32.xlu0 %v1497
        %v1499 = vpop.xlane.xlu0 %1498
        %v1500 = vsel %vm1493, %v1484, -inf
        %1501 = vmax.xlane.f32.xlu0 %v1500
        %v1502 = vpop.xlane.xlu0 %1501
        %v1503 = vsel %vm1493, %v1486, -inf
        %1504 = vmax.xlane.f32.xlu0 %v1503
        %v1505 = vpop.xlane.xlu0 %1504
        %v1506 = vsel %vm1493, %v1489, -inf
        %1507 = vmax.xlane.f32.xlu0 %v1506
        %v1508 = vpop.xlane.xlu0 %1507
        %v1509 = vsel %vm1493, %v1491, -inf
        %1510 = vmax.xlane.f32.xlu0 %v1509
        %v1511 = vpop.xlane.xlu0 %1510
        %v1512 = vsub.f32 %v1479, %v1496
        %v1513 = vsub.f32 %v1481, %v1499
        %v1514 = vsub.f32 %v1484, %v1502
        %v1515 = vsub.f32 %v1486, %v1505
        %v1516 = vsub.f32 %v1489, %v1508
        %v1517 = vsub.f32 %v1491, %v1511
        %v1518 = vmul.f32 %v1512, 1.442695
        %v1519 = vpow.pop %v1518
        %v1520 = vmul.f32 %v1513, 1.442695
        %v1521 = vpow.pop %v1520
        %v1522 = vmul.f32 %v1514, 1.442695
        %v1523 = vpow.pop %v1522
        %v1524 = vmul.f32 %v1515, 1.442695
        %v1525 = vpow.pop %v1524
        %v1526 = vmul.f32 %v1516, 1.442695
        %v1527 = vpow.pop %v1526
        %v1528 = vmul.f32 %v1517, 1.442695
        %v1529 = vpow.pop %v1528
        %v1530 = vsel %vm1493, %v1519, 0.0
        %1531 = vadd.xlane.f32.xlu0 %v1530
        %v1532 = vpop.xlane.xlu0 %1531
        %v1533 = vsel %vm1493, %v1521, 0.0
        %1534 = vadd.xlane.f32.xlu0 %v1533
        %v1535 = vpop.xlane.xlu0 %1534
        %v1536 = vsel %vm1493, %v1523, 0.0
        %1537 = vadd.xlane.f32.xlu0 %v1536
        %v1538 = vpop.xlane.xlu0 %1537
        %v1539 = vsel %vm1493, %v1525, 0.0
        %1540 = vadd.xlane.f32.xlu0 %v1539
        %v1541 = vpop.xlane.xlu0 %1540
        %v1542 = vsel %vm1493, %v1527, 0.0
        %1543 = vadd.xlane.f32.xlu0 %v1542
        %v1544 = vpop.xlane.xlu0 %1543
        %v1545 = vsel %vm1493, %v1529, 0.0
        %1546 = vadd.xlane.f32.xlu0 %v1545
        %v1547 = vpop.xlane.xlu0 %1546
        %v1548 = vpack.c.bf16 %v1521, %v1519
        %v1549 = vpack.c.bf16 %v1525, %v1523
        %v1550 = vpack.c.bf16 %v1529, %v1527
        %v1557 = vunpack.c.l.b16 %v1333
        %v1558 = vunpack.c.l.b16 %v1334
        %v1559 = vunpack.c.l.b16 %v1335
        %v1560 = vunpack.c.l.b16 %v1336
        %v1561 = vunpack.c.l.b16 %v1337
        %v1562 = vunpack.c.l.b16 %v1338
        %v1563 = vpack.c.b16 %v1558, %v1557
        %v1564 = vpack.c.b16 %v1560, %v1559
        %v1565 = vpack.c.b16 %v1562, %v1561
        %v1570 = vsel %vm1493, %v1548, 0
        %v1573 = vsel %vm1493, %v1549, 0
        %v1576 = vsel %vm1493, %v1550, 0
        %1578 = vmatpush.bf16.msra.mxu0 0
        %1579 = vmatpush.bf16.msra.mxu0 0
        %1580 = vmatpush.bf16.msra.mxu0 0
        %1581 = vmatpush.bf16.msra.mxu0 0
        %1582 = vmatpush.bf16.msra.mxu0 0
        %1583 = vmatpush.bf16.msra.mxu0 %v1565
        %1584 = vmatpush.bf16.msra.mxu0 %v1564
        %1585 = vmatpush.bf16.msra.mxu0 %v1563
        %1586 = vmatmul.bf16.gmra.mxu0 %v1570
        %v1587 = vpop.f32.mrf.mxu0
        %v1588 = vadd.f32 0.0, %v1587
        %v1589 = vpop.f32.mrf.mxu0
        %v1590 = vadd.f32 0.0, %v1589
        %1591 = vmatmul.bf16.gmra.mxu0 %v1573
        %v1592 = vpop.f32.mrf.mxu0
        %v1593 = vadd.f32 0.0, %v1592
        %v1594 = vpop.f32.mrf.mxu0
        %v1595 = vadd.f32 0.0, %v1594
        %1596 = vmatmul.bf16.gmra.mxu0 %v1576
        %v1597 = vpop.f32.mrf.mxu0
        %v1598 = vadd.f32 0.0, %v1597
        %v1599 = vpop.f32.mrf.mxu0
        %v1600 = vadd.f32 0.0, %v1599
        %1601 = vdwg.mxu0
        %v1602 = vrcp.pop %v1532
        %v1603 = vrcp.pop %v1535
        %v1604 = vrcp.pop %v1538
        %v1605 = vrcp.pop %v1541
        %v1606 = vrcp.pop %v1544
        %v1607 = vrcp.pop %v1547
        %v1608 = vmul.f32 %v1588, %v1602
        %v1609 = vmul.f32 %v1590, %v1603
        %v1610 = vmul.f32 %v1593, %v1604
        %v1611 = vmul.f32 %v1595, %v1605
        %v1612 = vmul.f32 %v1598, %v1606
        %v1613 = vmul.f32 %v1600, %v1607
        %1614 = vrot.lane.b32.xlu0 %v1441, 112
        %v1615 = vpop.permute.xlu0 %1614
        %1616 = vrot.lane.b32.xlu0 %v1442, 112
        %v1617 = vpop.permute.xlu0 %1616
        %1618 = vrot.lane.b32.xlu0 %v1443, 112
        %v1619 = vpop.permute.xlu0 %1618
        %1620 = vrot.lane.b32.xlu0 %v1441, 48
        %v1621 = vpop.permute.xlu0 %1620
        %1622 = vrot.lane.b32.xlu0 %v1442, 48
        %v1623 = vpop.permute.xlu0 %1622
        %1624 = vrot.lane.b32.xlu0 %v1443, 48
        %v1625 = vpop.permute.xlu0 %1624
        %v1627 = vsel %vm1450, %v1615, 0
        %v1630 = vsel %vm1450, %v1617, 0
        %v1633 = vsel %vm1450, %v1619, 0
        %v1636 = vsel %vm1450, %v1621, 0
        %v1639 = vsel %vm1450, %v1623, 0
        %v1642 = vsel %vm1450, %v1625, 0
        %1644 = vmatpush.bf16.xpose.msra.mxu0 0
        %1645 = vmatpush.bf16.xpose.msra.mxu0 0
        %1646 = vmatpush.bf16.xpose.msra.mxu0 0
        %1647 = vmatpush.bf16.xpose.msra.mxu0 0
        %1648 = vmatpush.bf16.xpose.msra.mxu0 0
        %1649 = vmatpush.bf16.xpose.msra.mxu0 %v1642
        %1650 = vmatpush.bf16.xpose.msra.mxu0 %v1639
        %1651 = vmatpush.bf16.xpose.msra.mxu0 %v1636
        %1652 = vmatmul.bf16.gmra.mxu0 %v1627
        %v1653 = vpop.f32.mrf.mxu0
        %v1654 = vadd.f32 0.0, %v1653
        %v1655 = vpop.f32.mrf.mxu0
        %v1656 = vadd.f32 0.0, %v1655
        %1657 = vmatmul.bf16.gmra.mxu0 %v1630
        %v1658 = vpop.f32.mrf.mxu0
        %v1659 = vadd.f32 0.0, %v1658
        %v1660 = vpop.f32.mrf.mxu0
        %v1661 = vadd.f32 0.0, %v1660
        %1662 = vmatmul.bf16.gmra.mxu0 %v1633
        %v1663 = vpop.f32.mrf.mxu0
        %v1664 = vadd.f32 0.0, %v1663
        %v1665 = vpop.f32.mrf.mxu0
        %v1666 = vadd.f32 0.0, %v1665
        %1667 = vdwg.mxu0
        %v1668 = vsel %vm1493, %v1654, -inf
        %1669 = vmax.xlane.f32.xlu0 %v1668
        %v1670 = vpop.xlane.xlu0 %1669
        %v1671 = vsel %vm1493, %v1656, -inf
        %1672 = vmax.xlane.f32.xlu0 %v1671
        %v1673 = vpop.xlane.xlu0 %1672
        %v1674 = vsel %vm1493, %v1659, -inf
        %1675 = vmax.xlane.f32.xlu0 %v1674
        %v1676 = vpop.xlane.xlu0 %1675
        %v1677 = vsel %vm1493, %v1661, -inf
        %1678 = vmax.xlane.f32.xlu0 %v1677
        %v1679 = vpop.xlane.xlu0 %1678
        %v1680 = vsel %vm1493, %v1664, -inf
        %1681 = vmax.xlane.f32.xlu0 %v1680
        %v1682 = vpop.xlane.xlu0 %1681
        %v1683 = vsel %vm1493, %v1666, -inf
        %1684 = vmax.xlane.f32.xlu0 %v1683
        %v1685 = vpop.xlane.xlu0 %1684
        %v1686 = vsub.f32 %v1654, %v1670
        %v1687 = vsub.f32 %v1656, %v1673
        %v1688 = vsub.f32 %v1659, %v1676
        %v1689 = vsub.f32 %v1661, %v1679
        %v1690 = vsub.f32 %v1664, %v1682
        %v1691 = vsub.f32 %v1666, %v1685
        %v1692 = vmul.f32 %v1686, 1.442695
        %v1693 = vpow.pop %v1692
        %v1694 = vmul.f32 %v1687, 1.442695
        %v1695 = vpow.pop %v1694
        %v1696 = vmul.f32 %v1688, 1.442695
        %v1697 = vpow.pop %v1696
        %v1698 = vmul.f32 %v1689, 1.442695
        %v1699 = vpow.pop %v1698
        %v1700 = vmul.f32 %v1690, 1.442695
        %v1701 = vpow.pop %v1700
        %v1702 = vmul.f32 %v1691, 1.442695
        %v1703 = vpow.pop %v1702
        %v1704 = vsel %vm1493, %v1693, 0.0
        %1705 = vadd.xlane.f32.xlu0 %v1704
        %v1706 = vpop.xlane.xlu0 %1705
        %v1707 = vsel %vm1493, %v1695, 0.0
        %1708 = vadd.xlane.f32.xlu0 %v1707
        %v1709 = vpop.xlane.xlu0 %1708
        %v1710 = vsel %vm1493, %v1697, 0.0
        %1711 = vadd.xlane.f32.xlu0 %v1710
        %v1712 = vpop.xlane.xlu0 %1711
        %v1713 = vsel %vm1493, %v1699, 0.0
        %1714 = vadd.xlane.f32.xlu0 %v1713
        %v1715 = vpop.xlane.xlu0 %1714
        %v1716 = vsel %vm1493, %v1701, 0.0
        %1717 = vadd.xlane.f32.xlu0 %v1716
        %v1718 = vpop.xlane.xlu0 %1717
        %v1719 = vsel %vm1493, %v1703, 0.0
        %1720 = vadd.xlane.f32.xlu0 %v1719
        %v1721 = vpop.xlane.xlu0 %1720
        %v1722 = vpack.c.bf16 %v1695, %v1693
        %v1723 = vpack.c.bf16 %v1699, %v1697
        %v1724 = vpack.c.bf16 %v1703, %v1701
        %1725 = vrot.lane.b32.xlu0 %v1563, 112
        %v1726 = vpop.permute.xlu0 %1725
        %1727 = vrot.lane.b32.xlu0 %v1564, 112
        %v1728 = vpop.permute.xlu0 %1727
        %1729 = vrot.lane.b32.xlu0 %v1565, 112
        %v1730 = vpop.permute.xlu0 %1729
        %v1735 = vsel %vm1493, %v1722, 0
        %v1738 = vsel %vm1493, %v1723, 0
        %v1741 = vsel %vm1493, %v1724, 0
        %1743 = vmatpush.bf16.msra.mxu0 0
        %1744 = vmatpush.bf16.msra.mxu0 0
        %1745 = vmatpush.bf16.msra.mxu0 0
        %1746 = vmatpush.bf16.msra.mxu0 0
        %1747 = vmatpush.bf16.msra.mxu0 0
        %1748 = vmatpush.bf16.msra.mxu0 %v1730
        %1749 = vmatpush.bf16.msra.mxu0 %v1728
        %1750 = vmatpush.bf16.msra.mxu0 %v1726
        %1751 = vmatmul.bf16.gmra.mxu0 %v1735
        %v1752 = vpop.f32.mrf.mxu0
        %v1753 = vadd.f32 0.0, %v1752
        %v1754 = vpop.f32.mrf.mxu0
        %v1755 = vadd.f32 0.0, %v1754
        %1756 = vmatmul.bf16.gmra.mxu0 %v1738
        %v1757 = vpop.f32.mrf.mxu0
        %v1758 = vadd.f32 0.0, %v1757
        %v1759 = vpop.f32.mrf.mxu0
        %v1760 = vadd.f32 0.0, %v1759
        %1761 = vmatmul.bf16.gmra.mxu0 %v1741
        %v1762 = vpop.f32.mrf.mxu0
        %v1763 = vadd.f32 0.0, %v1762
        %v1764 = vpop.f32.mrf.mxu0
        %v1765 = vadd.f32 0.0, %v1764
        %1766 = vdwg.mxu0
        %v1767 = vrcp.pop %v1706
        %v1768 = vrcp.pop %v1709
        %v1769 = vrcp.pop %v1712
        %v1770 = vrcp.pop %v1715
        %v1771 = vrcp.pop %v1718
        %v1772 = vrcp.pop %v1721
        %v1773 = vmul.f32 %v1753, %v1767
        %v1774 = vmul.f32 %v1755, %v1768
        %v1775 = vmul.f32 %v1758, %v1769
        %v1776 = vmul.f32 %v1760, %v1770
        %v1777 = vmul.f32 %v1763, %v1771
        %v1778 = vmul.f32 %v1765, %v1772
        %1779 = vrot.lane.b32.xlu0 %v1441, 96
        %v1780 = vpop.permute.xlu0 %1779
        %1781 = vrot.lane.b32.xlu0 %v1442, 96
        %v1782 = vpop.permute.xlu0 %1781
        %1783 = vrot.lane.b32.xlu0 %v1443, 96
        %v1784 = vpop.permute.xlu0 %1783
        %1785 = vrot.lane.b32.xlu0 %v1441, 32
        %v1786 = vpop.permute.xlu0 %1785
        %1787 = vrot.lane.b32.xlu0 %v1442, 32
        %v1788 = vpop.permute.xlu0 %1787
        %1789 = vrot.lane.b32.xlu0 %v1443, 32
        %v1790 = vpop.permute.xlu0 %1789
        %v1792 = vsel %vm1450, %v1780, 0
        %v1795 = vsel %vm1450, %v1782, 0
        %v1798 = vsel %vm1450, %v1784, 0
        %v1801 = vsel %vm1450, %v1786, 0
        %v1804 = vsel %vm1450, %v1788, 0
        %v1807 = vsel %vm1450, %v1790, 0
        %1809 = vmatpush.bf16.xpose.msra.mxu0 0
        %1810 = vmatpush.bf16.xpose.msra.mxu0 0
        %1811 = vmatpush.bf16.xpose.msra.mxu0 0
        %1812 = vmatpush.bf16.xpose.msra.mxu0 0
        %1813 = vmatpush.bf16.xpose.msra.mxu0 0
        %1814 = vmatpush.bf16.xpose.msra.mxu0 %v1807
        %1815 = vmatpush.bf16.xpose.msra.mxu0 %v1804
        %1816 = vmatpush.bf16.xpose.msra.mxu0 %v1801
        %1817 = vmatmul.bf16.gmra.mxu0 %v1792
        %v1818 = vpop.f32.mrf.mxu0
        %v1819 = vadd.f32 0.0, %v1818
        %v1820 = vpop.f32.mrf.mxu0
        %v1821 = vadd.f32 0.0, %v1820
        %1822 = vmatmul.bf16.gmra.mxu0 %v1795
        %v1823 = vpop.f32.mrf.mxu0
        %v1824 = vadd.f32 0.0, %v1823
        %v1825 = vpop.f32.mrf.mxu0
        %v1826 = vadd.f32 0.0, %v1825
        %1827 = vmatmul.bf16.gmra.mxu0 %v1798
        %v1828 = vpop.f32.mrf.mxu0
        %v1829 = vadd.f32 0.0, %v1828
        %v1830 = vpop.f32.mrf.mxu0
        %v1831 = vadd.f32 0.0, %v1830
        %1832 = vdwg.mxu0
        %v1833 = vsel %vm1493, %v1819, -inf
        %1834 = vmax.xlane.f32.xlu0 %v1833
        %v1835 = vpop.xlane.xlu0 %1834
        %v1836 = vsel %vm1493, %v1821, -inf
        %1837 = vmax.xlane.f32.xlu0 %v1836
        %v1838 = vpop.xlane.xlu0 %1837
        %v1839 = vsel %vm1493, %v1824, -inf
        %1840 = vmax.xlane.f32.xlu0 %v1839
        %v1841 = vpop.xlane.xlu0 %1840
        %v1842 = vsel %vm1493, %v1826, -inf
        %1843 = vmax.xlane.f32.xlu0 %v1842
        %v1844 = vpop.xlane.xlu0 %1843
        %v1845 = vsel %vm1493, %v1829, -inf
        %1846 = vmax.xlane.f32.xlu0 %v1845
        %v1847 = vpop.xlane.xlu0 %1846
        %v1848 = vsel %vm1493, %v1831, -inf
        %1849 = vmax.xlane.f32.xlu0 %v1848
        %v1850 = vpop.xlane.xlu0 %1849
        %v1851 = vsub.f32 %v1819, %v1835
        %v1852 = vsub.f32 %v1821, %v1838
        %v1853 = vsub.f32 %v1824, %v1841
        %v1854 = vsub.f32 %v1826, %v1844
        %v1855 = vsub.f32 %v1829, %v1847
        %v1856 = vsub.f32 %v1831, %v1850
        %v1857 = vmul.f32 %v1851, 1.442695
        %v1858 = vpow.pop %v1857
        %v1859 = vmul.f32 %v1852, 1.442695
        %v1860 = vpow.pop %v1859
        %v1861 = vmul.f32 %v1853, 1.442695
        %v1862 = vpow.pop %v1861
        %v1863 = vmul.f32 %v1854, 1.442695
        %v1864 = vpow.pop %v1863
        %v1865 = vmul.f32 %v1855, 1.442695
        %v1866 = vpow.pop %v1865
        %v1867 = vmul.f32 %v1856, 1.442695
        %v1868 = vpow.pop %v1867
        %v1869 = vsel %vm1493, %v1858, 0.0
        %1870 = vadd.xlane.f32.xlu0 %v1869
        %v1871 = vpop.xlane.xlu0 %1870
        %v1872 = vsel %vm1493, %v1860, 0.0
        %1873 = vadd.xlane.f32.xlu0 %v1872
        %v1874 = vpop.xlane.xlu0 %1873
        %v1875 = vsel %vm1493, %v1862, 0.0
        %1876 = vadd.xlane.f32.xlu0 %v1875
        %v1877 = vpop.xlane.xlu0 %1876
        %v1878 = vsel %vm1493, %v1864, 0.0
        %1879 = vadd.xlane.f32.xlu0 %v1878
        %v1880 = vpop.xlane.xlu0 %1879
        %v1881 = vsel %vm1493, %v1866, 0.0
        %1882 = vadd.xlane.f32.xlu0 %v1881
        %v1883 = vpop.xlane.xlu0 %1882
        %v1884 = vsel %vm1493, %v1868, 0.0
        %1885 = vadd.xlane.f32.xlu0 %v1884
        %v1886 = vpop.xlane.xlu0 %1885
        %v1887 = vpack.c.bf16 %v1860, %v1858
        %v1888 = vpack.c.bf16 %v1864, %v1862
        %v1889 = vpack.c.bf16 %v1868, %v1866
        %1890 = vrot.lane.b32.xlu0 %v1563, 96
        %v1891 = vpop.permute.xlu0 %1890
        %1892 = vrot.lane.b32.xlu0 %v1564, 96
        %v1893 = vpop.permute.xlu0 %1892
        %1894 = vrot.lane.b32.xlu0 %v1565, 96
        %v1895 = vpop.permute.xlu0 %1894
        %v1900 = vsel %vm1493, %v1887, 0
        %v1903 = vsel %vm1493, %v1888, 0
        %v1906 = vsel %vm1493, %v1889, 0
        %1908 = vmatpush.bf16.msra.mxu0 0
        %1909 = vmatpush.bf16.msra.mxu0 0
        %1910 = vmatpush.bf16.msra.mxu0 0
        %1911 = vmatpush.bf16.msra.mxu0 0
        %1912 = vmatpush.bf16.msra.mxu0 0
        %1913 = vmatpush.bf16.msra.mxu0 %v1895
        %1914 = vmatpush.bf16.msra.mxu0 %v1893
        %1915 = vmatpush.bf16.msra.mxu0 %v1891
        %1916 = vmatmul.bf16.gmra.mxu0 %v1900
        %v1917 = vpop.f32.mrf.mxu0
        %v1918 = vadd.f32 0.0, %v1917
        %v1919 = vpop.f32.mrf.mxu0
        %v1920 = vadd.f32 0.0, %v1919
        %1921 = vmatmul.bf16.gmra.mxu0 %v1903
        %v1922 = vpop.f32.mrf.mxu0
        %v1923 = vadd.f32 0.0, %v1922
        %v1924 = vpop.f32.mrf.mxu0
        %v1925 = vadd.f32 0.0, %v1924
        %1926 = vmatmul.bf16.gmra.mxu0 %v1906
        %v1927 = vpop.f32.mrf.mxu0
        %v1928 = vadd.f32 0.0, %v1927
        %v1929 = vpop.f32.mrf.mxu0
        %v1930 = vadd.f32 0.0, %v1929
        %1931 = vdwg.mxu0
        %v1932 = vrcp.pop %v1871
        %v1933 = vrcp.pop %v1874
        %v1934 = vrcp.pop %v1877
        %v1935 = vrcp.pop %v1880
        %v1936 = vrcp.pop %v1883
        %v1937 = vrcp.pop %v1886
        %v1938 = vmul.f32 %v1918, %v1932
        %v1939 = vmul.f32 %v1920, %v1933
        %v1940 = vmul.f32 %v1923, %v1934
        %v1941 = vmul.f32 %v1925, %v1935
        %v1942 = vmul.f32 %v1928, %v1936
        %v1943 = vmul.f32 %v1930, %v1937
        %1944 = vrot.lane.b32.xlu0 %v1441, 80
        %v1945 = vpop.permute.xlu0 %1944
        %1946 = vrot.lane.b32.xlu0 %v1442, 80
        %v1947 = vpop.permute.xlu0 %1946
        %1948 = vrot.lane.b32.xlu0 %v1443, 80
        %v1949 = vpop.permute.xlu0 %1948
        %1950 = vrot.lane.b32.xlu0 %v1441, 16
        %v1951 = vpop.permute.xlu0 %1950
        %1952 = vrot.lane.b32.xlu0 %v1442, 16
        %v1953 = vpop.permute.xlu0 %1952
        %1954 = vrot.lane.b32.xlu0 %v1443, 16
        %v1955 = vpop.permute.xlu0 %1954
        %v1957 = vsel %vm1450, %v1945, 0
        %v1960 = vsel %vm1450, %v1947, 0
        %v1963 = vsel %vm1450, %v1949, 0
        %v1966 = vsel %vm1450, %v1951, 0
        %v1969 = vsel %vm1450, %v1953, 0
        %v1972 = vsel %vm1450, %v1955, 0
        %1974 = vmatpush.bf16.xpose.msra.mxu0 0
        %1975 = vmatpush.bf16.xpose.msra.mxu0 0
        %1976 = vmatpush.bf16.xpose.msra.mxu0 0
        %1977 = vmatpush.bf16.xpose.msra.mxu0 0
        %1978 = vmatpush.bf16.xpose.msra.mxu0 0
        %1979 = vmatpush.bf16.xpose.msra.mxu0 %v1972
        %1980 = vmatpush.bf16.xpose.msra.mxu0 %v1969
        %1981 = vmatpush.bf16.xpose.msra.mxu0 %v1966
        %1982 = vmatmul.bf16.gmra.mxu0 %v1957
        %v1983 = vpop.f32.mrf.mxu0
        %v1984 = vadd.f32 0.0, %v1983
        %v1985 = vpop.f32.mrf.mxu0
        %v1986 = vadd.f32 0.0, %v1985
        %1987 = vmatmul.bf16.gmra.mxu0 %v1960
        %v1988 = vpop.f32.mrf.mxu0
        %v1989 = vadd.f32 0.0, %v1988
        %v1990 = vpop.f32.mrf.mxu0
        %v1991 = vadd.f32 0.0, %v1990
        %1992 = vmatmul.bf16.gmra.mxu0 %v1963
        %v1993 = vpop.f32.mrf.mxu0
        %v1994 = vadd.f32 0.0, %v1993
        %v1995 = vpop.f32.mrf.mxu0
        %v1996 = vadd.f32 0.0, %v1995
        %1997 = vdwg.mxu0
        %v1998 = vsel %vm1493, %v1984, -inf
        %1999 = vmax.xlane.f32.xlu0 %v1998
        %v2000 = vpop.xlane.xlu0 %1999
        %v2001 = vsel %vm1493, %v1986, -inf
        %2002 = vmax.xlane.f32.xlu0 %v2001
        %v2003 = vpop.xlane.xlu0 %2002
        %v2004 = vsel %vm1493, %v1989, -inf
        %2005 = vmax.xlane.f32.xlu0 %v2004
        %v2006 = vpop.xlane.xlu0 %2005
        %v2007 = vsel %vm1493, %v1991, -inf
        %2008 = vmax.xlane.f32.xlu0 %v2007
        %v2009 = vpop.xlane.xlu0 %2008
        %v2010 = vsel %vm1493, %v1994, -inf
        %2011 = vmax.xlane.f32.xlu0 %v2010
        %v2012 = vpop.xlane.xlu0 %2011
        %v2013 = vsel %vm1493, %v1996, -inf
        %2014 = vmax.xlane.f32.xlu0 %v2013
        %v2015 = vpop.xlane.xlu0 %2014
        %v2016 = vsub.f32 %v1984, %v2000
        %v2017 = vsub.f32 %v1986, %v2003
        %v2018 = vsub.f32 %v1989, %v2006
        %v2019 = vsub.f32 %v1991, %v2009
        %v2020 = vsub.f32 %v1994, %v2012
        %v2021 = vsub.f32 %v1996, %v2015
        %v2022 = vmul.f32 %v2016, 1.442695
        %v2023 = vpow.pop %v2022
        %v2024 = vmul.f32 %v2017, 1.442695
        %v2025 = vpow.pop %v2024
        %v2026 = vmul.f32 %v2018, 1.442695
        %v2027 = vpow.pop %v2026
        %v2028 = vmul.f32 %v2019, 1.442695
        %v2029 = vpow.pop %v2028
        %v2030 = vmul.f32 %v2020, 1.442695
        %v2031 = vpow.pop %v2030
        %v2032 = vmul.f32 %v2021, 1.442695
        %v2033 = vpow.pop %v2032
        %v2034 = vsel %vm1493, %v2023, 0.0
        %2035 = vadd.xlane.f32.xlu0 %v2034
        %v2036 = vpop.xlane.xlu0 %2035
        %v2037 = vsel %vm1493, %v2025, 0.0
        %2038 = vadd.xlane.f32.xlu0 %v2037
        %v2039 = vpop.xlane.xlu0 %2038
        %v2040 = vsel %vm1493, %v2027, 0.0
        %2041 = vadd.xlane.f32.xlu0 %v2040
        %v2042 = vpop.xlane.xlu0 %2041
        %v2043 = vsel %vm1493, %v2029, 0.0
        %2044 = vadd.xlane.f32.xlu0 %v2043
        %v2045 = vpop.xlane.xlu0 %2044
        %v2046 = vsel %vm1493, %v2031, 0.0
        %2047 = vadd.xlane.f32.xlu0 %v2046
        %v2048 = vpop.xlane.xlu0 %2047
        %v2049 = vsel %vm1493, %v2033, 0.0
        %2050 = vadd.xlane.f32.xlu0 %v2049
        %v2051 = vpop.xlane.xlu0 %2050
        %v2052 = vpack.c.bf16 %v2025, %v2023
        %v2053 = vpack.c.bf16 %v2029, %v2027
        %v2054 = vpack.c.bf16 %v2033, %v2031
        %2055 = vrot.lane.b32.xlu0 %v1563, 80
        %v2056 = vpop.permute.xlu0 %2055
        %2057 = vrot.lane.b32.xlu0 %v1564, 80
        %v2058 = vpop.permute.xlu0 %2057
        %2059 = vrot.lane.b32.xlu0 %v1565, 80
        %v2060 = vpop.permute.xlu0 %2059
        %v2065 = vsel %vm1493, %v2052, 0
        %v2068 = vsel %vm1493, %v2053, 0
        %v2071 = vsel %vm1493, %v2054, 0
        %2073 = vmatpush.bf16.msra.mxu0 0
        %2074 = vmatpush.bf16.msra.mxu0 0
        %2075 = vmatpush.bf16.msra.mxu0 0
        %2076 = vmatpush.bf16.msra.mxu0 0
        %2077 = vmatpush.bf16.msra.mxu0 0
        %2078 = vmatpush.bf16.msra.mxu0 %v2060
        %2079 = vmatpush.bf16.msra.mxu0 %v2058
        %2080 = vmatpush.bf16.msra.mxu0 %v2056
        %2081 = vmatmul.bf16.gmra.mxu0 %v2065
        %v2082 = vpop.f32.mrf.mxu0
        %v2083 = vadd.f32 0.0, %v2082
        %v2084 = vpop.f32.mrf.mxu0
        %v2085 = vadd.f32 0.0, %v2084
        %2086 = vmatmul.bf16.gmra.mxu0 %v2068
        %v2087 = vpop.f32.mrf.mxu0
        %v2088 = vadd.f32 0.0, %v2087
        %v2089 = vpop.f32.mrf.mxu0
        %v2090 = vadd.f32 0.0, %v2089
        %2091 = vmatmul.bf16.gmra.mxu0 %v2071
        %v2092 = vpop.f32.mrf.mxu0
        %v2093 = vadd.f32 0.0, %v2092
        %v2094 = vpop.f32.mrf.mxu0
        %v2095 = vadd.f32 0.0, %v2094
        %2096 = vdwg.mxu0
        %v2097 = vrcp.pop %v2036
        %v2098 = vrcp.pop %v2039
        %v2099 = vrcp.pop %v2042
        %v2100 = vrcp.pop %v2045
        %v2101 = vrcp.pop %v2048
        %v2102 = vrcp.pop %v2051
        %v2103 = vmul.f32 %v2083, %v2097
        %v2104 = vmul.f32 %v2085, %v2098
        %v2105 = vmul.f32 %v2088, %v2099
        %v2106 = vmul.f32 %v2090, %v2100
        %v2107 = vmul.f32 %v2093, %v2101
        %v2108 = vmul.f32 %v2095, %v2102
        %2115 = vrot.lane.b32.xlu0 %v1773, 16
        %v2116 = vpop.permute.xlu0 %2115
        %2117 = vrot.lane.b32.xlu0 %v1774, 16
        %v2118 = vpop.permute.xlu0 %2117
        %2119 = vrot.lane.b32.xlu0 %v1775, 16
        %v2120 = vpop.permute.xlu0 %2119
        %2121 = vrot.lane.b32.xlu0 %v1776, 16
        %v2122 = vpop.permute.xlu0 %2121
        %2123 = vrot.lane.b32.xlu0 %v1777, 16
        %v2124 = vpop.permute.xlu0 %2123
        %2125 = vrot.lane.b32.xlu0 %v1778, 16
        %v2126 = vpop.permute.xlu0 %2125
        %2139 = vrot.lane.b32.xlu0 %v1938, 32
        %v2140 = vpop.permute.xlu0 %2139
        %2141 = vrot.lane.b32.xlu0 %v1939, 32
        %v2142 = vpop.permute.xlu0 %2141
        %2143 = vrot.lane.b32.xlu0 %v1940, 32
        %v2144 = vpop.permute.xlu0 %2143
        %2145 = vrot.lane.b32.xlu0 %v1941, 32
        %v2146 = vpop.permute.xlu0 %2145
        %2147 = vrot.lane.b32.xlu0 %v1942, 32
        %v2148 = vpop.permute.xlu0 %2147
        %2149 = vrot.lane.b32.xlu0 %v1943, 32
        %v2150 = vpop.permute.xlu0 %2149
        %2163 = vrot.lane.b32.xlu0 %v2103, 48
        %v2164 = vpop.permute.xlu0 %2163
        %2165 = vrot.lane.b32.xlu0 %v2104, 48
        %v2166 = vpop.permute.xlu0 %2165
        %2167 = vrot.lane.b32.xlu0 %v2105, 48
        %v2168 = vpop.permute.xlu0 %2167
        %2169 = vrot.lane.b32.xlu0 %v2106, 48
        %v2170 = vpop.permute.xlu0 %2169
        %2171 = vrot.lane.b32.xlu0 %v2107, 48
        %v2172 = vpop.permute.xlu0 %2171
        %2173 = vrot.lane.b32.xlu0 %v2108, 48
        %v2174 = vpop.permute.xlu0 %2173
        %v2181 = vsel %vm1450, %v1608, %v2116
        %v2182 = vsel %vm1450, %v1609, %v2118
        %v2183 = vsel %vm1450, %v1610, %v2120
        %v2184 = vsel %vm1450, %v1611, %v2122
        %v2185 = vsel %vm1450, %v1612, %v2124
        %v2186 = vsel %vm1450, %v1613, %v2126
        %vm2187 = vcmask 261120
        %v2188 = vsel %vm2187, %v2181, %v2140
        %v2189 = vsel %vm2187, %v2182, %v2142
        %v2190 = vsel %vm2187, %v2183, %v2144
        %v2191 = vsel %vm2187, %v2184, %v2146
        %v2192 = vsel %vm2187, %v2185, %v2148
        %v2193 = vsel %vm2187, %v2186, %v2150
        %v2194 = vsel %vm1493, %v2188, %v2164
        %v2195 = vsel %vm1493, %v2189, %v2166
        %v2196 = vsel %vm1493, %v2190, %v2168
        %v2197 = vsel %vm1493, %v2191, %v2170
        %v2198 = vsel %vm1493, %v2192, %v2172
        %v2199 = vsel %vm1493, %v2193, %v2174
        %v2200 = vpack.c.bf16 %v2195, %v2194
        %v2201 = vpack.c.bf16 %v2197, %v2196
        %v2202 = vpack.c.bf16 %v2199, %v2198
        %v2204 = vperm.slane %v1154, 0
        %v2214 = vunpack.c.l.b16 %v1146
        %v2215 = vunpack.c.l.b16 %v1147
        %v2216 = vunpack.c.l.b16 %v1148
        %v2217 = vunpack.c.l.b16 %v1149
        %v2218 = vunpack.c.l.b16 %v1150
        %v2219 = vunpack.c.l.b16 %v1151
        %v2220 = vunpack.c.l.b16 %v1152
        %v2221 = vunpack.c.l.b16 %v1153
        %v2222 = vpack.c.b16 %v2215, %v2214
        %v2223 = vpack.c.b16 %v2217, %v2216
        %v2224 = vpack.c.b16 %v2219, %v2218
        %v2225 = vpack.c.b16 %v2221, %v2220
        %v2231 = vsel %vm1269, %v2200, 0
        %v2234 = vsel %vm1269, %v2201, 0
        %v2237 = vsel %vm1269, %v2202, 0
        %2239 = vmatpush.bf16.msra.mxu0 0
        %2240 = vmatpush.bf16.msra.mxu0 0
        %2241 = vmatpush.bf16.msra.mxu0 0
        %2242 = vmatpush.bf16.msra.mxu0 0
        %2243 = vmatpush.bf16.msra.mxu0 %v2225
        %2244 = vmatpush.bf16.msra.mxu0 %v2224
        %2245 = vmatpush.bf16.msra.mxu0 %v2223
        %2246 = vmatpush.bf16.msra.mxu0 %v2222
        %2247 = vmatmul.bf16.gmra.mxu0 %v2231
        %v2248 = vpop.f32.mrf.mxu0
        %v2249 = vadd.f32 %v2204, %v2248
        %v2250 = vpop.f32.mrf.mxu0
        %v2251 = vadd.f32 %v2204, %v2250
        %2252 = vmatmul.bf16.gmra.mxu0 %v2234
        %v2253 = vpop.f32.mrf.mxu0
        %v2254 = vadd.f32 %v2204, %v2253
        %v2255 = vpop.f32.mrf.mxu0
        %v2256 = vadd.f32 %v2204, %v2255
        %2257 = vmatmul.bf16.gmra.mxu0 %v2237
        %v2258 = vpop.f32.mrf.mxu0
        %v2259 = vadd.f32 %v2204, %v2258
        %v2260 = vpop.f32.mrf.mxu0
        %v2261 = vadd.f32 %v2204, %v2260
        %2262 = vdwg.mxu0
        %v2263 = vsel %vm1269, %v2249, 0.0
        %2264 = vadd.xlane.f32.xlu0 %v2263
        %v2265 = vpop.xlane.xlu0 %2264
        %v2266 = vsel %vm1269, %v2251, 0.0
        %2267 = vadd.xlane.f32.xlu0 %v2266
        %v2268 = vpop.xlane.xlu0 %2267
        %v2269 = vsel %vm1269, %v2254, 0.0
        %2270 = vadd.xlane.f32.xlu0 %v2269
        %v2271 = vpop.xlane.xlu0 %2270
        %v2272 = vsel %vm1269, %v2256, 0.0
        %2273 = vadd.xlane.f32.xlu0 %v2272
        %v2274 = vpop.xlane.xlu0 %2273
        %v2275 = vsel %vm1269, %v2259, 0.0
        %2276 = vadd.xlane.f32.xlu0 %v2275
        %v2277 = vpop.xlane.xlu0 %2276
        %v2278 = vsel %vm1269, %v2261, 0.0
        %2279 = vadd.xlane.f32.xlu0 %v2278
        %v2280 = vpop.xlane.xlu0 %2279
        %v2281 = vrcp.pop 64.0
        %v2282 = vmul.f32 64.0, %v2281
        %v2283 = vsub.f32 1.0, %v2282
        %v2284 = vmul.f32 %v2281, %v2283
        %v2285 = vadd.f32 %v2281, %v2284
        %vm2286 = vweird.f32 %v2281
        %v2287 = vsel %vm2286, %v2281, %v2285
        %v2288 = vmul.f32 %v2265, %v2287
        %v2289 = vmul.f32 %v2268, %v2287
        %v2290 = vmul.f32 %v2271, %v2287
        %v2291 = vmul.f32 %v2274, %v2287
        %v2292 = vmul.f32 %v2277, %v2287
        %v2293 = vmul.f32 %v2280, %v2287
        %v2294 = vsub.f32 %v2249, %v2288
        %v2295 = vsub.f32 %v2251, %v2289
        %v2296 = vsub.f32 %v2254, %v2290
        %v2297 = vsub.f32 %v2256, %v2291
        %v2298 = vsub.f32 %v2259, %v2292
        %v2299 = vsub.f32 %v2261, %v2293
        %v2300 = vmul.f32 %v2294, %v2294
        %v2301 = vmul.f32 %v2295, %v2295
        %v2302 = vmul.f32 %v2296, %v2296
        %v2303 = vmul.f32 %v2297, %v2297
        %v2304 = vmul.f32 %v2298, %v2298
        %v2305 = vmul.f32 %v2299, %v2299
        %v2306 = vsel %vm1269, %v2300, 0.0
        %2307 = vadd.xlane.f32.xlu0 %v2306
        %v2308 = vpop.xlane.xlu0 %2307
        %v2309 = vsel %vm1269, %v2301, 0.0
        %2310 = vadd.xlane.f32.xlu0 %v2309
        %v2311 = vpop.xlane.xlu0 %2310
        %v2312 = vsel %vm1269, %v2302, 0.0
        %2313 = vadd.xlane.f32.xlu0 %v2312
        %v2314 = vpop.xlane.xlu0 %2313
        %v2315 = vsel %vm1269, %v2303, 0.0
        %2316 = vadd.xlane.f32.xlu0 %v2315
        %v2317 = vpop.xlane.xlu0 %2316
        %v2318 = vsel %vm1269, %v2304, 0.0
        %2319 = vadd.xlane.f32.xlu0 %v2318
        %v2320 = vpop.xlane.xlu0 %2319
        %v2321 = vsel %vm1269, %v2305, 0.0
        %2322 = vadd.xlane.f32.xlu0 %v2321
        %v2323 = vpop.xlane.xlu0 %2322
        %v2324 = vmul.f32 %v2308, %v2287
        %v2325 = vmul.f32 %v2311, %v2287
        %v2326 = vmul.f32 %v2314, %v2287
        %v2327 = vmul.f32 %v2317, %v2287
        %v2328 = vmul.f32 %v2320, %v2287
        %v2329 = vmul.f32 %v2323, %v2287
        %v2330 = vadd.f32 %v2324, 1e-05
        %v2331 = vadd.f32 %v2325, 1e-05
        %v2332 = vadd.f32 %v2326, 1e-05
        %v2333 = vadd.f32 %v2327, 1e-05
        %v2334 = vadd.f32 %v2328, 1e-05
        %v2335 = vadd.f32 %v2329, 1e-05
        %v2336 = vrsqrt.pop %v2330
        %v2337 = vmul.f32 %v2336, %v2330
        %v2338 = vmul.f32 %v2337, %v2336
        %v2339 = vmul.f32 0.5, %v2338
        %v2340 = vsub.f32 1.5, %v2339
        %v2341 = vmul.f32 %v2336, %v2340
        %vm2342 = vweird.f32 %v2330
        %vm2343 = vweird.f32 %v2336
        %vm2344 = vmor %vm2342, %vm2343
        %v2345 = vsel %vm2344, %v2336, %v2341
        %v2346 = vrsqrt.pop %v2331
        %v2347 = vmul.f32 %v2346, %v2331
        %v2348 = vmul.f32 %v2347, %v2346
        %v2349 = vmul.f32 0.5, %v2348
        %v2350 = vsub.f32 1.5, %v2349
        %v2351 = vmul.f32 %v2346, %v2350
        %vm2352 = vweird.f32 %v2331
        %vm2353 = vweird.f32 %v2346
        %vm2354 = vmor %vm2352, %vm2353
        %v2355 = vsel %vm2354, %v2346, %v2351
        %v2356 = vrsqrt.pop %v2332
        %v2357 = vmul.f32 %v2356, %v2332
        %v2358 = vmul.f32 %v2357, %v2356
        %v2359 = vmul.f32 0.5, %v2358
        %v2360 = vsub.f32 1.5, %v2359
        %v2361 = vmul.f32 %v2356, %v2360
        %vm2362 = vweird.f32 %v2332
        %vm2363 = vweird.f32 %v2356
        %vm2364 = vmor %vm2362, %vm2363
        %v2365 = vsel %vm2364, %v2356, %v2361
        %v2366 = vrsqrt.pop %v2333
        %v2367 = vmul.f32 %v2366, %v2333
        %v2368 = vmul.f32 %v2367, %v2366
        %v2369 = vmul.f32 0.5, %v2368
        %v2370 = vsub.f32 1.5, %v2369
        %v2371 = vmul.f32 %v2366, %v2370
        %vm2372 = vweird.f32 %v2333
        %vm2373 = vweird.f32 %v2366
        %vm2374 = vmor %vm2372, %vm2373
        %v2375 = vsel %vm2374, %v2366, %v2371
        %v2376 = vrsqrt.pop %v2334
        %v2377 = vmul.f32 %v2376, %v2334
        %v2378 = vmul.f32 %v2377, %v2376
        %v2379 = vmul.f32 0.5, %v2378
        %v2380 = vsub.f32 1.5, %v2379
        %v2381 = vmul.f32 %v2376, %v2380
        %vm2382 = vweird.f32 %v2334
        %vm2383 = vweird.f32 %v2376
        %vm2384 = vmor %vm2382, %vm2383
        %v2385 = vsel %vm2384, %v2376, %v2381
        %v2386 = vrsqrt.pop %v2335
        %v2387 = vmul.f32 %v2386, %v2335
        %v2388 = vmul.f32 %v2387, %v2386
        %v2389 = vmul.f32 0.5, %v2388
        %v2390 = vsub.f32 1.5, %v2389
        %v2391 = vmul.f32 %v2386, %v2390
        %vm2392 = vweird.f32 %v2335
        %vm2393 = vweird.f32 %v2386
        %vm2394 = vmor %vm2392, %vm2393
        %v2395 = vsel %vm2394, %v2386, %v2391
        %v2396 = vmul.f32 %v2294, %v2345
        %v2397 = vmul.f32 %v2295, %v2355
        %v2398 = vmul.f32 %v2296, %v2365
        %v2399 = vmul.f32 %v2297, %v2375
        %v2400 = vmul.f32 %v2298, %v2385
        %v2401 = vmul.f32 %v2299, %v2395
        %v2403 = vperm.slane %v1155, 0
        %v2405 = vmul.f32 %v2396, %v2403
        %v2406 = vmul.f32 %v2397, %v2403
        %v2407 = vmul.f32 %v2398, %v2403
        %v2408 = vmul.f32 %v2399, %v2403
        %v2409 = vmul.f32 %v2400, %v2403
        %v2410 = vmul.f32 %v2401, %v2403
        %v2412 = vperm.slane %v1156, 0
        %v2414 = vadd.f32 %v2405, %v2412
        %v2415 = vadd.f32 %v2406, %v2412
        %v2416 = vadd.f32 %v2407, %v2412
        %v2417 = vadd.f32 %v2408, %v2412
        %v2418 = vadd.f32 %v2409, %v2412
        %v2419 = vadd.f32 %v2410, %v2412
        %v2420 = vadd.f32 %v2414, %v1131
        %v2421 = vadd.f32 %v2415, %v1132
        %v2422 = vadd.f32 %v2416, %v1133
        %v2423 = vadd.f32 %v2417, %v1134
        %v2424 = vadd.f32 %v2418, %v1135
        %v2425 = vadd.f32 %v2419, %v1136
        %v2426 = vpack.c.bf16 %v2421, %v2420
        %v2427 = vpack.c.bf16 %v2423, %v2422
        %v2428 = vpack.c.bf16 %v2425, %v2424
        %v2435 = vsel %vm1269, %v2426, 0
        %v2438 = vsel %vm1269, %v2427, 0
        %v2441 = vsel %vm1269, %v2428, 0
        %2443 = vmatpush.bf16.msra.mxu0 0
        %2444 = vmatpush.bf16.msra.mxu0 0
        %2445 = vmatpush.bf16.msra.mxu0 0
        %2446 = vmatpush.bf16.msra.mxu0 0
        %2447 = vmatpush.bf16.msra.mxu0 %v1377
        %2448 = vmatpush.bf16.msra.mxu0 %v1375
        %2449 = vmatpush.bf16.msra.mxu0 %v1373
        %2450 = vmatpush.bf16.msra.mxu0 %v1371
        %2451 = vmatmul.bf16.gmra.mxu0 %v2435
        %v2452 = vpop.f32.mrf.mxu0
        %v2453 = vadd.f32 %v1340, %v2452
        %v2454 = vpop.f32.mrf.mxu0
        %v2455 = vadd.f32 %v1340, %v2454
        %2456 = vmatmul.bf16.gmra.mxu0 %v2438
        %v2457 = vpop.f32.mrf.mxu0
        %v2458 = vadd.f32 %v1340, %v2457
        %v2459 = vpop.f32.mrf.mxu0
        %v2460 = vadd.f32 %v1340, %v2459
        %2461 = vmatmul.bf16.gmra.mxu0 %v2441
        %v2462 = vpop.f32.mrf.mxu0
        %v2463 = vadd.f32 %v1340, %v2462
        %v2464 = vpop.f32.mrf.mxu0
        %v2465 = vadd.f32 %v1340, %v2464
        %2466 = vdwg.mxu0
        %v2467 = vpack.c.bf16 %v2453, %v2453
        %v2468 = vpack.c.bf16 %v2455, %v2455
        %v2469 = vpack.c.bf16 %v2458, %v2458
        %v2470 = vpack.c.bf16 %v2460, %v2460
        %v2471 = vpack.c.bf16 %v2463, %v2463
        %v2472 = vpack.c.bf16 %v2465, %v2465
        %v2479 = vunpack.c.l.b16 %v2467
        %v2480 = vunpack.c.l.b16 %v2468
        %v2481 = vunpack.c.l.b16 %v2469
        %v2482 = vunpack.c.l.b16 %v2470
        %v2483 = vunpack.c.l.b16 %v2471
        %v2484 = vunpack.c.l.b16 %v2472
        %v2485 = vpack.c.b16 %v2480, %v2479
        %v2486 = vpack.c.b16 %v2482, %v2481
        %v2487 = vpack.c.b16 %v2484, %v2483
        %v2490 = vunpack.c.l.b16 %v1427
        %v2491 = vunpack.c.l.b16 %v1428
        %v2492 = vpack.c.b16 %v2491, %v2490
        %v2494 = vsel %vm1450, %v2485, 0
        %v2497 = vsel %vm1450, %v2486, 0
        %v2500 = vsel %vm1450, %v2487, 0
        %v2503 = vsel %vm1450, %v2492, 0
        %2505 = vmatpush.bf16.xpose.msra.mxu0 0
        %2506 = vmatpush.bf16.xpose.msra.mxu0 0
        %2507 = vmatpush.bf16.xpose.msra.mxu0 0
        %2508 = vmatpush.bf16.xpose.msra.mxu0 0
        %2509 = vmatpush.bf16.xpose.msra.mxu0 0
        %2510 = vmatpush.bf16.xpose.msra.mxu0 0
        %2511 = vmatpush.bf16.xpose.msra.mxu0 0
        %2512 = vmatpush.bf16.xpose.msra.mxu0 %v2503
        %2513 = vmatmul.bf16.gmra.mxu0 %v2494
        %v2514 = vpop.f32.mrf.mxu0
        %v2515 = vadd.f32 0.0, %v2514
        %v2516 = vpop.f32.mrf.mxu0
        %v2517 = vadd.f32 0.0, %v2516
        %2518 = vmatmul.bf16.gmra.mxu0 %v2497
        %v2519 = vpop.f32.mrf.mxu0
        %v2520 = vadd.f32 0.0, %v2519
        %v2521 = vpop.f32.mrf.mxu0
        %v2522 = vadd.f32 0.0, %v2521
        %2523 = vmatmul.bf16.gmra.mxu0 %v2500
        %v2524 = vpop.f32.mrf.mxu0
        %v2525 = vadd.f32 0.0, %v2524
        %v2526 = vpop.f32.mrf.mxu0
        %v2527 = vadd.f32 0.0, %v2526
        %2528 = vdwg.mxu0
        %v2529 = vsel %vm1450, %v2515, -inf
        %2530 = vmax.xlane.f32.xlu0 %v2529
        %v2531 = vpop.xlane.xlu0 %2530
        %v2532 = vsel %vm1450, %v2517, -inf
        %2533 = vmax.xlane.f32.xlu0 %v2532
        %v2534 = vpop.xlane.xlu0 %2533
        %v2535 = vsel %vm1450, %v2520, -inf
        %2536 = vmax.xlane.f32.xlu0 %v2535
        %v2537 = vpop.xlane.xlu0 %2536
        %v2538 = vsel %vm1450, %v2522, -inf
        %2539 = vmax.xlane.f32.xlu0 %v2538
        %v2540 = vpop.xlane.xlu0 %2539
        %v2541 = vsel %vm1450, %v2525, -inf
        %2542 = vmax.xlane.f32.xlu0 %v2541
        %v2543 = vpop.xlane.xlu0 %2542
        %v2544 = vsel %vm1450, %v2527, -inf
        %2545 = vmax.xlane.f32.xlu0 %v2544
        %v2546 = vpop.xlane.xlu0 %2545
        %v2547 = vsub.f32 %v2515, %v2531
        %v2548 = vsub.f32 %v2517, %v2534
        %v2549 = vsub.f32 %v2520, %v2537
        %v2550 = vsub.f32 %v2522, %v2540
        %v2551 = vsub.f32 %v2525, %v2543
        %v2552 = vsub.f32 %v2527, %v2546
        %v2553 = vmul.f32 %v2547, 1.442695
        %v2554 = vpow.pop %v2553
        %v2555 = vmul.f32 %v2548, 1.442695
        %v2556 = vpow.pop %v2555
        %v2557 = vmul.f32 %v2549, 1.442695
        %v2558 = vpow.pop %v2557
        %v2559 = vmul.f32 %v2550, 1.442695
        %v2560 = vpow.pop %v2559
        %v2561 = vmul.f32 %v2551, 1.442695
        %v2562 = vpow.pop %v2561
        %v2563 = vmul.f32 %v2552, 1.442695
        %v2564 = vpow.pop %v2563
        %v2565 = vsel %vm1450, %v2554, 0.0
        %2566 = vadd.xlane.f32.xlu0 %v2565
        %v2567 = vpop.xlane.xlu0 %2566
        %v2568 = vsel %vm1450, %v2556, 0.0
        %2569 = vadd.xlane.f32.xlu0 %v2568
        %v2570 = vpop.xlane.xlu0 %2569
        %v2571 = vsel %vm1450, %v2558, 0.0
        %2572 = vadd.xlane.f32.xlu0 %v2571
        %v2573 = vpop.xlane.xlu0 %2572
        %v2574 = vsel %vm1450, %v2560, 0.0
        %2575 = vadd.xlane.f32.xlu0 %v2574
        %v2576 = vpop.xlane.xlu0 %2575
        %v2577 = vsel %vm1450, %v2562, 0.0
        %2578 = vadd.xlane.f32.xlu0 %v2577
        %v2579 = vpop.xlane.xlu0 %2578
        %v2580 = vsel %vm1450, %v2564, 0.0
        %2581 = vadd.xlane.f32.xlu0 %v2580
        %v2582 = vpop.xlane.xlu0 %2581
        %v2583 = vpack.c.bf16 %v2556, %v2554
        %v2584 = vpack.c.bf16 %v2560, %v2558
        %v2585 = vpack.c.bf16 %v2564, %v2562
        %2586 = vrot.lane.b32.xlu0 %v2492, 64
        %v2587 = vpop.permute.xlu0 %2586
        %v2590 = vsel %vm1450, %v2583, 0
        %v2593 = vsel %vm1450, %v2584, 0
        %v2596 = vsel %vm1450, %v2585, 0
        %2598 = vmatpush.bf16.msra.mxu0 0
        %2599 = vmatpush.bf16.msra.mxu0 0
        %2600 = vmatpush.bf16.msra.mxu0 0
        %2601 = vmatpush.bf16.msra.mxu0 0
        %2602 = vmatpush.bf16.msra.mxu0 0
        %2603 = vmatpush.bf16.msra.mxu0 0
        %2604 = vmatpush.bf16.msra.mxu0 0
        %2605 = vmatpush.bf16.msra.mxu0 %v2587
        %2606 = vmatmul.bf16.gmra.mxu0 %v2590
        %v2607 = vpop.f32.mrf.mxu0
        %v2608 = vadd.f32 0.0, %v2607
        %v2609 = vpop.f32.mrf.mxu0
        %v2610 = vadd.f32 0.0, %v2609
        %2611 = vmatmul.bf16.gmra.mxu0 %v2593
        %v2612 = vpop.f32.mrf.mxu0
        %v2613 = vadd.f32 0.0, %v2612
        %v2614 = vpop.f32.mrf.mxu0
        %v2615 = vadd.f32 0.0, %v2614
        %2616 = vmatmul.bf16.gmra.mxu0 %v2596
        %v2617 = vpop.f32.mrf.mxu0
        %v2618 = vadd.f32 0.0, %v2617
        %v2619 = vpop.f32.mrf.mxu0
        %v2620 = vadd.f32 0.0, %v2619
        %2621 = vdwg.mxu0
        %v2622 = vrcp.pop %v2567
        %v2623 = vrcp.pop %v2570
        %v2624 = vrcp.pop %v2573
        %v2625 = vrcp.pop %v2576
        %v2626 = vrcp.pop %v2579
        %v2627 = vrcp.pop %v2582
        %v2628 = vmul.f32 %v2608, %v2622
        %v2629 = vmul.f32 %v2610, %v2623
        %v2630 = vmul.f32 %v2613, %v2624
        %v2631 = vmul.f32 %v2615, %v2625
        %v2632 = vmul.f32 %v2618, %v2626
        %v2633 = vmul.f32 %v2620, %v2627
        %2634 = vrot.lane.b32.xlu0 %v2485, 112
        %v2635 = vpop.permute.xlu0 %2634
        %2636 = vrot.lane.b32.xlu0 %v2486, 112
        %v2637 = vpop.permute.xlu0 %2636
        %2638 = vrot.lane.b32.xlu0 %v2487, 112
        %v2639 = vpop.permute.xlu0 %2638
        %2640 = vrot.lane.b32.xlu0 %v2492, 112
        %v2641 = vpop.permute.xlu0 %2640
        %v2643 = vsel %vm1450, %v2635, 0
        %v2646 = vsel %vm1450, %v2637, 0
        %v2649 = vsel %vm1450, %v2639, 0
        %v2652 = vsel %vm1450, %v2641, 0
        %2654 = vmatpush.bf16.xpose.msra.mxu0 0
        %2655 = vmatpush.bf16.xpose.msra.mxu0 0
        %2656 = vmatpush.bf16.xpose.msra.mxu0 0
        %2657 = vmatpush.bf16.xpose.msra.mxu0 0
        %2658 = vmatpush.bf16.xpose.msra.mxu0 0
        %2659 = vmatpush.bf16.xpose.msra.mxu0 0
        %2660 = vmatpush.bf16.xpose.msra.mxu0 0
        %2661 = vmatpush.bf16.xpose.msra.mxu0 %v2652
        %2662 = vmatmul.bf16.gmra.mxu0 %v2643
        %v2663 = vpop.f32.mrf.mxu0
        %v2664 = vadd.f32 0.0, %v2663
        %v2665 = vpop.f32.mrf.mxu0
        %v2666 = vadd.f32 0.0, %v2665
        %2667 = vmatmul.bf16.gmra.mxu0 %v2646
        %v2668 = vpop.f32.mrf.mxu0
        %v2669 = vadd.f32 0.0, %v2668
        %v2670 = vpop.f32.mrf.mxu0
        %v2671 = vadd.f32 0.0, %v2670
        %2672 = vmatmul.bf16.gmra.mxu0 %v2649
        %v2673 = vpop.f32.mrf.mxu0
        %v2674 = vadd.f32 0.0, %v2673
        %v2675 = vpop.f32.mrf.mxu0
        %v2676 = vadd.f32 0.0, %v2675
        %2677 = vdwg.mxu0
        %v2678 = vsel %vm1450, %v2664, -inf
        %2679 = vmax.xlane.f32.xlu0 %v2678
        %v2680 = vpop.xlane.xlu0 %2679
        %v2681 = vsel %vm1450, %v2666, -inf
        %2682 = vmax.xlane.f32.xlu0 %v2681
        %v2683 = vpop.xlane.xlu0 %2682
        %v2684 = vsel %vm1450, %v2669, -inf
        %2685 = vmax.xlane.f32.xlu0 %v2684
        %v2686 = vpop.xlane.xlu0 %2685
        %v2687 = vsel %vm1450, %v2671, -inf
        %2688 = vmax.xlane.f32.xlu0 %v2687
        %v2689 = vpop.xlane.xlu0 %2688
        %v2690 = vsel %vm1450, %v2674, -inf
        %2691 = vmax.xlane.f32.xlu0 %v2690
        %v2692 = vpop.xlane.xlu0 %2691
        %v2693 = vsel %vm1450, %v2676, -inf
        %2694 = vmax.xlane.f32.xlu0 %v2693
        %v2695 = vpop.xlane.xlu0 %2694
        %v2696 = vsub.f32 %v2664, %v2680
        %v2697 = vsub.f32 %v2666, %v2683
        %v2698 = vsub.f32 %v2669, %v2686
        %v2699 = vsub.f32 %v2671, %v2689
        %v2700 = vsub.f32 %v2674, %v2692
        %v2701 = vsub.f32 %v2676, %v2695
        %v2702 = vmul.f32 %v2696, 1.442695
        %v2703 = vpow.pop %v2702
        %v2704 = vmul.f32 %v2697, 1.442695
        %v2705 = vpow.pop %v2704
        %v2706 = vmul.f32 %v2698, 1.442695
        %v2707 = vpow.pop %v2706
        %v2708 = vmul.f32 %v2699, 1.442695
        %v2709 = vpow.pop %v2708
        %v2710 = vmul.f32 %v2700, 1.442695
        %v2711 = vpow.pop %v2710
        %v2712 = vmul.f32 %v2701, 1.442695
        %v2713 = vpow.pop %v2712
        %v2714 = vsel %vm1450, %v2703, 0.0
        %2715 = vadd.xlane.f32.xlu0 %v2714
        %v2716 = vpop.xlane.xlu0 %2715
        %v2717 = vsel %vm1450, %v2705, 0.0
        %2718 = vadd.xlane.f32.xlu0 %v2717
        %v2719 = vpop.xlane.xlu0 %2718
        %v2720 = vsel %vm1450, %v2707, 0.0
        %2721 = vadd.xlane.f32.xlu0 %v2720
        %v2722 = vpop.xlane.xlu0 %2721
        %v2723 = vsel %vm1450, %v2709, 0.0
        %2724 = vadd.xlane.f32.xlu0 %v2723
        %v2725 = vpop.xlane.xlu0 %2724
        %v2726 = vsel %vm1450, %v2711, 0.0
        %2727 = vadd.xlane.f32.xlu0 %v2726
        %v2728 = vpop.xlane.xlu0 %2727
        %v2729 = vsel %vm1450, %v2713, 0.0
        %2730 = vadd.xlane.f32.xlu0 %v2729
        %v2731 = vpop.xlane.xlu0 %2730
        %v2732 = vpack.c.bf16 %v2705, %v2703
        %v2733 = vpack.c.bf16 %v2709, %v2707
        %v2734 = vpack.c.bf16 %v2713, %v2711
        %2735 = vrot.lane.b32.xlu0 %v2492, 48
        %v2736 = vpop.permute.xlu0 %2735
        %v2739 = vsel %vm1450, %v2732, 0
        %v2742 = vsel %vm1450, %v2733, 0
        %v2745 = vsel %vm1450, %v2734, 0
        %2747 = vmatpush.bf16.msra.mxu0 0
        %2748 = vmatpush.bf16.msra.mxu0 0
        %2749 = vmatpush.bf16.msra.mxu0 0
        %2750 = vmatpush.bf16.msra.mxu0 0
        %2751 = vmatpush.bf16.msra.mxu0 0
        %2752 = vmatpush.bf16.msra.mxu0 0
        %2753 = vmatpush.bf16.msra.mxu0 0
        %2754 = vmatpush.bf16.msra.mxu0 %v2736
        %2755 = vmatmul.bf16.gmra.mxu0 %v2739
        %v2756 = vpop.f32.mrf.mxu0
        %v2757 = vadd.f32 0.0, %v2756
        %v2758 = vpop.f32.mrf.mxu0
        %v2759 = vadd.f32 0.0, %v2758
        %2760 = vmatmul.bf16.gmra.mxu0 %v2742
        %v2761 = vpop.f32.mrf.mxu0
        %v2762 = vadd.f32 0.0, %v2761
        %v2763 = vpop.f32.mrf.mxu0
        %v2764 = vadd.f32 0.0, %v2763
        %2765 = vmatmul.bf16.gmra.mxu0 %v2745
        %v2766 = vpop.f32.mrf.mxu0
        %v2767 = vadd.f32 0.0, %v2766
        %v2768 = vpop.f32.mrf.mxu0
        %v2769 = vadd.f32 0.0, %v2768
        %2770 = vdwg.mxu0
        %v2771 = vrcp.pop %v2716
        %v2772 = vrcp.pop %v2719
        %v2773 = vrcp.pop %v2722
        %v2774 = vrcp.pop %v2725
        %v2775 = vrcp.pop %v2728
        %v2776 = vrcp.pop %v2731
        %v2777 = vmul.f32 %v2757, %v2771
        %v2778 = vmul.f32 %v2759, %v2772
        %v2779 = vmul.f32 %v2762, %v2773
        %v2780 = vmul.f32 %v2764, %v2774
        %v2781 = vmul.f32 %v2767, %v2775
        %v2782 = vmul.f32 %v2769, %v2776
        %2783 = vrot.lane.b32.xlu0 %v2485, 96
        %v2784 = vpop.permute.xlu0 %2783
        %2785 = vrot.lane.b32.xlu0 %v2486, 96
        %v2786 = vpop.permute.xlu0 %2785
        %2787 = vrot.lane.b32.xlu0 %v2487, 96
        %v2788 = vpop.permute.xlu0 %2787
        %2789 = vrot.lane.b32.xlu0 %v2492, 96
        %v2790 = vpop.permute.xlu0 %2789
        %v2792 = vsel %vm1450, %v2784, 0
        %v2795 = vsel %vm1450, %v2786, 0
        %v2798 = vsel %vm1450, %v2788, 0
        %v2801 = vsel %vm1450, %v2790, 0
        %2803 = vmatpush.bf16.xpose.msra.mxu0 0
        %2804 = vmatpush.bf16.xpose.msra.mxu0 0
        %2805 = vmatpush.bf16.xpose.msra.mxu0 0
        %2806 = vmatpush.bf16.xpose.msra.mxu0 0
        %2807 = vmatpush.bf16.xpose.msra.mxu0 0
        %2808 = vmatpush.bf16.xpose.msra.mxu0 0
        %2809 = vmatpush.bf16.xpose.msra.mxu0 0
        %2810 = vmatpush.bf16.xpose.msra.mxu0 %v2801
        %2811 = vmatmul.bf16.gmra.mxu0 %v2792
        %v2812 = vpop.f32.mrf.mxu0
        %v2813 = vadd.f32 0.0, %v2812
        %v2814 = vpop.f32.mrf.mxu0
        %v2815 = vadd.f32 0.0, %v2814
        %2816 = vmatmul.bf16.gmra.mxu0 %v2795
        %v2817 = vpop.f32.mrf.mxu0
        %v2818 = vadd.f32 0.0, %v2817
        %v2819 = vpop.f32.mrf.mxu0
        %v2820 = vadd.f32 0.0, %v2819
        %2821 = vmatmul.bf16.gmra.mxu0 %v2798
        %v2822 = vpop.f32.mrf.mxu0
        %v2823 = vadd.f32 0.0, %v2822
        %v2824 = vpop.f32.mrf.mxu0
        %v2825 = vadd.f32 0.0, %v2824
        %2826 = vdwg.mxu0
        %v2827 = vsel %vm1450, %v2813, -inf
        %2828 = vmax.xlane.f32.xlu0 %v2827
        %v2829 = vpop.xlane.xlu0 %2828
        %v2830 = vsel %vm1450, %v2815, -inf
        %2831 = vmax.xlane.f32.xlu0 %v2830
        %v2832 = vpop.xlane.xlu0 %2831
        %v2833 = vsel %vm1450, %v2818, -inf
        %2834 = vmax.xlane.f32.xlu0 %v2833
        %v2835 = vpop.xlane.xlu0 %2834
        %v2836 = vsel %vm1450, %v2820, -inf
        %2837 = vmax.xlane.f32.xlu0 %v2836
        %v2838 = vpop.xlane.xlu0 %2837
        %v2839 = vsel %vm1450, %v2823, -inf
        %2840 = vmax.xlane.f32.xlu0 %v2839
        %v2841 = vpop.xlane.xlu0 %2840
        %v2842 = vsel %vm1450, %v2825, -inf
        %2843 = vmax.xlane.f32.xlu0 %v2842
        %v2844 = vpop.xlane.xlu0 %2843
        %v2845 = vsub.f32 %v2813, %v2829
        %v2846 = vsub.f32 %v2815, %v2832
        %v2847 = vsub.f32 %v2818, %v2835
        %v2848 = vsub.f32 %v2820, %v2838
        %v2849 = vsub.f32 %v2823, %v2841
        %v2850 = vsub.f32 %v2825, %v2844
        %v2851 = vmul.f32 %v2845, 1.442695
        %v2852 = vpow.pop %v2851
        %v2853 = vmul.f32 %v2846, 1.442695
        %v2854 = vpow.pop %v2853
        %v2855 = vmul.f32 %v2847, 1.442695
        %v2856 = vpow.pop %v2855
        %v2857 = vmul.f32 %v2848, 1.442695
        %v2858 = vpow.pop %v2857
        %v2859 = vmul.f32 %v2849, 1.442695
        %v2860 = vpow.pop %v2859
        %v2861 = vmul.f32 %v2850, 1.442695
        %v2862 = vpow.pop %v2861
        %v2863 = vsel %vm1450, %v2852, 0.0
        %2864 = vadd.xlane.f32.xlu0 %v2863
        %v2865 = vpop.xlane.xlu0 %2864
        %v2866 = vsel %vm1450, %v2854, 0.0
        %2867 = vadd.xlane.f32.xlu0 %v2866
        %v2868 = vpop.xlane.xlu0 %2867
        %v2869 = vsel %vm1450, %v2856, 0.0
        %2870 = vadd.xlane.f32.xlu0 %v2869
        %v2871 = vpop.xlane.xlu0 %2870
        %v2872 = vsel %vm1450, %v2858, 0.0
        %2873 = vadd.xlane.f32.xlu0 %v2872
        %v2874 = vpop.xlane.xlu0 %2873
        %v2875 = vsel %vm1450, %v2860, 0.0
        %2876 = vadd.xlane.f32.xlu0 %v2875
        %v2877 = vpop.xlane.xlu0 %2876
        %v2878 = vsel %vm1450, %v2862, 0.0
        %2879 = vadd.xlane.f32.xlu0 %v2878
        %v2880 = vpop.xlane.xlu0 %2879
        %v2881 = vpack.c.bf16 %v2854, %v2852
        %v2882 = vpack.c.bf16 %v2858, %v2856
        %v2883 = vpack.c.bf16 %v2862, %v2860
        %2884 = vrot.lane.b32.xlu0 %v2492, 32
        %v2885 = vpop.permute.xlu0 %2884
        %v2888 = vsel %vm1450, %v2881, 0
        %v2891 = vsel %vm1450, %v2882, 0
        %v2894 = vsel %vm1450, %v2883, 0
        %2896 = vmatpush.bf16.msra.mxu0 0
        %2897 = vmatpush.bf16.msra.mxu0 0
        %2898 = vmatpush.bf16.msra.mxu0 0
        %2899 = vmatpush.bf16.msra.mxu0 0
        %2900 = vmatpush.bf16.msra.mxu0 0
        %2901 = vmatpush.bf16.msra.mxu0 0
        %2902 = vmatpush.bf16.msra.mxu0 0
        %2903 = vmatpush.bf16.msra.mxu0 %v2885
        %2904 = vmatmul.bf16.gmra.mxu0 %v2888
        %v2905 = vpop.f32.mrf.mxu0
        %v2906 = vadd.f32 0.0, %v2905
        %v2907 = vpop.f32.mrf.mxu0
        %v2908 = vadd.f32 0.0, %v2907
        %2909 = vmatmul.bf16.gmra.mxu0 %v2891
        %v2910 = vpop.f32.mrf.mxu0
        %v2911 = vadd.f32 0.0, %v2910
        %v2912 = vpop.f32.mrf.mxu0
        %v2913 = vadd.f32 0.0, %v2912
        %2914 = vmatmul.bf16.gmra.mxu0 %v2894
        %v2915 = vpop.f32.mrf.mxu0
        %v2916 = vadd.f32 0.0, %v2915
        %v2917 = vpop.f32.mrf.mxu0
        %v2918 = vadd.f32 0.0, %v2917
        %2919 = vdwg.mxu0
        %v2920 = vrcp.pop %v2865
        %v2921 = vrcp.pop %v2868
        %v2922 = vrcp.pop %v2871
        %v2923 = vrcp.pop %v2874
        %v2924 = vrcp.pop %v2877
        %v2925 = vrcp.pop %v2880
        %v2926 = vmul.f32 %v2906, %v2920
        %v2927 = vmul.f32 %v2908, %v2921
        %v2928 = vmul.f32 %v2911, %v2922
        %v2929 = vmul.f32 %v2913, %v2923
        %v2930 = vmul.f32 %v2916, %v2924
        %v2931 = vmul.f32 %v2918, %v2925
        %2932 = vrot.lane.b32.xlu0 %v2485, 80
        %v2933 = vpop.permute.xlu0 %2932
        %2934 = vrot.lane.b32.xlu0 %v2486, 80
        %v2935 = vpop.permute.xlu0 %2934
        %2936 = vrot.lane.b32.xlu0 %v2487, 80
        %v2937 = vpop.permute.xlu0 %2936
        %2938 = vrot.lane.b32.xlu0 %v2492, 80
        %v2939 = vpop.permute.xlu0 %2938
        %v2941 = vsel %vm1450, %v2933, 0
        %v2944 = vsel %vm1450, %v2935, 0
        %v2947 = vsel %vm1450, %v2937, 0
        %v2950 = vsel %vm1450, %v2939, 0
        %2952 = vmatpush.bf16.xpose.msra.mxu0 0
        %2953 = vmatpush.bf16.xpose.msra.mxu0 0
        %2954 = vmatpush.bf16.xpose.msra.mxu0 0
        %2955 = vmatpush.bf16.xpose.msra.mxu0 0
        %2956 = vmatpush.bf16.xpose.msra.mxu0 0
        %2957 = vmatpush.bf16.xpose.msra.mxu0 0
        %2958 = vmatpush.bf16.xpose.msra.mxu0 0
        %2959 = vmatpush.bf16.xpose.msra.mxu0 %v2950
        %2960 = vmatmul.bf16.gmra.mxu0 %v2941
        %v2961 = vpop.f32.mrf.mxu0
        %v2962 = vadd.f32 0.0, %v2961
        %v2963 = vpop.f32.mrf.mxu0
        %v2964 = vadd.f32 0.0, %v2963
        %2965 = vmatmul.bf16.gmra.mxu0 %v2944
        %v2966 = vpop.f32.mrf.mxu0
        %v2967 = vadd.f32 0.0, %v2966
        %v2968 = vpop.f32.mrf.mxu0
        %v2969 = vadd.f32 0.0, %v2968
        %2970 = vmatmul.bf16.gmra.mxu0 %v2947
        %v2971 = vpop.f32.mrf.mxu0
        %v2972 = vadd.f32 0.0, %v2971
        %v2973 = vpop.f32.mrf.mxu0
        %v2974 = vadd.f32 0.0, %v2973
        %2975 = vdwg.mxu0
        %v2976 = vsel %vm1450, %v2962, -inf
        %2977 = vmax.xlane.f32.xlu0 %v2976
        %v2978 = vpop.xlane.xlu0 %2977
        %v2979 = vsel %vm1450, %v2964, -inf
        %2980 = vmax.xlane.f32.xlu0 %v2979
        %v2981 = vpop.xlane.xlu0 %2980
        %v2982 = vsel %vm1450, %v2967, -inf
        %2983 = vmax.xlane.f32.xlu0 %v2982
        %v2984 = vpop.xlane.xlu0 %2983
        %v2985 = vsel %vm1450, %v2969, -inf
        %2986 = vmax.xlane.f32.xlu0 %v2985
        %v2987 = vpop.xlane.xlu0 %2986
        %v2988 = vsel %vm1450, %v2972, -inf
        %2989 = vmax.xlane.f32.xlu0 %v2988
        %v2990 = vpop.xlane.xlu0 %2989
        %v2991 = vsel %vm1450, %v2974, -inf
        %2992 = vmax.xlane.f32.xlu0 %v2991
        %v2993 = vpop.xlane.xlu0 %2992
        %v2994 = vsub.f32 %v2962, %v2978
        %v2995 = vsub.f32 %v2964, %v2981
        %v2996 = vsub.f32 %v2967, %v2984
        %v2997 = vsub.f32 %v2969, %v2987
        %v2998 = vsub.f32 %v2972, %v2990
        %v2999 = vsub.f32 %v2974, %v2993
        %v3000 = vmul.f32 %v2994, 1.442695
        %v3001 = vpow.pop %v3000
        %v3002 = vmul.f32 %v2995, 1.442695
        %v3003 = vpow.pop %v3002
        %v3004 = vmul.f32 %v2996, 1.442695
        %v3005 = vpow.pop %v3004
        %v3006 = vmul.f32 %v2997, 1.442695
        %v3007 = vpow.pop %v3006
        %v3008 = vmul.f32 %v2998, 1.442695
        %v3009 = vpow.pop %v3008
        %v3010 = vmul.f32 %v2999, 1.442695
        %v3011 = vpow.pop %v3010
        %v3012 = vsel %vm1450, %v3001, 0.0
        %3013 = vadd.xlane.f32.xlu0 %v3012
        %v3014 = vpop.xlane.xlu0 %3013
        %v3015 = vsel %vm1450, %v3003, 0.0
        %3016 = vadd.xlane.f32.xlu0 %v3015
        %v3017 = vpop.xlane.xlu0 %3016
        %v3018 = vsel %vm1450, %v3005, 0.0
        %3019 = vadd.xlane.f32.xlu0 %v3018
        %v3020 = vpop.xlane.xlu0 %3019
        %v3021 = vsel %vm1450, %v3007, 0.0
        %3022 = vadd.xlane.f32.xlu0 %v3021
        %v3023 = vpop.xlane.xlu0 %3022
        %v3024 = vsel %vm1450, %v3009, 0.0
        %3025 = vadd.xlane.f32.xlu0 %v3024
        %v3026 = vpop.xlane.xlu0 %3025
        %v3027 = vsel %vm1450, %v3011, 0.0
        %3028 = vadd.xlane.f32.xlu0 %v3027
        %v3029 = vpop.xlane.xlu0 %3028
        %v3030 = vpack.c.bf16 %v3003, %v3001
        %v3031 = vpack.c.bf16 %v3007, %v3005
        %v3032 = vpack.c.bf16 %v3011, %v3009
        %3033 = vrot.lane.b32.xlu0 %v2492, 16
        %v3034 = vpop.permute.xlu0 %3033
        %v3037 = vsel %vm1450, %v3030, 0
        %v3040 = vsel %vm1450, %v3031, 0
        %v3043 = vsel %vm1450, %v3032, 0
        %3045 = vmatpush.bf16.msra.mxu0 0
        %3046 = vmatpush.bf16.msra.mxu0 0
        %3047 = vmatpush.bf16.msra.mxu0 0
        %3048 = vmatpush.bf16.msra.mxu0 0
        %3049 = vmatpush.bf16.msra.mxu0 0
        %3050 = vmatpush.bf16.msra.mxu0 0
        %3051 = vmatpush.bf16.msra.mxu0 0
        %3052 = vmatpush.bf16.msra.mxu0 %v3034
        %3053 = vmatmul.bf16.gmra.mxu0 %v3037
        %v3054 = vpop.f32.mrf.mxu0
        %v3055 = vadd.f32 0.0, %v3054
        %v3056 = vpop.f32.mrf.mxu0
        %v3057 = vadd.f32 0.0, %v3056
        %3058 = vmatmul.bf16.gmra.mxu0 %v3040
        %v3059 = vpop.f32.mrf.mxu0
        %v3060 = vadd.f32 0.0, %v3059
        %v3061 = vpop.f32.mrf.mxu0
        %v3062 = vadd.f32 0.0, %v3061
        %3063 = vmatmul.bf16.gmra.mxu0 %v3043
        %v3064 = vpop.f32.mrf.mxu0
        %v3065 = vadd.f32 0.0, %v3064
        %v3066 = vpop.f32.mrf.mxu0
        %v3067 = vadd.f32 0.0, %v3066
        %3068 = vdwg.mxu0
        %v3069 = vrcp.pop %v3014
        %v3070 = vrcp.pop %v3017
        %v3071 = vrcp.pop %v3020
        %v3072 = vrcp.pop %v3023
        %v3073 = vrcp.pop %v3026
        %v3074 = vrcp.pop %v3029
        %v3075 = vmul.f32 %v3055, %v3069
        %v3076 = vmul.f32 %v3057, %v3070
        %v3077 = vmul.f32 %v3060, %v3071
        %v3078 = vmul.f32 %v3062, %v3072
        %v3079 = vmul.f32 %v3065, %v3073
        %v3080 = vmul.f32 %v3067, %v3074
        %3087 = vrot.lane.b32.xlu0 %v2777, 16
        %v3088 = vpop.permute.xlu0 %3087
        %3089 = vrot.lane.b32.xlu0 %v2778, 16
        %v3090 = vpop.permute.xlu0 %3089
        %3091 = vrot.lane.b32.xlu0 %v2779, 16
        %v3092 = vpop.permute.xlu0 %3091
        %3093 = vrot.lane.b32.xlu0 %v2780, 16
        %v3094 = vpop.permute.xlu0 %3093
        %3095 = vrot.lane.b32.xlu0 %v2781, 16
        %v3096 = vpop.permute.xlu0 %3095
        %3097 = vrot.lane.b32.xlu0 %v2782, 16
        %v3098 = vpop.permute.xlu0 %3097
        %3111 = vrot.lane.b32.xlu0 %v2926, 32
        %v3112 = vpop.permute.xlu0 %3111
        %3113 = vrot.lane.b32.xlu0 %v2927, 32
        %v3114 = vpop.permute.xlu0 %3113
        %3115 = vrot.lane.b32.xlu0 %v2928, 32
        %v3116 = vpop.permute.xlu0 %3115
        %3117 = vrot.lane.b32.xlu0 %v2929, 32
        %v3118 = vpop.permute.xlu0 %3117
        %3119 = vrot.lane.b32.xlu0 %v2930, 32
        %v3120 = vpop.permute.xlu0 %3119
        %3121 = vrot.lane.b32.xlu0 %v2931, 32
        %v3122 = vpop.permute.xlu0 %3121
        %3135 = vrot.lane.b32.xlu0 %v3075, 48
        %v3136 = vpop.permute.xlu0 %3135
        %3137 = vrot.lane.b32.xlu0 %v3076, 48
        %v3138 = vpop.permute.xlu0 %3137
        %3139 = vrot.lane.b32.xlu0 %v3077, 48
        %v3140 = vpop.permute.xlu0 %3139
        %3141 = vrot.lane.b32.xlu0 %v3078, 48
        %v3142 = vpop.permute.xlu0 %3141
        %3143 = vrot.lane.b32.xlu0 %v3079, 48
        %v3144 = vpop.permute.xlu0 %3143
        %3145 = vrot.lane.b32.xlu0 %v3080, 48
        %v3146 = vpop.permute.xlu0 %3145
        %v3153 = vsel %vm1450, %v2628, %v3088
        %v3154 = vsel %vm1450, %v2629, %v3090
        %v3155 = vsel %vm1450, %v2630, %v3092
        %v3156 = vsel %vm1450, %v2631, %v3094
        %v3157 = vsel %vm1450, %v2632, %v3096
        %v3158 = vsel %vm1450, %v2633, %v3098
        %v3159 = vsel %vm2187, %v3153, %v3112
        %v3160 = vsel %vm2187, %v3154, %v3114
        %v3161 = vsel %vm2187, %v3155, %v3116
        %v3162 = vsel %vm2187, %v3156, %v3118
        %v3163 = vsel %vm2187, %v3157, %v3120
        %v3164 = vsel %vm2187, %v3158, %v3122
        %v3165 = vsel %vm1493, %v3159, %v3136
        %v3166 = vsel %vm1493, %v3160, %v3138
        %v3167 = vsel %vm1493, %v3161, %v3140
        %v3168 = vsel %vm1493, %v3162, %v3142
        %v3169 = vsel %vm1493, %v3163, %v3144
        %v3170 = vsel %vm1493, %v3164, %v3146
        %v3171 = vpack.c.bf16 %v3166, %v3165
        %v3172 = vpack.c.bf16 %v3168, %v3167
        %v3173 = vpack.c.bf16 %v3170, %v3169
        %v3175 = vperm.slane %v1174, 0
        %v3185 = vunpack.c.l.b16 %v1166
        %v3186 = vunpack.c.l.b16 %v1167
        %v3187 = vunpack.c.l.b16 %v1168
        %v3188 = vunpack.c.l.b16 %v1169
        %v3189 = vunpack.c.l.b16 %v1170
        %v3190 = vunpack.c.l.b16 %v1171
        %v3191 = vunpack.c.l.b16 %v1172
        %v3192 = vunpack.c.l.b16 %v1173
        %v3193 = vpack.c.b16 %v3186, %v3185
        %v3194 = vpack.c.b16 %v3188, %v3187
        %v3195 = vpack.c.b16 %v3190, %v3189
        %v3196 = vpack.c.b16 %v3192, %v3191
        %v3202 = vsel %vm1269, %v3171, 0
        %v3205 = vsel %vm1269, %v3172, 0
        %v3208 = vsel %vm1269, %v3173, 0
        %3210 = vmatpush.bf16.msra.mxu0 0
        %3211 = vmatpush.bf16.msra.mxu0 0
        %3212 = vmatpush.bf16.msra.mxu0 0
        %3213 = vmatpush.bf16.msra.mxu0 0
        %3214 = vmatpush.bf16.msra.mxu0 %v3196
        %3215 = vmatpush.bf16.msra.mxu0 %v3195
        %3216 = vmatpush.bf16.msra.mxu0 %v3194
        %3217 = vmatpush.bf16.msra.mxu0 %v3193
        %3218 = vmatmul.bf16.gmra.mxu0 %v3202
        %v3219 = vpop.f32.mrf.mxu0
        %v3220 = vadd.f32 %v3175, %v3219
        %v3221 = vpop.f32.mrf.mxu0
        %v3222 = vadd.f32 %v3175, %v3221
        %3223 = vmatmul.bf16.gmra.mxu0 %v3205
        %v3224 = vpop.f32.mrf.mxu0
        %v3225 = vadd.f32 %v3175, %v3224
        %v3226 = vpop.f32.mrf.mxu0
        %v3227 = vadd.f32 %v3175, %v3226
        %3228 = vmatmul.bf16.gmra.mxu0 %v3208
        %v3229 = vpop.f32.mrf.mxu0
        %v3230 = vadd.f32 %v3175, %v3229
        %v3231 = vpop.f32.mrf.mxu0
        %v3232 = vadd.f32 %v3175, %v3231
        %3233 = vdwg.mxu0
        %v3234 = vsel %vm1269, %v3220, 0.0
        %3235 = vadd.xlane.f32.xlu0 %v3234
        %v3236 = vpop.xlane.xlu0 %3235
        %v3237 = vsel %vm1269, %v3222, 0.0
        %3238 = vadd.xlane.f32.xlu0 %v3237
        %v3239 = vpop.xlane.xlu0 %3238
        %v3240 = vsel %vm1269, %v3225, 0.0
        %3241 = vadd.xlane.f32.xlu0 %v3240
        %v3242 = vpop.xlane.xlu0 %3241
        %v3243 = vsel %vm1269, %v3227, 0.0
        %3244 = vadd.xlane.f32.xlu0 %v3243
        %v3245 = vpop.xlane.xlu0 %3244
        %v3246 = vsel %vm1269, %v3230, 0.0
        %3247 = vadd.xlane.f32.xlu0 %v3246
        %v3248 = vpop.xlane.xlu0 %3247
        %v3249 = vsel %vm1269, %v3232, 0.0
        %3250 = vadd.xlane.f32.xlu0 %v3249
        %v3251 = vpop.xlane.xlu0 %3250
        %v3252 = vmul.f32 %v3236, %v2287
        %v3253 = vmul.f32 %v3239, %v2287
        %v3254 = vmul.f32 %v3242, %v2287
        %v3255 = vmul.f32 %v3245, %v2287
        %v3256 = vmul.f32 %v3248, %v2287
        %v3257 = vmul.f32 %v3251, %v2287
        %v3258 = vsub.f32 %v3220, %v3252
        %v3259 = vsub.f32 %v3222, %v3253
        %v3260 = vsub.f32 %v3225, %v3254
        %v3261 = vsub.f32 %v3227, %v3255
        %v3262 = vsub.f32 %v3230, %v3256
        %v3263 = vsub.f32 %v3232, %v3257
        %v3264 = vmul.f32 %v3258, %v3258
        %v3265 = vmul.f32 %v3259, %v3259
        %v3266 = vmul.f32 %v3260, %v3260
        %v3267 = vmul.f32 %v3261, %v3261
        %v3268 = vmul.f32 %v3262, %v3262
        %v3269 = vmul.f32 %v3263, %v3263
        %v3270 = vsel %vm1269, %v3264, 0.0
        %3271 = vadd.xlane.f32.xlu0 %v3270
        %v3272 = vpop.xlane.xlu0 %3271
        %v3273 = vsel %vm1269, %v3265, 0.0
        %3274 = vadd.xlane.f32.xlu0 %v3273
        %v3275 = vpop.xlane.xlu0 %3274
        %v3276 = vsel %vm1269, %v3266, 0.0
        %3277 = vadd.xlane.f32.xlu0 %v3276
        %v3278 = vpop.xlane.xlu0 %3277
        %v3279 = vsel %vm1269, %v3267, 0.0
        %3280 = vadd.xlane.f32.xlu0 %v3279
        %v3281 = vpop.xlane.xlu0 %3280
        %v3282 = vsel %vm1269, %v3268, 0.0
        %3283 = vadd.xlane.f32.xlu0 %v3282
        %v3284 = vpop.xlane.xlu0 %3283
        %v3285 = vsel %vm1269, %v3269, 0.0
        %3286 = vadd.xlane.f32.xlu0 %v3285
        %v3287 = vpop.xlane.xlu0 %3286
        %v3288 = vmul.f32 %v3272, %v2287
        %v3289 = vmul.f32 %v3275, %v2287
        %v3290 = vmul.f32 %v3278, %v2287
        %v3291 = vmul.f32 %v3281, %v2287
        %v3292 = vmul.f32 %v3284, %v2287
        %v3293 = vmul.f32 %v3287, %v2287
        %v3294 = vadd.f32 %v3288, 1e-05
        %v3295 = vadd.f32 %v3289, 1e-05
        %v3296 = vadd.f32 %v3290, 1e-05
        %v3297 = vadd.f32 %v3291, 1e-05
        %v3298 = vadd.f32 %v3292, 1e-05
        %v3299 = vadd.f32 %v3293, 1e-05
        %v3300 = vrsqrt.pop %v3294
        %v3301 = vmul.f32 %v3300, %v3294
        %v3302 = vmul.f32 %v3301, %v3300
        %v3303 = vmul.f32 0.5, %v3302
        %v3304 = vsub.f32 1.5, %v3303
        %v3305 = vmul.f32 %v3300, %v3304
        %vm3306 = vweird.f32 %v3294
        %vm3307 = vweird.f32 %v3300
        %vm3308 = vmor %vm3306, %vm3307
        %v3309 = vsel %vm3308, %v3300, %v3305
        %v3310 = vrsqrt.pop %v3295
        %v3311 = vmul.f32 %v3310, %v3295
        %v3312 = vmul.f32 %v3311, %v3310
        %v3313 = vmul.f32 0.5, %v3312
        %v3314 = vsub.f32 1.5, %v3313
        %v3315 = vmul.f32 %v3310, %v3314
        %vm3316 = vweird.f32 %v3295
        %vm3317 = vweird.f32 %v3310
        %vm3318 = vmor %vm3316, %vm3317
        %v3319 = vsel %vm3318, %v3310, %v3315
        %v3320 = vrsqrt.pop %v3296
        %v3321 = vmul.f32 %v3320, %v3296
        %v3322 = vmul.f32 %v3321, %v3320
        %v3323 = vmul.f32 0.5, %v3322
        %v3324 = vsub.f32 1.5, %v3323
        %v3325 = vmul.f32 %v3320, %v3324
        %vm3326 = vweird.f32 %v3296
        %vm3327 = vweird.f32 %v3320
        %vm3328 = vmor %vm3326, %vm3327
        %v3329 = vsel %vm3328, %v3320, %v3325
        %v3330 = vrsqrt.pop %v3297
        %v3331 = vmul.f32 %v3330, %v3297
        %v3332 = vmul.f32 %v3331, %v3330
        %v3333 = vmul.f32 0.5, %v3332
        %v3334 = vsub.f32 1.5, %v3333
        %v3335 = vmul.f32 %v3330, %v3334
        %vm3336 = vweird.f32 %v3297
        %vm3337 = vweird.f32 %v3330
        %vm3338 = vmor %vm3336, %vm3337
        %v3339 = vsel %vm3338, %v3330, %v3335
        %v3340 = vrsqrt.pop %v3298
        %v3341 = vmul.f32 %v3340, %v3298
        %v3342 = vmul.f32 %v3341, %v3340
        %v3343 = vmul.f32 0.5, %v3342
        %v3344 = vsub.f32 1.5, %v3343
        %v3345 = vmul.f32 %v3340, %v3344
        %vm3346 = vweird.f32 %v3298
        %vm3347 = vweird.f32 %v3340
        %vm3348 = vmor %vm3346, %vm3347
        %v3349 = vsel %vm3348, %v3340, %v3345
        %v3350 = vrsqrt.pop %v3299
        %v3351 = vmul.f32 %v3350, %v3299
        %v3352 = vmul.f32 %v3351, %v3350
        %v3353 = vmul.f32 0.5, %v3352
        %v3354 = vsub.f32 1.5, %v3353
        %v3355 = vmul.f32 %v3350, %v3354
        %vm3356 = vweird.f32 %v3299
        %vm3357 = vweird.f32 %v3350
        %vm3358 = vmor %vm3356, %vm3357
        %v3359 = vsel %vm3358, %v3350, %v3355
        %v3360 = vmul.f32 %v3258, %v3309
        %v3361 = vmul.f32 %v3259, %v3319
        %v3362 = vmul.f32 %v3260, %v3329
        %v3363 = vmul.f32 %v3261, %v3339
        %v3364 = vmul.f32 %v3262, %v3349
        %v3365 = vmul.f32 %v3263, %v3359
        %v3367 = vperm.slane %v1175, 0
        %v3369 = vmul.f32 %v3360, %v3367
        %v3370 = vmul.f32 %v3361, %v3367
        %v3371 = vmul.f32 %v3362, %v3367
        %v3372 = vmul.f32 %v3363, %v3367
        %v3373 = vmul.f32 %v3364, %v3367
        %v3374 = vmul.f32 %v3365, %v3367
        %v3376 = vperm.slane %v1176, 0
        %v3378 = vadd.f32 %v3369, %v3376
        %v3379 = vadd.f32 %v3370, %v3376
        %v3380 = vadd.f32 %v3371, %v3376
        %v3381 = vadd.f32 %v3372, %v3376
        %v3382 = vadd.f32 %v3373, %v3376
        %v3383 = vadd.f32 %v3374, %v3376
        %v3384 = vadd.f32 %v3378, %v2420
        %v3385 = vadd.f32 %v3379, %v2421
        %v3386 = vadd.f32 %v3380, %v2422
        %v3387 = vadd.f32 %v3381, %v2423
        %v3388 = vadd.f32 %v3382, %v2424
        %v3389 = vadd.f32 %v3383, %v2425
        %v3390 = vpack.c.bf16 %v3385, %v3384
        %v3391 = vpack.c.bf16 %v3387, %v3386
        %v3392 = vpack.c.bf16 %v3389, %v3388
        %v3394 = vperm.slane %v1185, 0
        %v3395 = vperm.slane %v1185, 1
        %v3406 = vunpack.c.l.b16 %v1177
        %v3407 = vunpack.c.h.b16 %v1177
        %v3408 = vunpack.c.l.b16 %v1178
        %v3409 = vunpack.c.h.b16 %v1178
        %v3410 = vunpack.c.l.b16 %v1179
        %v3411 = vunpack.c.h.b16 %v1179
        %v3412 = vunpack.c.l.b16 %v1180
        %v3413 = vunpack.c.h.b16 %v1180
        %v3414 = vunpack.c.l.b16 %v1181
        %v3415 = vunpack.c.h.b16 %v1181
        %v3416 = vunpack.c.l.b16 %v1182
        %v3417 = vunpack.c.h.b16 %v1182
        %v3418 = vunpack.c.l.b16 %v1183
        %v3419 = vunpack.c.h.b16 %v1183
        %v3420 = vunpack.c.l.b16 %v1184
        %v3421 = vunpack.c.h.b16 %v1184
        %v3422 = vpack.c.b16 %v3408, %v3406
        %v3423 = vpack.c.b16 %v3409, %v3407
        %v3424 = vpack.c.b16 %v3412, %v3410
        %v3425 = vpack.c.b16 %v3413, %v3411
        %v3426 = vpack.c.b16 %v3416, %v3414
        %v3427 = vpack.c.b16 %v3417, %v3415
        %v3428 = vpack.c.b16 %v3420, %v3418
        %v3429 = vpack.c.b16 %v3421, %v3419
        %v3439 = vsel %vm1269, %v3390, 0
        %v3442 = vsel %vm1269, %v3391, 0
        %v3445 = vsel %vm1269, %v3392, 0
        %3447 = vmatpush.bf16.msra.mxu0 0
        %3448 = vmatpush.bf16.msra.mxu0 0
        %3449 = vmatpush.bf16.msra.mxu0 0
        %3450 = vmatpush.bf16.msra.mxu0 0
        %3451 = vmatpush.bf16.msra.mxu0 %v3428
        %3452 = vmatpush.bf16.msra.mxu0 %v3426
        %3453 = vmatpush.bf16.msra.mxu0 %v3424
        %3454 = vmatpush.bf16.msra.mxu0 %v3422
        %3455 = vmatmul.bf16.gmra.mxu0 %v3439
        %v3456 = vpop.f32.mrf.mxu0
        %v3457 = vadd.f32 %v3394, %v3456
        %v3458 = vpop.f32.mrf.mxu0
        %v3459 = vadd.f32 %v3394, %v3458
        %3460 = vmatmul.bf16.gmra.mxu0 %v3442
        %v3461 = vpop.f32.mrf.mxu0
        %v3462 = vadd.f32 %v3394, %v3461
        %v3463 = vpop.f32.mrf.mxu0
        %v3464 = vadd.f32 %v3394, %v3463
        %3465 = vmatmul.bf16.gmra.mxu0 %v3445
        %v3466 = vpop.f32.mrf.mxu0
        %v3467 = vadd.f32 %v3394, %v3466
        %v3468 = vpop.f32.mrf.mxu0
        %v3469 = vadd.f32 %v3394, %v3468
        %3470 = vdwg.mxu0
        %3471 = vmatpush.bf16.msra.mxu0 0
        %3472 = vmatpush.bf16.msra.mxu0 0
        %3473 = vmatpush.bf16.msra.mxu0 0
        %3474 = vmatpush.bf16.msra.mxu0 0
        %3475 = vmatpush.bf16.msra.mxu0 %v3429
        %3476 = vmatpush.bf16.msra.mxu0 %v3427
        %3477 = vmatpush.bf16.msra.mxu0 %v3425
        %3478 = vmatpush.bf16.msra.mxu0 %v3423
        %3479 = vmatmul.bf16.gmra.mxu0 %v3439
        %v3480 = vpop.f32.mrf.mxu0
        %v3481 = vadd.f32 %v3395, %v3480
        %v3482 = vpop.f32.mrf.mxu0
        %v3483 = vadd.f32 %v3395, %v3482
        %3484 = vmatmul.bf16.gmra.mxu0 %v3442
        %v3485 = vpop.f32.mrf.mxu0
        %v3486 = vadd.f32 %v3395, %v3485
        %v3487 = vpop.f32.mrf.mxu0
        %v3488 = vadd.f32 %v3395, %v3487
        %3489 = vmatmul.bf16.gmra.mxu0 %v3445
        %v3490 = vpop.f32.mrf.mxu0
        %v3491 = vadd.f32 %v3395, %v3490
        %v3492 = vpop.f32.mrf.mxu0
        %v3493 = vadd.f32 %v3395, %v3492
        %3494 = vdwg.mxu0
        %v3495 = vmul.f32 %v3457, 0.5
        %v3496 = vmul.f32 %v3481, 0.5
        %v3497 = vmul.f32 %v3459, 0.5
        %v3498 = vmul.f32 %v3483, 0.5
        %v3499 = vmul.f32 %v3462, 0.5
        %v3500 = vmul.f32 %v3486, 0.5
        %v3501 = vmul.f32 %v3464, 0.5
        %v3502 = vmul.f32 %v3488, 0.5
        %v3503 = vmul.f32 %v3467, 0.5
        %v3504 = vmul.f32 %v3491, 0.5
        %v3505 = vmul.f32 %v3469, 0.5
        %v3506 = vmul.f32 %v3493, 0.5
        %v3507 = vmul.f32 %v3457, 0.70710677
        %v3508 = vmul.f32 %v3481, 0.70710677
        %v3509 = vmul.f32 %v3459, 0.70710677
        %v3510 = vmul.f32 %v3483, 0.70710677
        %v3511 = vmul.f32 %v3462, 0.70710677
        %v3512 = vmul.f32 %v3486, 0.70710677
        %v3513 = vmul.f32 %v3464, 0.70710677
        %v3514 = vmul.f32 %v3488, 0.70710677
        %v3515 = vmul.f32 %v3467, 0.70710677
        %v3516 = vmul.f32 %v3491, 0.70710677
        %v3517 = vmul.f32 %v3469, 0.70710677
        %v3518 = vmul.f32 %v3493, 0.70710677
        %vm3519 = vcmp.ge.f32.partialorder %v3507, 0.0
        %vm3520 = vcmp.ge.f32.partialorder %v3508, 0.0
        %vm3521 = vcmp.ge.f32.partialorder %v3509, 0.0
        %vm3522 = vcmp.ge.f32.partialorder %v3510, 0.0
        %vm3523 = vcmp.ge.f32.partialorder %v3511, 0.0
        %vm3524 = vcmp.ge.f32.partialorder %v3512, 0.0
        %vm3525 = vcmp.ge.f32.partialorder %v3513, 0.0
        %vm3526 = vcmp.ge.f32.partialorder %v3514, 0.0
        %vm3527 = vcmp.ge.f32.partialorder %v3515, 0.0
        %vm3528 = vcmp.ge.f32.partialorder %v3516, 0.0
        %vm3529 = vcmp.ge.f32.partialorder %v3517, 0.0
        %vm3530 = vcmp.ge.f32.partialorder %v3518, 0.0
        %v3531 = vsel %vm3519, 1.0, -1.0
        %v3532 = vsel %vm3520, 1.0, -1.0
        %v3533 = vsel %vm3521, 1.0, -1.0
        %v3534 = vsel %vm3522, 1.0, -1.0
        %v3535 = vsel %vm3523, 1.0, -1.0
        %v3536 = vsel %vm3524, 1.0, -1.0
        %v3537 = vsel %vm3525, 1.0, -1.0
        %v3538 = vsel %vm3526, 1.0, -1.0
        %v3539 = vsel %vm3527, 1.0, -1.0
        %v3540 = vsel %vm3528, 1.0, -1.0
        %v3541 = vsel %vm3529, 1.0, -1.0
        %v3542 = vsel %vm3530, 1.0, -1.0
        %v3543 = vand.u32 2147483647, %v3507
        %v3544 = vand.u32 2147483647, %v3508
        %v3545 = vand.u32 2147483647, %v3509
        %v3546 = vand.u32 2147483647, %v3510
        %v3547 = vand.u32 2147483647, %v3511
        %v3548 = vand.u32 2147483647, %v3512
        %v3549 = vand.u32 2147483647, %v3513
        %v3550 = vand.u32 2147483647, %v3514
        %v3551 = vand.u32 2147483647, %v3515
        %v3552 = vand.u32 2147483647, %v3516
        %v3553 = vand.u32 2147483647, %v3517
        %v3554 = vand.u32 2147483647, %v3518
        %v3555 = vmul.f32 %v3543, 0.3275911
        %v3556 = vmul.f32 %v3544, 0.3275911
        %v3557 = vmul.f32 %v3545, 0.3275911
        %v3558 = vmul.f32 %v3546, 0.3275911
        %v3559 = vmul.f32 %v3547, 0.3275911
        %v3560 = vmul.f32 %v3548, 0.3275911
        %v3561 = vmul.f32 %v3549, 0.3275911
        %v3562 = vmul.f32 %v3550, 0.3275911
        %v3563 = vmul.f32 %v3551, 0.3275911
        %v3564 = vmul.f32 %v3552, 0.3275911
        %v3565 = vmul.f32 %v3553, 0.3275911
        %v3566 = vmul.f32 %v3554, 0.3275911
        %v3567 = vadd.f32 %v3555, 1.0
        %v3568 = vadd.f32 %v3556, 1.0
        %v3569 = vadd.f32 %v3557, 1.0
        %v3570 = vadd.f32 %v3558, 1.0
        %v3571 = vadd.f32 %v3559, 1.0
        %v3572 = vadd.f32 %v3560, 1.0
        %v3573 = vadd.f32 %v3561, 1.0
        %v3574 = vadd.f32 %v3562, 1.0
        %v3575 = vadd.f32 %v3563, 1.0
        %v3576 = vadd.f32 %v3564, 1.0
        %v3577 = vadd.f32 %v3565, 1.0
        %v3578 = vadd.f32 %v3566, 1.0
        %v3579 = vrcp.pop %v3567
        %v3580 = vmul.f32 %v3567, %v3579
        %v3581 = vsub.f32 1.0, %v3580
        %v3582 = vmul.f32 %v3579, %v3581
        %v3583 = vadd.f32 %v3579, %v3582
        %vm3584 = vweird.f32 %v3567
        %vm3585 = vweird.f32 %v3579
        %vm3586 = vmor %vm3584, %vm3585
        %v3587 = vsel %vm3586, %v3579, %v3583
        %v3588 = vand.u32 2147483647, %v3567
        %vm3589 = vcmp.eq.f32.partialorder %v3588, 8.507059e+37
        %v3590 = vand.u32 %v3567, 2147483648
        %v3591 = vor.u32 1.1754944e-38, %v3590
        %v3592 = vsel %vm3589, %v3591, %v3587
        %v3593 = vmul.f32 1.0, %v3592
        %v3594 = vrcp.pop %v3568
        %v3595 = vmul.f32 %v3568, %v3594
        %v3596 = vsub.f32 1.0, %v3595
        %v3597 = vmul.f32 %v3594, %v3596
        %v3598 = vadd.f32 %v3594, %v3597
        %vm3599 = vweird.f32 %v3568
        %vm3600 = vweird.f32 %v3594
        %vm3601 = vmor %vm3599, %vm3600
        %v3602 = vsel %vm3601, %v3594, %v3598
        %v3603 = vand.u32 2147483647, %v3568
        %vm3604 = vcmp.eq.f32.partialorder %v3603, 8.507059e+37
        %v3605 = vand.u32 %v3568, 2147483648
        %v3606 = vor.u32 1.1754944e-38, %v3605
        %v3607 = vsel %vm3604, %v3606, %v3602
        %v3608 = vmul.f32 1.0, %v3607
        %v3609 = vrcp.pop %v3569
        %v3610 = vmul.f32 %v3569, %v3609
        %v3611 = vsub.f32 1.0, %v3610
        %v3612 = vmul.f32 %v3609, %v3611
        %v3613 = vadd.f32 %v3609, %v3612
        %vm3614 = vweird.f32 %v3569
        %vm3615 = vweird.f32 %v3609
        %vm3616 = vmor %vm3614, %vm3615
        %v3617 = vsel %vm3616, %v3609, %v3613
        %v3618 = vand.u32 2147483647, %v3569
        %vm3619 = vcmp.eq.f32.partialorder %v3618, 8.507059e+37
        %v3620 = vand.u32 %v3569, 2147483648
        %v3621 = vor.u32 1.1754944e-38, %v3620
        %v3622 = vsel %vm3619, %v3621, %v3617
        %v3623 = vmul.f32 1.0, %v3622
        %v3624 = vrcp.pop %v3570
        %v3625 = vmul.f32 %v3570, %v3624
        %v3626 = vsub.f32 1.0, %v3625
        %v3627 = vmul.f32 %v3624, %v3626
        %v3628 = vadd.f32 %v3624, %v3627
        %vm3629 = vweird.f32 %v3570
        %vm3630 = vweird.f32 %v3624
        %vm3631 = vmor %vm3629, %vm3630
        %v3632 = vsel %vm3631, %v3624, %v3628
        %v3633 = vand.u32 2147483647, %v3570
        %vm3634 = vcmp.eq.f32.partialorder %v3633, 8.507059e+37
        %v3635 = vand.u32 %v3570, 2147483648
        %v3636 = vor.u32 1.1754944e-38, %v3635
        %v3637 = vsel %vm3634, %v3636, %v3632
        %v3638 = vmul.f32 1.0, %v3637
        %v3639 = vrcp.pop %v3571
        %v3640 = vmul.f32 %v3571, %v3639
        %v3641 = vsub.f32 1.0, %v3640
        %v3642 = vmul.f32 %v3639, %v3641
        %v3643 = vadd.f32 %v3639, %v3642
        %vm3644 = vweird.f32 %v3571
        %vm3645 = vweird.f32 %v3639
        %vm3646 = vmor %vm3644, %vm3645
        %v3647 = vsel %vm3646, %v3639, %v3643
        %v3648 = vand.u32 2147483647, %v3571
        %vm3649 = vcmp.eq.f32.partialorder %v3648, 8.507059e+37
        %v3650 = vand.u32 %v3571, 2147483648
        %v3651 = vor.u32 1.1754944e-38, %v3650
        %v3652 = vsel %vm3649, %v3651, %v3647
        %v3653 = vmul.f32 1.0, %v3652
        %v3654 = vrcp.pop %v3572
        %v3655 = vmul.f32 %v3572, %v3654
        %v3656 = vsub.f32 1.0, %v3655
        %v3657 = vmul.f32 %v3654, %v3656
        %v3658 = vadd.f32 %v3654, %v3657
        %vm3659 = vweird.f32 %v3572
        %vm3660 = vweird.f32 %v3654
        %vm3661 = vmor %vm3659, %vm3660
        %v3662 = vsel %vm3661, %v3654, %v3658
        %v3663 = vand.u32 2147483647, %v3572
        %vm3664 = vcmp.eq.f32.partialorder %v3663, 8.507059e+37
        %v3665 = vand.u32 %v3572, 2147483648
        %v3666 = vor.u32 1.1754944e-38, %v3665
        %v3667 = vsel %vm3664, %v3666, %v3662
        %v3668 = vmul.f32 1.0, %v3667
        %v3669 = vrcp.pop %v3573
        %v3670 = vmul.f32 %v3573, %v3669
        %v3671 = vsub.f32 1.0, %v3670
        %v3672 = vmul.f32 %v3669, %v3671
        %v3673 = vadd.f32 %v3669, %v3672
        %vm3674 = vweird.f32 %v3573
        %vm3675 = vweird.f32 %v3669
        %vm3676 = vmor %vm3674, %vm3675
        %v3677 = vsel %vm3676, %v3669, %v3673
        %v3678 = vand.u32 2147483647, %v3573
        %vm3679 = vcmp.eq.f32.partialorder %v3678, 8.507059e+37
        %v3680 = vand.u32 %v3573, 2147483648
        %v3681 = vor.u32 1.1754944e-38, %v3680
        %v3682 = vsel %vm3679, %v3681, %v3677
        %v3683 = vmul.f32 1.0, %v3682
        %v3684 = vrcp.pop %v3574
        %v3685 = vmul.f32 %v3574, %v3684
        %v3686 = vsub.f32 1.0, %v3685
        %v3687 = vmul.f32 %v3684, %v3686
        %v3688 = vadd.f32 %v3684, %v3687
        %vm3689 = vweird.f32 %v3574
        %vm3690 = vweird.f32 %v3684
        %vm3691 = vmor %vm3689, %vm3690
        %v3692 = vsel %vm3691, %v3684, %v3688
        %v3693 = vand.u32 2147483647, %v3574
        %vm3694 = vcmp.eq.f32.partialorder %v3693, 8.507059e+37
        %v3695 = vand.u32 %v3574, 2147483648
        %v3696 = vor.u32 1.1754944e-38, %v3695
        %v3697 = vsel %vm3694, %v3696, %v3692
        %v3698 = vmul.f32 1.0, %v3697
        %v3699 = vrcp.pop %v3575
        %v3700 = vmul.f32 %v3575, %v3699
        %v3701 = vsub.f32 1.0, %v3700
        %v3702 = vmul.f32 %v3699, %v3701
        %v3703 = vadd.f32 %v3699, %v3702
        %vm3704 = vweird.f32 %v3575
        %vm3705 = vweird.f32 %v3699
        %vm3706 = vmor %vm3704, %vm3705
        %v3707 = vsel %vm3706, %v3699, %v3703
        %v3708 = vand.u32 2147483647, %v3575
        %vm3709 = vcmp.eq.f32.partialorder %v3708, 8.507059e+37
        %v3710 = vand.u32 %v3575, 2147483648
        %v3711 = vor.u32 1.1754944e-38, %v3710
        %v3712 = vsel %vm3709, %v3711, %v3707
        %v3713 = vmul.f32 1.0, %v3712
        %v3714 = vrcp.pop %v3576
        %v3715 = vmul.f32 %v3576, %v3714
        %v3716 = vsub.f32 1.0, %v3715
        %v3717 = vmul.f32 %v3714, %v3716
        %v3718 = vadd.f32 %v3714, %v3717
        %vm3719 = vweird.f32 %v3576
        %vm3720 = vweird.f32 %v3714
        %vm3721 = vmor %vm3719, %vm3720
        %v3722 = vsel %vm3721, %v3714, %v3718
        %v3723 = vand.u32 2147483647, %v3576
        %vm3724 = vcmp.eq.f32.partialorder %v3723, 8.507059e+37
        %v3725 = vand.u32 %v3576, 2147483648
        %v3726 = vor.u32 1.1754944e-38, %v3725
        %v3727 = vsel %vm3724, %v3726, %v3722
        %v3728 = vmul.f32 1.0, %v3727
        %v3729 = vrcp.pop %v3577
        %v3730 = vmul.f32 %v3577, %v3729
        %v3731 = vsub.f32 1.0, %v3730
        %v3732 = vmul.f32 %v3729, %v3731
        %v3733 = vadd.f32 %v3729, %v3732
        %vm3734 = vweird.f32 %v3577
        %vm3735 = vweird.f32 %v3729
        %vm3736 = vmor %vm3734, %vm3735
        %v3737 = vsel %vm3736, %v3729, %v3733
        %v3738 = vand.u32 2147483647, %v3577
        %vm3739 = vcmp.eq.f32.partialorder %v3738, 8.507059e+37
        %v3740 = vand.u32 %v3577, 2147483648
        %v3741 = vor.u32 1.1754944e-38, %v3740
        %v3742 = vsel %vm3739, %v3741, %v3737
        %v3743 = vmul.f32 1.0, %v3742
        %v3744 = vrcp.pop %v3578
        %v3745 = vmul.f32 %v3578, %v3744
        %v3746 = vsub.f32 1.0, %v3745
        %v3747 = vmul.f32 %v3744, %v3746
        %v3748 = vadd.f32 %v3744, %v3747
        %vm3749 = vweird.f32 %v3578
        %vm3750 = vweird.f32 %v3744
        %vm3751 = vmor %vm3749, %vm3750
        %v3752 = vsel %vm3751, %v3744, %v3748
        %v3753 = vand.u32 2147483647, %v3578
        %vm3754 = vcmp.eq.f32.partialorder %v3753, 8.507059e+37
        %v3755 = vand.u32 %v3578, 2147483648
        %v3756 = vor.u32 1.1754944e-38, %v3755
        %v3757 = vsel %vm3754, %v3756, %v3752
        %v3758 = vmul.f32 1.0, %v3757
        %v3759 = vmul.f32 %v3593, 1.0614054
        %v3760 = vmul.f32 %v3608, 1.0614054
        %v3761 = vmul.f32 %v3623, 1.0614054
        %v3762 = vmul.f32 %v3638, 1.0614054
        %v3763 = vmul.f32 %v3653, 1.0614054
        %v3764 = vmul.f32 %v3668, 1.0614054
        %v3765 = vmul.f32 %v3683, 1.0614054
        %v3766 = vmul.f32 %v3698, 1.0614054
        %v3767 = vmul.f32 %v3713, 1.0614054
        %v3768 = vmul.f32 %v3728, 1.0614054
        %v3769 = vmul.f32 %v3743, 1.0614054
        %v3770 = vmul.f32 %v3758, 1.0614054
        %v3771 = vadd.f32 %v3759, -1.4531521
        %v3772 = vadd.f32 %v3760, -1.4531521
        %v3773 = vadd.f32 %v3761, -1.4531521
        %v3774 = vadd.f32 %v3762, -1.4531521
        %v3775 = vadd.f32 %v3763, -1.4531521
        %v3776 = vadd.f32 %v3764, -1.4531521
        %v3777 = vadd.f32 %v3765, -1.4531521
        %v3778 = vadd.f32 %v3766, -1.4531521
        %v3779 = vadd.f32 %v3767, -1.4531521
        %v3780 = vadd.f32 %v3768, -1.4531521
        %v3781 = vadd.f32 %v3769, -1.4531521
        %v3782 = vadd.f32 %v3770, -1.4531521
        %v3783 = vmul.f32 %v3771, %v3593
        %v3784 = vmul.f32 %v3772, %v3608
        %v3785 = vmul.f32 %v3773, %v3623
        %v3786 = vmul.f32 %v3774, %v3638
        %v3787 = vmul.f32 %v3775, %v3653
        %v3788 = vmul.f32 %v3776, %v3668
        %v3789 = vmul.f32 %v3777, %v3683
        %v3790 = vmul.f32 %v3778, %v3698
        %v3791 = vmul.f32 %v3779, %v3713
        %v3792 = vmul.f32 %v3780, %v3728
        %v3793 = vmul.f32 %v3781, %v3743
        %v3794 = vmul.f32 %v3782, %v3758
        %v3795 = vadd.f32 %v3783, 1.4214138
        %v3796 = vadd.f32 %v3784, 1.4214138
        %v3797 = vadd.f32 %v3785, 1.4214138
        %v3798 = vadd.f32 %v3786, 1.4214138
        %v3799 = vadd.f32 %v3787, 1.4214138
        %v3800 = vadd.f32 %v3788, 1.4214138
        %v3801 = vadd.f32 %v3789, 1.4214138
        %v3802 = vadd.f32 %v3790, 1.4214138
        %v3803 = vadd.f32 %v3791, 1.4214138
        %v3804 = vadd.f32 %v3792, 1.4214138
        %v3805 = vadd.f32 %v3793, 1.4214138
        %v3806 = vadd.f32 %v3794, 1.4214138
        %v3807 = vmul.f32 %v3795, %v3593
        %v3808 = vmul.f32 %v3796, %v3608
        %v3809 = vmul.f32 %v3797, %v3623
        %v3810 = vmul.f32 %v3798, %v3638
        %v3811 = vmul.f32 %v3799, %v3653
        %v3812 = vmul.f32 %v3800, %v3668
        %v3813 = vmul.f32 %v3801, %v3683
        %v3814 = vmul.f32 %v3802, %v3698
        %v3815 = vmul.f32 %v3803, %v3713
        %v3816 = vmul.f32 %v3804, %v3728
        %v3817 = vmul.f32 %v3805, %v3743
        %v3818 = vmul.f32 %v3806, %v3758
        %v3819 = vadd.f32 %v3807, -0.28449672
        %v3820 = vadd.f32 %v3808, -0.28449672
        %v3821 = vadd.f32 %v3809, -0.28449672
        %v3822 = vadd.f32 %v3810, -0.28449672
        %v3823 = vadd.f32 %v3811, -0.28449672
        %v3824 = vadd.f32 %v3812, -0.28449672
        %v3825 = vadd.f32 %v3813, -0.28449672
        %v3826 = vadd.f32 %v3814, -0.28449672
        %v3827 = vadd.f32 %v3815, -0.28449672
        %v3828 = vadd.f32 %v3816, -0.28449672
        %v3829 = vadd.f32 %v3817, -0.28449672
        %v3830 = vadd.f32 %v3818, -0.28449672
        %v3831 = vmul.f32 %v3819, %v3593
        %v3832 = vmul.f32 %v3820, %v3608
        %v3833 = vmul.f32 %v3821, %v3623
        %v3834 = vmul.f32 %v3822, %v3638
        %v3835 = vmul.f32 %v3823, %v3653
        %v3836 = vmul.f32 %v3824, %v3668
        %v3837 = vmul.f32 %v3825, %v3683
        %v3838 = vmul.f32 %v3826, %v3698
        %v3839 = vmul.f32 %v3827, %v3713
        %v3840 = vmul.f32 %v3828, %v3728
        %v3841 = vmul.f32 %v3829, %v3743
        %v3842 = vmul.f32 %v3830, %v3758
        %v3843 = vadd.f32 %v3831, 0.2548296
        %v3844 = vadd.f32 %v3832, 0.2548296
        %v3845 = vadd.f32 %v3833, 0.2548296
        %v3846 = vadd.f32 %v3834, 0.2548296
        %v3847 = vadd.f32 %v3835, 0.2548296
        %v3848 = vadd.f32 %v3836, 0.2548296
        %v3849 = vadd.f32 %v3837, 0.2548296
        %v3850 = vadd.f32 %v3838, 0.2548296
        %v3851 = vadd.f32 %v3839, 0.2548296
        %v3852 = vadd.f32 %v3840, 0.2548296
        %v3853 = vadd.f32 %v3841, 0.2548296
        %v3854 = vadd.f32 %v3842, 0.2548296
        %v3855 = vmul.f32 %v3843, %v3593
        %v3856 = vmul.f32 %v3844, %v3608
        %v3857 = vmul.f32 %v3845, %v3623
        %v3858 = vmul.f32 %v3846, %v3638
        %v3859 = vmul.f32 %v3847, %v3653
        %v3860 = vmul.f32 %v3848, %v3668
        %v3861 = vmul.f32 %v3849, %v3683
        %v3862 = vmul.f32 %v3850, %v3698
        %v3863 = vmul.f32 %v3851, %v3713
        %v3864 = vmul.f32 %v3852, %v3728
        %v3865 = vmul.f32 %v3853, %v3743
        %v3866 = vmul.f32 %v3854, %v3758
        %v3867 = vsub.f32 0.0, %v3543
        %v3868 = vsub.f32 0.0, %v3544
        %v3869 = vsub.f32 0.0, %v3545
        %v3870 = vsub.f32 0.0, %v3546
        %v3871 = vsub.f32 0.0, %v3547
        %v3872 = vsub.f32 0.0, %v3548
        %v3873 = vsub.f32 0.0, %v3549
        %v3874 = vsub.f32 0.0, %v3550
        %v3875 = vsub.f32 0.0, %v3551
        %v3876 = vsub.f32 0.0, %v3552
        %v3877 = vsub.f32 0.0, %v3553
        %v3878 = vsub.f32 0.0, %v3554
        %v3879 = vmul.f32 %v3867, %v3543
        %v3880 = vmul.f32 %v3868, %v3544
        %v3881 = vmul.f32 %v3869, %v3545
        %v3882 = vmul.f32 %v3870, %v3546
        %v3883 = vmul.f32 %v3871, %v3547
        %v3884 = vmul.f32 %v3872, %v3548
        %v3885 = vmul.f32 %v3873, %v3549
        %v3886 = vmul.f32 %v3874, %v3550
        %v3887 = vmul.f32 %v3875, %v3551
        %v3888 = vmul.f32 %v3876, %v3552
        %v3889 = vmul.f32 %v3877, %v3553
        %v3890 = vmul.f32 %v3878, %v3554
        %v3891 = vmul.f32 %v3879, 1.442695
        %v3892 = vpow.pop %v3891
        %v3893 = vmul.f32 %v3880, 1.442695
        %v3894 = vpow.pop %v3893
        %v3895 = vmul.f32 %v3881, 1.442695
        %v3896 = vpow.pop %v3895
        %v3897 = vmul.f32 %v3882, 1.442695
        %v3898 = vpow.pop %v3897
        %v3899 = vmul.f32 %v3883, 1.442695
        %v3900 = vpow.pop %v3899
        %v3901 = vmul.f32 %v3884, 1.442695
        %v3902 = vpow.pop %v3901
        %v3903 = vmul.f32 %v3885, 1.442695
        %v3904 = vpow.pop %v3903
        %v3905 = vmul.f32 %v3886, 1.442695
        %v3906 = vpow.pop %v3905
        %v3907 = vmul.f32 %v3887, 1.442695
        %v3908 = vpow.pop %v3907
        %v3909 = vmul.f32 %v3888, 1.442695
        %v3910 = vpow.pop %v3909
        %v3911 = vmul.f32 %v3889, 1.442695
        %v3912 = vpow.pop %v3911
        %v3913 = vmul.f32 %v3890, 1.442695
        %v3914 = vpow.pop %v3913
        %v3915 = vmul.f32 %v3855, %v3892
        %v3916 = vmul.f32 %v3856, %v3894
        %v3917 = vmul.f32 %v3857, %v3896
        %v3918 = vmul.f32 %v3858, %v3898
        %v3919 = vmul.f32 %v3859, %v3900
        %v3920 = vmul.f32 %v3860, %v3902
        %v3921 = vmul.f32 %v3861, %v3904
        %v3922 = vmul.f32 %v3862, %v3906
        %v3923 = vmul.f32 %v3863, %v3908
        %v3924 = vmul.f32 %v3864, %v3910
        %v3925 = vmul.f32 %v3865, %v3912
        %v3926 = vmul.f32 %v3866, %v3914
        %v3927 = vsub.f32 1.0, %v3915
        %v3928 = vsub.f32 1.0, %v3916
        %v3929 = vsub.f32 1.0, %v3917
        %v3930 = vsub.f32 1.0, %v3918
        %v3931 = vsub.f32 1.0, %v3919
        %v3932 = vsub.f32 1.0, %v3920
        %v3933 = vsub.f32 1.0, %v3921
        %v3934 = vsub.f32 1.0, %v3922
        %v3935 = vsub.f32 1.0, %v3923
        %v3936 = vsub.f32 1.0, %v3924
        %v3937 = vsub.f32 1.0, %v3925
        %v3938 = vsub.f32 1.0, %v3926
        %v3939 = vmul.f32 %v3531, %v3927
        %v3940 = vmul.f32 %v3532, %v3928
        %v3941 = vmul.f32 %v3533, %v3929
        %v3942 = vmul.f32 %v3534, %v3930
        %v3943 = vmul.f32 %v3535, %v3931
        %v3944 = vmul.f32 %v3536, %v3932
        %v3945 = vmul.f32 %v3537, %v3933
        %v3946 = vmul.f32 %v3538, %v3934
        %v3947 = vmul.f32 %v3539, %v3935
        %v3948 = vmul.f32 %v3540, %v3936
        %v3949 = vmul.f32 %v3541, %v3937
        %v3950 = vmul.f32 %v3542, %v3938
        %v3951 = vadd.f32 %v3939, 1.0
        %v3952 = vadd.f32 %v3940, 1.0
        %v3953 = vadd.f32 %v3941, 1.0
        %v3954 = vadd.f32 %v3942, 1.0
        %v3955 = vadd.f32 %v3943, 1.0
        %v3956 = vadd.f32 %v3944, 1.0
        %v3957 = vadd.f32 %v3945, 1.0
        %v3958 = vadd.f32 %v3946, 1.0
        %v3959 = vadd.f32 %v3947, 1.0
        %v3960 = vadd.f32 %v3948, 1.0
        %v3961 = vadd.f32 %v3949, 1.0
        %v3962 = vadd.f32 %v3950, 1.0
        %v3963 = vmul.f32 %v3495, %v3951
        %v3964 = vmul.f32 %v3496, %v3952
        %v3965 = vmul.f32 %v3497, %v3953
        %v3966 = vmul.f32 %v3498, %v3954
        %v3967 = vmul.f32 %v3499, %v3955
        %v3968 = vmul.f32 %v3500, %v3956
        %v3969 = vmul.f32 %v3501, %v3957
        %v3970 = vmul.f32 %v3502, %v3958
        %v3971 = vmul.f32 %v3503, %v3959
        %v3972 = vmul.f32 %v3504, %v3960
        %v3973 = vmul.f32 %v3505, %v3961
        %v3974 = vmul.f32 %v3506, %v3962
        %v3975 = vpack.c.bf16 %v3965, %v3963
        %v3976 = vpack.c.bf16 %v3966, %v3964
        %v3977 = vpack.c.bf16 %v3969, %v3967
        %v3978 = vpack.c.bf16 %v3970, %v3968
        %v3979 = vpack.c.bf16 %v3973, %v3971
        %v3980 = vpack.c.bf16 %v3974, %v3972
        %v3982 = vperm.slane %v1218, 0
        %v4016 = vunpack.c.l.b16 %v1186
        %v4017 = vunpack.c.l.b16 %v1187
        %v4018 = vunpack.c.l.b16 %v1188
        %v4019 = vunpack.c.l.b16 %v1189
        %v4020 = vunpack.c.l.b16 %v1190
        %v4021 = vunpack.c.l.b16 %v1191
        %v4022 = vunpack.c.l.b16 %v1192
        %v4023 = vunpack.c.l.b16 %v1193
        %v4024 = vunpack.c.l.b16 %v1194
        %v4025 = vunpack.c.l.b16 %v1195
        %v4026 = vunpack.c.l.b16 %v1196
        %v4027 = vunpack.c.l.b16 %v1197
        %v4028 = vunpack.c.l.b16 %v1198
        %v4029 = vunpack.c.l.b16 %v1199
        %v4030 = vunpack.c.l.b16 %v1200
        %v4031 = vunpack.c.l.b16 %v1201
        %v4032 = vunpack.c.l.b16 %v1202
        %v4033 = vunpack.c.l.b16 %v1203
        %v4034 = vunpack.c.l.b16 %v1204
        %v4035 = vunpack.c.l.b16 %v1205
        %v4036 = vunpack.c.l.b16 %v1206
        %v4037 = vunpack.c.l.b16 %v1207
        %v4038 = vunpack.c.l.b16 %v1208
        %v4039 = vunpack.c.l.b16 %v1209
        %v4040 = vunpack.c.l.b16 %v1210
        %v4041 = vunpack.c.l.b16 %v1211
        %v4042 = vunpack.c.l.b16 %v1212
        %v4043 = vunpack.c.l.b16 %v1213
        %v4044 = vunpack.c.l.b16 %v1214
        %v4045 = vunpack.c.l.b16 %v1215
        %v4046 = vunpack.c.l.b16 %v1216
        %v4047 = vunpack.c.l.b16 %v1217
        %v4048 = vpack.c.b16 %v4017, %v4016
        %v4049 = vpack.c.b16 %v4019, %v4018
        %v4050 = vpack.c.b16 %v4021, %v4020
        %v4051 = vpack.c.b16 %v4023, %v4022
        %v4052 = vpack.c.b16 %v4025, %v4024
        %v4053 = vpack.c.b16 %v4027, %v4026
        %v4054 = vpack.c.b16 %v4029, %v4028
        %v4055 = vpack.c.b16 %v4031, %v4030
        %v4056 = vpack.c.b16 %v4033, %v4032
        %v4057 = vpack.c.b16 %v4035, %v4034
        %v4058 = vpack.c.b16 %v4037, %v4036
        %v4059 = vpack.c.b16 %v4039, %v4038
        %v4060 = vpack.c.b16 %v4041, %v4040
        %v4061 = vpack.c.b16 %v4043, %v4042
        %v4062 = vpack.c.b16 %v4045, %v4044
        %v4063 = vpack.c.b16 %v4047, %v4046
        %4080 = vmatpush.bf16.msra.mxu0 %v4055
        %4081 = vmatpush.bf16.msra.mxu0 %v4054
        %4082 = vmatpush.bf16.msra.mxu0 %v4053
        %4083 = vmatpush.bf16.msra.mxu0 %v4052
        %4084 = vmatpush.bf16.msra.mxu0 %v4051
        %4085 = vmatpush.bf16.msra.mxu0 %v4050
        %4086 = vmatpush.bf16.msra.mxu0 %v4049
        %4087 = vmatpush.bf16.msra.mxu0 %v4048
        %4088 = vmatmul.bf16.gmra.mxu0 %v3975
        %v4089 = vpop.f32.mrf.mxu0
        %v4090 = vadd.f32 %v3982, %v4089
        %v4091 = vpop.f32.mrf.mxu0
        %v4092 = vadd.f32 %v3982, %v4091
        %4093 = vmatmul.bf16.gmra.mxu0 %v3977
        %v4094 = vpop.f32.mrf.mxu0
        %v4095 = vadd.f32 %v3982, %v4094
        %v4096 = vpop.f32.mrf.mxu0
        %v4097 = vadd.f32 %v3982, %v4096
        %4098 = vmatmul.bf16.gmra.mxu0 %v3979
        %v4099 = vpop.f32.mrf.mxu0
        %v4100 = vadd.f32 %v3982, %v4099
        %v4101 = vpop.f32.mrf.mxu0
        %v4102 = vadd.f32 %v3982, %v4101
        %4103 = vdwg.mxu0
        %4104 = vmatpush.bf16.msra.mxu0 %v4063
        %4105 = vmatpush.bf16.msra.mxu0 %v4062
        %4106 = vmatpush.bf16.msra.mxu0 %v4061
        %4107 = vmatpush.bf16.msra.mxu0 %v4060
        %4108 = vmatpush.bf16.msra.mxu0 %v4059
        %4109 = vmatpush.bf16.msra.mxu0 %v4058
        %4110 = vmatpush.bf16.msra.mxu0 %v4057
        %4111 = vmatpush.bf16.msra.mxu0 %v4056
        %4112 = vmatmul.bf16.gmra.mxu0 %v3976
        %v4113 = vpop.f32.mrf.mxu0
        %v4114 = vadd.f32 %v4090, %v4113
        %v4115 = vpop.f32.mrf.mxu0
        %v4116 = vadd.f32 %v4092, %v4115
        %4117 = vmatmul.bf16.gmra.mxu0 %v3978
        %v4118 = vpop.f32.mrf.mxu0
        %v4119 = vadd.f32 %v4095, %v4118
        %v4120 = vpop.f32.mrf.mxu0
        %v4121 = vadd.f32 %v4097, %v4120
        %4122 = vmatmul.bf16.gmra.mxu0 %v3980
        %v4123 = vpop.f32.mrf.mxu0
        %v4124 = vadd.f32 %v4100, %v4123
        %v4125 = vpop.f32.mrf.mxu0
        %v4126 = vadd.f32 %v4102, %v4125
        %4127 = vdwg.mxu0
        %v4128 = vsel %vm1269, %v4114, 0.0
        %4129 = vadd.xlane.f32.xlu0 %v4128
        %v4130 = vpop.xlane.xlu0 %4129
        %v4131 = vsel %vm1269, %v4116, 0.0
        %4132 = vadd.xlane.f32.xlu0 %v4131
        %v4133 = vpop.xlane.xlu0 %4132
        %v4134 = vsel %vm1269, %v4119, 0.0
        %4135 = vadd.xlane.f32.xlu0 %v4134
        %v4136 = vpop.xlane.xlu0 %4135
        %v4137 = vsel %vm1269, %v4121, 0.0
        %4138 = vadd.xlane.f32.xlu0 %v4137
        %v4139 = vpop.xlane.xlu0 %4138
        %v4140 = vsel %vm1269, %v4124, 0.0
        %4141 = vadd.xlane.f32.xlu0 %v4140
        %v4142 = vpop.xlane.xlu0 %4141
        %v4143 = vsel %vm1269, %v4126, 0.0
        %4144 = vadd.xlane.f32.xlu0 %v4143
        %v4145 = vpop.xlane.xlu0 %4144
        %v4146 = vmul.f32 %v4130, %v2287
        %v4147 = vmul.f32 %v4133, %v2287
        %v4148 = vmul.f32 %v4136, %v2287
        %v4149 = vmul.f32 %v4139, %v2287
        %v4150 = vmul.f32 %v4142, %v2287
        %v4151 = vmul.f32 %v4145, %v2287
        %v4152 = vsub.f32 %v4114, %v4146
        %v4153 = vsub.f32 %v4116, %v4147
        %v4154 = vsub.f32 %v4119, %v4148
        %v4155 = vsub.f32 %v4121, %v4149
        %v4156 = vsub.f32 %v4124, %v4150
        %v4157 = vsub.f32 %v4126, %v4151
        %v4158 = vmul.f32 %v4152, %v4152
        %v4159 = vmul.f32 %v4153, %v4153
        %v4160 = vmul.f32 %v4154, %v4154
        %v4161 = vmul.f32 %v4155, %v4155
        %v4162 = vmul.f32 %v4156, %v4156
        %v4163 = vmul.f32 %v4157, %v4157
        %v4164 = vsel %vm1269, %v4158, 0.0
        %4165 = vadd.xlane.f32.xlu0 %v4164
        %v4166 = vpop.xlane.xlu0 %4165
        %v4167 = vsel %vm1269, %v4159, 0.0
        %4168 = vadd.xlane.f32.xlu0 %v4167
        %v4169 = vpop.xlane.xlu0 %4168
        %v4170 = vsel %vm1269, %v4160, 0.0
        %4171 = vadd.xlane.f32.xlu0 %v4170
        %v4172 = vpop.xlane.xlu0 %4171
        %v4173 = vsel %vm1269, %v4161, 0.0
        %4174 = vadd.xlane.f32.xlu0 %v4173
        %v4175 = vpop.xlane.xlu0 %4174
        %v4176 = vsel %vm1269, %v4162, 0.0
        %4177 = vadd.xlane.f32.xlu0 %v4176
        %v4178 = vpop.xlane.xlu0 %4177
        %v4179 = vsel %vm1269, %v4163, 0.0
        %4180 = vadd.xlane.f32.xlu0 %v4179
        %v4181 = vpop.xlane.xlu0 %4180
        %v4182 = vmul.f32 %v4166, %v2287
        %v4183 = vmul.f32 %v4169, %v2287
        %v4184 = vmul.f32 %v4172, %v2287
        %v4185 = vmul.f32 %v4175, %v2287
        %v4186 = vmul.f32 %v4178, %v2287
        %v4187 = vmul.f32 %v4181, %v2287
        %v4188 = vadd.f32 %v4182, 1e-05
        %v4189 = vadd.f32 %v4183, 1e-05
        %v4190 = vadd.f32 %v4184, 1e-05
        %v4191 = vadd.f32 %v4185, 1e-05
        %v4192 = vadd.f32 %v4186, 1e-05
        %v4193 = vadd.f32 %v4187, 1e-05
        %v4194 = vrsqrt.pop %v4188
        %v4195 = vmul.f32 %v4194, %v4188
        %v4196 = vmul.f32 %v4195, %v4194
        %v4197 = vmul.f32 0.5, %v4196
        %v4198 = vsub.f32 1.5, %v4197
        %v4199 = vmul.f32 %v4194, %v4198
        %vm4200 = vweird.f32 %v4188
        %vm4201 = vweird.f32 %v4194
        %vm4202 = vmor %vm4200, %vm4201
        %v4203 = vsel %vm4202, %v4194, %v4199
        %v4204 = vrsqrt.pop %v4189
        %v4205 = vmul.f32 %v4204, %v4189
        %v4206 = vmul.f32 %v4205, %v4204
        %v4207 = vmul.f32 0.5, %v4206
        %v4208 = vsub.f32 1.5, %v4207
        %v4209 = vmul.f32 %v4204, %v4208
        %vm4210 = vweird.f32 %v4189
        %vm4211 = vweird.f32 %v4204
        %vm4212 = vmor %vm4210, %vm4211
        %v4213 = vsel %vm4212, %v4204, %v4209
        %v4214 = vrsqrt.pop %v4190
        %v4215 = vmul.f32 %v4214, %v4190
        %v4216 = vmul.f32 %v4215, %v4214
        %v4217 = vmul.f32 0.5, %v4216
        %v4218 = vsub.f32 1.5, %v4217
        %v4219 = vmul.f32 %v4214, %v4218
        %vm4220 = vweird.f32 %v4190
        %vm4221 = vweird.f32 %v4214
        %vm4222 = vmor %vm4220, %vm4221
        %v4223 = vsel %vm4222, %v4214, %v4219
        %v4224 = vrsqrt.pop %v4191
        %v4225 = vmul.f32 %v4224, %v4191
        %v4226 = vmul.f32 %v4225, %v4224
        %v4227 = vmul.f32 0.5, %v4226
        %v4228 = vsub.f32 1.5, %v4227
        %v4229 = vmul.f32 %v4224, %v4228
        %vm4230 = vweird.f32 %v4191
        %vm4231 = vweird.f32 %v4224
        %vm4232 = vmor %vm4230, %vm4231
        %v4233 = vsel %vm4232, %v4224, %v4229
        %v4234 = vrsqrt.pop %v4192
        %v4235 = vmul.f32 %v4234, %v4192
        %v4236 = vmul.f32 %v4235, %v4234
        %v4237 = vmul.f32 0.5, %v4236
        %v4238 = vsub.f32 1.5, %v4237
        %v4239 = vmul.f32 %v4234, %v4238
        %vm4240 = vweird.f32 %v4192
        %vm4241 = vweird.f32 %v4234
        %vm4242 = vmor %vm4240, %vm4241
        %v4243 = vsel %vm4242, %v4234, %v4239
        %v4244 = vrsqrt.pop %v4193
        %v4245 = vmul.f32 %v4244, %v4193
        %v4246 = vmul.f32 %v4245, %v4244
        %v4247 = vmul.f32 0.5, %v4246
        %v4248 = vsub.f32 1.5, %v4247
        %v4249 = vmul.f32 %v4244, %v4248
        %vm4250 = vweird.f32 %v4193
        %vm4251 = vweird.f32 %v4244
        %vm4252 = vmor %vm4250, %vm4251
        %v4253 = vsel %vm4252, %v4244, %v4249
        %v4254 = vmul.f32 %v4152, %v4203
        %v4255 = vmul.f32 %v4153, %v4213
        %v4256 = vmul.f32 %v4154, %v4223
        %v4257 = vmul.f32 %v4155, %v4233
        %v4258 = vmul.f32 %v4156, %v4243
        %v4259 = vmul.f32 %v4157, %v4253
        %v4261 = vperm.slane %v1219, 0
        %v4263 = vmul.f32 %v4254, %v4261
        %v4264 = vmul.f32 %v4255, %v4261
        %v4265 = vmul.f32 %v4256, %v4261
        %v4266 = vmul.f32 %v4257, %v4261
        %v4267 = vmul.f32 %v4258, %v4261
        %v4268 = vmul.f32 %v4259, %v4261
        %v4270 = vperm.slane %v1220, 0
        %v4272 = vadd.f32 %v4263, %v4270
        %v4273 = vadd.f32 %v4264, %v4270
        %v4274 = vadd.f32 %v4265, %v4270
        %v4275 = vadd.f32 %v4266, %v4270
        %v4276 = vadd.f32 %v4267, %v4270
        %v4277 = vadd.f32 %v4268, %v4270
        %v4278 = vadd.f32 %v4272, %v3384
        %v4279 = vadd.f32 %v4273, %v3385
        %v4280 = vadd.f32 %v4274, %v3386
        %v4281 = vadd.f32 %v4275, %v3387
        %v4282 = vadd.f32 %v4276, %v3388
        %v4283 = vadd.f32 %v4277, %v3389
        %4284 = vst.msk [vmem:[%s20] sm:$0xff] %vm1269, %v4278
        %4285 = vst.msk [vmem:[%s20 + $0x8] sm:$0xff] %vm1269, %v4279
        %4286 = vst.msk [vmem:[%s20 + $0x10] sm:$0xff] %vm1269, %v4280
        %4287 = vst.msk [vmem:[%s20 + $0x18] sm:$0xff] %vm1269, %v4281
        %4288 = vst.msk [vmem:[%s20 + $0x20] sm:$0xff] %vm1269, %v4282
        %4289 = vst.msk [vmem:[%s20 + $0x28] sm:$0xff] %vm1269, %v4283
        // Predicated region
        $region149: #{cyattn_forward.7} parent=99 // pred_check
          %p4290 = pneg %p572
        $region150: #{cyattn_forward.7} parent=99 // pred_check_branch
          %4292 = sbr.rel (%p4290) target = $region152
        $region151: #{cyattn_forward.7} parent=99 // pred_region
          _
        $region152: #{cyattn_forward.7} parent=99 // pred_fallthru
          _
        // Predicated region
        $region153: #{cyattn_forward.7} parent=99 // pred_check
          %p4293 = pneg %p572
        $region154: #{cyattn_forward.7} parent=99 // pred_check_branch
          %4295 = sbr.rel (%p4293) target = $region156
        $region155: #{cyattn_forward.7} parent=99 // pred_region
          _
        $region156: #{cyattn_forward.7} parent=99 // pred_fallthru
          _
      $region100: #{cyattn_forward.7} parent=5 // pred_fallthru
        _
      %p4296 = scmp.le.s32.totalorder 2, %s44
      // Predicated region
      $region157: #{cyattn_forward.7} parent=5 // pred_check
        %p4297 = pneg %p4296
      $region158: #{cyattn_forward.7} parent=5 // pred_check_branch
        %4299 = sbr.rel (%p4297) target = $region160
      $region159: #{cyattn_forward.7} parent=5 // pred_region
        %s4300 = ssub.s32 %s44, 2
      $region160: #{cyattn_forward.7} parent=5 // pred_fallthru
        _
    $region6: #{cyattn_forward.7} parent=1 // loop_footer
      %s48 = sadd.s32 1, %s44
    $region7: #{cyattn_forward.7} parent=1 // loop_footer_branch
      %43 = sbr.rel target = $region3
    $region8: #{cyattn_forward.7} parent=1 // loop_exit
      _
    %4301 = vsyncpa [#allocation3], 1
    %s4302 = scalar_lea.sflag [#allocation3], 1
    %4303 = vsyncpa %s4302, 1
    %4304 = vsyncpa [#allocation5], 1
    %s4305 = scalar_lea.sflag [#allocation5], 1
    %4306 = vsyncpa %s4305, 1
    %4307 = vsyncpa [#allocation8], 1
    %s4308 = scalar_lea.sflag [#allocation8], 1
    %4309 = vsyncpa %s4308, 1
    %4310 = vsyncpa [#allocation11], 1
    %s4311 = scalar_lea.sflag [#allocation11], 1
    %4312 = vsyncpa %s4311, 1
    %4313 = vsyncpa [#allocation14], 1
    %s4314 = scalar_lea.sflag [#allocation14], 1
    %4315 = vsyncpa %s4314, 1
    %4316 = vsyncpa [#allocation17], 1
    %s4317 = scalar_lea.sflag [#allocation17], 1
    %4318 = vsyncpa %s4317, 1

</llo_original>
